<compile_context>
chip_gen: v7x
topology: tpu7x:2x2x1
jax: 0.10.0
libtpu: 0.0.40
codegen_flags: <defaults>
</compile_context>

<pallas_src>
import functools

import jax
import jax.numpy as jnp
from jax.experimental import pallas as pl
from jax.experimental.pallas import tpu as pltpu


def _pair(v):
    return (v, v) if isinstance(v, int) else tuple(v)


# ---------------------------------------------------------------------------
# Pallas kernels
# ---------------------------------------------------------------------------
def _conv_kernel(x_ref, w_ref, b_ref, o_ref, *, offs, rout, act):
    # x_ref: (1, Rin, Cin) f32 flattened padded image
    # w_ref: (KK, Cin, Cout) bf16 (BN scale folded in)
    # b_ref: (1, Cout) f32, o_ref: (1, Rout, Cout) f32
    cout = o_ref.shape[2]
    acc = jnp.zeros((rout, cout), jnp.float32)
    for t, off in enumerate(offs):          # static unroll over kernel taps
        xs = x_ref[0, off:off + rout, :].astype(jnp.bfloat16)
        acc = acc + jnp.dot(xs, w_ref[t], preferred_element_type=jnp.float32)
    y = acc + b_ref[...]
    if act == "relu":
        y = jnp.maximum(y, 0.0)
    o_ref[0] = y


def _dw_kernel(x_ref, w_ref, b_ref, o_ref, *, offs, rout, act):
    # depthwise conv: per-channel MAC over taps.  w_ref: (KK, 1, C) f32.
    c = o_ref.shape[2]
    acc = jnp.zeros((rout, c), jnp.float32)
    for t, off in enumerate(offs):
        acc = acc + x_ref[0, off:off + rout, :] * w_ref[t]
    y = acc + b_ref[...]
    if act == "relu":
        y = jnp.maximum(y, 0.0)
    o_ref[0] = y


def _pa_kernel(x_ref, p_ref, wx_ref, wp_ref, b_ref, o_ref, *, offs, rout):
    # PixelAttention grouped conv: dw(x, wx) + dw(pattn1, wp) + bias, sigmoid.
    c = o_ref.shape[2]
    acc = jnp.zeros((rout, c), jnp.float32)
    for t, off in enumerate(offs):
        acc = acc + x_ref[0, off:off + rout, :] * wx_ref[t]
        acc = acc + p_ref[0, off:off + rout, :] * wp_ref[t]
    y = acc + b_ref[...]
    o_ref[0] = 0.5 * (jnp.tanh(0.5 * y) + 1.0)   # exact, overflow-safe sigmoid


def _scale_add_kernel(a_ref, b_ref, o_ref, *, alpha, act):
    y = a_ref[...] * alpha + b_ref[...]
    if act == "relu":
        y = jnp.maximum(y, 0.0)
    o_ref[...] = y


def _mul_add_kernel(a_ref, b_ref, c_ref, o_ref, *, beta):
    o_ref[...] = a_ref[...] * b_ref[...] + beta * c_ref[...]


def _affine_kernel(x_ref, s_ref, t_ref, o_ref, *, act):
    y = x_ref[...] * s_ref[...] + t_ref[...]
    if act == "relu":
        y = jnp.maximum(y, 0.0)
    o_ref[...] = y


# ---------------------------------------------------------------------------
# Cached pallas_call builders (one compile per unique signature)
# ---------------------------------------------------------------------------
def _cp():
    return pltpu.CompilerParams(dimension_semantics=("parallel",))


@functools.lru_cache(maxsize=None)
def _conv_call(B, Rin, Cin, KK, Rout, Cout, offs, act):
    return jax.jit(pl.pallas_call(
        functools.partial(_conv_kernel, offs=offs, rout=Rout, act=act),
        out_shape=jax.ShapeDtypeStruct((B, Rout, Cout), jnp.float32),
        grid=(B,),
        in_specs=[
            pl.BlockSpec((1, Rin, Cin), lambda b: (b, 0, 0)),
            pl.BlockSpec((KK, Cin, Cout), lambda b: (0, 0, 0)),
            pl.BlockSpec((1, Cout), lambda b: (0, 0)),
        ],
        out_specs=pl.BlockSpec((1, Rout, Cout), lambda b: (b, 0, 0)),
        compiler_params=_cp(),
    ))


@functools.lru_cache(maxsize=None)
def _dw_call(B, Rin, C, KK, Rout, offs, act):
    return jax.jit(pl.pallas_call(
        functools.partial(_dw_kernel, offs=offs, rout=Rout, act=act),
        out_shape=jax.ShapeDtypeStruct((B, Rout, C), jnp.float32),
        grid=(B,),
        in_specs=[
            pl.BlockSpec((1, Rin, C), lambda b: (b, 0, 0)),
            pl.BlockSpec((KK, 1, C), lambda b: (0, 0, 0)),
            pl.BlockSpec((1, C), lambda b: (0, 0)),
        ],
        out_specs=pl.BlockSpec((1, Rout, C), lambda b: (b, 0, 0)),
        compiler_params=_cp(),
    ))


@functools.lru_cache(maxsize=None)
def _pa_call(B, Rin, C, KK, Rout, offs):
    return jax.jit(pl.pallas_call(
        functools.partial(_pa_kernel, offs=offs, rout=Rout),
        out_shape=jax.ShapeDtypeStruct((B, Rout, C), jnp.float32),
        grid=(B,),
        in_specs=[
            pl.BlockSpec((1, Rin, C), lambda b: (b, 0, 0)),
            pl.BlockSpec((1, Rin, C), lambda b: (b, 0, 0)),
            pl.BlockSpec((KK, 1, C), lambda b: (0, 0, 0)),
            pl.BlockSpec((KK, 1, C), lambda b: (0, 0, 0)),
            pl.BlockSpec((1, C), lambda b: (0, 0)),
        ],
        out_specs=pl.BlockSpec((1, Rout, C), lambda b: (b, 0, 0)),
        compiler_params=_cp(),
    ))


@functools.lru_cache(maxsize=None)
def _scale_add_call(B, H, W, C, alpha, act):
    blk = pl.BlockSpec((1, H, W, C), lambda b: (b, 0, 0, 0))
    return jax.jit(pl.pallas_call(
        functools.partial(_scale_add_kernel, alpha=alpha, act=act),
        out_shape=jax.ShapeDtypeStruct((B, H, W, C), jnp.float32),
        grid=(B,), in_specs=[blk, blk], out_specs=blk, compiler_params=_cp(),
    ))


@functools.lru_cache(maxsize=None)
def _mul_add_call(B, H, W, C, beta):
    blk = pl.BlockSpec((1, H, W, C), lambda b: (b, 0, 0, 0))
    return jax.jit(pl.pallas_call(
        functools.partial(_mul_add_kernel, beta=beta),
        out_shape=jax.ShapeDtypeStruct((B, H, W, C), jnp.float32),
        grid=(B,), in_specs=[blk, blk, blk], out_specs=blk,
        compiler_params=_cp(),
    ))


@functools.lru_cache(maxsize=None)
def _affine_call(B, H, W, C, act):
    blk = pl.BlockSpec((1, H, W, C), lambda b: (b, 0, 0, 0))
    vec = pl.BlockSpec((1, 1, 1, C), lambda b: (0, 0, 0, 0))
    return jax.jit(pl.pallas_call(
        functools.partial(_affine_kernel, act=act),
        out_shape=jax.ShapeDtypeStruct((B, H, W, C), jnp.float32),
        grid=(B,), in_specs=[blk, vec, vec], out_specs=blk,
        compiler_params=_cp(),
    ))


# ---------------------------------------------------------------------------
# Host-side wrappers
# ---------------------------------------------------------------------------
def _flatten_padded(x, kh, kw, dh, dw, ph, pw, pad_mode):
    """Spatially pad, flatten rows, append tail rows so every tap offset is a
    contiguous in-bounds row range of the flattened image."""
    B, H, W, C = x.shape
    if ph or pw:
        mode = "reflect" if pad_mode == "reflect" else "constant"
        x = jnp.pad(x, ((0, 0), (ph, ph), (pw, pw), (0, 0)), mode=mode)
    Hp, Wp = H + 2 * ph, W + 2 * pw
    Ho, Wo = Hp - dh * (kh - 1), Wp - dw * (kw - 1)
    tail = (kw - 1) * dw
    xf = x.reshape(B, Hp * Wp, C)
    if tail:
        xf = jnp.pad(xf, ((0, 0), (0, tail), (0, 0)))
    offs = tuple(i * dh * Wp + j * dw for i in range(kh) for j in range(kw))
    return xf, offs, Wp, Ho, Wo


def _fuse_affine(cout, conv_b, bn, eps=1e-5):
    # inference-mode BN folded into (scale, bias)
    if bn is not None:
        s = bn["g"] / jnp.sqrt(bn["v"] + eps)
        b0 = conv_b if conv_b is not None else 0.0
        bias = (b0 - bn["m"]) * s + bn["b"]
    else:
        s = jnp.ones((cout,), jnp.float32)
        bias = conv_b if conv_b is not None else jnp.zeros((cout,), jnp.float32)
    return s, bias


def conv2d(x, w, conv_b=None, bn=None, stride=(1, 1), padding=(0, 0),
           dilation=(1, 1), act=None, pad_mode="zeros"):
    O, Ci, kh, kw = w.shape
    (sh, sw), (ph, pw), (dh, dw) = _pair(stride), _pair(padding), _pair(dilation)
    xf, offs, Wp, Ho, Wo = _flatten_padded(x, kh, kw, dh, dw, ph, pw, pad_mode)
    B, Rin = xf.shape[0], xf.shape[1]
    Rout = Ho * Wp
    s, bias = _fuse_affine(O, conv_b, bn)
    wm = (jnp.transpose(w, (2, 3, 1, 0)).reshape(kh * kw, Ci, O)
          * s[None, None, :]).astype(jnp.bfloat16)
    out = _conv_call(B, Rin, Ci, kh * kw, Rout, O, offs, act)(
        xf, wm, bias.reshape(1, O).astype(jnp.float32))
    out = out.reshape(B, Ho, Wp, O)[:, :, :Wo, :]
    if sh > 1 or sw > 1:                    # stride>1 == subsampled stride-1 conv
        out = out[:, ::sh, ::sw, :]
    return out


def depthwise2d(x, w, conv_b=None, bn=None, stride=(1, 1), padding=(0, 0),
                dilation=(1, 1), act=None, pad_mode="zeros"):
    C, _, kh, kw = w.shape
    (sh, sw), (ph, pw), (dh, dw) = _pair(stride), _pair(padding), _pair(dilation)
    xf, offs, Wp, Ho, Wo = _flatten_padded(x, kh, kw, dh, dw, ph, pw, pad_mode)
    B, Rin = xf.shape[0], xf.shape[1]
    Rout = Ho * Wp
    s, bias = _fuse_affine(C, conv_b, bn)
    wm = (jnp.transpose(w[:, 0], (1, 2, 0)).reshape(kh * kw, 1, C)
          * s[None, None, :]).astype(jnp.float32)
    out = _dw_call(B, Rin, C, kh * kw, Rout, offs, act)(
        xf, wm, bias.reshape(1, C).astype(jnp.float32))
    out = out.reshape(B, Ho, Wp, C)[:, :, :Wo, :]
    if sh > 1 or sw > 1:
        out = out[:, ::sh, ::sw, :]
    return out


def pa_fused(x, pattn1, w, bias):
    # grouped 2C->C 7x7 reflect conv + bias + sigmoid, fused in one kernel
    C = x.shape[-1]
    xf, offs, Wp, Ho, Wo = _flatten_padded(x, 7, 7, 1, 1, 3, 3, "reflect")
    pf, _, _, _, _ = _flatten_padded(pattn1, 7, 7, 1, 1, 3, 3, "reflect")
    B, Rin = xf.shape[0], xf.shape[1]
    Rout = Ho * Wp
    wx = jnp.transpose(w[:, 0], (1, 2, 0)).reshape(49, 1, C).astype(jnp.float32)
    wp = jnp.transpose(w[:, 1], (1, 2, 0)).reshape(49, 1, C).astype(jnp.float32)
    out = _pa_call(B, Rin, C, 49, Rout, offs)(
        xf, pf, wx, wp, bias.reshape(1, C).astype(jnp.float32))
    return out.reshape(B, Ho, Wp, C)[:, :, :Wo, :]


def ew_scale_add(a, b, alpha=1.0, act=None):        # a*alpha + b
    B, H, W, C = a.shape
    return _scale_add_call(B, H, W, C, float(alpha), act)(a, b)


def ew_mul_add(a, b, c, beta=1.0):                  # a*b + beta*c
    B, H, W, C = a.shape
    return _mul_add_call(B, H, W, C, float(beta))(a, b, c)


def ew_affine(x, s, t, act=None):                   # per-channel x*s + t
    B, H, W, C = x.shape
    return _affine_call(B, H, W, C, act)(
        x, s.reshape(1, 1, 1, C), t.reshape(1, 1, 1, C))


def maxpool2(x):  # MaxPool2d(2, stride=2) glue
    B, H, W, C = x.shape
    return jnp.max(x.reshape(B, H // 2, 2, W // 2, 2, C), axis=(2, 4))


def bilinear_up2(x):  # F.interpolate(scale_factor=2, bilinear, align_corners=True)
    B, H, W, C = x.shape
    Ho, Wo = 2 * H, 2 * W

    def idx(out_n, in_n):
        pos = jnp.arange(out_n, dtype=jnp.float32) * ((in_n - 1) / (out_n - 1))
        i0 = jnp.clip(jnp.floor(pos).astype(jnp.int32), 0, in_n - 1)
        i1 = jnp.clip(i0 + 1, 0, in_n - 1)
        f = pos - i0.astype(jnp.float32)
        return i0, i1, f

    h0, h1, fh = idx(Ho, H)
    w0, w1, fw = idx(Wo, W)
    x00 = x[:, h0][:, :, w0]
    x01 = x[:, h0][:, :, w1]
    x10 = x[:, h1][:, :, w0]
    x11 = x[:, h1][:, :, w1]
    fw_ = fw[None, None, :, None]
    fh_ = fh[None, :, None, None]
    top = x00 * (1.0 - fw_) + x01 * fw_
    bot = x10 * (1.0 - fw_) + x11 * fw_
    return top * (1.0 - fh_) + bot * fh_


# ---------------------------------------------------------------------------
# Deterministic parameter construction
# ---------------------------------------------------------------------------
class _ParamGen:
    def __init__(self, seed=42):
        self.key = jax.random.PRNGKey(seed)
        self.i = 0

    def normal(self, shape, scale=0.05):
        self.i += 1
        k = jax.random.fold_in(self.key, self.i)
        return jax.random.normal(k, shape, jnp.float32) * scale


PG = _ParamGen()


def conv_p(cin, cout, k, bias=True):
    kh, kw = _pair(k)
    p = {"w": PG.normal((cout, cin, kh, kw))}
    p["b"] = PG.normal((cout,)) if bias else None
    return p


def bn_p(c):
    # TODO(synk): training-mode batch statistics (PyTorch default .train()) are
    # not reproduced; BN uses folded running statistics (inference mode).
    return {"g": jnp.ones((c,), jnp.float32) + PG.normal((c,), 0.02),
            "b": PG.normal((c,), 0.02),
            "m": PG.normal((c,), 0.02),
            "v": jnp.ones((c,), jnp.float32) + jnp.abs(PG.normal((c,), 0.02))}


# ---------------------------------------------------------------------------
# Module params + forwards
# ---------------------------------------------------------------------------
def make_dsc(cin, cout, k, stride=1, padding=0, dilation=1, relu=True,
             bias=False, bn1=True, bn2=True):
    kh, kw = _pair(k)
    return {"cfg": dict(stride=_pair(stride), padding=_pair(padding),
                        dilation=_pair(dilation), relu=relu),
            "dw_w": PG.normal((cin, 1, kh, kw)),
            "bn1": bn_p(cin) if bn1 else None,
            "pw": conv_p(cin, cout, 1, bias=bias),
            "bn2": bn_p(cout) if bn2 else None}


def dsc_fwd(p, x):
    cfg = p["cfg"]
    act = "relu" if cfg["relu"] else None
    x = depthwise2d(x, p["dw_w"], None, p["bn1"], cfg["stride"], cfg["padding"],
                    cfg["dilation"], act)
    x = conv2d(x, p["pw"]["w"], p["pw"]["b"], p["bn2"], act=act)
    return x


def make_dsfem(in_planes, out_planes, stride=1, scale=0.1, map_reduce=8):
    ip = in_planes // map_reduce
    return {"scale": scale,
            "b0": [make_dsc(in_planes, 2 * ip, 1, stride=stride),
                   make_dsc(2 * ip, 2 * ip, 3, stride=1, padding=1)],
            "b1": [make_dsc(in_planes, ip, 1, stride=1),
                   make_dsc(ip, ip // 2 * 3, (1, 3), stride=stride, padding=(0, 1)),
                   make_dsc(ip // 2 * 3, 2 * ip, (3, 1), stride=stride, padding=(1, 0)),
                   make_dsc(2 * ip, 2 * ip, 3, stride=1, padding=5, dilation=5)],
            "b2": [make_dsc(in_planes, ip, 1, stride=1),
                   make_dsc(ip, ip // 2 * 3, (3, 1), stride=stride, padding=(1, 0)),
                   make_dsc(ip // 2 * 3, 2 * ip, (1, 3), stride=stride, padding=(0, 1)),
                   make_dsc(2 * ip, 2 * ip, 3, stride=1, padding=5, dilation=5)],
            "lin": make_dsc(6 * ip, out_planes, 1, stride=1),
            "short": make_dsc(in_planes, out_planes, 1, stride=stride)}


def dsfem_fwd(p, x):
    def seq(lst, y):
        for q in lst:
            y = dsc_fwd(q, y)
        return y
    x0, x1, x2 = seq(p["b0"], x), seq(p["b1"], x), seq(p["b2"], x)
    out = jnp.concatenate([x0, x1, x2], axis=-1)
    out = dsc_fwd(p["lin"], out)
    short = dsc_fwd(p["short"], x)
    return ew_scale_add(out, short, alpha=p["scale"], act="relu")


def make_ca(dim, reduction=8):
    return {"c1": conv_p(dim, dim // reduction, 1, True),
            "c2": conv_p(dim // reduction, dim, 1, True)}


def ca_fwd(p, x):
    gap = jnp.mean(x, axis=(1, 2), keepdims=True)   # AdaptiveAvgPool2d(1) glue
    y = conv2d(gap, p["c1"]["w"], p["c1"]["b"], None, act="relu")
    y = conv2d(y, p["c2"]["w"], p["c2"]["b"], None, act=None)
    return y                                        # (B,1,1,C)


def make_sa():
    return {"c": conv_p(2, 1, 7, True)}


def sa_fwd(p, x):
    x_avg = jnp.mean(x, axis=-1, keepdims=True)     # channel reductions: glue
    x_max = jnp.max(x, axis=-1, keepdims=True)
    x2 = jnp.concatenate([x_avg, x_max], axis=-1)
    return conv2d(x2, p["c"]["w"], p["c"]["b"], None, padding=(3, 3),
                  pad_mode="reflect")


def make_pa(dim):
    return {"w": PG.normal((dim, 2, 7, 7)), "b": PG.normal((dim,))}


def make_dea(dim, k=3, reduction=8):
    return {"conv1": conv_p(dim, dim, k, True), "conv2": conv_p(dim, dim, k, True),
            "sa": make_sa(), "ca": make_ca(dim, reduction), "pa": make_pa(dim),
            "pad": k // 2}


def dea_fwd(p, x, beta=1.0):
    # returns res*pattn2 + beta*x  (beta=2 folds the LUM main+side add)
    pad = (p["pad"], p["pad"])
    res = conv2d(x, p["conv1"]["w"], p["conv1"]["b"], None, padding=pad)
    res = ew_scale_add(res, x, 1.0, None)            # res + x
    res = conv2d(res, p["conv2"]["w"], p["conv2"]["b"], None, padding=pad)
    cattn = ca_fwd(p["ca"], res)                      # (B,1,1,C)
    sattn = sa_fwd(p["sa"], res)                      # (B,H,W,1)
    pattn1 = sattn + cattn                            # broadcast add (glue)
    pattn2 = pa_fused(res, pattn1, p["pa"]["w"], p["pa"]["b"])
    return ew_mul_add(res, pattn2, x, beta)


def make_upsample(cin, cout, k=3):
    return {"c": conv_p(cin, cout, k, True)}


def upsample_fwd(p, x):
    x = bilinear_up2(x)
    return conv2d(x, p["c"]["w"], p["c"]["b"], None, padding=(1, 1))


def make_lum(cin, cout, k=3, reduction=8):
    return {"main": make_upsample(cin, cout, k), "side": make_dea(cout, k, reduction)}


def lum_fwd(p, x):
    m = upsample_fwd(p["main"], x)
    return dea_fwd(p["side"], m, beta=2.0)           # == m + DEA(m)


def make_decoder(cin, cmid, cout):
    return {"conv1": conv_p(cin, cmid, 1, True), "bn1": bn_p(cmid),
            "conv2": conv_p(cmid, cout, 3, True), "bn2": bn_p(cout),
            "up": make_lum(cmid, cmid)}


def decoder_fwd(p, down_inp, up_inp):
    x = jnp.concatenate([down_inp, up_inp], axis=-1)
    x = conv2d(x, p["conv1"]["w"], p["conv1"]["b"], p["bn1"], act="relu")
    x = lum_fwd(p["up"], x)
    x = conv2d(x, p["conv2"]["w"], p["conv2"]["b"], p["bn2"], padding=(1, 1),
               act="relu")
    return x


def make_irdm(nin, nout):
    p = {"nin": nin, "nout": nout, "bn": bn_p(nout)}
    if nin < nout:
        p["conv"] = conv_p(nin, nout - nin, 3, True)
    else:
        p["conv1"] = conv_p(nin, nout // 2, 3, True)
        p["conv2"] = conv_p(nout // 2, nout, 3, True)
    return p


def irdm_fwd(p, x):
    if p["nin"] < p["nout"]:
        # relu(BN(cat([conv(x), pool(x)]))) split per-channel: BN folded into
        # the conv; the pool branch uses a per-channel affine+relu kernel.
        n1 = p["nout"] - p["nin"]
        bn_c = {k: v[:n1] for k, v in p["bn"].items()}
        bn_p_ = {k: v[n1:] for k, v in p["bn"].items()}
        c = conv2d(x, p["conv"]["w"], p["conv"]["b"], bn_c, stride=(2, 2),
                   padding=(1, 1), act="relu")
        s, b = _fuse_affine(p["nin"], None, bn_p_)
        pool = ew_affine(maxpool2(x), s, b, act="relu")
        return jnp.concatenate([c, pool], axis=-1)
    out = conv2d(x, p["conv1"]["w"], p["conv1"]["b"], None, padding=(1, 1))
    out = conv2d(out, p["conv2"]["w"], p["conv2"]["b"], p["bn"], stride=(2, 2),
                 padding=(1, 1), act="relu")
    return out


def make_resblock(cin, cout, dilation=(1, 1), shortcut=False):
    p = {"c1": conv_p(cin, cout, 3, False), "bn1": bn_p(cout),
         "c2": conv_p(cout, cout, 3, False), "bn2": bn_p(cout),
         "dil": dilation}
    if shortcut:
        p["sc"] = conv_p(cin, cout, 1, False)
        p["sc_bn"] = bn_p(cout)
    return p


def resblock_fwd(p, x):
    d0, d1 = p["dil"]
    left = conv2d(x, p["c1"]["w"], None, p["bn1"], padding=(d0, d0),
                  dilation=(d0, d0), act="relu")
    left = conv2d(left, p["c2"]["w"], None, p["bn2"], padding=(d1, d1),
                  dilation=(d1, d1), act=None)
    right = conv2d(x, p["sc"]["w"], None, p["sc_bn"], act=None) if "sc" in p else x
    return ew_scale_add(left, right, 1.0, "relu")


def make_linkcrack():
    return {
        "pre": [conv_p(3, 32, 3, True), bn_p(32), conv_p(32, 64, 3, True), bn_p(64)],
        "res1": {"rb1": make_resblock(64, 64, shortcut=True),
                 "irdm": make_irdm(64, 64),
                 "rb2": make_resblock(64, 64), "rb3": make_resblock(64, 64)},
        "res2": {"irdm": make_irdm(64, 64),
                 "rb1": make_resblock(64, 64, shortcut=True),
                 "rb2": make_resblock(64, 64), "rb3": make_resblock(64, 64),
                 "rb4": make_resblock(64, 64)},
        "res3": {"irdm": make_irdm(64, 128),
                 "rb1": make_resblock(128, 128, shortcut=True),
                 "rb2": make_resblock(128, 128),
                 "dsfem1": make_dsfem(128, 128),
                 "rb3": make_resblock(128, 128, dilation=(2, 2)),
                 "dsfem2": make_dsfem(128, 128),
                 "rb4": make_resblock(128, 128, dilation=(2, 2))},
        "res4": {"rb1": make_resblock(128, 128, dilation=(2, 2), shortcut=True),
                 "dsfem": make_dsfem(128, 128),
                 "rb2": make_resblock(128, 128, dilation=(4, 4))},
        "dec4": make_decoder(256, 128, 64),
        "dec3": make_decoder(128, 64, 64),
        "dec2": make_decoder(128, 64, 64),
        "mask": [conv_p(64, 32, 3, True), conv_p(32, 1, 1, False)],
        "link": [conv_p(64, 32, 3, True), conv_p(32, 8, 1, False)],
    }


def linkcrack_fwd(P, x):          # x: NHWC
    p = P["pre"]
    x = conv2d(x, p[0]["w"], p[0]["b"], p[1], padding=(1, 1), act="relu")
    x = conv2d(x, p[2]["w"], p[2]["b"], p[3], padding=(1, 1), act="relu")

    r = P["res1"]
    x1 = resblock_fwd(r["rb1"], x)
    x1 = irdm_fwd(r["irdm"], x1)
    x1 = resblock_fwd(r["rb2"], x1)
    x1 = resblock_fwd(r["rb3"], x1)

    r = P["res2"]
    x2 = irdm_fwd(r["irdm"], x1)
    x2 = resblock_fwd(r["rb1"], x2)
    x2 = resblock_fwd(r["rb2"], x2)
    x2 = resblock_fwd(r["rb3"], x2)
    x2 = resblock_fwd(r["rb4"], x2)

    r = P["res3"]
    x3 = irdm_fwd(r["irdm"], x2)
    x3 = resblock_fwd(r["rb1"], x3)
    x3 = resblock_fwd(r["rb2"], x3)
    x3 = dsfem_fwd(r["dsfem1"], x3)
    x3 = resblock_fwd(r["rb3"], x3)
    x3 = dsfem_fwd(r["dsfem2"], x3)
    x3 = resblock_fwd(r["rb4"], x3)

    r = P["res4"]
    x4 = resblock_fwd(r["rb1"], x3)
    x4 = dsfem_fwd(r["dsfem"], x4)
    x4 = resblock_fwd(r["rb2"], x4)

    x5 = decoder_fwd(P["dec4"], x4, x3)
    x6 = decoder_fwd(P["dec3"], x5, x2)
    x7 = decoder_fwd(P["dec2"], x6, x1)

    # Fused mask/link heads: 3x3 convs concatenated into one 64->64 conv,
    # then one block-diagonal 1x1 64->9 conv (exact: zero cross-weights).
    w1 = jnp.concatenate([P["mask"][0]["w"], P["link"][0]["w"]], axis=0)
    b1 = jnp.concatenate([P["mask"][0]["b"], P["link"][0]["b"]], axis=0)
    h = conv2d(x7, w1, b1, None, padding=(1, 1), act="relu")
    w2 = jnp.zeros((9, 64, 1, 1), jnp.float32)
    w2 = w2.at[0:1, 0:32].set(P["mask"][1]["w"])
    w2 = w2.at[1:9, 32:64].set(P["link"][1]["w"])
    out = conv2d(h, w2, None, None)
    return out[..., 0:1], out[..., 1:9]


if __name__ == "__main__":
    params = make_linkcrack()
    key = jax.random.PRNGKey(0)
    x_nchw = jax.random.normal(key, (2, 3, 32, 32), jnp.float32)
    x_nhwc = jnp.transpose(x_nchw, (0, 2, 3, 1))

    mask_nhwc, link_nhwc = linkcrack_fwd(params, x_nhwc)
    mask = jnp.transpose(mask_nhwc, (0, 3, 1, 2))
    link = jnp.transpose(link_nhwc, (0, 3, 1, 2))
    jax.block_until_ready((mask, link))

    assert mask.shape == (2, 1, 32, 32), mask.shape
    assert link.shape == (2, 8, 32, 32), link.shape
    assert bool(jnp.all(jnp.isfinite(mask))) and bool(jnp.all(jnp.isfinite(link)))
    print("KERNEL_OK")
</pallas_src>

<mosaic_0001>
module attributes {stable_mosaic.version = 11 : i64} {
  func.func @_conv_kernel(%arg0: i32, %arg1: memref<1x1158x3xf32, #tpu.memory_space<vmem>>, %arg2: memref<9x3x32xbf16, #tpu.memory_space<vmem>>, %arg3: memref<1x32xf32, #tpu.memory_space<vmem>>, %arg4: memref<1x1088x32xf32, #tpu.memory_space<vmem>>) attributes {dimension_semantics = [#tpu.dimension_semantics<parallel>], iteration_bounds = array<i64: 2>, scalar_prefetch = 0 : i64, scratch_operands = 0 : i64, tpu.core_type = #tpu.core_type<tc>, window_params = [{transform_indices = @transform_0, window_bounds = array<i64: 1, 1158, 3>}, {pipeline_mode = #tpu.pipeline_mode<synchronous>, transform_indices = @transform_1, window_bounds = array<i64: 9, 3, 32>}, {pipeline_mode = #tpu.pipeline_mode<synchronous>, transform_indices = @transform_2, window_bounds = array<i64: 1, 32>}, {transform_indices = @transform_3, window_bounds = array<i64: 1, 1088, 32>}]} {
    %cst = arith.constant 0.000000e+00 : f32
    %0 = vector.broadcast %cst : f32 to vector<1088x32xf32>
    %c0 = arith.constant 0 : index
    %c0_0 = arith.constant 0 : index
    %c0_1 = arith.constant 0 : index
    %1 = vector.load %arg1[%c0, %c0_0, %c0_1] : memref<1x1158x3xf32, #tpu.memory_space<vmem>>, vector<1x1088x3xf32>
    %2 = vector.shape_cast %1 : vector<1x1088x3xf32> to vector<1088x3xf32>
    %3 = arith.truncf %2 : vector<1088x3xf32> to vector<1088x3xbf16>
    %c0_2 = arith.constant 0 : index
    %c0_3 = arith.constant 0 : index
    %c0_4 = arith.constant 0 : index
    %4 = vector.load %arg2[%c0_2, %c0_3, %c0_4] : memref<9x3x32xbf16, #tpu.memory_space<vmem>>, vector<1x3x32xbf16>
    %5 = vector.shape_cast %4 : vector<1x3x32xbf16> to vector<3x32xbf16>
    %cst_5 = arith.constant dense<0.000000e+00> : vector<1088x32xf32>
    %6 = tpu.matmul %3, %5, %cst_5 {dimension_numbers = #tpu.dot_dimension_numbers<[1], [0], [0], [1], [0, 0, 1, 1], [], []>} : vector<1088x3xbf16>, vector<3x32xbf16>, vector<1088x32xf32> -> vector<1088x32xf32>
    %7 = arith.addf %0, %6 : vector<1088x32xf32>
    %c0_6 = arith.constant 0 : index
    %c1 = arith.constant 1 : index
    %c0_7 = arith.constant 0 : index
    %8 = vector.load %arg1[%c0_6, %c1, %c0_7] : memref<1x1158x3xf32, #tpu.memory_space<vmem>>, vector<1x1088x3xf32>
    %9 = vector.shape_cast %8 : vector<1x1088x3xf32> to vector<1088x3xf32>
    %10 = arith.truncf %9 : vector<1088x3xf32> to vector<1088x3xbf16>
    %c1_8 = arith.constant 1 : index
    %c0_9 = arith.constant 0 : index
    %c0_10 = arith.constant 0 : index
    %11 = vector.load %arg2[%c1_8, %c0_9, %c0_10] : memref<9x3x32xbf16, #tpu.memory_space<vmem>>, vector<1x3x32xbf16>
    %12 = vector.shape_cast %11 : vector<1x3x32xbf16> to vector<3x32xbf16>
    %cst_11 = arith.constant dense<0.000000e+00> : vector<1088x32xf32>
    %13 = tpu.matmul %10, %12, %cst_11 {dimension_numbers = #tpu.dot_dimension_numbers<[1], [0], [0], [1], [0, 0, 1, 1], [], []>} : vector<1088x3xbf16>, vector<3x32xbf16>, vector<1088x32xf32> -> vector<1088x32xf32>
    %14 = arith.addf %7, %13 : vector<1088x32xf32>
    %c0_12 = arith.constant 0 : index
    %c2 = arith.constant 2 : index
    %c0_13 = arith.constant 0 : index
    %15 = vector.load %arg1[%c0_12, %c2, %c0_13] : memref<1x1158x3xf32, #tpu.memory_space<vmem>>, vector<1x1088x3xf32>
    %16 = vector.shape_cast %15 : vector<1x1088x3xf32> to vector<1088x3xf32>
    %17 = arith.truncf %16 : vector<1088x3xf32> to vector<1088x3xbf16>
    %c2_14 = arith.constant 2 : index
    %c0_15 = arith.constant 0 : index
    %c0_16 = arith.constant 0 : index
    %18 = vector.load %arg2[%c2_14, %c0_15, %c0_16] : memref<9x3x32xbf16, #tpu.memory_space<vmem>>, vector<1x3x32xbf16>
    %19 = vector.shape_cast %18 : vector<1x3x32xbf16> to vector<3x32xbf16>
    %cst_17 = arith.constant dense<0.000000e+00> : vector<1088x32xf32>
    %20 = tpu.matmul %17, %19, %cst_17 {dimension_numbers = #tpu.dot_dimension_numbers<[1], [0], [0], [1], [0, 0, 1, 1], [], []>} : vector<1088x3xbf16>, vector<3x32xbf16>, vector<1088x32xf32> -> vector<1088x32xf32>
    %21 = arith.addf %14, %20 : vector<1088x32xf32>
    %c0_18 = arith.constant 0 : index
    %c34 = arith.constant 34 : index
    %c0_19 = arith.constant 0 : index
    %22 = vector.load %arg1[%c0_18, %c34, %c0_19] : memref<1x1158x3xf32, #tpu.memory_space<vmem>>, vector<1x1088x3xf32>
    %23 = vector.shape_cast %22 : vector<1x1088x3xf32> to vector<1088x3xf32>
    %24 = arith.truncf %23 : vector<1088x3xf32> to vector<1088x3xbf16>
    %c3 = arith.constant 3 : index
    %c0_20 = arith.constant 0 : index
    %c0_21 = arith.constant 0 : index
    %25 = vector.load %arg2[%c3, %c0_20, %c0_21] : memref<9x3x32xbf16, #tpu.memory_space<vmem>>, vector<1x3x32xbf16>
    %26 = vector.shape_cast %25 : vector<1x3x32xbf16> to vector<3x32xbf16>
    %cst_22 = arith.constant dense<0.000000e+00> : vector<1088x32xf32>
    %27 = tpu.matmul %24, %26, %cst_22 {dimension_numbers = #tpu.dot_dimension_numbers<[1], [0], [0], [1], [0, 0, 1, 1], [], []>} : vector<1088x3xbf16>, vector<3x32xbf16>, vector<1088x32xf32> -> vector<1088x32xf32>
    %28 = arith.addf %21, %27 : vector<1088x32xf32>
    %c0_23 = arith.constant 0 : index
    %c35 = arith.constant 35 : index
    %c0_24 = arith.constant 0 : index
    %29 = vector.load %arg1[%c0_23, %c35, %c0_24] : memref<1x1158x3xf32, #tpu.memory_space<vmem>>, vector<1x1088x3xf32>
    %30 = vector.shape_cast %29 : vector<1x1088x3xf32> to vector<1088x3xf32>
    %31 = arith.truncf %30 : vector<1088x3xf32> to vector<1088x3xbf16>
    %c4 = arith.constant 4 : index
    %c0_25 = arith.constant 0 : index
    %c0_26 = arith.constant 0 : index
    %32 = vector.load %arg2[%c4, %c0_25, %c0_26] : memref<9x3x32xbf16, #tpu.memory_space<vmem>>, vector<1x3x32xbf16>
    %33 = vector.shape_cast %32 : vector<1x3x32xbf16> to vector<3x32xbf16>
    %cst_27 = arith.constant dense<0.000000e+00> : vector<1088x32xf32>
    %34 = tpu.matmul %31, %33, %cst_27 {dimension_numbers = #tpu.dot_dimension_numbers<[1], [0], [0], [1], [0, 0, 1, 1], [], []>} : vector<1088x3xbf16>, vector<3x32xbf16>, vector<1088x32xf32> -> vector<1088x32xf32>
    %35 = arith.addf %28, %34 : vector<1088x32xf32>
    %c0_28 = arith.constant 0 : index
    %c36 = arith.constant 36 : index
    %c0_29 = arith.constant 0 : index
    %36 = vector.load %arg1[%c0_28, %c36, %c0_29] : memref<1x1158x3xf32, #tpu.memory_space<vmem>>, vector<1x1088x3xf32>
    %37 = vector.shape_cast %36 : vector<1x1088x3xf32> to vector<1088x3xf32>
    %38 = arith.truncf %37 : vector<1088x3xf32> to vector<1088x3xbf16>
    %c5 = arith.constant 5 : index
    %c0_30 = arith.constant 0 : index
    %c0_31 = arith.constant 0 : index
    %39 = vector.load %arg2[%c5, %c0_30, %c0_31] : memref<9x3x32xbf16, #tpu.memory_space<vmem>>, vector<1x3x32xbf16>
    %40 = vector.shape_cast %39 : vector<1x3x32xbf16> to vector<3x32xbf16>
    %cst_32 = arith.constant dense<0.000000e+00> : vector<1088x32xf32>
    %41 = tpu.matmul %38, %40, %cst_32 {dimension_numbers = #tpu.dot_dimension_numbers<[1], [0], [0], [1], [0, 0, 1, 1], [], []>} : vector<1088x3xbf16>, vector<3x32xbf16>, vector<1088x32xf32> -> vector<1088x32xf32>
    %42 = arith.addf %35, %41 : vector<1088x32xf32>
    %c0_33 = arith.constant 0 : index
    %c68 = arith.constant 68 : index
    %c0_34 = arith.constant 0 : index
    %43 = vector.load %arg1[%c0_33, %c68, %c0_34] : memref<1x1158x3xf32, #tpu.memory_space<vmem>>, vector<1x1088x3xf32>
    %44 = vector.shape_cast %43 : vector<1x1088x3xf32> to vector<1088x3xf32>
    %45 = arith.truncf %44 : vector<1088x3xf32> to vector<1088x3xbf16>
    %c6 = arith.constant 6 : index
    %c0_35 = arith.constant 0 : index
    %c0_36 = arith.constant 0 : index
    %46 = vector.load %arg2[%c6, %c0_35, %c0_36] : memref<9x3x32xbf16, #tpu.memory_space<vmem>>, vector<1x3x32xbf16>
    %47 = vector.shape_cast %46 : vector<1x3x32xbf16> to vector<3x32xbf16>
    %cst_37 = arith.constant dense<0.000000e+00> : vector<1088x32xf32>
    %48 = tpu.matmul %45, %47, %cst_37 {dimension_numbers = #tpu.dot_dimension_numbers<[1], [0], [0], [1], [0, 0, 1, 1], [], []>} : vector<1088x3xbf16>, vector<3x32xbf16>, vector<1088x32xf32> -> vector<1088x32xf32>
    %49 = arith.addf %42, %48 : vector<1088x32xf32>
    %c0_38 = arith.constant 0 : index
    %c69 = arith.constant 69 : index
    %c0_39 = arith.constant 0 : index
    %50 = vector.load %arg1[%c0_38, %c69, %c0_39] : memref<1x1158x3xf32, #tpu.memory_space<vmem>>, vector<1x1088x3xf32>
    %51 = vector.shape_cast %50 : vector<1x1088x3xf32> to vector<1088x3xf32>
    %52 = arith.truncf %51 : vector<1088x3xf32> to vector<1088x3xbf16>
    %c7 = arith.constant 7 : index
    %c0_40 = arith.constant 0 : index
    %c0_41 = arith.constant 0 : index
    %53 = vector.load %arg2[%c7, %c0_40, %c0_41] : memref<9x3x32xbf16, #tpu.memory_space<vmem>>, vector<1x3x32xbf16>
    %54 = vector.shape_cast %53 : vector<1x3x32xbf16> to vector<3x32xbf16>
    %cst_42 = arith.constant dense<0.000000e+00> : vector<1088x32xf32>
    %55 = tpu.matmul %52, %54, %cst_42 {dimension_numbers = #tpu.dot_dimension_numbers<[1], [0], [0], [1], [0, 0, 1, 1], [], []>} : vector<1088x3xbf16>, vector<3x32xbf16>, vector<1088x32xf32> -> vector<1088x32xf32>
    %56 = arith.addf %49, %55 : vector<1088x32xf32>
    %c0_43 = arith.constant 0 : index
    %c70 = arith.constant 70 : index
    %c0_44 = arith.constant 0 : index
    %57 = vector.load %arg1[%c0_43, %c70, %c0_44] : memref<1x1158x3xf32, #tpu.memory_space<vmem>>, vector<1x1088x3xf32>
    %58 = vector.shape_cast %57 : vector<1x1088x3xf32> to vector<1088x3xf32>
    %59 = arith.truncf %58 : vector<1088x3xf32> to vector<1088x3xbf16>
    %c8 = arith.constant 8 : index
    %c0_45 = arith.constant 0 : index
    %c0_46 = arith.constant 0 : index
    %60 = vector.load %arg2[%c8, %c0_45, %c0_46] : memref<9x3x32xbf16, #tpu.memory_space<vmem>>, vector<1x3x32xbf16>
    %61 = vector.shape_cast %60 : vector<1x3x32xbf16> to vector<3x32xbf16>
    %cst_47 = arith.constant dense<0.000000e+00> : vector<1088x32xf32>
    %62 = tpu.matmul %59, %61, %cst_47 {dimension_numbers = #tpu.dot_dimension_numbers<[1], [0], [0], [1], [0, 0, 1, 1], [], []>} : vector<1088x3xbf16>, vector<3x32xbf16>, vector<1088x32xf32> -> vector<1088x32xf32>
    %63 = arith.addf %56, %62 : vector<1088x32xf32>
    %c0_48 = arith.constant 0 : index
    %c0_49 = arith.constant 0 : index
    %64 = vector.load %arg3[%c0_48, %c0_49] : memref<1x32xf32, #tpu.memory_space<vmem>>, vector<1x32xf32>
    %65 = vector.broadcast %64 : vector<1x32xf32> to vector<1088x32xf32>
    %66 = arith.addf %63, %65 : vector<1088x32xf32>
    %cst_50 = arith.constant 0.000000e+00 : f32
    %67 = vector.broadcast %cst_50 : f32 to vector<1088x32xf32>
    %68 = arith.maximumf %66, %67 : vector<1088x32xf32>
    %c0_51 = arith.constant 0 : index
    %c0_52 = arith.constant 0 : index
    %c0_53 = arith.constant 0 : index
    %69 = vector.load %arg4[%c0_51, %c0_52, %c0_53] : memref<1x1088x32xf32, #tpu.memory_space<vmem>>, vector<1x1088x32xf32>
    %70 = vector.shape_cast %69 : vector<1x1088x32xf32> to vector<1088x32xf32>
    %71 = vector.shape_cast %68 : vector<1088x32xf32> to vector<1x1088x32xf32>
    tpu.vector_store %arg4[%c0_51, %c0_52, %c0_53], %71 {strides = array<i32>} : memref<1x1088x32xf32, #tpu.memory_space<vmem>>, vector<1x1088x32xf32>,
    return
  }
  func.func @transform_0(%arg0: i32) -> (i32, i32, i32) {
    %c0_i32 = arith.constant 0 : i32
    %c0_i32_0 = arith.constant 0 : i32
    %c0_i32_1 = arith.constant 0 : i32
    return %arg0, %c0_i32, %c0_i32_0 : i32, i32, i32
  }
  func.func @transform_1(%arg0: i32) -> (i32, i32, i32) {
    %c0_i32 = arith.constant 0 : i32
    %c0_i32_0 = arith.constant 0 : i32
    %c0_i32_1 = arith.constant 0 : i32
    %c0_i32_2 = arith.constant 0 : i32
    return %c0_i32, %c0_i32_0, %c0_i32_1 : i32, i32, i32
  }
  func.func @transform_2(%arg0: i32) -> (i32, i32) {
    %c0_i32 = arith.constant 0 : i32
    %c0_i32_0 = arith.constant 0 : i32
    %c0_i32_1 = arith.constant 0 : i32
    return %c0_i32, %c0_i32_0 : i32, i32
  }
  func.func @transform_3(%arg0: i32) -> (i32, i32, i32) {
    %c0_i32 = arith.constant 0 : i32
    %c0_i32_0 = arith.constant 0 : i32
    %c0_i32_1 = arith.constant 0 : i32
    return %arg0, %c0_i32, %c0_i32_0 : i32, i32, i32
  }
}

</mosaic_0001>

<llo_original>
// kernel: tpu_custom_call.1
$region0: #{tpu_custom_call.1}
  #allocation0 [shape = 'u32[]', space=smem, size = 0x4, offset = 0x4, fixed_abs, tag = 'smem constant byte address 0x4 - core index']
  #allocation1 [shape = 'u32[144,128]{1,0:T(1,128)}', space=vmem, size = 0x12000, scoped, tag = 'internal scratch']
  %s0 = inlined_call_operand.vmem [shape: f32[2,1158,3], index: 0, kind: input, shape index: {}]
  %s1 = inlined_call_operand.vmem [shape: bf16[9,3,32], index: 1, kind: input, shape index: {}]
  %s2 = inlined_call_operand.vmem [shape: f32[1,32], index: 2, kind: input, shape index: {}]
  %s3 = inlined_call_operand.vmem [shape: f32[2,1088,32], index: 3, kind: output, shape index: {}]
  %s4 = sld [smem:[#allocation0]]
  $region45: #{tpu_custom_call.1} parent=0
    _
  %s6 = ssub.s32 1, %s4
  %s7 = scalar_select 0, %s6, %s4
  loop: start=0, step=1, limit=4
  $region2: #{tpu_custom_call.1} parent=0 // loop_pre_header
    _
  $region3: #{tpu_custom_call.1} parent=0 // loop_header
    %s9 = sphi 0, %s13
    %p10 = scmp.ge.s32.totalorder %s9, 4
    %s19 = sphi 0, %s21
    %s22 = sphi 0, %s19
    %s23 = sphi 0, %s22
    %s39 = sphi 0, %s23
    %s43 = sphi 0, %s43
    %s45 = sphi 0, %s43
    %s46 = sphi 0, %s45
    %s60 = sphi 0, %s46
    %s64 = sphi 0, %s64
    %s66 = sphi 0, %s64
    %s67 = sphi 0, %s66
    %s81 = sphi 0, %s67
    %s87 = sphi 0, %s89
    %s90 = sphi 0, %s87
    %s91 = sphi 0, %s90
    %s107 = sphi 0, %s91
  $region4: #{tpu_custom_call.1} parent=0 // loop_header_branch
    %12 = sbr.rel (%p10) target = $region8
  $region5: #{tpu_custom_call.1} parent=0 // loop_body
    %s14 = ssub.s32 %s9, 1
    %s15 = ssub.s32 %s9, 2
    %s16 = sadd.s32 %s9, 1
    %s17 = ssub.s32 %s9, %s16
    %p18 = scmp.eq.s32.totalorder %s17, 0
    %s20 = sadd.s32 %s19, 1
    %s21 = scalar_select %p18, %s19, %s20
    %p24 = pneg %p18
    %p25 = scmp.eq.s32.totalorder %s9, 1
    %p26 = por %p24, %p25
    %p27 = scmp.ne.s32.totalorder %s19, %s22
    %p28 = scmp.eq.s32.totalorder %s9, 0
    %p29 = por %p27, %p28
    %p30 = scmp.ne.s32.totalorder %s19, %s22
    %p31 = scmp.eq.s32.totalorder %s14, 1
    %p32 = por %p30, %p31
    %p33 = scmp.ne.s32.totalorder %s22, %s23
    %p34 = scmp.eq.s32.totalorder %s14, 0
    %p35 = por %p33, %p34
    %p36 = scmp.ne.s32.totalorder %s22, %s23
    %p37 = scmp.eq.s32.totalorder %s15, 1
    %p38 = por %p36, %p37
    %p40 = scmp.ne.s32.totalorder %s23, %s39
    %p41 = scmp.eq.s32.totalorder %s15, 0
    %p42 = por %p40, %p41
    %s44 = sadd.s32 %s43, 1
    %p47 = scmp.eq.s32.totalorder %s9, 1
    %p48 = scmp.ne.s32.totalorder %s43, %s45
    %p49 = scmp.eq.s32.totalorder %s9, 0
    %p50 = por %p48, %p49
    %p51 = scmp.ne.s32.totalorder %s43, %s45
    %p52 = scmp.eq.s32.totalorder %s14, 1
    %p53 = por %p51, %p52
    %p54 = scmp.ne.s32.totalorder %s45, %s46
    %p55 = scmp.eq.s32.totalorder %s14, 0
    %p56 = por %p54, %p55
    %p57 = scmp.ne.s32.totalorder %s45, %s46
    %p58 = scmp.eq.s32.totalorder %s15, 1
    %p59 = por %p57, %p58
    %p61 = scmp.ne.s32.totalorder %s46, %s60
    %p62 = scmp.eq.s32.totalorder %s15, 0
    %p63 = por %p61, %p62
    %s65 = sadd.s32 %s64, 1
    %p68 = scmp.eq.s32.totalorder %s9, 1
    %p69 = scmp.ne.s32.totalorder %s64, %s66
    %p70 = scmp.eq.s32.totalorder %s9, 0
    %p71 = por %p69, %p70
    %p72 = scmp.ne.s32.totalorder %s64, %s66
    %p73 = scmp.eq.s32.totalorder %s14, 1
    %p74 = por %p72, %p73
    %p75 = scmp.ne.s32.totalorder %s66, %s67
    %p76 = scmp.eq.s32.totalorder %s14, 0
    %p77 = por %p75, %p76
    %p78 = scmp.ne.s32.totalorder %s66, %s67
    %p79 = scmp.eq.s32.totalorder %s15, 1
    %p80 = por %p78, %p79
    %p82 = scmp.ne.s32.totalorder %s67, %s81
    %p83 = scmp.eq.s32.totalorder %s15, 0
    %p84 = por %p82, %p83
    %s85 = ssub.s32 %s9, %s16
    %p86 = scmp.eq.s32.totalorder %s85, 0
    %s88 = sadd.s32 %s87, 1
    %s89 = scalar_select %p86, %s87, %s88
    %p92 = pneg %p86
    %p93 = scmp.eq.s32.totalorder %s9, 1
    %p94 = por %p92, %p93
    %p95 = scmp.ne.s32.totalorder %s87, %s90
    %p96 = scmp.eq.s32.totalorder %s9, 0
    %p97 = por %p95, %p96
    %p98 = scmp.ne.s32.totalorder %s87, %s90
    %p99 = scmp.eq.s32.totalorder %s14, 1
    %p100 = por %p98, %p99
    %p101 = scmp.ne.s32.totalorder %s90, %s91
    %p102 = scmp.eq.s32.totalorder %s14, 0
    %p103 = por %p101, %p102
    %p104 = scmp.ne.s32.totalorder %s90, %s91
    %p105 = scmp.eq.s32.totalorder %s15, 1
    %p106 = por %p104, %p105
    %p108 = scmp.ne.s32.totalorder %s91, %s107
    %p109 = scmp.eq.s32.totalorder %s15, 0
    %p110 = por %p108, %p109
    %p111 = scmp.le.s32.totalorder 1, %s9
    %p112 = scmp.lt.s32.totalorder %s9, 3
    %p113 = pnand %p111, %p112
    %p114 = pneg %p113
    // Predicated region
    $region9: #{tpu_custom_call.1} parent=5 // pred_check
      _
    $region10: #{tpu_custom_call.1} parent=5 // pred_check_branch
      %116 = sbr.rel (%p113) target = $region12
    $region11: #{tpu_custom_call.1} parent=5 // pred_region
      %s117 = ssub.s32 %s9, 1
      // Predicated region
      $region13: #{tpu_custom_call.1} parent=11 // pred_check
        %p118 = pneg %p56
      $region14: #{tpu_custom_call.1} parent=11 // pred_check_branch
        %120 = sbr.rel (%p118) target = $region16
      $region15: #{tpu_custom_call.1} parent=11 // pred_region
        _
      $region16: #{tpu_custom_call.1} parent=11 // pred_fallthru
        _
      // Predicated region
      $region17: #{tpu_custom_call.1} parent=11 // pred_check
        %p121 = pneg %p77
      $region18: #{tpu_custom_call.1} parent=11 // pred_check_branch
        %123 = sbr.rel (%p121) target = $region20
      $region19: #{tpu_custom_call.1} parent=11 // pred_region
        _
      $region20: #{tpu_custom_call.1} parent=11 // pred_fallthru
        _
    $region12: #{tpu_custom_call.1} parent=5 // pred_fallthru
      _
    %p124 = scmp.lt.s32.totalorder %s9, 2
    // Predicated region
    $region21: #{tpu_custom_call.1} parent=5 // pred_check
      %p125 = pneg %p124
    $region22: #{tpu_custom_call.1} parent=5 // pred_check_branch
      %127 = sbr.rel (%p125) target = $region24
    $region23: #{tpu_custom_call.1} parent=5 // pred_region
      // Predicated region
      $region25: #{tpu_custom_call.1} parent=23 // pred_check
        %p128 = pneg %p29
      $region26: #{tpu_custom_call.1} parent=23 // pred_check_branch
        %130 = sbr.rel (%p128) target = $region28
      $region27: #{tpu_custom_call.1} parent=23 // pred_region
        %p131 = scmp.lt.s32.totalorder %s9, 1
        %s132 = scalar_select %p131, %s9, 1
        %s133 = smul.addr %s132, 145
        %s134 = smul.addr %s133, 8
        %s135 = scalar_lea.vmem %s0, %s134
      $region28: #{tpu_custom_call.1} parent=23 // pred_fallthru
        _
    $region24: #{tpu_custom_call.1} parent=5 // pred_fallthru
      _
    %p136 = scmp.le.s32.totalorder 1, %s9
    %p137 = scmp.lt.s32.totalorder %s9, 3
    %p138 = pnand %p136, %p137
    %p139 = pneg %p138
    // Predicated region
    $region29: #{tpu_custom_call.1} parent=5 // pred_check
      _
    $region30: #{tpu_custom_call.1} parent=5 // pred_check_branch
      %141 = sbr.rel (%p138) target = $region32
    $region31: #{tpu_custom_call.1} parent=5 // pred_region
      %s142 = ssub.s32 %s9, 1
      %p143 = scmp.lt.s32.totalorder %s14, 1
      %s144 = scalar_select %p143, %s14, 1
      %s145 = smul.addr %s144, 145
      %s146 = smul.addr %s145, 8
      %s147 = scalar_lea.vmem %s0, %s146
      %p148 = pneg %p35
      %p149 = pneg %p32
      %p150 = pneg %p56
      %p151 = pneg %p53
      %p152 = pneg %p77
      %p153 = pneg %p74
      %p154 = pneg %p103
      %p155 = pneg %p100
      %p156 = scmp.lt.s32.totalorder %s14, 1
      %s157 = scalar_select %p156, %s14, 1
      %s158 = smul.addr %s157, 136
      %s159 = smul.addr %s158, 8
      %s160 = scalar_lea.vmem %s3, %s159
      %p161 = scmp.lt.s32.totalorder %s14, 1
      %s162 = scalar_select %p161, %s14, 1
      %s163 = smul.addr %s162, 145
      %s164 = smul.addr %s163, 8
      %s165 = scalar_lea.vmem %s0, %s164
      %p166 = scmp.lt.s32.totalorder %s14, 1
      %s167 = scalar_select %p166, %s14, 1
      %s168 = smul.addr %s167, 136
      %s169 = smul.addr %s168, 8
      %s170 = scalar_lea.vmem %s3, %s169
      %v172 = vld [vmem:[%s165] sm:$0xff]
      %v173 = vld [vmem:[%s165 + $0x8] sm:$0xff]
      %v174 = vld [vmem:[%s165 + $0x10] sm:$0xff]
      %v175 = vld [vmem:[%s165 + $0x18] sm:$0xff]
      %v176 = vld [vmem:[%s165 + $0x20] sm:$0xff]
      %v177 = vld [vmem:[%s165 + $0x28] sm:$0xff]
      %v178 = vld [vmem:[%s165 + $0x30] sm:$0xff]
      %v179 = vld [vmem:[%s165 + $0x38] sm:$0xff]
      %v180 = vld [vmem:[%s165 + $0x40] sm:$0xff]
      %v181 = vld [vmem:[%s165 + $0x48] sm:$0xff]
      %v182 = vld [vmem:[%s165 + $0x50] sm:$0xff]
      %v183 = vld [vmem:[%s165 + $0x58] sm:$0xff]
      %v184 = vld [vmem:[%s165 + $0x60] sm:$0xff]
      %v185 = vld [vmem:[%s165 + $0x68] sm:$0xff]
      %v186 = vld [vmem:[%s165 + $0x70] sm:$0xff]
      %v187 = vld [vmem:[%s165 + $0x78] sm:$0xff]
      %v188 = vld [vmem:[%s165 + $0x80] sm:$0xff]
      %v189 = vld [vmem:[%s165 + $0x88] sm:$0xff]
      %v190 = vld [vmem:[%s165 + $0x90] sm:$0xff]
      %v191 = vld [vmem:[%s165 + $0x98] sm:$0xff]
      %v192 = vld [vmem:[%s165 + $0xa0] sm:$0xff]
      %v193 = vld [vmem:[%s165 + $0xa8] sm:$0xff]
      %v194 = vld [vmem:[%s165 + $0xb0] sm:$0xff]
      %v195 = vld [vmem:[%s165 + $0xb8] sm:$0xff]
      %v196 = vld [vmem:[%s165 + $0xc0] sm:$0xff]
      %v197 = vld [vmem:[%s165 + $0xc8] sm:$0xff]
      %v198 = vld [vmem:[%s165 + $0xd0] sm:$0xff]
      %v199 = vld [vmem:[%s165 + $0xd8] sm:$0xff]
      %v200 = vld [vmem:[%s165 + $0xe0] sm:$0xff]
      %v201 = vld [vmem:[%s165 + $0xe8] sm:$0xff]
      %v202 = vld [vmem:[%s165 + $0xf0] sm:$0xff]
      %v203 = vld [vmem:[%s165 + $0xf8] sm:$0xff]
      %v204 = vld [vmem:[%s165 + $0x100] sm:$0xff]
      %v205 = vld [vmem:[%s165 + $0x108] sm:$0xff]
      %v206 = vld [vmem:[%s165 + $0x110] sm:$0xff]
      %v207 = vld [vmem:[%s165 + $0x118] sm:$0xff]
      %v208 = vld [vmem:[%s165 + $0x120] sm:$0xff]
      %v209 = vld [vmem:[%s165 + $0x128] sm:$0xff]
      %v210 = vld [vmem:[%s165 + $0x130] sm:$0xff]
      %v211 = vld [vmem:[%s165 + $0x138] sm:$0xff]
      %v212 = vld [vmem:[%s165 + $0x140] sm:$0xff]
      %v213 = vld [vmem:[%s165 + $0x148] sm:$0xff]
      %v214 = vld [vmem:[%s165 + $0x150] sm:$0xff]
      %v215 = vld [vmem:[%s165 + $0x158] sm:$0xff]
      %v216 = vld [vmem:[%s165 + $0x160] sm:$0xff]
      %v217 = vld [vmem:[%s165 + $0x168] sm:$0xff]
      %v218 = vld [vmem:[%s165 + $0x170] sm:$0xff]
      %v219 = vld [vmem:[%s165 + $0x178] sm:$0xff]
      %v220 = vld [vmem:[%s165 + $0x180] sm:$0xff]
      %v221 = vld [vmem:[%s165 + $0x188] sm:$0xff]
      %v222 = vld [vmem:[%s165 + $0x190] sm:$0xff]
      %v223 = vld [vmem:[%s165 + $0x198] sm:$0xff]
      %v224 = vld [vmem:[%s165 + $0x1a0] sm:$0xff]
      %v225 = vld [vmem:[%s165 + $0x1a8] sm:$0xff]
      %v226 = vld [vmem:[%s165 + $0x1b0] sm:$0xff]
      %v227 = vld [vmem:[%s165 + $0x1b8] sm:$0xff]
      %v228 = vld [vmem:[%s165 + $0x1c0] sm:$0xff]
      %v229 = vld [vmem:[%s165 + $0x1c8] sm:$0xff]
      %v230 = vld [vmem:[%s165 + $0x1d0] sm:$0xff]
      %v231 = vld [vmem:[%s165 + $0x1d8] sm:$0xff]
      %v232 = vld [vmem:[%s165 + $0x1e0] sm:$0xff]
      %v233 = vld [vmem:[%s165 + $0x1e8] sm:$0xff]
      %v234 = vld [vmem:[%s165 + $0x1f0] sm:$0xff]
      %v235 = vld [vmem:[%s165 + $0x1f8] sm:$0xff]
      %v236 = vld [vmem:[%s165 + $0x200] sm:$0xff]
      %v237 = vld [vmem:[%s165 + $0x208] sm:$0xff]
      %v238 = vld [vmem:[%s165 + $0x210] sm:$0xff]
      %v239 = vld [vmem:[%s165 + $0x218] sm:$0xff]
      %v240 = vld [vmem:[%s165 + $0x220] sm:$0xff]
      %v241 = vld [vmem:[%s165 + $0x228] sm:$0xff]
      %v242 = vld [vmem:[%s165 + $0x230] sm:$0xff]
      %v243 = vld [vmem:[%s165 + $0x238] sm:$0xff]
      %v244 = vld [vmem:[%s165 + $0x240] sm:$0xff]
      %v245 = vld [vmem:[%s165 + $0x248] sm:$0xff]
      %v246 = vld [vmem:[%s165 + $0x250] sm:$0xff]
      %v247 = vld [vmem:[%s165 + $0x258] sm:$0xff]
      %v248 = vld [vmem:[%s165 + $0x260] sm:$0xff]
      %v249 = vld [vmem:[%s165 + $0x268] sm:$0xff]
      %v250 = vld [vmem:[%s165 + $0x270] sm:$0xff]
      %v251 = vld [vmem:[%s165 + $0x278] sm:$0xff]
      %v252 = vld [vmem:[%s165 + $0x280] sm:$0xff]
      %v253 = vld [vmem:[%s165 + $0x288] sm:$0xff]
      %v254 = vld [vmem:[%s165 + $0x290] sm:$0xff]
      %v255 = vld [vmem:[%s165 + $0x298] sm:$0xff]
      %v256 = vld [vmem:[%s165 + $0x2a0] sm:$0xff]
      %v257 = vld [vmem:[%s165 + $0x2a8] sm:$0xff]
      %v258 = vld [vmem:[%s165 + $0x2b0] sm:$0xff]
      %v259 = vld [vmem:[%s165 + $0x2b8] sm:$0xff]
      %v260 = vld [vmem:[%s165 + $0x2c0] sm:$0xff]
      %v261 = vld [vmem:[%s165 + $0x2c8] sm:$0xff]
      %v262 = vld [vmem:[%s165 + $0x2d0] sm:$0xff]
      %v263 = vld [vmem:[%s165 + $0x2d8] sm:$0xff]
      %v264 = vld [vmem:[%s165 + $0x2e0] sm:$0xff]
      %v265 = vld [vmem:[%s165 + $0x2e8] sm:$0xff]
      %v266 = vld [vmem:[%s165 + $0x2f0] sm:$0xff]
      %v267 = vld [vmem:[%s165 + $0x2f8] sm:$0xff]
      %v268 = vld [vmem:[%s165 + $0x300] sm:$0xff]
      %v269 = vld [vmem:[%s165 + $0x308] sm:$0xff]
      %v270 = vld [vmem:[%s165 + $0x310] sm:$0xff]
      %v271 = vld [vmem:[%s165 + $0x318] sm:$0xff]
      %v272 = vld [vmem:[%s165 + $0x320] sm:$0xff]
      %v273 = vld [vmem:[%s165 + $0x328] sm:$0xff]
      %v274 = vld [vmem:[%s165 + $0x330] sm:$0xff]
      %v275 = vld [vmem:[%s165 + $0x338] sm:$0xff]
      %v276 = vld [vmem:[%s165 + $0x340] sm:$0xff]
      %v277 = vld [vmem:[%s165 + $0x348] sm:$0xff]
      %v278 = vld [vmem:[%s165 + $0x350] sm:$0xff]
      %v279 = vld [vmem:[%s165 + $0x358] sm:$0xff]
      %v280 = vld [vmem:[%s165 + $0x360] sm:$0xff]
      %v281 = vld [vmem:[%s165 + $0x368] sm:$0xff]
      %v282 = vld [vmem:[%s165 + $0x370] sm:$0xff]
      %v283 = vld [vmem:[%s165 + $0x378] sm:$0xff]
      %v284 = vld [vmem:[%s165 + $0x380] sm:$0xff]
      %v285 = vld [vmem:[%s165 + $0x388] sm:$0xff]
      %v286 = vld [vmem:[%s165 + $0x390] sm:$0xff]
      %v287 = vld [vmem:[%s165 + $0x398] sm:$0xff]
      %v288 = vld [vmem:[%s165 + $0x3a0] sm:$0xff]
      %v289 = vld [vmem:[%s165 + $0x3a8] sm:$0xff]
      %v290 = vld [vmem:[%s165 + $0x3b0] sm:$0xff]
      %v291 = vld [vmem:[%s165 + $0x3b8] sm:$0xff]
      %v292 = vld [vmem:[%s165 + $0x3c0] sm:$0xff]
      %v293 = vld [vmem:[%s165 + $0x3c8] sm:$0xff]
      %v294 = vld [vmem:[%s165 + $0x3d0] sm:$0xff]
      %v295 = vld [vmem:[%s165 + $0x3d8] sm:$0xff]
      %v296 = vld [vmem:[%s165 + $0x3e0] sm:$0xff]
      %v297 = vld [vmem:[%s165 + $0x3e8] sm:$0xff]
      %v298 = vld [vmem:[%s165 + $0x3f0] sm:$0xff]
      %v299 = vld [vmem:[%s165 + $0x3f8] sm:$0xff]
      %v300 = vld [vmem:[%s165 + $0x400] sm:$0xff]
      %v301 = vld [vmem:[%s165 + $0x408] sm:$0xff]
      %v302 = vld [vmem:[%s165 + $0x410] sm:$0xff]
      %v303 = vld [vmem:[%s165 + $0x418] sm:$0xff]
      %v304 = vld [vmem:[%s165 + $0x420] sm:$0xff]
      %v305 = vld [vmem:[%s165 + $0x428] sm:$0xff]
      %v306 = vld [vmem:[%s165 + $0x430] sm:$0xff]
      %v307 = vld [vmem:[%s165 + $0x438] sm:$0xff]
      %v308 = vpack.c.bf16 %v173, %v172
      %v309 = vpack.c.bf16 %v175, %v174
      %v310 = vpack.c.bf16 %v177, %v176
      %v311 = vpack.c.bf16 %v179, %v178
      %v312 = vpack.c.bf16 %v181, %v180
      %v313 = vpack.c.bf16 %v183, %v182
      %v314 = vpack.c.bf16 %v185, %v184
      %v315 = vpack.c.bf16 %v187, %v186
      %v316 = vpack.c.bf16 %v189, %v188
      %v317 = vpack.c.bf16 %v191, %v190
      %v318 = vpack.c.bf16 %v193, %v192
      %v319 = vpack.c.bf16 %v195, %v194
      %v320 = vpack.c.bf16 %v197, %v196
      %v321 = vpack.c.bf16 %v199, %v198
      %v322 = vpack.c.bf16 %v201, %v200
      %v323 = vpack.c.bf16 %v203, %v202
      %v324 = vpack.c.bf16 %v205, %v204
      %v325 = vpack.c.bf16 %v207, %v206
      %v326 = vpack.c.bf16 %v209, %v208
      %v327 = vpack.c.bf16 %v211, %v210
      %v328 = vpack.c.bf16 %v213, %v212
      %v329 = vpack.c.bf16 %v215, %v214
      %v330 = vpack.c.bf16 %v217, %v216
      %v331 = vpack.c.bf16 %v219, %v218
      %v332 = vpack.c.bf16 %v221, %v220
      %v333 = vpack.c.bf16 %v223, %v222
      %v334 = vpack.c.bf16 %v225, %v224
      %v335 = vpack.c.bf16 %v227, %v226
      %v336 = vpack.c.bf16 %v229, %v228
      %v337 = vpack.c.bf16 %v231, %v230
      %v338 = vpack.c.bf16 %v233, %v232
      %v339 = vpack.c.bf16 %v235, %v234
      %v340 = vpack.c.bf16 %v237, %v236
      %v341 = vpack.c.bf16 %v239, %v238
      %v342 = vpack.c.bf16 %v241, %v240
      %v343 = vpack.c.bf16 %v243, %v242
      %v344 = vpack.c.bf16 %v245, %v244
      %v345 = vpack.c.bf16 %v247, %v246
      %v346 = vpack.c.bf16 %v249, %v248
      %v347 = vpack.c.bf16 %v251, %v250
      %v348 = vpack.c.bf16 %v253, %v252
      %v349 = vpack.c.bf16 %v255, %v254
      %v350 = vpack.c.bf16 %v257, %v256
      %v351 = vpack.c.bf16 %v259, %v258
      %v352 = vpack.c.bf16 %v261, %v260
      %v353 = vpack.c.bf16 %v263, %v262
      %v354 = vpack.c.bf16 %v265, %v264
      %v355 = vpack.c.bf16 %v267, %v266
      %v356 = vpack.c.bf16 %v269, %v268
      %v357 = vpack.c.bf16 %v271, %v270
      %v358 = vpack.c.bf16 %v273, %v272
      %v359 = vpack.c.bf16 %v275, %v274
      %v360 = vpack.c.bf16 %v277, %v276
      %v361 = vpack.c.bf16 %v279, %v278
      %v362 = vpack.c.bf16 %v281, %v280
      %v363 = vpack.c.bf16 %v283, %v282
      %v364 = vpack.c.bf16 %v285, %v284
      %v365 = vpack.c.bf16 %v287, %v286
      %v366 = vpack.c.bf16 %v289, %v288
      %v367 = vpack.c.bf16 %v291, %v290
      %v368 = vpack.c.bf16 %v293, %v292
      %v369 = vpack.c.bf16 %v295, %v294
      %v370 = vpack.c.bf16 %v297, %v296
      %v371 = vpack.c.bf16 %v299, %v298
      %v372 = vpack.c.bf16 %v301, %v300
      %v373 = vpack.c.bf16 %v303, %v302
      %v374 = vpack.c.bf16 %v305, %v304
      %v375 = vpack.c.bf16 %v307, %v306
      %v376 = vld [vmem:[%s1] sm:$0x3]
      %v377 = vld [vmem:[%s165 + $0x1] sm:$0xff]
      %v378 = vld [vmem:[%s165 + $0x9] sm:$0xff]
      %v379 = vld [vmem:[%s165 + $0x11] sm:$0xff]
      %v380 = vld [vmem:[%s165 + $0x19] sm:$0xff]
      %v381 = vld [vmem:[%s165 + $0x21] sm:$0xff]
      %v382 = vld [vmem:[%s165 + $0x29] sm:$0xff]
      %v383 = vld [vmem:[%s165 + $0x31] sm:$0xff]
      %v384 = vld [vmem:[%s165 + $0x39] sm:$0xff]
      %v385 = vld [vmem:[%s165 + $0x41] sm:$0xff]
      %v386 = vld [vmem:[%s165 + $0x49] sm:$0xff]
      %v387 = vld [vmem:[%s165 + $0x51] sm:$0xff]
      %v388 = vld [vmem:[%s165 + $0x59] sm:$0xff]
      %v389 = vld [vmem:[%s165 + $0x61] sm:$0xff]
      %v390 = vld [vmem:[%s165 + $0x69] sm:$0xff]
      %v391 = vld [vmem:[%s165 + $0x71] sm:$0xff]
      %v392 = vld [vmem:[%s165 + $0x79] sm:$0xff]
      %v393 = vld [vmem:[%s165 + $0x81] sm:$0xff]
      %v394 = vld [vmem:[%s165 + $0x89] sm:$0xff]
      %v395 = vld [vmem:[%s165 + $0x91] sm:$0xff]
      %v396 = vld [vmem:[%s165 + $0x99] sm:$0xff]
      %v397 = vld [vmem:[%s165 + $0xa1] sm:$0xff]
      %v398 = vld [vmem:[%s165 + $0xa9] sm:$0xff]
      %v399 = vld [vmem:[%s165 + $0xb1] sm:$0xff]
      %v400 = vld [vmem:[%s165 + $0xb9] sm:$0xff]
      %v401 = vld [vmem:[%s165 + $0xc1] sm:$0xff]
      %v402 = vld [vmem:[%s165 + $0xc9] sm:$0xff]
      %v403 = vld [vmem:[%s165 + $0xd1] sm:$0xff]
      %v404 = vld [vmem:[%s165 + $0xd9] sm:$0xff]
      %v405 = vld [vmem:[%s165 + $0xe1] sm:$0xff]
      %v406 = vld [vmem:[%s165 + $0xe9] sm:$0xff]
      %v407 = vld [vmem:[%s165 + $0xf1] sm:$0xff]
      %v408 = vld [vmem:[%s165 + $0xf9] sm:$0xff]
      %v409 = vld [vmem:[%s165 + $0x101] sm:$0xff]
      %v410 = vld [vmem:[%s165 + $0x109] sm:$0xff]
      %v411 = vld [vmem:[%s165 + $0x111] sm:$0xff]
      %v412 = vld [vmem:[%s165 + $0x119] sm:$0xff]
      %v413 = vld [vmem:[%s165 + $0x121] sm:$0xff]
      %v414 = vld [vmem:[%s165 + $0x129] sm:$0xff]
      %v415 = vld [vmem:[%s165 + $0x131] sm:$0xff]
      %v416 = vld [vmem:[%s165 + $0x139] sm:$0xff]
      %v417 = vld [vmem:[%s165 + $0x141] sm:$0xff]
      %v418 = vld [vmem:[%s165 + $0x149] sm:$0xff]
      %v419 = vld [vmem:[%s165 + $0x151] sm:$0xff]
      %v420 = vld [vmem:[%s165 + $0x159] sm:$0xff]
      %v421 = vld [vmem:[%s165 + $0x161] sm:$0xff]
      %v422 = vld [vmem:[%s165 + $0x169] sm:$0xff]
      %v423 = vld [vmem:[%s165 + $0x171] sm:$0xff]
      %v424 = vld [vmem:[%s165 + $0x179] sm:$0xff]
      %v425 = vld [vmem:[%s165 + $0x181] sm:$0xff]
      %v426 = vld [vmem:[%s165 + $0x189] sm:$0xff]
      %v427 = vld [vmem:[%s165 + $0x191] sm:$0xff]
      %v428 = vld [vmem:[%s165 + $0x199] sm:$0xff]
      %v429 = vld [vmem:[%s165 + $0x1a1] sm:$0xff]
      %v430 = vld [vmem:[%s165 + $0x1a9] sm:$0xff]
      %v431 = vld [vmem:[%s165 + $0x1b1] sm:$0xff]
      %v432 = vld [vmem:[%s165 + $0x1b9] sm:$0xff]
      %v433 = vld [vmem:[%s165 + $0x1c1] sm:$0xff]
      %v434 = vld [vmem:[%s165 + $0x1c9] sm:$0xff]
      %v435 = vld [vmem:[%s165 + $0x1d1] sm:$0xff]
      %v436 = vld [vmem:[%s165 + $0x1d9] sm:$0xff]
      %v437 = vld [vmem:[%s165 + $0x1e1] sm:$0xff]
      %v438 = vld [vmem:[%s165 + $0x1e9] sm:$0xff]
      %v439 = vld [vmem:[%s165 + $0x1f1] sm:$0xff]
      %v440 = vld [vmem:[%s165 + $0x1f9] sm:$0xff]
      %v441 = vld [vmem:[%s165 + $0x201] sm:$0xff]
      %v442 = vld [vmem:[%s165 + $0x209] sm:$0xff]
      %v443 = vld [vmem:[%s165 + $0x211] sm:$0xff]
      %v444 = vld [vmem:[%s165 + $0x219] sm:$0xff]
      %v445 = vld [vmem:[%s165 + $0x221] sm:$0xff]
      %v446 = vld [vmem:[%s165 + $0x229] sm:$0xff]
      %v447 = vld [vmem:[%s165 + $0x231] sm:$0xff]
      %v448 = vld [vmem:[%s165 + $0x239] sm:$0xff]
      %v449 = vld [vmem:[%s165 + $0x241] sm:$0xff]
      %v450 = vld [vmem:[%s165 + $0x249] sm:$0xff]
      %v451 = vld [vmem:[%s165 + $0x251] sm:$0xff]
      %v452 = vld [vmem:[%s165 + $0x259] sm:$0xff]
      %v453 = vld [vmem:[%s165 + $0x261] sm:$0xff]
      %v454 = vld [vmem:[%s165 + $0x269] sm:$0xff]
      %v455 = vld [vmem:[%s165 + $0x271] sm:$0xff]
      %v456 = vld [vmem:[%s165 + $0x279] sm:$0xff]
      %v457 = vld [vmem:[%s165 + $0x281] sm:$0xff]
      %v458 = vld [vmem:[%s165 + $0x289] sm:$0xff]
      %v459 = vld [vmem:[%s165 + $0x291] sm:$0xff]
      %v460 = vld [vmem:[%s165 + $0x299] sm:$0xff]
      %v461 = vld [vmem:[%s165 + $0x2a1] sm:$0xff]
      %v462 = vld [vmem:[%s165 + $0x2a9] sm:$0xff]
      %v463 = vld [vmem:[%s165 + $0x2b1] sm:$0xff]
      %v464 = vld [vmem:[%s165 + $0x2b9] sm:$0xff]
      %v465 = vld [vmem:[%s165 + $0x2c1] sm:$0xff]
      %v466 = vld [vmem:[%s165 + $0x2c9] sm:$0xff]
      %v467 = vld [vmem:[%s165 + $0x2d1] sm:$0xff]
      %v468 = vld [vmem:[%s165 + $0x2d9] sm:$0xff]
      %v469 = vld [vmem:[%s165 + $0x2e1] sm:$0xff]
      %v470 = vld [vmem:[%s165 + $0x2e9] sm:$0xff]
      %v471 = vld [vmem:[%s165 + $0x2f1] sm:$0xff]
      %v472 = vld [vmem:[%s165 + $0x2f9] sm:$0xff]
      %v473 = vld [vmem:[%s165 + $0x301] sm:$0xff]
      %v474 = vld [vmem:[%s165 + $0x309] sm:$0xff]
      %v475 = vld [vmem:[%s165 + $0x311] sm:$0xff]
      %v476 = vld [vmem:[%s165 + $0x319] sm:$0xff]
      %v477 = vld [vmem:[%s165 + $0x321] sm:$0xff]
      %v478 = vld [vmem:[%s165 + $0x329] sm:$0xff]
      %v479 = vld [vmem:[%s165 + $0x331] sm:$0xff]
      %v480 = vld [vmem:[%s165 + $0x339] sm:$0xff]
      %v481 = vld [vmem:[%s165 + $0x341] sm:$0xff]
      %v482 = vld [vmem:[%s165 + $0x349] sm:$0xff]
      %v483 = vld [vmem:[%s165 + $0x351] sm:$0xff]
      %v484 = vld [vmem:[%s165 + $0x359] sm:$0xff]
      %v485 = vld [vmem:[%s165 + $0x361] sm:$0xff]
      %v486 = vld [vmem:[%s165 + $0x369] sm:$0xff]
      %v487 = vld [vmem:[%s165 + $0x371] sm:$0xff]
      %v488 = vld [vmem:[%s165 + $0x379] sm:$0xff]
      %v489 = vld [vmem:[%s165 + $0x381] sm:$0xff]
      %v490 = vld [vmem:[%s165 + $0x389] sm:$0xff]
      %v491 = vld [vmem:[%s165 + $0x391] sm:$0xff]
      %v492 = vld [vmem:[%s165 + $0x399] sm:$0xff]
      %v493 = vld [vmem:[%s165 + $0x3a1] sm:$0xff]
      %v494 = vld [vmem:[%s165 + $0x3a9] sm:$0xff]
      %v495 = vld [vmem:[%s165 + $0x3b1] sm:$0xff]
      %v496 = vld [vmem:[%s165 + $0x3b9] sm:$0xff]
      %v497 = vld [vmem:[%s165 + $0x3c1] sm:$0xff]
      %v498 = vld [vmem:[%s165 + $0x3c9] sm:$0xff]
      %v499 = vld [vmem:[%s165 + $0x3d1] sm:$0xff]
      %v500 = vld [vmem:[%s165 + $0x3d9] sm:$0xff]
      %v501 = vld [vmem:[%s165 + $0x3e1] sm:$0xff]
      %v502 = vld [vmem:[%s165 + $0x3e9] sm:$0xff]
      %v503 = vld [vmem:[%s165 + $0x3f1] sm:$0xff]
      %v504 = vld [vmem:[%s165 + $0x3f9] sm:$0xff]
      %v505 = vld [vmem:[%s165 + $0x401] sm:$0xff]
      %v506 = vld [vmem:[%s165 + $0x409] sm:$0xff]
      %v507 = vld [vmem:[%s165 + $0x411] sm:$0xff]
      %v508 = vld [vmem:[%s165 + $0x419] sm:$0xff]
      %v509 = vld [vmem:[%s165 + $0x421] sm:$0xff]
      %v510 = vld [vmem:[%s165 + $0x429] sm:$0xff]
      %v511 = vld [vmem:[%s165 + $0x431] sm:$0xff]
      %v512 = vld [vmem:[%s165 + $0x439] sm:$0xff]
      %v513 = vpack.c.bf16 %v378, %v377
      %v514 = vpack.c.bf16 %v380, %v379
      %v515 = vpack.c.bf16 %v382, %v381
      %v516 = vpack.c.bf16 %v384, %v383
      %v517 = vpack.c.bf16 %v386, %v385
      %v518 = vpack.c.bf16 %v388, %v387
      %v519 = vpack.c.bf16 %v390, %v389
      %v520 = vpack.c.bf16 %v392, %v391
      %v521 = vpack.c.bf16 %v394, %v393
      %v522 = vpack.c.bf16 %v396, %v395
      %v523 = vpack.c.bf16 %v398, %v397
      %v524 = vpack.c.bf16 %v400, %v399
      %v525 = vpack.c.bf16 %v402, %v401
      %v526 = vpack.c.bf16 %v404, %v403
      %v527 = vpack.c.bf16 %v406, %v405
      %v528 = vpack.c.bf16 %v408, %v407
      %v529 = vpack.c.bf16 %v410, %v409
      %v530 = vpack.c.bf16 %v412, %v411
      %v531 = vpack.c.bf16 %v414, %v413
      %v532 = vpack.c.bf16 %v416, %v415
      %v533 = vpack.c.bf16 %v418, %v417
      %v534 = vpack.c.bf16 %v420, %v419
      %v535 = vpack.c.bf16 %v422, %v421
      %v536 = vpack.c.bf16 %v424, %v423
      %v537 = vpack.c.bf16 %v426, %v425
      %v538 = vpack.c.bf16 %v428, %v427
      %v539 = vpack.c.bf16 %v430, %v429
      %v540 = vpack.c.bf16 %v432, %v431
      %v541 = vpack.c.bf16 %v434, %v433
      %v542 = vpack.c.bf16 %v436, %v435
      %v543 = vpack.c.bf16 %v438, %v437
      %v544 = vpack.c.bf16 %v440, %v439
      %v545 = vpack.c.bf16 %v442, %v441
      %v546 = vpack.c.bf16 %v444, %v443
      %v547 = vpack.c.bf16 %v446, %v445
      %v548 = vpack.c.bf16 %v448, %v447
      %v549 = vpack.c.bf16 %v450, %v449
      %v550 = vpack.c.bf16 %v452, %v451
      %v551 = vpack.c.bf16 %v454, %v453
      %v552 = vpack.c.bf16 %v456, %v455
      %v553 = vpack.c.bf16 %v458, %v457
      %v554 = vpack.c.bf16 %v460, %v459
      %v555 = vpack.c.bf16 %v462, %v461
      %v556 = vpack.c.bf16 %v464, %v463
      %v557 = vpack.c.bf16 %v466, %v465
      %v558 = vpack.c.bf16 %v468, %v467
      %v559 = vpack.c.bf16 %v470, %v469
      %v560 = vpack.c.bf16 %v472, %v471
      %v561 = vpack.c.bf16 %v474, %v473
      %v562 = vpack.c.bf16 %v476, %v475
      %v563 = vpack.c.bf16 %v478, %v477
      %v564 = vpack.c.bf16 %v480, %v479
      %v565 = vpack.c.bf16 %v482, %v481
      %v566 = vpack.c.bf16 %v484, %v483
      %v567 = vpack.c.bf16 %v486, %v485
      %v568 = vpack.c.bf16 %v488, %v487
      %v569 = vpack.c.bf16 %v490, %v489
      %v570 = vpack.c.bf16 %v492, %v491
      %v571 = vpack.c.bf16 %v494, %v493
      %v572 = vpack.c.bf16 %v496, %v495
      %v573 = vpack.c.bf16 %v498, %v497
      %v574 = vpack.c.bf16 %v500, %v499
      %v575 = vpack.c.bf16 %v502, %v501
      %v576 = vpack.c.bf16 %v504, %v503
      %v577 = vpack.c.bf16 %v506, %v505
      %v578 = vpack.c.bf16 %v508, %v507
      %v579 = vpack.c.bf16 %v510, %v509
      %v580 = vpack.c.bf16 %v512, %v511
      %s581 = scalar_lea.vmem %s1, 2
      %v582 = vld [vmem:[%s581] sm:$0x3]
      %vm583 = vcmask 23552
      %v585 = vsel %vm583, %v513, 0
      %v588 = vsel %vm583, %v514, 0
      %v591 = vsel %vm583, %v515, 0
      %v594 = vsel %vm583, %v516, 0
      %v597 = vsel %vm583, %v517, 0
      %v600 = vsel %vm583, %v518, 0
      %v603 = vsel %vm583, %v519, 0
      %v606 = vsel %vm583, %v520, 0
      %v609 = vsel %vm583, %v521, 0
      %v612 = vsel %vm583, %v522, 0
      %v615 = vsel %vm583, %v523, 0
      %v618 = vsel %vm583, %v524, 0
      %v621 = vsel %vm583, %v525, 0
      %v624 = vsel %vm583, %v526, 0
      %v627 = vsel %vm583, %v527, 0
      %v630 = vsel %vm583, %v528, 0
      %v633 = vsel %vm583, %v529, 0
      %v636 = vsel %vm583, %v530, 0
      %v639 = vsel %vm583, %v531, 0
      %v642 = vsel %vm583, %v532, 0
      %v645 = vsel %vm583, %v533, 0
      %v648 = vsel %vm583, %v534, 0
      %v651 = vsel %vm583, %v535, 0
      %v654 = vsel %vm583, %v536, 0
      %v657 = vsel %vm583, %v537, 0
      %v660 = vsel %vm583, %v538, 0
      %v663 = vsel %vm583, %v539, 0
      %v666 = vsel %vm583, %v540, 0
      %v669 = vsel %vm583, %v541, 0
      %v672 = vsel %vm583, %v542, 0
      %v675 = vsel %vm583, %v543, 0
      %v678 = vsel %vm583, %v544, 0
      %v681 = vsel %vm583, %v545, 0
      %v684 = vsel %vm583, %v546, 0
      %v687 = vsel %vm583, %v547, 0
      %v690 = vsel %vm583, %v548, 0
      %v693 = vsel %vm583, %v549, 0
      %v696 = vsel %vm583, %v550, 0
      %v699 = vsel %vm583, %v551, 0
      %v702 = vsel %vm583, %v552, 0
      %v705 = vsel %vm583, %v553, 0
      %v708 = vsel %vm583, %v554, 0
      %v711 = vsel %vm583, %v555, 0
      %v714 = vsel %vm583, %v556, 0
      %v717 = vsel %vm583, %v557, 0
      %v720 = vsel %vm583, %v558, 0
      %v723 = vsel %vm583, %v559, 0
      %v726 = vsel %vm583, %v560, 0
      %v729 = vsel %vm583, %v561, 0
      %v732 = vsel %vm583, %v562, 0
      %v735 = vsel %vm583, %v563, 0
      %v738 = vsel %vm583, %v564, 0
      %v741 = vsel %vm583, %v565, 0
      %v744 = vsel %vm583, %v566, 0
      %v747 = vsel %vm583, %v567, 0
      %v750 = vsel %vm583, %v568, 0
      %v753 = vsel %vm583, %v569, 0
      %v756 = vsel %vm583, %v570, 0
      %v759 = vsel %vm583, %v571, 0
      %v762 = vsel %vm583, %v572, 0
      %v765 = vsel %vm583, %v573, 0
      %v768 = vsel %vm583, %v574, 0
      %v771 = vsel %vm583, %v575, 0
      %v774 = vsel %vm583, %v576, 0
      %v777 = vsel %vm583, %v577, 0
      %v780 = vsel %vm583, %v578, 0
      %v783 = vsel %vm583, %v579, 0
      %v786 = vsel %vm583, %v580, 0
      %vm788 = vcmask 1040384
      %vm789 = vcmask 1041408
      %v790 = vsel %vm788, 4294967295, 65535
      %v791 = vsel %vm789, %v790, 0
      %v793 = vand.u32 %v582, %v791
      %795 = vmatprep.subr.bf16.mxu0 0
      %796 = vmatpush1.bf16.msra.mxu0 %v793
      %797 = vmatprep.subr.bf16.mxu0 0
      %798 = vmatpush1.bf16.msra.mxu0 0
      %799 = vmatprep.subr.bf16.mxu0 0
      %800 = vmatpush1.bf16.msra.mxu0 0
      %801 = vmatprep.subr.bf16.mxu0 0
      %802 = vmatpush1.bf16.msra.mxu0 0
      %803 = vmatprep.subr.bf16.mxu0 0
      %804 = vmatpush1.bf16.msra.mxu0 0
      %805 = vmatprep.subr.bf16.mxu0 0
      %806 = vmatpush1.bf16.msra.mxu0 0
      %807 = vmatprep.subr.bf16.mxu0 0
      %808 = vmatpush1.bf16.msra.mxu0 0
      %809 = vmatprep.subr.bf16.mxu0 0
      %810 = vmatpush1.bf16.msra.mxu0 0
      %811 = vmatprep.subr.bf16.mxu0 0
      %812 = vmatpush1.bf16.msra.mxu0 0
      %813 = vmatprep.subr.bf16.mxu0 0
      %814 = vmatpush1.bf16.msra.mxu0 0
      %815 = vmatprep.subr.bf16.mxu0 0
      %816 = vmatpush1.bf16.msra.mxu0 0
      %817 = vmatprep.subr.bf16.mxu0 0
      %818 = vmatpush1.bf16.msra.mxu0 0
      %819 = vmatprep.subr.bf16.mxu0 0
      %820 = vmatpush1.bf16.msra.mxu0 0
      %821 = vmatprep.subr.bf16.mxu0 0
      %822 = vmatpush1.bf16.msra.mxu0 0
      %823 = vmatprep.subr.bf16.mxu0 0
      %824 = vmatpush1.bf16.msra.mxu0 0
      %825 = vmatprep.subr.bf16.mxu0 0
      %826 = vmatpush1.bf16.msra.mxu0 0
      %827 = vmatprep.mubr.bf16.mxu0 0
      %828 = vmatmul.mubr.bf16.gmra.mrb[0].mxu0 %v585
      %v829 = vpop.f32.mrb[0].mxu0
      %v830 = vadd.f32 0.0, %v829
      %v831 = vpop.f32.mrb[0].mxu0
      %v832 = vpop.f32.mrb[0].mxu0
      %v833 = vadd.f32 0.0, %v832
      %v834 = vpop.f32.mrb[0].mxu0
      %835 = vmatprep.mubr.bf16.mxu0 0
      %836 = vmatmul.mubr.bf16.gmra.mrb[0].mxu0 %v588
      %v837 = vpop.f32.mrb[0].mxu0
      %v838 = vadd.f32 0.0, %v837
      %v839 = vpop.f32.mrb[0].mxu0
      %v840 = vpop.f32.mrb[0].mxu0
      %v841 = vadd.f32 0.0, %v840
      %v842 = vpop.f32.mrb[0].mxu0
      %843 = vmatprep.mubr.bf16.mxu0 0
      %844 = vmatmul.mubr.bf16.gmra.mrb[0].mxu0 %v591
      %v845 = vpop.f32.mrb[0].mxu0
      %v846 = vadd.f32 0.0, %v845
      %v847 = vpop.f32.mrb[0].mxu0
      %v848 = vpop.f32.mrb[0].mxu0
      %v849 = vadd.f32 0.0, %v848
      %v850 = vpop.f32.mrb[0].mxu0
      %851 = vmatprep.mubr.bf16.mxu0 0
      %852 = vmatmul.mubr.bf16.gmra.mrb[0].mxu0 %v594
      %v853 = vpop.f32.mrb[0].mxu0
      %v854 = vadd.f32 0.0, %v853
      %v855 = vpop.f32.mrb[0].mxu0
      %v856 = vpop.f32.mrb[0].mxu0
      %v857 = vadd.f32 0.0, %v856
      %v858 = vpop.f32.mrb[0].mxu0
      %859 = vmatprep.mubr.bf16.mxu0 0
      %860 = vmatmul.mubr.bf16.gmra.mrb[0].mxu0 %v597
      %v861 = vpop.f32.mrb[0].mxu0
      %v862 = vadd.f32 0.0, %v861
      %v863 = vpop.f32.mrb[0].mxu0
      %v864 = vpop.f32.mrb[0].mxu0
      %v865 = vadd.f32 0.0, %v864
      %v866 = vpop.f32.mrb[0].mxu0
      %867 = vmatprep.mubr.bf16.mxu0 0
      %868 = vmatmul.mubr.bf16.gmra.mrb[0].mxu0 %v600
      %v869 = vpop.f32.mrb[0].mxu0
      %v870 = vadd.f32 0.0, %v869
      %v871 = vpop.f32.mrb[0].mxu0
      %v872 = vpop.f32.mrb[0].mxu0
      %v873 = vadd.f32 0.0, %v872
      %v874 = vpop.f32.mrb[0].mxu0
      %875 = vmatprep.mubr.bf16.mxu0 0
      %876 = vmatmul.mubr.bf16.gmra.mrb[0].mxu0 %v603
      %v877 = vpop.f32.mrb[0].mxu0
      %v878 = vadd.f32 0.0, %v877
      %v879 = vpop.f32.mrb[0].mxu0
      %v880 = vpop.f32.mrb[0].mxu0
      %v881 = vadd.f32 0.0, %v880
      %v882 = vpop.f32.mrb[0].mxu0
      %883 = vmatprep.mubr.bf16.mxu0 0
      %884 = vmatmul.mubr.bf16.gmra.mrb[0].mxu0 %v606
      %v885 = vpop.f32.mrb[0].mxu0
      %v886 = vadd.f32 0.0, %v885
      %v887 = vpop.f32.mrb[0].mxu0
      %v888 = vpop.f32.mrb[0].mxu0
      %v889 = vadd.f32 0.0, %v888
      %v890 = vpop.f32.mrb[0].mxu0
      %891 = vmatprep.mubr.bf16.mxu0 0
      %892 = vmatmul.mubr.bf16.gmra.mrb[0].mxu0 %v609
      %v893 = vpop.f32.mrb[0].mxu0
      %v894 = vadd.f32 0.0, %v893
      %v895 = vpop.f32.mrb[0].mxu0
      %v896 = vpop.f32.mrb[0].mxu0
      %v897 = vadd.f32 0.0, %v896
      %v898 = vpop.f32.mrb[0].mxu0
      %899 = vmatprep.mubr.bf16.mxu0 0
      %900 = vmatmul.mubr.bf16.gmra.mrb[0].mxu0 %v612
      %v901 = vpop.f32.mrb[0].mxu0
      %v902 = vadd.f32 0.0, %v901
      %v903 = vpop.f32.mrb[0].mxu0
      %v904 = vpop.f32.mrb[0].mxu0
      %v905 = vadd.f32 0.0, %v904
      %v906 = vpop.f32.mrb[0].mxu0
      %907 = vmatprep.mubr.bf16.mxu0 0
      %908 = vmatmul.mubr.bf16.gmra.mrb[0].mxu0 %v615
      %v909 = vpop.f32.mrb[0].mxu0
      %v910 = vadd.f32 0.0, %v909
      %v911 = vpop.f32.mrb[0].mxu0
      %v912 = vpop.f32.mrb[0].mxu0
      %v913 = vadd.f32 0.0, %v912
      %v914 = vpop.f32.mrb[0].mxu0
      %915 = vmatprep.mubr.bf16.mxu0 0
      %916 = vmatmul.mubr.bf16.gmra.mrb[0].mxu0 %v618
      %v917 = vpop.f32.mrb[0].mxu0
      %v918 = vadd.f32 0.0, %v917
      %v919 = vpop.f32.mrb[0].mxu0
      %v920 = vpop.f32.mrb[0].mxu0
      %v921 = vadd.f32 0.0, %v920
      %v922 = vpop.f32.mrb[0].mxu0
      %923 = vmatprep.mubr.bf16.mxu0 0
      %924 = vmatmul.mubr.bf16.gmra.mrb[0].mxu0 %v621
      %v925 = vpop.f32.mrb[0].mxu0
      %v926 = vadd.f32 0.0, %v925
      %v927 = vpop.f32.mrb[0].mxu0
      %v928 = vpop.f32.mrb[0].mxu0
      %v929 = vadd.f32 0.0, %v928
      %v930 = vpop.f32.mrb[0].mxu0
      %931 = vmatprep.mubr.bf16.mxu0 0
      %932 = vmatmul.mubr.bf16.gmra.mrb[0].mxu0 %v624
      %v933 = vpop.f32.mrb[0].mxu0
      %v934 = vadd.f32 0.0, %v933
      %v935 = vpop.f32.mrb[0].mxu0
      %v936 = vpop.f32.mrb[0].mxu0
      %v937 = vadd.f32 0.0, %v936
      %v938 = vpop.f32.mrb[0].mxu0
      %939 = vmatprep.mubr.bf16.mxu0 0
      %940 = vmatmul.mubr.bf16.gmra.mrb[0].mxu0 %v627
      %v941 = vpop.f32.mrb[0].mxu0
      %v942 = vadd.f32 0.0, %v941
      %v943 = vpop.f32.mrb[0].mxu0
      %v944 = vpop.f32.mrb[0].mxu0
      %v945 = vadd.f32 0.0, %v944
      %v946 = vpop.f32.mrb[0].mxu0
      %947 = vmatprep.mubr.bf16.mxu0 0
      %948 = vmatmul.mubr.bf16.gmra.mrb[0].mxu0 %v630
      %v949 = vpop.f32.mrb[0].mxu0
      %v950 = vadd.f32 0.0, %v949
      %v951 = vpop.f32.mrb[0].mxu0
      %v952 = vpop.f32.mrb[0].mxu0
      %v953 = vadd.f32 0.0, %v952
      %v954 = vpop.f32.mrb[0].mxu0
      %955 = vmatprep.mubr.bf16.mxu0 0
      %956 = vmatmul.mubr.bf16.gmra.mrb[0].mxu0 %v633
      %v957 = vpop.f32.mrb[0].mxu0
      %v958 = vadd.f32 0.0, %v957
      %v959 = vpop.f32.mrb[0].mxu0
      %v960 = vpop.f32.mrb[0].mxu0
      %v961 = vadd.f32 0.0, %v960
      %v962 = vpop.f32.mrb[0].mxu0
      %963 = vmatprep.mubr.bf16.mxu0 0
      %964 = vmatmul.mubr.bf16.gmra.mrb[0].mxu0 %v636
      %v965 = vpop.f32.mrb[0].mxu0
      %v966 = vadd.f32 0.0, %v965
      %v967 = vpop.f32.mrb[0].mxu0
      %v968 = vpop.f32.mrb[0].mxu0
      %v969 = vadd.f32 0.0, %v968
      %v970 = vpop.f32.mrb[0].mxu0
      %971 = vmatprep.mubr.bf16.mxu0 0
      %972 = vmatmul.mubr.bf16.gmra.mrb[0].mxu0 %v639
      %v973 = vpop.f32.mrb[0].mxu0
      %v974 = vadd.f32 0.0, %v973
      %v975 = vpop.f32.mrb[0].mxu0
      %v976 = vpop.f32.mrb[0].mxu0
      %v977 = vadd.f32 0.0, %v976
      %v978 = vpop.f32.mrb[0].mxu0
      %979 = vmatprep.mubr.bf16.mxu0 0
      %980 = vmatmul.mubr.bf16.gmra.mrb[0].mxu0 %v642
      %v981 = vpop.f32.mrb[0].mxu0
      %v982 = vadd.f32 0.0, %v981
      %v983 = vpop.f32.mrb[0].mxu0
      %v984 = vpop.f32.mrb[0].mxu0
      %v985 = vadd.f32 0.0, %v984
      %v986 = vpop.f32.mrb[0].mxu0
      %987 = vmatprep.mubr.bf16.mxu0 0
      %988 = vmatmul.mubr.bf16.gmra.mrb[0].mxu0 %v645
      %v989 = vpop.f32.mrb[0].mxu0
      %v990 = vadd.f32 0.0, %v989
      %v991 = vpop.f32.mrb[0].mxu0
      %v992 = vpop.f32.mrb[0].mxu0
      %v993 = vadd.f32 0.0, %v992
      %v994 = vpop.f32.mrb[0].mxu0
      %995 = vmatprep.mubr.bf16.mxu0 0
      %996 = vmatmul.mubr.bf16.gmra.mrb[0].mxu0 %v648
      %v997 = vpop.f32.mrb[0].mxu0
      %v998 = vadd.f32 0.0, %v997
      %v999 = vpop.f32.mrb[0].mxu0
      %v1000 = vpop.f32.mrb[0].mxu0
      %v1001 = vadd.f32 0.0, %v1000
      %v1002 = vpop.f32.mrb[0].mxu0
      %1003 = vmatprep.mubr.bf16.mxu0 0
      %1004 = vmatmul.mubr.bf16.gmra.mrb[0].mxu0 %v651
      %v1005 = vpop.f32.mrb[0].mxu0
      %v1006 = vadd.f32 0.0, %v1005
      %v1007 = vpop.f32.mrb[0].mxu0
      %v1008 = vpop.f32.mrb[0].mxu0
      %v1009 = vadd.f32 0.0, %v1008
      %v1010 = vpop.f32.mrb[0].mxu0
      %1011 = vmatprep.mubr.bf16.mxu0 0
      %1012 = vmatmul.mubr.bf16.gmra.mrb[0].mxu0 %v654
      %v1013 = vpop.f32.mrb[0].mxu0
      %v1014 = vadd.f32 0.0, %v1013
      %v1015 = vpop.f32.mrb[0].mxu0
      %v1016 = vpop.f32.mrb[0].mxu0
      %v1017 = vadd.f32 0.0, %v1016
      %v1018 = vpop.f32.mrb[0].mxu0
      %1019 = vmatprep.mubr.bf16.mxu0 0
      %1020 = vmatmul.mubr.bf16.gmra.mrb[0].mxu0 %v657
      %v1021 = vpop.f32.mrb[0].mxu0
      %v1022 = vadd.f32 0.0, %v1021
      %v1023 = vpop.f32.mrb[0].mxu0
      %v1024 = vpop.f32.mrb[0].mxu0
      %v1025 = vadd.f32 0.0, %v1024
      %v1026 = vpop.f32.mrb[0].mxu0
      %1027 = vmatprep.mubr.bf16.mxu0 0
      %1028 = vmatmul.mubr.bf16.gmra.mrb[0].mxu0 %v660
      %v1029 = vpop.f32.mrb[0].mxu0
      %v1030 = vadd.f32 0.0, %v1029
      %v1031 = vpop.f32.mrb[0].mxu0
      %v1032 = vpop.f32.mrb[0].mxu0
      %v1033 = vadd.f32 0.0, %v1032
      %v1034 = vpop.f32.mrb[0].mxu0
      %1035 = vmatprep.mubr.bf16.mxu0 0
      %1036 = vmatmul.mubr.bf16.gmra.mrb[0].mxu0 %v663
      %v1037 = vpop.f32.mrb[0].mxu0
      %v1038 = vadd.f32 0.0, %v1037
      %v1039 = vpop.f32.mrb[0].mxu0
      %v1040 = vpop.f32.mrb[0].mxu0
      %v1041 = vadd.f32 0.0, %v1040
      %v1042 = vpop.f32.mrb[0].mxu0
      %1043 = vmatprep.mubr.bf16.mxu0 0
      %1044 = vmatmul.mubr.bf16.gmra.mrb[0].mxu0 %v666
      %v1045 = vpop.f32.mrb[0].mxu0
      %v1046 = vadd.f32 0.0, %v1045
      %v1047 = vpop.f32.mrb[0].mxu0
      %v1048 = vpop.f32.mrb[0].mxu0
      %v1049 = vadd.f32 0.0, %v1048
      %v1050 = vpop.f32.mrb[0].mxu0
      %1051 = vmatprep.mubr.bf16.mxu0 0
      %1052 = vmatmul.mubr.bf16.gmra.mrb[0].mxu0 %v669
      %v1053 = vpop.f32.mrb[0].mxu0
      %v1054 = vadd.f32 0.0, %v1053
      %v1055 = vpop.f32.mrb[0].mxu0
      %v1056 = vpop.f32.mrb[0].mxu0
      %v1057 = vadd.f32 0.0, %v1056
      %v1058 = vpop.f32.mrb[0].mxu0
      %1059 = vmatprep.mubr.bf16.mxu0 0
      %1060 = vmatmul.mubr.bf16.gmra.mrb[0].mxu0 %v672
      %v1061 = vpop.f32.mrb[0].mxu0
      %v1062 = vadd.f32 0.0, %v1061
      %v1063 = vpop.f32.mrb[0].mxu0
      %v1064 = vpop.f32.mrb[0].mxu0
      %v1065 = vadd.f32 0.0, %v1064
      %v1066 = vpop.f32.mrb[0].mxu0
      %1067 = vmatprep.mubr.bf16.mxu0 0
      %1068 = vmatmul.mubr.bf16.gmra.mrb[0].mxu0 %v675
      %v1069 = vpop.f32.mrb[0].mxu0
      %v1070 = vadd.f32 0.0, %v1069
      %v1071 = vpop.f32.mrb[0].mxu0
      %v1072 = vpop.f32.mrb[0].mxu0
      %v1073 = vadd.f32 0.0, %v1072
      %v1074 = vpop.f32.mrb[0].mxu0
      %1075 = vmatprep.mubr.bf16.mxu0 0
      %1076 = vmatmul.mubr.bf16.gmra.mrb[0].mxu0 %v678
      %v1077 = vpop.f32.mrb[0].mxu0
      %v1078 = vadd.f32 0.0, %v1077
      %v1079 = vpop.f32.mrb[0].mxu0
      %v1080 = vpop.f32.mrb[0].mxu0
      %v1081 = vadd.f32 0.0, %v1080
      %v1082 = vpop.f32.mrb[0].mxu0
      %1083 = vmatprep.mubr.bf16.mxu0 0
      %1084 = vmatmul.mubr.bf16.gmra.mrb[0].mxu0 %v681
      %v1085 = vpop.f32.mrb[0].mxu0
      %v1086 = vadd.f32 0.0, %v1085
      %v1087 = vpop.f32.mrb[0].mxu0
      %v1088 = vpop.f32.mrb[0].mxu0
      %v1089 = vadd.f32 0.0, %v1088
      %v1090 = vpop.f32.mrb[0].mxu0
      %1091 = vmatprep.mubr.bf16.mxu0 0
      %1092 = vmatmul.mubr.bf16.gmra.mrb[0].mxu0 %v684
      %v1093 = vpop.f32.mrb[0].mxu0
      %v1094 = vadd.f32 0.0, %v1093
      %v1095 = vpop.f32.mrb[0].mxu0
      %v1096 = vpop.f32.mrb[0].mxu0
      %v1097 = vadd.f32 0.0, %v1096
      %v1098 = vpop.f32.mrb[0].mxu0
      %1099 = vmatprep.mubr.bf16.mxu0 0
      %1100 = vmatmul.mubr.bf16.gmra.mrb[0].mxu0 %v687
      %v1101 = vpop.f32.mrb[0].mxu0
      %v1102 = vadd.f32 0.0, %v1101
      %v1103 = vpop.f32.mrb[0].mxu0
      %v1104 = vpop.f32.mrb[0].mxu0
      %v1105 = vadd.f32 0.0, %v1104
      %v1106 = vpop.f32.mrb[0].mxu0
      %1107 = vmatprep.mubr.bf16.mxu0 0
      %1108 = vmatmul.mubr.bf16.gmra.mrb[0].mxu0 %v690
      %v1109 = vpop.f32.mrb[0].mxu0
      %v1110 = vadd.f32 0.0, %v1109
      %v1111 = vpop.f32.mrb[0].mxu0
      %v1112 = vpop.f32.mrb[0].mxu0
      %v1113 = vadd.f32 0.0, %v1112
      %v1114 = vpop.f32.mrb[0].mxu0
      %1115 = vmatprep.mubr.bf16.mxu0 0
      %1116 = vmatmul.mubr.bf16.gmra.mrb[0].mxu0 %v693
      %v1117 = vpop.f32.mrb[0].mxu0
      %v1118 = vadd.f32 0.0, %v1117
      %v1119 = vpop.f32.mrb[0].mxu0
      %v1120 = vpop.f32.mrb[0].mxu0
      %v1121 = vadd.f32 0.0, %v1120
      %v1122 = vpop.f32.mrb[0].mxu0
      %1123 = vmatprep.mubr.bf16.mxu0 0
      %1124 = vmatmul.mubr.bf16.gmra.mrb[0].mxu0 %v696
      %v1125 = vpop.f32.mrb[0].mxu0
      %v1126 = vadd.f32 0.0, %v1125
      %v1127 = vpop.f32.mrb[0].mxu0
      %v1128 = vpop.f32.mrb[0].mxu0
      %v1129 = vadd.f32 0.0, %v1128
      %v1130 = vpop.f32.mrb[0].mxu0
      %1131 = vmatprep.mubr.bf16.mxu0 0
      %1132 = vmatmul.mubr.bf16.gmra.mrb[0].mxu0 %v699
      %v1133 = vpop.f32.mrb[0].mxu0
      %v1134 = vadd.f32 0.0, %v1133
      %v1135 = vpop.f32.mrb[0].mxu0
      %v1136 = vpop.f32.mrb[0].mxu0
      %v1137 = vadd.f32 0.0, %v1136
      %v1138 = vpop.f32.mrb[0].mxu0
      %1139 = vmatprep.mubr.bf16.mxu0 0
      %1140 = vmatmul.mubr.bf16.gmra.mrb[0].mxu0 %v702
      %v1141 = vpop.f32.mrb[0].mxu0
      %v1142 = vadd.f32 0.0, %v1141
      %v1143 = vpop.f32.mrb[0].mxu0
      %v1144 = vpop.f32.mrb[0].mxu0
      %v1145 = vadd.f32 0.0, %v1144
      %v1146 = vpop.f32.mrb[0].mxu0
      %1147 = vmatprep.mubr.bf16.mxu0 0
      %1148 = vmatmul.mubr.bf16.gmra.mrb[0].mxu0 %v705
      %v1149 = vpop.f32.mrb[0].mxu0
      %v1150 = vadd.f32 0.0, %v1149
      %v1151 = vpop.f32.mrb[0].mxu0
      %v1152 = vpop.f32.mrb[0].mxu0
      %v1153 = vadd.f32 0.0, %v1152
      %v1154 = vpop.f32.mrb[0].mxu0
      %1155 = vmatprep.mubr.bf16.mxu0 0
      %1156 = vmatmul.mubr.bf16.gmra.mrb[0].mxu0 %v708
      %v1157 = vpop.f32.mrb[0].mxu0
      %v1158 = vadd.f32 0.0, %v1157
      %v1159 = vpop.f32.mrb[0].mxu0
      %v1160 = vpop.f32.mrb[0].mxu0
      %v1161 = vadd.f32 0.0, %v1160
      %v1162 = vpop.f32.mrb[0].mxu0
      %1163 = vmatprep.mubr.bf16.mxu0 0
      %1164 = vmatmul.mubr.bf16.gmra.mrb[0].mxu0 %v711
      %v1165 = vpop.f32.mrb[0].mxu0
      %v1166 = vadd.f32 0.0, %v1165
      %v1167 = vpop.f32.mrb[0].mxu0
      %v1168 = vpop.f32.mrb[0].mxu0
      %v1169 = vadd.f32 0.0, %v1168
      %v1170 = vpop.f32.mrb[0].mxu0
      %1171 = vmatprep.mubr.bf16.mxu0 0
      %1172 = vmatmul.mubr.bf16.gmra.mrb[0].mxu0 %v714
      %v1173 = vpop.f32.mrb[0].mxu0
      %v1174 = vadd.f32 0.0, %v1173
      %v1175 = vpop.f32.mrb[0].mxu0
      %v1176 = vpop.f32.mrb[0].mxu0
      %v1177 = vadd.f32 0.0, %v1176
      %v1178 = vpop.f32.mrb[0].mxu0
      %1179 = vmatprep.mubr.bf16.mxu0 0
      %1180 = vmatmul.mubr.bf16.gmra.mrb[0].mxu0 %v717
      %v1181 = vpop.f32.mrb[0].mxu0
      %v1182 = vadd.f32 0.0, %v1181
      %v1183 = vpop.f32.mrb[0].mxu0
      %v1184 = vpop.f32.mrb[0].mxu0
      %v1185 = vadd.f32 0.0, %v1184
      %v1186 = vpop.f32.mrb[0].mxu0
      %1187 = vmatprep.mubr.bf16.mxu0 0
      %1188 = vmatmul.mubr.bf16.gmra.mrb[0].mxu0 %v720
      %v1189 = vpop.f32.mrb[0].mxu0
      %v1190 = vadd.f32 0.0, %v1189
      %v1191 = vpop.f32.mrb[0].mxu0
      %v1192 = vpop.f32.mrb[0].mxu0
      %v1193 = vadd.f32 0.0, %v1192
      %v1194 = vpop.f32.mrb[0].mxu0
      %1195 = vmatprep.mubr.bf16.mxu0 0
      %1196 = vmatmul.mubr.bf16.gmra.mrb[0].mxu0 %v723
      %v1197 = vpop.f32.mrb[0].mxu0
      %v1198 = vadd.f32 0.0, %v1197
      %v1199 = vpop.f32.mrb[0].mxu0
      %v1200 = vpop.f32.mrb[0].mxu0
      %v1201 = vadd.f32 0.0, %v1200
      %v1202 = vpop.f32.mrb[0].mxu0
      %1203 = vmatprep.mubr.bf16.mxu0 0
      %1204 = vmatmul.mubr.bf16.gmra.mrb[0].mxu0 %v726
      %v1205 = vpop.f32.mrb[0].mxu0
      %v1206 = vadd.f32 0.0, %v1205
      %v1207 = vpop.f32.mrb[0].mxu0
      %v1208 = vpop.f32.mrb[0].mxu0
      %v1209 = vadd.f32 0.0, %v1208
      %v1210 = vpop.f32.mrb[0].mxu0
      %1211 = vmatprep.mubr.bf16.mxu0 0
      %1212 = vmatmul.mubr.bf16.gmra.mrb[0].mxu0 %v729
      %v1213 = vpop.f32.mrb[0].mxu0
      %v1214 = vadd.f32 0.0, %v1213
      %v1215 = vpop.f32.mrb[0].mxu0
      %v1216 = vpop.f32.mrb[0].mxu0
      %v1217 = vadd.f32 0.0, %v1216
      %v1218 = vpop.f32.mrb[0].mxu0
      %1219 = vmatprep.mubr.bf16.mxu0 0
      %1220 = vmatmul.mubr.bf16.gmra.mrb[0].mxu0 %v732
      %v1221 = vpop.f32.mrb[0].mxu0
      %v1222 = vadd.f32 0.0, %v1221
      %v1223 = vpop.f32.mrb[0].mxu0
      %v1224 = vpop.f32.mrb[0].mxu0
      %v1225 = vadd.f32 0.0, %v1224
      %v1226 = vpop.f32.mrb[0].mxu0
      %1227 = vmatprep.mubr.bf16.mxu0 0
      %1228 = vmatmul.mubr.bf16.gmra.mrb[0].mxu0 %v735
      %v1229 = vpop.f32.mrb[0].mxu0
      %v1230 = vadd.f32 0.0, %v1229
      %v1231 = vpop.f32.mrb[0].mxu0
      %v1232 = vpop.f32.mrb[0].mxu0
      %v1233 = vadd.f32 0.0, %v1232
      %v1234 = vpop.f32.mrb[0].mxu0
      %1235 = vmatprep.mubr.bf16.mxu0 0
      %1236 = vmatmul.mubr.bf16.gmra.mrb[0].mxu0 %v738
      %v1237 = vpop.f32.mrb[0].mxu0
      %v1238 = vadd.f32 0.0, %v1237
      %v1239 = vpop.f32.mrb[0].mxu0
      %v1240 = vpop.f32.mrb[0].mxu0
      %v1241 = vadd.f32 0.0, %v1240
      %v1242 = vpop.f32.mrb[0].mxu0
      %1243 = vmatprep.mubr.bf16.mxu0 0
      %1244 = vmatmul.mubr.bf16.gmra.mrb[0].mxu0 %v741
      %v1245 = vpop.f32.mrb[0].mxu0
      %v1246 = vadd.f32 0.0, %v1245
      %v1247 = vpop.f32.mrb[0].mxu0
      %v1248 = vpop.f32.mrb[0].mxu0
      %v1249 = vadd.f32 0.0, %v1248
      %v1250 = vpop.f32.mrb[0].mxu0
      %1251 = vmatprep.mubr.bf16.mxu0 0
      %1252 = vmatmul.mubr.bf16.gmra.mrb[0].mxu0 %v744
      %v1253 = vpop.f32.mrb[0].mxu0
      %v1254 = vadd.f32 0.0, %v1253
      %v1255 = vpop.f32.mrb[0].mxu0
      %v1256 = vpop.f32.mrb[0].mxu0
      %v1257 = vadd.f32 0.0, %v1256
      %v1258 = vpop.f32.mrb[0].mxu0
      %1259 = vmatprep.mubr.bf16.mxu0 0
      %1260 = vmatmul.mubr.bf16.gmra.mrb[0].mxu0 %v747
      %v1261 = vpop.f32.mrb[0].mxu0
      %v1262 = vadd.f32 0.0, %v1261
      %v1263 = vpop.f32.mrb[0].mxu0
      %v1264 = vpop.f32.mrb[0].mxu0
      %v1265 = vadd.f32 0.0, %v1264
      %v1266 = vpop.f32.mrb[0].mxu0
      %1267 = vmatprep.mubr.bf16.mxu0 0
      %1268 = vmatmul.mubr.bf16.gmra.mrb[0].mxu0 %v750
      %v1269 = vpop.f32.mrb[0].mxu0
      %v1270 = vadd.f32 0.0, %v1269
      %v1271 = vpop.f32.mrb[0].mxu0
      %v1272 = vpop.f32.mrb[0].mxu0
      %v1273 = vadd.f32 0.0, %v1272
      %v1274 = vpop.f32.mrb[0].mxu0
      %1275 = vmatprep.mubr.bf16.mxu0 0
      %1276 = vmatmul.mubr.bf16.gmra.mrb[0].mxu0 %v753
      %v1277 = vpop.f32.mrb[0].mxu0
      %v1278 = vadd.f32 0.0, %v1277
      %v1279 = vpop.f32.mrb[0].mxu0
      %v1280 = vpop.f32.mrb[0].mxu0
      %v1281 = vadd.f32 0.0, %v1280
      %v1282 = vpop.f32.mrb[0].mxu0
      %1283 = vmatprep.mubr.bf16.mxu0 0
      %1284 = vmatmul.mubr.bf16.gmra.mrb[0].mxu0 %v756
      %v1285 = vpop.f32.mrb[0].mxu0
      %v1286 = vadd.f32 0.0, %v1285
      %v1287 = vpop.f32.mrb[0].mxu0
      %v1288 = vpop.f32.mrb[0].mxu0
      %v1289 = vadd.f32 0.0, %v1288
      %v1290 = vpop.f32.mrb[0].mxu0
      %1291 = vmatprep.mubr.bf16.mxu0 0
      %1292 = vmatmul.mubr.bf16.gmra.mrb[0].mxu0 %v759
      %v1293 = vpop.f32.mrb[0].mxu0
      %v1294 = vadd.f32 0.0, %v1293
      %v1295 = vpop.f32.mrb[0].mxu0
      %v1296 = vpop.f32.mrb[0].mxu0
      %v1297 = vadd.f32 0.0, %v1296
      %v1298 = vpop.f32.mrb[0].mxu0
      %1299 = vmatprep.mubr.bf16.mxu0 0
      %1300 = vmatmul.mubr.bf16.gmra.mrb[0].mxu0 %v762
      %v1301 = vpop.f32.mrb[0].mxu0
      %v1302 = vadd.f32 0.0, %v1301
      %v1303 = vpop.f32.mrb[0].mxu0
      %v1304 = vpop.f32.mrb[0].mxu0
      %v1305 = vadd.f32 0.0, %v1304
      %v1306 = vpop.f32.mrb[0].mxu0
      %1307 = vmatprep.mubr.bf16.mxu0 0
      %1308 = vmatmul.mubr.bf16.gmra.mrb[0].mxu0 %v765
      %v1309 = vpop.f32.mrb[0].mxu0
      %v1310 = vadd.f32 0.0, %v1309
      %v1311 = vpop.f32.mrb[0].mxu0
      %v1312 = vpop.f32.mrb[0].mxu0
      %v1313 = vadd.f32 0.0, %v1312
      %v1314 = vpop.f32.mrb[0].mxu0
      %1315 = vmatprep.mubr.bf16.mxu0 0
      %1316 = vmatmul.mubr.bf16.gmra.mrb[0].mxu0 %v768
      %v1317 = vpop.f32.mrb[0].mxu0
      %v1318 = vadd.f32 0.0, %v1317
      %v1319 = vpop.f32.mrb[0].mxu0
      %v1320 = vpop.f32.mrb[0].mxu0
      %v1321 = vadd.f32 0.0, %v1320
      %v1322 = vpop.f32.mrb[0].mxu0
      %1323 = vmatprep.mubr.bf16.mxu0 0
      %1324 = vmatmul.mubr.bf16.gmra.mrb[0].mxu0 %v771
      %v1325 = vpop.f32.mrb[0].mxu0
      %v1326 = vadd.f32 0.0, %v1325
      %v1327 = vpop.f32.mrb[0].mxu0
      %v1328 = vpop.f32.mrb[0].mxu0
      %v1329 = vadd.f32 0.0, %v1328
      %v1330 = vpop.f32.mrb[0].mxu0
      %1331 = vmatprep.mubr.bf16.mxu0 0
      %1332 = vmatmul.mubr.bf16.gmra.mrb[0].mxu0 %v774
      %v1333 = vpop.f32.mrb[0].mxu0
      %v1334 = vadd.f32 0.0, %v1333
      %v1335 = vpop.f32.mrb[0].mxu0
      %v1336 = vpop.f32.mrb[0].mxu0
      %v1337 = vadd.f32 0.0, %v1336
      %v1338 = vpop.f32.mrb[0].mxu0
      %1339 = vmatprep.mubr.bf16.mxu0 0
      %1340 = vmatmul.mubr.bf16.gmra.mrb[0].mxu0 %v777
      %v1341 = vpop.f32.mrb[0].mxu0
      %v1342 = vadd.f32 0.0, %v1341
      %v1343 = vpop.f32.mrb[0].mxu0
      %v1344 = vpop.f32.mrb[0].mxu0
      %v1345 = vadd.f32 0.0, %v1344
      %v1346 = vpop.f32.mrb[0].mxu0
      %1347 = vmatprep.mubr.bf16.mxu0 0
      %1348 = vmatmul.mubr.bf16.gmra.mrb[0].mxu0 %v780
      %v1349 = vpop.f32.mrb[0].mxu0
      %v1350 = vadd.f32 0.0, %v1349
      %v1351 = vpop.f32.mrb[0].mxu0
      %v1352 = vpop.f32.mrb[0].mxu0
      %v1353 = vadd.f32 0.0, %v1352
      %v1354 = vpop.f32.mrb[0].mxu0
      %1355 = vmatprep.mubr.bf16.mxu0 0
      %1356 = vmatmul.mubr.bf16.gmra.mrb[0].mxu0 %v783
      %v1357 = vpop.f32.mrb[0].mxu0
      %v1358 = vadd.f32 0.0, %v1357
      %v1359 = vpop.f32.mrb[0].mxu0
      %v1360 = vpop.f32.mrb[0].mxu0
      %v1361 = vadd.f32 0.0, %v1360
      %v1362 = vpop.f32.mrb[0].mxu0
      %1363 = vmatprep.mubr.bf16.mxu0 0
      %1364 = vmatmul.mubr.bf16.gmra.mrb[0].mxu0 %v786
      %v1365 = vpop.f32.mrb[0].mxu0
      %v1366 = vadd.f32 0.0, %v1365
      %v1367 = vpop.f32.mrb[0].mxu0
      %v1368 = vpop.f32.mrb[0].mxu0
      %v1369 = vadd.f32 0.0, %v1368
      %v1370 = vpop.f32.mrb[0].mxu0
      %1371 = vdwg.mxu0
      %v1373 = vsel %vm583, %v308, 0
      %v1376 = vsel %vm583, %v309, 0
      %v1379 = vsel %vm583, %v310, 0
      %v1382 = vsel %vm583, %v311, 0
      %v1385 = vsel %vm583, %v312, 0
      %v1388 = vsel %vm583, %v313, 0
      %v1391 = vsel %vm583, %v314, 0
      %v1394 = vsel %vm583, %v315, 0
      %v1397 = vsel %vm583, %v316, 0
      %v1400 = vsel %vm583, %v317, 0
      %v1403 = vsel %vm583, %v318, 0
      %v1406 = vsel %vm583, %v319, 0
      %v1409 = vsel %vm583, %v320, 0
      %v1412 = vsel %vm583, %v321, 0
      %v1415 = vsel %vm583, %v322, 0
      %v1418 = vsel %vm583, %v323, 0
      %v1421 = vsel %vm583, %v324, 0
      %v1424 = vsel %vm583, %v325, 0
      %v1427 = vsel %vm583, %v326, 0
      %v1430 = vsel %vm583, %v327, 0
      %v1433 = vsel %vm583, %v328, 0
      %v1436 = vsel %vm583, %v329, 0
      %v1439 = vsel %vm583, %v330, 0
      %v1442 = vsel %vm583, %v331, 0
      %v1445 = vsel %vm583, %v332, 0
      %v1448 = vsel %vm583, %v333, 0
      %v1451 = vsel %vm583, %v334, 0
      %v1454 = vsel %vm583, %v335, 0
      %v1457 = vsel %vm583, %v336, 0
      %v1460 = vsel %vm583, %v337, 0
      %v1463 = vsel %vm583, %v338, 0
      %v1466 = vsel %vm583, %v339, 0
      %v1469 = vsel %vm583, %v340, 0
      %v1472 = vsel %vm583, %v341, 0
      %v1475 = vsel %vm583, %v342, 0
      %v1478 = vsel %vm583, %v343, 0
      %v1481 = vsel %vm583, %v344, 0
      %v1484 = vsel %vm583, %v345, 0
      %v1487 = vsel %vm583, %v346, 0
      %v1490 = vsel %vm583, %v347, 0
      %v1493 = vsel %vm583, %v348, 0
      %v1496 = vsel %vm583, %v349, 0
      %v1499 = vsel %vm583, %v350, 0
      %v1502 = vsel %vm583, %v351, 0
      %v1505 = vsel %vm583, %v352, 0
      %v1508 = vsel %vm583, %v353, 0
      %v1511 = vsel %vm583, %v354, 0
      %v1514 = vsel %vm583, %v355, 0
      %v1517 = vsel %vm583, %v356, 0
      %v1520 = vsel %vm583, %v357, 0
      %v1523 = vsel %vm583, %v358, 0
      %v1526 = vsel %vm583, %v359, 0
      %v1529 = vsel %vm583, %v360, 0
      %v1532 = vsel %vm583, %v361, 0
      %v1535 = vsel %vm583, %v362, 0
      %v1538 = vsel %vm583, %v363, 0
      %v1541 = vsel %vm583, %v364, 0
      %v1544 = vsel %vm583, %v365, 0
      %v1547 = vsel %vm583, %v366, 0
      %v1550 = vsel %vm583, %v367, 0
      %v1553 = vsel %vm583, %v368, 0
      %v1556 = vsel %vm583, %v369, 0
      %v1559 = vsel %vm583, %v370, 0
      %v1562 = vsel %vm583, %v371, 0
      %v1565 = vsel %vm583, %v372, 0
      %v1568 = vsel %vm583, %v373, 0
      %v1571 = vsel %vm583, %v374, 0
      %v1574 = vsel %vm583, %v375, 0
      %v1577 = vand.u32 %v376, %v791
      %1579 = vmatprep.subr.bf16.mxu0 0
      %1580 = vmatpush1.bf16.msra.mxu0 %v1577
      %1581 = vmatprep.subr.bf16.mxu0 0
      %1582 = vmatpush1.bf16.msra.mxu0 0
      %1583 = vmatprep.subr.bf16.mxu0 0
      %1584 = vmatpush1.bf16.msra.mxu0 0
      %1585 = vmatprep.subr.bf16.mxu0 0
      %1586 = vmatpush1.bf16.msra.mxu0 0
      %1587 = vmatprep.subr.bf16.mxu0 0
      %1588 = vmatpush1.bf16.msra.mxu0 0
      %1589 = vmatprep.subr.bf16.mxu0 0
      %1590 = vmatpush1.bf16.msra.mxu0 0
      %1591 = vmatprep.subr.bf16.mxu0 0
      %1592 = vmatpush1.bf16.msra.mxu0 0
      %1593 = vmatprep.subr.bf16.mxu0 0
      %1594 = vmatpush1.bf16.msra.mxu0 0
      %1595 = vmatprep.subr.bf16.mxu0 0
      %1596 = vmatpush1.bf16.msra.mxu0 0
      %1597 = vmatprep.subr.bf16.mxu0 0
      %1598 = vmatpush1.bf16.msra.mxu0 0
      %1599 = vmatprep.subr.bf16.mxu0 0
      %1600 = vmatpush1.bf16.msra.mxu0 0
      %1601 = vmatprep.subr.bf16.mxu0 0
      %1602 = vmatpush1.bf16.msra.mxu0 0
      %1603 = vmatprep.subr.bf16.mxu0 0
      %1604 = vmatpush1.bf16.msra.mxu0 0
      %1605 = vmatprep.subr.bf16.mxu0 0
      %1606 = vmatpush1.bf16.msra.mxu0 0
      %1607 = vmatprep.subr.bf16.mxu0 0
      %1608 = vmatpush1.bf16.msra.mxu0 0
      %1609 = vmatprep.subr.bf16.mxu0 0
      %1610 = vmatpush1.bf16.msra.mxu0 0
      %1611 = vmatprep.mubr.bf16.mxu0 0
      %1612 = vmatmul.mubr.bf16.gmra.mrb[0].mxu0 %v1373
      %v1613 = vpop.f32.mrb[0].mxu0
      %v1614 = vadd.f32 %v830, %v1613
      %v1615 = vpop.f32.mrb[0].mxu0
      %v1616 = vpop.f32.mrb[0].mxu0
      %v1617 = vadd.f32 %v833, %v1616
      %v1618 = vpop.f32.mrb[0].mxu0
      %1619 = vmatprep.mubr.bf16.mxu0 0
      %1620 = vmatmul.mubr.bf16.gmra.mrb[0].mxu0 %v1376
      %v1621 = vpop.f32.mrb[0].mxu0
      %v1622 = vadd.f32 %v838, %v1621
      %v1623 = vpop.f32.mrb[0].mxu0
      %v1624 = vpop.f32.mrb[0].mxu0
      %v1625 = vadd.f32 %v841, %v1624
      %v1626 = vpop.f32.mrb[0].mxu0
      %1627 = vmatprep.mubr.bf16.mxu0 0
      %1628 = vmatmul.mubr.bf16.gmra.mrb[0].mxu0 %v1379
      %v1629 = vpop.f32.mrb[0].mxu0
      %v1630 = vadd.f32 %v846, %v1629
      %v1631 = vpop.f32.mrb[0].mxu0
      %v1632 = vpop.f32.mrb[0].mxu0
      %v1633 = vadd.f32 %v849, %v1632
      %v1634 = vpop.f32.mrb[0].mxu0
      %1635 = vmatprep.mubr.bf16.mxu0 0
      %1636 = vmatmul.mubr.bf16.gmra.mrb[0].mxu0 %v1382
      %v1637 = vpop.f32.mrb[0].mxu0
      %v1638 = vadd.f32 %v854, %v1637
      %v1639 = vpop.f32.mrb[0].mxu0
      %v1640 = vpop.f32.mrb[0].mxu0
      %v1641 = vadd.f32 %v857, %v1640
      %v1642 = vpop.f32.mrb[0].mxu0
      %1643 = vmatprep.mubr.bf16.mxu0 0
      %1644 = vmatmul.mubr.bf16.gmra.mrb[0].mxu0 %v1385
      %v1645 = vpop.f32.mrb[0].mxu0
      %v1646 = vadd.f32 %v862, %v1645
      %v1647 = vpop.f32.mrb[0].mxu0
      %v1648 = vpop.f32.mrb[0].mxu0
      %v1649 = vadd.f32 %v865, %v1648
      %v1650 = vpop.f32.mrb[0].mxu0
      %1651 = vmatprep.mubr.bf16.mxu0 0
      %1652 = vmatmul.mubr.bf16.gmra.mrb[0].mxu0 %v1388
      %v1653 = vpop.f32.mrb[0].mxu0
      %v1654 = vadd.f32 %v870, %v1653
      %v1655 = vpop.f32.mrb[0].mxu0
      %v1656 = vpop.f32.mrb[0].mxu0
      %v1657 = vadd.f32 %v873, %v1656
      %v1658 = vpop.f32.mrb[0].mxu0
      %1659 = vmatprep.mubr.bf16.mxu0 0
      %1660 = vmatmul.mubr.bf16.gmra.mrb[0].mxu0 %v1391
      %v1661 = vpop.f32.mrb[0].mxu0
      %v1662 = vadd.f32 %v878, %v1661
      %v1663 = vpop.f32.mrb[0].mxu0
      %v1664 = vpop.f32.mrb[0].mxu0
      %v1665 = vadd.f32 %v881, %v1664
      %v1666 = vpop.f32.mrb[0].mxu0
      %1667 = vmatprep.mubr.bf16.mxu0 0
      %1668 = vmatmul.mubr.bf16.gmra.mrb[0].mxu0 %v1394
      %v1669 = vpop.f32.mrb[0].mxu0
      %v1670 = vadd.f32 %v886, %v1669
      %v1671 = vpop.f32.mrb[0].mxu0
      %v1672 = vpop.f32.mrb[0].mxu0
      %v1673 = vadd.f32 %v889, %v1672
      %v1674 = vpop.f32.mrb[0].mxu0
      %1675 = vmatprep.mubr.bf16.mxu0 0
      %1676 = vmatmul.mubr.bf16.gmra.mrb[0].mxu0 %v1397
      %v1677 = vpop.f32.mrb[0].mxu0
      %v1678 = vadd.f32 %v894, %v1677
      %v1679 = vpop.f32.mrb[0].mxu0
      %v1680 = vpop.f32.mrb[0].mxu0
      %v1681 = vadd.f32 %v897, %v1680
      %v1682 = vpop.f32.mrb[0].mxu0
      %1683 = vmatprep.mubr.bf16.mxu0 0
      %1684 = vmatmul.mubr.bf16.gmra.mrb[0].mxu0 %v1400
      %v1685 = vpop.f32.mrb[0].mxu0
      %v1686 = vadd.f32 %v902, %v1685
      %v1687 = vpop.f32.mrb[0].mxu0
      %v1688 = vpop.f32.mrb[0].mxu0
      %v1689 = vadd.f32 %v905, %v1688
      %v1690 = vpop.f32.mrb[0].mxu0
      %1691 = vmatprep.mubr.bf16.mxu0 0
      %1692 = vmatmul.mubr.bf16.gmra.mrb[0].mxu0 %v1403
      %v1693 = vpop.f32.mrb[0].mxu0
      %v1694 = vadd.f32 %v910, %v1693
      %v1695 = vpop.f32.mrb[0].mxu0
      %v1696 = vpop.f32.mrb[0].mxu0
      %v1697 = vadd.f32 %v913, %v1696
      %v1698 = vpop.f32.mrb[0].mxu0
      %1699 = vmatprep.mubr.bf16.mxu0 0
      %1700 = vmatmul.mubr.bf16.gmra.mrb[0].mxu0 %v1406
      %v1701 = vpop.f32.mrb[0].mxu0
      %v1702 = vadd.f32 %v918, %v1701
      %v1703 = vpop.f32.mrb[0].mxu0
      %v1704 = vpop.f32.mrb[0].mxu0
      %v1705 = vadd.f32 %v921, %v1704
      %v1706 = vpop.f32.mrb[0].mxu0
      %1707 = vmatprep.mubr.bf16.mxu0 0
      %1708 = vmatmul.mubr.bf16.gmra.mrb[0].mxu0 %v1409
      %v1709 = vpop.f32.mrb[0].mxu0
      %v1710 = vadd.f32 %v926, %v1709
      %v1711 = vpop.f32.mrb[0].mxu0
      %v1712 = vpop.f32.mrb[0].mxu0
      %v1713 = vadd.f32 %v929, %v1712
      %v1714 = vpop.f32.mrb[0].mxu0
      %1715 = vmatprep.mubr.bf16.mxu0 0
      %1716 = vmatmul.mubr.bf16.gmra.mrb[0].mxu0 %v1412
      %v1717 = vpop.f32.mrb[0].mxu0
      %v1718 = vadd.f32 %v934, %v1717
      %v1719 = vpop.f32.mrb[0].mxu0
      %v1720 = vpop.f32.mrb[0].mxu0
      %v1721 = vadd.f32 %v937, %v1720
      %v1722 = vpop.f32.mrb[0].mxu0
      %1723 = vmatprep.mubr.bf16.mxu0 0
      %1724 = vmatmul.mubr.bf16.gmra.mrb[0].mxu0 %v1415
      %v1725 = vpop.f32.mrb[0].mxu0
      %v1726 = vadd.f32 %v942, %v1725
      %v1727 = vpop.f32.mrb[0].mxu0
      %v1728 = vpop.f32.mrb[0].mxu0
      %v1729 = vadd.f32 %v945, %v1728
      %v1730 = vpop.f32.mrb[0].mxu0
      %1731 = vmatprep.mubr.bf16.mxu0 0
      %1732 = vmatmul.mubr.bf16.gmra.mrb[0].mxu0 %v1418
      %v1733 = vpop.f32.mrb[0].mxu0
      %v1734 = vadd.f32 %v950, %v1733
      %v1735 = vpop.f32.mrb[0].mxu0
      %v1736 = vpop.f32.mrb[0].mxu0
      %v1737 = vadd.f32 %v953, %v1736
      %v1738 = vpop.f32.mrb[0].mxu0
      %1739 = vmatprep.mubr.bf16.mxu0 0
      %1740 = vmatmul.mubr.bf16.gmra.mrb[0].mxu0 %v1421
      %v1741 = vpop.f32.mrb[0].mxu0
      %v1742 = vadd.f32 %v958, %v1741
      %v1743 = vpop.f32.mrb[0].mxu0
      %v1744 = vpop.f32.mrb[0].mxu0
      %v1745 = vadd.f32 %v961, %v1744
      %v1746 = vpop.f32.mrb[0].mxu0
      %1747 = vmatprep.mubr.bf16.mxu0 0
      %1748 = vmatmul.mubr.bf16.gmra.mrb[0].mxu0 %v1424
      %v1749 = vpop.f32.mrb[0].mxu0
      %v1750 = vadd.f32 %v966, %v1749
      %v1751 = vpop.f32.mrb[0].mxu0
      %v1752 = vpop.f32.mrb[0].mxu0
      %v1753 = vadd.f32 %v969, %v1752
      %v1754 = vpop.f32.mrb[0].mxu0
      %1755 = vmatprep.mubr.bf16.mxu0 0
      %1756 = vmatmul.mubr.bf16.gmra.mrb[0].mxu0 %v1427
      %v1757 = vpop.f32.mrb[0].mxu0
      %v1758 = vadd.f32 %v974, %v1757
      %v1759 = vpop.f32.mrb[0].mxu0
      %v1760 = vpop.f32.mrb[0].mxu0
      %v1761 = vadd.f32 %v977, %v1760
      %v1762 = vpop.f32.mrb[0].mxu0
      %1763 = vmatprep.mubr.bf16.mxu0 0
      %1764 = vmatmul.mubr.bf16.gmra.mrb[0].mxu0 %v1430
      %v1765 = vpop.f32.mrb[0].mxu0
      %v1766 = vadd.f32 %v982, %v1765
      %v1767 = vpop.f32.mrb[0].mxu0
      %v1768 = vpop.f32.mrb[0].mxu0
      %v1769 = vadd.f32 %v985, %v1768
      %v1770 = vpop.f32.mrb[0].mxu0
      %1771 = vmatprep.mubr.bf16.mxu0 0
      %1772 = vmatmul.mubr.bf16.gmra.mrb[0].mxu0 %v1433
      %v1773 = vpop.f32.mrb[0].mxu0
      %v1774 = vadd.f32 %v990, %v1773
      %v1775 = vpop.f32.mrb[0].mxu0
      %v1776 = vpop.f32.mrb[0].mxu0
      %v1777 = vadd.f32 %v993, %v1776
      %v1778 = vpop.f32.mrb[0].mxu0
      %1779 = vmatprep.mubr.bf16.mxu0 0
      %1780 = vmatmul.mubr.bf16.gmra.mrb[0].mxu0 %v1436
      %v1781 = vpop.f32.mrb[0].mxu0
      %v1782 = vadd.f32 %v998, %v1781
      %v1783 = vpop.f32.mrb[0].mxu0
      %v1784 = vpop.f32.mrb[0].mxu0
      %v1785 = vadd.f32 %v1001, %v1784
      %v1786 = vpop.f32.mrb[0].mxu0
      %1787 = vmatprep.mubr.bf16.mxu0 0
      %1788 = vmatmul.mubr.bf16.gmra.mrb[0].mxu0 %v1439
      %v1789 = vpop.f32.mrb[0].mxu0
      %v1790 = vadd.f32 %v1006, %v1789
      %v1791 = vpop.f32.mrb[0].mxu0
      %v1792 = vpop.f32.mrb[0].mxu0
      %v1793 = vadd.f32 %v1009, %v1792
      %v1794 = vpop.f32.mrb[0].mxu0
      %1795 = vmatprep.mubr.bf16.mxu0 0
      %1796 = vmatmul.mubr.bf16.gmra.mrb[0].mxu0 %v1442
      %v1797 = vpop.f32.mrb[0].mxu0
      %v1798 = vadd.f32 %v1014, %v1797
      %v1799 = vpop.f32.mrb[0].mxu0
      %v1800 = vpop.f32.mrb[0].mxu0
      %v1801 = vadd.f32 %v1017, %v1800
      %v1802 = vpop.f32.mrb[0].mxu0
      %1803 = vmatprep.mubr.bf16.mxu0 0
      %1804 = vmatmul.mubr.bf16.gmra.mrb[0].mxu0 %v1445
      %v1805 = vpop.f32.mrb[0].mxu0
      %v1806 = vadd.f32 %v1022, %v1805
      %v1807 = vpop.f32.mrb[0].mxu0
      %v1808 = vpop.f32.mrb[0].mxu0
      %v1809 = vadd.f32 %v1025, %v1808
      %v1810 = vpop.f32.mrb[0].mxu0
      %1811 = vmatprep.mubr.bf16.mxu0 0
      %1812 = vmatmul.mubr.bf16.gmra.mrb[0].mxu0 %v1448
      %v1813 = vpop.f32.mrb[0].mxu0
      %v1814 = vadd.f32 %v1030, %v1813
      %v1815 = vpop.f32.mrb[0].mxu0
      %v1816 = vpop.f32.mrb[0].mxu0
      %v1817 = vadd.f32 %v1033, %v1816
      %v1818 = vpop.f32.mrb[0].mxu0
      %1819 = vmatprep.mubr.bf16.mxu0 0
      %1820 = vmatmul.mubr.bf16.gmra.mrb[0].mxu0 %v1451
      %v1821 = vpop.f32.mrb[0].mxu0
      %v1822 = vadd.f32 %v1038, %v1821
      %v1823 = vpop.f32.mrb[0].mxu0
      %v1824 = vpop.f32.mrb[0].mxu0
      %v1825 = vadd.f32 %v1041, %v1824
      %v1826 = vpop.f32.mrb[0].mxu0
      %1827 = vmatprep.mubr.bf16.mxu0 0
      %1828 = vmatmul.mubr.bf16.gmra.mrb[0].mxu0 %v1454
      %v1829 = vpop.f32.mrb[0].mxu0
      %v1830 = vadd.f32 %v1046, %v1829
      %v1831 = vpop.f32.mrb[0].mxu0
      %v1832 = vpop.f32.mrb[0].mxu0
      %v1833 = vadd.f32 %v1049, %v1832
      %v1834 = vpop.f32.mrb[0].mxu0
      %1835 = vmatprep.mubr.bf16.mxu0 0
      %1836 = vmatmul.mubr.bf16.gmra.mrb[0].mxu0 %v1457
      %v1837 = vpop.f32.mrb[0].mxu0
      %v1838 = vadd.f32 %v1054, %v1837
      %v1839 = vpop.f32.mrb[0].mxu0
      %v1840 = vpop.f32.mrb[0].mxu0
      %v1841 = vadd.f32 %v1057, %v1840
      %v1842 = vpop.f32.mrb[0].mxu0
      %1843 = vmatprep.mubr.bf16.mxu0 0
      %1844 = vmatmul.mubr.bf16.gmra.mrb[0].mxu0 %v1460
      %v1845 = vpop.f32.mrb[0].mxu0
      %v1846 = vadd.f32 %v1062, %v1845
      %v1847 = vpop.f32.mrb[0].mxu0
      %v1848 = vpop.f32.mrb[0].mxu0
      %v1849 = vadd.f32 %v1065, %v1848
      %v1850 = vpop.f32.mrb[0].mxu0
      %1851 = vmatprep.mubr.bf16.mxu0 0
      %1852 = vmatmul.mubr.bf16.gmra.mrb[0].mxu0 %v1463
      %v1853 = vpop.f32.mrb[0].mxu0
      %v1854 = vadd.f32 %v1070, %v1853
      %v1855 = vpop.f32.mrb[0].mxu0
      %v1856 = vpop.f32.mrb[0].mxu0
      %v1857 = vadd.f32 %v1073, %v1856
      %v1858 = vpop.f32.mrb[0].mxu0
      %1859 = vmatprep.mubr.bf16.mxu0 0
      %1860 = vmatmul.mubr.bf16.gmra.mrb[0].mxu0 %v1466
      %v1861 = vpop.f32.mrb[0].mxu0
      %v1862 = vadd.f32 %v1078, %v1861
      %v1863 = vpop.f32.mrb[0].mxu0
      %v1864 = vpop.f32.mrb[0].mxu0
      %v1865 = vadd.f32 %v1081, %v1864
      %v1866 = vpop.f32.mrb[0].mxu0
      %1867 = vmatprep.mubr.bf16.mxu0 0
      %1868 = vmatmul.mubr.bf16.gmra.mrb[0].mxu0 %v1469
      %v1869 = vpop.f32.mrb[0].mxu0
      %v1870 = vadd.f32 %v1086, %v1869
      %v1871 = vpop.f32.mrb[0].mxu0
      %v1872 = vpop.f32.mrb[0].mxu0
      %v1873 = vadd.f32 %v1089, %v1872
      %v1874 = vpop.f32.mrb[0].mxu0
      %1875 = vmatprep.mubr.bf16.mxu0 0
      %1876 = vmatmul.mubr.bf16.gmra.mrb[0].mxu0 %v1472
      %v1877 = vpop.f32.mrb[0].mxu0
      %v1878 = vadd.f32 %v1094, %v1877
      %v1879 = vpop.f32.mrb[0].mxu0
      %v1880 = vpop.f32.mrb[0].mxu0
      %v1881 = vadd.f32 %v1097, %v1880
      %v1882 = vpop.f32.mrb[0].mxu0
      %1883 = vmatprep.mubr.bf16.mxu0 0
      %1884 = vmatmul.mubr.bf16.gmra.mrb[0].mxu0 %v1475
      %v1885 = vpop.f32.mrb[0].mxu0
      %v1886 = vadd.f32 %v1102, %v1885
      %v1887 = vpop.f32.mrb[0].mxu0
      %v1888 = vpop.f32.mrb[0].mxu0
      %v1889 = vadd.f32 %v1105, %v1888
      %v1890 = vpop.f32.mrb[0].mxu0
      %1891 = vmatprep.mubr.bf16.mxu0 0
      %1892 = vmatmul.mubr.bf16.gmra.mrb[0].mxu0 %v1478
      %v1893 = vpop.f32.mrb[0].mxu0
      %v1894 = vadd.f32 %v1110, %v1893
      %v1895 = vpop.f32.mrb[0].mxu0
      %v1896 = vpop.f32.mrb[0].mxu0
      %v1897 = vadd.f32 %v1113, %v1896
      %v1898 = vpop.f32.mrb[0].mxu0
      %1899 = vmatprep.mubr.bf16.mxu0 0
      %1900 = vmatmul.mubr.bf16.gmra.mrb[0].mxu0 %v1481
      %v1901 = vpop.f32.mrb[0].mxu0
      %v1902 = vadd.f32 %v1118, %v1901
      %v1903 = vpop.f32.mrb[0].mxu0
      %v1904 = vpop.f32.mrb[0].mxu0
      %v1905 = vadd.f32 %v1121, %v1904
      %v1906 = vpop.f32.mrb[0].mxu0
      %1907 = vmatprep.mubr.bf16.mxu0 0
      %1908 = vmatmul.mubr.bf16.gmra.mrb[0].mxu0 %v1484
      %v1909 = vpop.f32.mrb[0].mxu0
      %v1910 = vadd.f32 %v1126, %v1909
      %v1911 = vpop.f32.mrb[0].mxu0
      %v1912 = vpop.f32.mrb[0].mxu0
      %v1913 = vadd.f32 %v1129, %v1912
      %v1914 = vpop.f32.mrb[0].mxu0
      %1915 = vmatprep.mubr.bf16.mxu0 0
      %1916 = vmatmul.mubr.bf16.gmra.mrb[0].mxu0 %v1487
      %v1917 = vpop.f32.mrb[0].mxu0
      %v1918 = vadd.f32 %v1134, %v1917
      %v1919 = vpop.f32.mrb[0].mxu0
      %v1920 = vpop.f32.mrb[0].mxu0
      %v1921 = vadd.f32 %v1137, %v1920
      %v1922 = vpop.f32.mrb[0].mxu0
      %1923 = vmatprep.mubr.bf16.mxu0 0
      %1924 = vmatmul.mubr.bf16.gmra.mrb[0].mxu0 %v1490
      %v1925 = vpop.f32.mrb[0].mxu0
      %v1926 = vadd.f32 %v1142, %v1925
      %v1927 = vpop.f32.mrb[0].mxu0
      %v1928 = vpop.f32.mrb[0].mxu0
      %v1929 = vadd.f32 %v1145, %v1928
      %v1930 = vpop.f32.mrb[0].mxu0
      %1931 = vmatprep.mubr.bf16.mxu0 0
      %1932 = vmatmul.mubr.bf16.gmra.mrb[0].mxu0 %v1493
      %v1933 = vpop.f32.mrb[0].mxu0
      %v1934 = vadd.f32 %v1150, %v1933
      %v1935 = vpop.f32.mrb[0].mxu0
      %v1936 = vpop.f32.mrb[0].mxu0
      %v1937 = vadd.f32 %v1153, %v1936
      %v1938 = vpop.f32.mrb[0].mxu0
      %1939 = vmatprep.mubr.bf16.mxu0 0
      %1940 = vmatmul.mubr.bf16.gmra.mrb[0].mxu0 %v1496
      %v1941 = vpop.f32.mrb[0].mxu0
      %v1942 = vadd.f32 %v1158, %v1941
      %v1943 = vpop.f32.mrb[0].mxu0
      %v1944 = vpop.f32.mrb[0].mxu0
      %v1945 = vadd.f32 %v1161, %v1944
      %v1946 = vpop.f32.mrb[0].mxu0
      %1947 = vmatprep.mubr.bf16.mxu0 0
      %1948 = vmatmul.mubr.bf16.gmra.mrb[0].mxu0 %v1499
      %v1949 = vpop.f32.mrb[0].mxu0
      %v1950 = vadd.f32 %v1166, %v1949
      %v1951 = vpop.f32.mrb[0].mxu0
      %v1952 = vpop.f32.mrb[0].mxu0
      %v1953 = vadd.f32 %v1169, %v1952
      %v1954 = vpop.f32.mrb[0].mxu0
      %1955 = vmatprep.mubr.bf16.mxu0 0
      %1956 = vmatmul.mubr.bf16.gmra.mrb[0].mxu0 %v1502
      %v1957 = vpop.f32.mrb[0].mxu0
      %v1958 = vadd.f32 %v1174, %v1957
      %v1959 = vpop.f32.mrb[0].mxu0
      %v1960 = vpop.f32.mrb[0].mxu0
      %v1961 = vadd.f32 %v1177, %v1960
      %v1962 = vpop.f32.mrb[0].mxu0
      %1963 = vmatprep.mubr.bf16.mxu0 0
      %1964 = vmatmul.mubr.bf16.gmra.mrb[0].mxu0 %v1505
      %v1965 = vpop.f32.mrb[0].mxu0
      %v1966 = vadd.f32 %v1182, %v1965
      %v1967 = vpop.f32.mrb[0].mxu0
      %v1968 = vpop.f32.mrb[0].mxu0
      %v1969 = vadd.f32 %v1185, %v1968
      %v1970 = vpop.f32.mrb[0].mxu0
      %1971 = vmatprep.mubr.bf16.mxu0 0
      %1972 = vmatmul.mubr.bf16.gmra.mrb[0].mxu0 %v1508
      %v1973 = vpop.f32.mrb[0].mxu0
      %v1974 = vadd.f32 %v1190, %v1973
      %v1975 = vpop.f32.mrb[0].mxu0
      %v1976 = vpop.f32.mrb[0].mxu0
      %v1977 = vadd.f32 %v1193, %v1976
      %v1978 = vpop.f32.mrb[0].mxu0
      %1979 = vmatprep.mubr.bf16.mxu0 0
      %1980 = vmatmul.mubr.bf16.gmra.mrb[0].mxu0 %v1511
      %v1981 = vpop.f32.mrb[0].mxu0
      %v1982 = vadd.f32 %v1198, %v1981
      %v1983 = vpop.f32.mrb[0].mxu0
      %v1984 = vpop.f32.mrb[0].mxu0
      %v1985 = vadd.f32 %v1201, %v1984
      %v1986 = vpop.f32.mrb[0].mxu0
      %1987 = vmatprep.mubr.bf16.mxu0 0
      %1988 = vmatmul.mubr.bf16.gmra.mrb[0].mxu0 %v1514
      %v1989 = vpop.f32.mrb[0].mxu0
      %v1990 = vadd.f32 %v1206, %v1989
      %v1991 = vpop.f32.mrb[0].mxu0
      %v1992 = vpop.f32.mrb[0].mxu0
      %v1993 = vadd.f32 %v1209, %v1992
      %v1994 = vpop.f32.mrb[0].mxu0
      %1995 = vmatprep.mubr.bf16.mxu0 0
      %1996 = vmatmul.mubr.bf16.gmra.mrb[0].mxu0 %v1517
      %v1997 = vpop.f32.mrb[0].mxu0
      %v1998 = vadd.f32 %v1214, %v1997
      %v1999 = vpop.f32.mrb[0].mxu0
      %v2000 = vpop.f32.mrb[0].mxu0
      %v2001 = vadd.f32 %v1217, %v2000
      %v2002 = vpop.f32.mrb[0].mxu0
      %2003 = vmatprep.mubr.bf16.mxu0 0
      %2004 = vmatmul.mubr.bf16.gmra.mrb[0].mxu0 %v1520
      %v2005 = vpop.f32.mrb[0].mxu0
      %v2006 = vadd.f32 %v1222, %v2005
      %v2007 = vpop.f32.mrb[0].mxu0
      %v2008 = vpop.f32.mrb[0].mxu0
      %v2009 = vadd.f32 %v1225, %v2008
      %v2010 = vpop.f32.mrb[0].mxu0
      %2011 = vmatprep.mubr.bf16.mxu0 0
      %2012 = vmatmul.mubr.bf16.gmra.mrb[0].mxu0 %v1523
      %v2013 = vpop.f32.mrb[0].mxu0
      %v2014 = vadd.f32 %v1230, %v2013
      %v2015 = vpop.f32.mrb[0].mxu0
      %v2016 = vpop.f32.mrb[0].mxu0
      %v2017 = vadd.f32 %v1233, %v2016
      %v2018 = vpop.f32.mrb[0].mxu0
      %2019 = vmatprep.mubr.bf16.mxu0 0
      %2020 = vmatmul.mubr.bf16.gmra.mrb[0].mxu0 %v1526
      %v2021 = vpop.f32.mrb[0].mxu0
      %v2022 = vadd.f32 %v1238, %v2021
      %v2023 = vpop.f32.mrb[0].mxu0
      %v2024 = vpop.f32.mrb[0].mxu0
      %v2025 = vadd.f32 %v1241, %v2024
      %v2026 = vpop.f32.mrb[0].mxu0
      %2027 = vmatprep.mubr.bf16.mxu0 0
      %2028 = vmatmul.mubr.bf16.gmra.mrb[0].mxu0 %v1529
      %v2029 = vpop.f32.mrb[0].mxu0
      %v2030 = vadd.f32 %v1246, %v2029
      %v2031 = vpop.f32.mrb[0].mxu0
      %v2032 = vpop.f32.mrb[0].mxu0
      %v2033 = vadd.f32 %v1249, %v2032
      %v2034 = vpop.f32.mrb[0].mxu0
      %2035 = vmatprep.mubr.bf16.mxu0 0
      %2036 = vmatmul.mubr.bf16.gmra.mrb[0].mxu0 %v1532
      %v2037 = vpop.f32.mrb[0].mxu0
      %v2038 = vadd.f32 %v1254, %v2037
      %v2039 = vpop.f32.mrb[0].mxu0
      %v2040 = vpop.f32.mrb[0].mxu0
      %v2041 = vadd.f32 %v1257, %v2040
      %v2042 = vpop.f32.mrb[0].mxu0
      %2043 = vmatprep.mubr.bf16.mxu0 0
      %2044 = vmatmul.mubr.bf16.gmra.mrb[0].mxu0 %v1535
      %v2045 = vpop.f32.mrb[0].mxu0
      %v2046 = vadd.f32 %v1262, %v2045
      %v2047 = vpop.f32.mrb[0].mxu0
      %v2048 = vpop.f32.mrb[0].mxu0
      %v2049 = vadd.f32 %v1265, %v2048
      %v2050 = vpop.f32.mrb[0].mxu0
      %2051 = vmatprep.mubr.bf16.mxu0 0
      %2052 = vmatmul.mubr.bf16.gmra.mrb[0].mxu0 %v1538
      %v2053 = vpop.f32.mrb[0].mxu0
      %v2054 = vadd.f32 %v1270, %v2053
      %v2055 = vpop.f32.mrb[0].mxu0
      %v2056 = vpop.f32.mrb[0].mxu0
      %v2057 = vadd.f32 %v1273, %v2056
      %v2058 = vpop.f32.mrb[0].mxu0
      %2059 = vmatprep.mubr.bf16.mxu0 0
      %2060 = vmatmul.mubr.bf16.gmra.mrb[0].mxu0 %v1541
      %v2061 = vpop.f32.mrb[0].mxu0
      %v2062 = vadd.f32 %v1278, %v2061
      %v2063 = vpop.f32.mrb[0].mxu0
      %v2064 = vpop.f32.mrb[0].mxu0
      %v2065 = vadd.f32 %v1281, %v2064
      %v2066 = vpop.f32.mrb[0].mxu0
      %2067 = vmatprep.mubr.bf16.mxu0 0
      %2068 = vmatmul.mubr.bf16.gmra.mrb[0].mxu0 %v1544
      %v2069 = vpop.f32.mrb[0].mxu0
      %v2070 = vadd.f32 %v1286, %v2069
      %v2071 = vpop.f32.mrb[0].mxu0
      %v2072 = vpop.f32.mrb[0].mxu0
      %v2073 = vadd.f32 %v1289, %v2072
      %v2074 = vpop.f32.mrb[0].mxu0
      %2075 = vmatprep.mubr.bf16.mxu0 0
      %2076 = vmatmul.mubr.bf16.gmra.mrb[0].mxu0 %v1547
      %v2077 = vpop.f32.mrb[0].mxu0
      %v2078 = vadd.f32 %v1294, %v2077
      %v2079 = vpop.f32.mrb[0].mxu0
      %v2080 = vpop.f32.mrb[0].mxu0
      %v2081 = vadd.f32 %v1297, %v2080
      %v2082 = vpop.f32.mrb[0].mxu0
      %2083 = vmatprep.mubr.bf16.mxu0 0
      %2084 = vmatmul.mubr.bf16.gmra.mrb[0].mxu0 %v1550
      %v2085 = vpop.f32.mrb[0].mxu0
      %v2086 = vadd.f32 %v1302, %v2085
      %v2087 = vpop.f32.mrb[0].mxu0
      %v2088 = vpop.f32.mrb[0].mxu0
      %v2089 = vadd.f32 %v1305, %v2088
      %v2090 = vpop.f32.mrb[0].mxu0
      %2091 = vmatprep.mubr.bf16.mxu0 0
      %2092 = vmatmul.mubr.bf16.gmra.mrb[0].mxu0 %v1553
      %v2093 = vpop.f32.mrb[0].mxu0
      %v2094 = vadd.f32 %v1310, %v2093
      %v2095 = vpop.f32.mrb[0].mxu0
      %v2096 = vpop.f32.mrb[0].mxu0
      %v2097 = vadd.f32 %v1313, %v2096
      %v2098 = vpop.f32.mrb[0].mxu0
      %2099 = vmatprep.mubr.bf16.mxu0 0
      %2100 = vmatmul.mubr.bf16.gmra.mrb[0].mxu0 %v1556
      %v2101 = vpop.f32.mrb[0].mxu0
      %v2102 = vadd.f32 %v1318, %v2101
      %v2103 = vpop.f32.mrb[0].mxu0
      %v2104 = vpop.f32.mrb[0].mxu0
      %v2105 = vadd.f32 %v1321, %v2104
      %v2106 = vpop.f32.mrb[0].mxu0
      %2107 = vmatprep.mubr.bf16.mxu0 0
      %2108 = vmatmul.mubr.bf16.gmra.mrb[0].mxu0 %v1559
      %v2109 = vpop.f32.mrb[0].mxu0
      %v2110 = vadd.f32 %v1326, %v2109
      %v2111 = vpop.f32.mrb[0].mxu0
      %v2112 = vpop.f32.mrb[0].mxu0
      %v2113 = vadd.f32 %v1329, %v2112
      %v2114 = vpop.f32.mrb[0].mxu0
      %2115 = vmatprep.mubr.bf16.mxu0 0
      %2116 = vmatmul.mubr.bf16.gmra.mrb[0].mxu0 %v1562
      %v2117 = vpop.f32.mrb[0].mxu0
      %v2118 = vadd.f32 %v1334, %v2117
      %v2119 = vpop.f32.mrb[0].mxu0
      %v2120 = vpop.f32.mrb[0].mxu0
      %v2121 = vadd.f32 %v1337, %v2120
      %v2122 = vpop.f32.mrb[0].mxu0
      %2123 = vmatprep.mubr.bf16.mxu0 0
      %2124 = vmatmul.mubr.bf16.gmra.mrb[0].mxu0 %v1565
      %v2125 = vpop.f32.mrb[0].mxu0
      %v2126 = vadd.f32 %v1342, %v2125
      %v2127 = vpop.f32.mrb[0].mxu0
      %v2128 = vpop.f32.mrb[0].mxu0
      %v2129 = vadd.f32 %v1345, %v2128
      %v2130 = vpop.f32.mrb[0].mxu0
      %2131 = vmatprep.mubr.bf16.mxu0 0
      %2132 = vmatmul.mubr.bf16.gmra.mrb[0].mxu0 %v1568
      %v2133 = vpop.f32.mrb[0].mxu0
      %v2134 = vadd.f32 %v1350, %v2133
      %v2135 = vpop.f32.mrb[0].mxu0
      %v2136 = vpop.f32.mrb[0].mxu0
      %v2137 = vadd.f32 %v1353, %v2136
      %v2138 = vpop.f32.mrb[0].mxu0
      %2139 = vmatprep.mubr.bf16.mxu0 0
      %2140 = vmatmul.mubr.bf16.gmra.mrb[0].mxu0 %v1571
      %v2141 = vpop.f32.mrb[0].mxu0
      %v2142 = vadd.f32 %v1358, %v2141
      %v2143 = vpop.f32.mrb[0].mxu0
      %v2144 = vpop.f32.mrb[0].mxu0
      %v2145 = vadd.f32 %v1361, %v2144
      %v2146 = vpop.f32.mrb[0].mxu0
      %2147 = vmatprep.mubr.bf16.mxu0 0
      %2148 = vmatmul.mubr.bf16.gmra.mrb[0].mxu0 %v1574
      %v2149 = vpop.f32.mrb[0].mxu0
      %v2150 = vadd.f32 %v1366, %v2149
      %v2151 = vpop.f32.mrb[0].mxu0
      %v2152 = vpop.f32.mrb[0].mxu0
      %v2153 = vadd.f32 %v1369, %v2152
      %v2154 = vpop.f32.mrb[0].mxu0
      %2155 = vdwg.mxu0
      %v2156 = vld [vmem:[%s165 + $0x2] sm:$0xff]
      %v2157 = vld [vmem:[%s165 + $0xa] sm:$0xff]
      %v2158 = vld [vmem:[%s165 + $0x12] sm:$0xff]
      %v2159 = vld [vmem:[%s165 + $0x1a] sm:$0xff]
      %v2160 = vld [vmem:[%s165 + $0x22] sm:$0xff]
      %v2161 = vld [vmem:[%s165 + $0x2a] sm:$0xff]
      %v2162 = vld [vmem:[%s165 + $0x32] sm:$0xff]
      %v2163 = vld [vmem:[%s165 + $0x3a] sm:$0xff]
      %v2164 = vld [vmem:[%s165 + $0x42] sm:$0xff]
      %v2165 = vld [vmem:[%s165 + $0x4a] sm:$0xff]
      %v2166 = vld [vmem:[%s165 + $0x52] sm:$0xff]
      %v2167 = vld [vmem:[%s165 + $0x5a] sm:$0xff]
      %v2168 = vld [vmem:[%s165 + $0x62] sm:$0xff]
      %v2169 = vld [vmem:[%s165 + $0x6a] sm:$0xff]
      %v2170 = vld [vmem:[%s165 + $0x72] sm:$0xff]
      %v2171 = vld [vmem:[%s165 + $0x7a] sm:$0xff]
      %v2172 = vld [vmem:[%s165 + $0x82] sm:$0xff]
      %v2173 = vld [vmem:[%s165 + $0x8a] sm:$0xff]
      %v2174 = vld [vmem:[%s165 + $0x92] sm:$0xff]
      %v2175 = vld [vmem:[%s165 + $0x9a] sm:$0xff]
      %v2176 = vld [vmem:[%s165 + $0xa2] sm:$0xff]
      %v2177 = vld [vmem:[%s165 + $0xaa] sm:$0xff]
      %v2178 = vld [vmem:[%s165 + $0xb2] sm:$0xff]
      %v2179 = vld [vmem:[%s165 + $0xba] sm:$0xff]
      %v2180 = vld [vmem:[%s165 + $0xc2] sm:$0xff]
      %v2181 = vld [vmem:[%s165 + $0xca] sm:$0xff]
      %v2182 = vld [vmem:[%s165 + $0xd2] sm:$0xff]
      %v2183 = vld [vmem:[%s165 + $0xda] sm:$0xff]
      %v2184 = vld [vmem:[%s165 + $0xe2] sm:$0xff]
      %v2185 = vld [vmem:[%s165 + $0xea] sm:$0xff]
      %v2186 = vld [vmem:[%s165 + $0xf2] sm:$0xff]
      %v2187 = vld [vmem:[%s165 + $0xfa] sm:$0xff]
      %v2188 = vld [vmem:[%s165 + $0x102] sm:$0xff]
      %v2189 = vld [vmem:[%s165 + $0x10a] sm:$0xff]
      %v2190 = vld [vmem:[%s165 + $0x112] sm:$0xff]
      %v2191 = vld [vmem:[%s165 + $0x11a] sm:$0xff]
      %v2192 = vld [vmem:[%s165 + $0x122] sm:$0xff]
      %v2193 = vld [vmem:[%s165 + $0x12a] sm:$0xff]
      %v2194 = vld [vmem:[%s165 + $0x132] sm:$0xff]
      %v2195 = vld [vmem:[%s165 + $0x13a] sm:$0xff]
      %v2196 = vld [vmem:[%s165 + $0x142] sm:$0xff]
      %v2197 = vld [vmem:[%s165 + $0x14a] sm:$0xff]
      %v2198 = vld [vmem:[%s165 + $0x152] sm:$0xff]
      %v2199 = vld [vmem:[%s165 + $0x15a] sm:$0xff]
      %v2200 = vld [vmem:[%s165 + $0x162] sm:$0xff]
      %v2201 = vld [vmem:[%s165 + $0x16a] sm:$0xff]
      %v2202 = vld [vmem:[%s165 + $0x172] sm:$0xff]
      %v2203 = vld [vmem:[%s165 + $0x17a] sm:$0xff]
      %v2204 = vld [vmem:[%s165 + $0x182] sm:$0xff]
      %v2205 = vld [vmem:[%s165 + $0x18a] sm:$0xff]
      %v2206 = vld [vmem:[%s165 + $0x192] sm:$0xff]
      %v2207 = vld [vmem:[%s165 + $0x19a] sm:$0xff]
      %v2208 = vld [vmem:[%s165 + $0x1a2] sm:$0xff]
      %v2209 = vld [vmem:[%s165 + $0x1aa] sm:$0xff]
      %v2210 = vld [vmem:[%s165 + $0x1b2] sm:$0xff]
      %v2211 = vld [vmem:[%s165 + $0x1ba] sm:$0xff]
      %v2212 = vld [vmem:[%s165 + $0x1c2] sm:$0xff]
      %v2213 = vld [vmem:[%s165 + $0x1ca] sm:$0xff]
      %v2214 = vld [vmem:[%s165 + $0x1d2] sm:$0xff]
      %v2215 = vld [vmem:[%s165 + $0x1da] sm:$0xff]
      %v2216 = vld [vmem:[%s165 + $0x1e2] sm:$0xff]
      %v2217 = vld [vmem:[%s165 + $0x1ea] sm:$0xff]
      %v2218 = vld [vmem:[%s165 + $0x1f2] sm:$0xff]
      %v2219 = vld [vmem:[%s165 + $0x1fa] sm:$0xff]
      %v2220 = vld [vmem:[%s165 + $0x202] sm:$0xff]
      %v2221 = vld [vmem:[%s165 + $0x20a] sm:$0xff]
      %v2222 = vld [vmem:[%s165 + $0x212] sm:$0xff]
      %v2223 = vld [vmem:[%s165 + $0x21a] sm:$0xff]
      %v2224 = vld [vmem:[%s165 + $0x222] sm:$0xff]
      %v2225 = vld [vmem:[%s165 + $0x22a] sm:$0xff]
      %v2226 = vld [vmem:[%s165 + $0x232] sm:$0xff]
      %v2227 = vld [vmem:[%s165 + $0x23a] sm:$0xff]
      %v2228 = vld [vmem:[%s165 + $0x242] sm:$0xff]
      %v2229 = vld [vmem:[%s165 + $0x24a] sm:$0xff]
      %v2230 = vld [vmem:[%s165 + $0x252] sm:$0xff]
      %v2231 = vld [vmem:[%s165 + $0x25a] sm:$0xff]
      %v2232 = vld [vmem:[%s165 + $0x262] sm:$0xff]
      %v2233 = vld [vmem:[%s165 + $0x26a] sm:$0xff]
      %v2234 = vld [vmem:[%s165 + $0x272] sm:$0xff]
      %v2235 = vld [vmem:[%s165 + $0x27a] sm:$0xff]
      %v2236 = vld [vmem:[%s165 + $0x282] sm:$0xff]
      %v2237 = vld [vmem:[%s165 + $0x28a] sm:$0xff]
      %v2238 = vld [vmem:[%s165 + $0x292] sm:$0xff]
      %v2239 = vld [vmem:[%s165 + $0x29a] sm:$0xff]
      %v2240 = vld [vmem:[%s165 + $0x2a2] sm:$0xff]
      %v2241 = vld [vmem:[%s165 + $0x2aa] sm:$0xff]
      %v2242 = vld [vmem:[%s165 + $0x2b2] sm:$0xff]
      %v2243 = vld [vmem:[%s165 + $0x2ba] sm:$0xff]
      %v2244 = vld [vmem:[%s165 + $0x2c2] sm:$0xff]
      %v2245 = vld [vmem:[%s165 + $0x2ca] sm:$0xff]
      %v2246 = vld [vmem:[%s165 + $0x2d2] sm:$0xff]
      %v2247 = vld [vmem:[%s165 + $0x2da] sm:$0xff]
      %v2248 = vld [vmem:[%s165 + $0x2e2] sm:$0xff]
      %v2249 = vld [vmem:[%s165 + $0x2ea] sm:$0xff]
      %v2250 = vld [vmem:[%s165 + $0x2f2] sm:$0xff]
      %v2251 = vld [vmem:[%s165 + $0x2fa] sm:$0xff]
      %v2252 = vld [vmem:[%s165 + $0x302] sm:$0xff]
      %v2253 = vld [vmem:[%s165 + $0x30a] sm:$0xff]
      %v2254 = vld [vmem:[%s165 + $0x312] sm:$0xff]
      %v2255 = vld [vmem:[%s165 + $0x31a] sm:$0xff]
      %v2256 = vld [vmem:[%s165 + $0x322] sm:$0xff]
      %v2257 = vld [vmem:[%s165 + $0x32a] sm:$0xff]
      %v2258 = vld [vmem:[%s165 + $0x332] sm:$0xff]
      %v2259 = vld [vmem:[%s165 + $0x33a] sm:$0xff]
      %v2260 = vld [vmem:[%s165 + $0x342] sm:$0xff]
      %v2261 = vld [vmem:[%s165 + $0x34a] sm:$0xff]
      %v2262 = vld [vmem:[%s165 + $0x352] sm:$0xff]
      %v2263 = vld [vmem:[%s165 + $0x35a] sm:$0xff]
      %v2264 = vld [vmem:[%s165 + $0x362] sm:$0xff]
      %v2265 = vld [vmem:[%s165 + $0x36a] sm:$0xff]
      %v2266 = vld [vmem:[%s165 + $0x372] sm:$0xff]
      %v2267 = vld [vmem:[%s165 + $0x37a] sm:$0xff]
      %v2268 = vld [vmem:[%s165 + $0x382] sm:$0xff]
      %v2269 = vld [vmem:[%s165 + $0x38a] sm:$0xff]
      %v2270 = vld [vmem:[%s165 + $0x392] sm:$0xff]
      %v2271 = vld [vmem:[%s165 + $0x39a] sm:$0xff]
      %v2272 = vld [vmem:[%s165 + $0x3a2] sm:$0xff]
      %v2273 = vld [vmem:[%s165 + $0x3aa] sm:$0xff]
      %v2274 = vld [vmem:[%s165 + $0x3b2] sm:$0xff]
      %v2275 = vld [vmem:[%s165 + $0x3ba] sm:$0xff]
      %v2276 = vld [vmem:[%s165 + $0x3c2] sm:$0xff]
      %v2277 = vld [vmem:[%s165 + $0x3ca] sm:$0xff]
      %v2278 = vld [vmem:[%s165 + $0x3d2] sm:$0xff]
      %v2279 = vld [vmem:[%s165 + $0x3da] sm:$0xff]
      %v2280 = vld [vmem:[%s165 + $0x3e2] sm:$0xff]
      %v2281 = vld [vmem:[%s165 + $0x3ea] sm:$0xff]
      %v2282 = vld [vmem:[%s165 + $0x3f2] sm:$0xff]
      %v2283 = vld [vmem:[%s165 + $0x3fa] sm:$0xff]
      %v2284 = vld [vmem:[%s165 + $0x402] sm:$0xff]
      %v2285 = vld [vmem:[%s165 + $0x40a] sm:$0xff]
      %v2286 = vld [vmem:[%s165 + $0x412] sm:$0xff]
      %v2287 = vld [vmem:[%s165 + $0x41a] sm:$0xff]
      %v2288 = vld [vmem:[%s165 + $0x422] sm:$0xff]
      %v2289 = vld [vmem:[%s165 + $0x42a] sm:$0xff]
      %v2290 = vld [vmem:[%s165 + $0x432] sm:$0xff]
      %v2291 = vld [vmem:[%s165 + $0x43a] sm:$0xff]
      %v2292 = vpack.c.bf16 %v2157, %v2156
      %v2293 = vpack.c.bf16 %v2159, %v2158
      %v2294 = vpack.c.bf16 %v2161, %v2160
      %v2295 = vpack.c.bf16 %v2163, %v2162
      %v2296 = vpack.c.bf16 %v2165, %v2164
      %v2297 = vpack.c.bf16 %v2167, %v2166
      %v2298 = vpack.c.bf16 %v2169, %v2168
      %v2299 = vpack.c.bf16 %v2171, %v2170
      %v2300 = vpack.c.bf16 %v2173, %v2172
      %v2301 = vpack.c.bf16 %v2175, %v2174
      %v2302 = vpack.c.bf16 %v2177, %v2176
      %v2303 = vpack.c.bf16 %v2179, %v2178
      %v2304 = vpack.c.bf16 %v2181, %v2180
      %v2305 = vpack.c.bf16 %v2183, %v2182
      %v2306 = vpack.c.bf16 %v2185, %v2184
      %v2307 = vpack.c.bf16 %v2187, %v2186
      %v2308 = vpack.c.bf16 %v2189, %v2188
      %v2309 = vpack.c.bf16 %v2191, %v2190
      %v2310 = vpack.c.bf16 %v2193, %v2192
      %v2311 = vpack.c.bf16 %v2195, %v2194
      %v2312 = vpack.c.bf16 %v2197, %v2196
      %v2313 = vpack.c.bf16 %v2199, %v2198
      %v2314 = vpack.c.bf16 %v2201, %v2200
      %v2315 = vpack.c.bf16 %v2203, %v2202
      %v2316 = vpack.c.bf16 %v2205, %v2204
      %v2317 = vpack.c.bf16 %v2207, %v2206
      %v2318 = vpack.c.bf16 %v2209, %v2208
      %v2319 = vpack.c.bf16 %v2211, %v2210
      %v2320 = vpack.c.bf16 %v2213, %v2212
      %v2321 = vpack.c.bf16 %v2215, %v2214
      %v2322 = vpack.c.bf16 %v2217, %v2216
      %v2323 = vpack.c.bf16 %v2219, %v2218
      %v2324 = vpack.c.bf16 %v2221, %v2220
      %v2325 = vpack.c.bf16 %v2223, %v2222
      %v2326 = vpack.c.bf16 %v2225, %v2224
      %v2327 = vpack.c.bf16 %v2227, %v2226
      %v2328 = vpack.c.bf16 %v2229, %v2228
      %v2329 = vpack.c.bf16 %v2231, %v2230
      %v2330 = vpack.c.bf16 %v2233, %v2232
      %v2331 = vpack.c.bf16 %v2235, %v2234
      %v2332 = vpack.c.bf16 %v2237, %v2236
      %v2333 = vpack.c.bf16 %v2239, %v2238
      %v2334 = vpack.c.bf16 %v2241, %v2240
      %v2335 = vpack.c.bf16 %v2243, %v2242
      %v2336 = vpack.c.bf16 %v2245, %v2244
      %v2337 = vpack.c.bf16 %v2247, %v2246
      %v2338 = vpack.c.bf16 %v2249, %v2248
      %v2339 = vpack.c.bf16 %v2251, %v2250
      %v2340 = vpack.c.bf16 %v2253, %v2252
      %v2341 = vpack.c.bf16 %v2255, %v2254
      %v2342 = vpack.c.bf16 %v2257, %v2256
      %v2343 = vpack.c.bf16 %v2259, %v2258
      %v2344 = vpack.c.bf16 %v2261, %v2260
      %v2345 = vpack.c.bf16 %v2263, %v2262
      %v2346 = vpack.c.bf16 %v2265, %v2264
      %v2347 = vpack.c.bf16 %v2267, %v2266
      %v2348 = vpack.c.bf16 %v2269, %v2268
      %v2349 = vpack.c.bf16 %v2271, %v2270
      %v2350 = vpack.c.bf16 %v2273, %v2272
      %v2351 = vpack.c.bf16 %v2275, %v2274
      %v2352 = vpack.c.bf16 %v2277, %v2276
      %v2353 = vpack.c.bf16 %v2279, %v2278
      %v2354 = vpack.c.bf16 %v2281, %v2280
      %v2355 = vpack.c.bf16 %v2283, %v2282
      %v2356 = vpack.c.bf16 %v2285, %v2284
      %v2357 = vpack.c.bf16 %v2287, %v2286
      %v2358 = vpack.c.bf16 %v2289, %v2288
      %v2359 = vpack.c.bf16 %v2291, %v2290
      %s2360 = scalar_lea.vmem %s1, 4
      %v2361 = vld [vmem:[%s2360] sm:$0x3]
      %v2363 = vsel %vm583, %v2292, 0
      %v2366 = vsel %vm583, %v2293, 0
      %v2369 = vsel %vm583, %v2294, 0
      %v2372 = vsel %vm583, %v2295, 0
      %v2375 = vsel %vm583, %v2296, 0
      %v2378 = vsel %vm583, %v2297, 0
      %v2381 = vsel %vm583, %v2298, 0
      %v2384 = vsel %vm583, %v2299, 0
      %v2387 = vsel %vm583, %v2300, 0
      %v2390 = vsel %vm583, %v2301, 0
      %v2393 = vsel %vm583, %v2302, 0
      %v2396 = vsel %vm583, %v2303, 0
      %v2399 = vsel %vm583, %v2304, 0
      %v2402 = vsel %vm583, %v2305, 0
      %v2405 = vsel %vm583, %v2306, 0
      %v2408 = vsel %vm583, %v2307, 0
      %v2411 = vsel %vm583, %v2308, 0
      %v2414 = vsel %vm583, %v2309, 0
      %v2417 = vsel %vm583, %v2310, 0
      %v2420 = vsel %vm583, %v2311, 0
      %v2423 = vsel %vm583, %v2312, 0
      %v2426 = vsel %vm583, %v2313, 0
      %v2429 = vsel %vm583, %v2314, 0
      %v2432 = vsel %vm583, %v2315, 0
      %v2435 = vsel %vm583, %v2316, 0
      %v2438 = vsel %vm583, %v2317, 0
      %v2441 = vsel %vm583, %v2318, 0
      %v2444 = vsel %vm583, %v2319, 0
      %v2447 = vsel %vm583, %v2320, 0
      %v2450 = vsel %vm583, %v2321, 0
      %v2453 = vsel %vm583, %v2322, 0
      %v2456 = vsel %vm583, %v2323, 0
      %v2459 = vsel %vm583, %v2324, 0
      %v2462 = vsel %vm583, %v2325, 0
      %v2465 = vsel %vm583, %v2326, 0
      %v2468 = vsel %vm583, %v2327, 0
      %v2471 = vsel %vm583, %v2328, 0
      %v2474 = vsel %vm583, %v2329, 0
      %v2477 = vsel %vm583, %v2330, 0
      %v2480 = vsel %vm583, %v2331, 0
      %v2483 = vsel %vm583, %v2332, 0
      %v2486 = vsel %vm583, %v2333, 0
      %v2489 = vsel %vm583, %v2334, 0
      %v2492 = vsel %vm583, %v2335, 0
      %v2495 = vsel %vm583, %v2336, 0
      %v2498 = vsel %vm583, %v2337, 0
      %v2501 = vsel %vm583, %v2338, 0
      %v2504 = vsel %vm583, %v2339, 0
      %v2507 = vsel %vm583, %v2340, 0
      %v2510 = vsel %vm583, %v2341, 0
      %v2513 = vsel %vm583, %v2342, 0
      %v2516 = vsel %vm583, %v2343, 0
      %v2519 = vsel %vm583, %v2344, 0
      %v2522 = vsel %vm583, %v2345, 0
      %v2525 = vsel %vm583, %v2346, 0
      %v2528 = vsel %vm583, %v2347, 0
      %v2531 = vsel %vm583, %v2348, 0
      %v2534 = vsel %vm583, %v2349, 0
      %v2537 = vsel %vm583, %v2350, 0
      %v2540 = vsel %vm583, %v2351, 0
      %v2543 = vsel %vm583, %v2352, 0
      %v2546 = vsel %vm583, %v2353, 0
      %v2549 = vsel %vm583, %v2354, 0
      %v2552 = vsel %vm583, %v2355, 0
      %v2555 = vsel %vm583, %v2356, 0
      %v2558 = vsel %vm583, %v2357, 0
      %v2561 = vsel %vm583, %v2358, 0
      %v2564 = vsel %vm583, %v2359, 0
      %v2567 = vand.u32 %v2361, %v791
      %2569 = vmatprep.subr.bf16.mxu0 0
      %2570 = vmatpush1.bf16.msra.mxu0 %v2567
      %2571 = vmatprep.subr.bf16.mxu0 0
      %2572 = vmatpush1.bf16.msra.mxu0 0
      %2573 = vmatprep.subr.bf16.mxu0 0
      %2574 = vmatpush1.bf16.msra.mxu0 0
      %2575 = vmatprep.subr.bf16.mxu0 0
      %2576 = vmatpush1.bf16.msra.mxu0 0
      %2577 = vmatprep.subr.bf16.mxu0 0
      %2578 = vmatpush1.bf16.msra.mxu0 0
      %2579 = vmatprep.subr.bf16.mxu0 0
      %2580 = vmatpush1.bf16.msra.mxu0 0
      %2581 = vmatprep.subr.bf16.mxu0 0
      %2582 = vmatpush1.bf16.msra.mxu0 0
      %2583 = vmatprep.subr.bf16.mxu0 0
      %2584 = vmatpush1.bf16.msra.mxu0 0
      %2585 = vmatprep.subr.bf16.mxu0 0
      %2586 = vmatpush1.bf16.msra.mxu0 0
      %2587 = vmatprep.subr.bf16.mxu0 0
      %2588 = vmatpush1.bf16.msra.mxu0 0
      %2589 = vmatprep.subr.bf16.mxu0 0
      %2590 = vmatpush1.bf16.msra.mxu0 0
      %2591 = vmatprep.subr.bf16.mxu0 0
      %2592 = vmatpush1.bf16.msra.mxu0 0
      %2593 = vmatprep.subr.bf16.mxu0 0
      %2594 = vmatpush1.bf16.msra.mxu0 0
      %2595 = vmatprep.subr.bf16.mxu0 0
      %2596 = vmatpush1.bf16.msra.mxu0 0
      %2597 = vmatprep.subr.bf16.mxu0 0
      %2598 = vmatpush1.bf16.msra.mxu0 0
      %2599 = vmatprep.subr.bf16.mxu0 0
      %2600 = vmatpush1.bf16.msra.mxu0 0
      %2601 = vmatprep.mubr.bf16.mxu0 0
      %2602 = vmatmul.mubr.bf16.gmra.mrb[0].mxu0 %v2363
      %v2603 = vpop.f32.mrb[0].mxu0
      %v2604 = vadd.f32 0.0, %v2603
      %v2605 = vpop.f32.mrb[0].mxu0
      %v2606 = vpop.f32.mrb[0].mxu0
      %v2607 = vadd.f32 0.0, %v2606
      %v2608 = vpop.f32.mrb[0].mxu0
      %2609 = vmatprep.mubr.bf16.mxu0 0
      %2610 = vmatmul.mubr.bf16.gmra.mrb[0].mxu0 %v2366
      %v2611 = vpop.f32.mrb[0].mxu0
      %v2612 = vadd.f32 0.0, %v2611
      %v2613 = vpop.f32.mrb[0].mxu0
      %v2614 = vpop.f32.mrb[0].mxu0
      %v2615 = vadd.f32 0.0, %v2614
      %v2616 = vpop.f32.mrb[0].mxu0
      %2617 = vmatprep.mubr.bf16.mxu0 0
      %2618 = vmatmul.mubr.bf16.gmra.mrb[0].mxu0 %v2369
      %v2619 = vpop.f32.mrb[0].mxu0
      %v2620 = vadd.f32 0.0, %v2619
      %v2621 = vpop.f32.mrb[0].mxu0
      %v2622 = vpop.f32.mrb[0].mxu0
      %v2623 = vadd.f32 0.0, %v2622
      %v2624 = vpop.f32.mrb[0].mxu0
      %2625 = vmatprep.mubr.bf16.mxu0 0
      %2626 = vmatmul.mubr.bf16.gmra.mrb[0].mxu0 %v2372
      %v2627 = vpop.f32.mrb[0].mxu0
      %v2628 = vadd.f32 0.0, %v2627
      %v2629 = vpop.f32.mrb[0].mxu0
      %v2630 = vpop.f32.mrb[0].mxu0
      %v2631 = vadd.f32 0.0, %v2630
      %v2632 = vpop.f32.mrb[0].mxu0
      %2633 = vmatprep.mubr.bf16.mxu0 0
      %2634 = vmatmul.mubr.bf16.gmra.mrb[0].mxu0 %v2375
      %v2635 = vpop.f32.mrb[0].mxu0
      %v2636 = vadd.f32 0.0, %v2635
      %v2637 = vpop.f32.mrb[0].mxu0
      %v2638 = vpop.f32.mrb[0].mxu0
      %v2639 = vadd.f32 0.0, %v2638
      %v2640 = vpop.f32.mrb[0].mxu0
      %2641 = vmatprep.mubr.bf16.mxu0 0
      %2642 = vmatmul.mubr.bf16.gmra.mrb[0].mxu0 %v2378
      %v2643 = vpop.f32.mrb[0].mxu0
      %v2644 = vadd.f32 0.0, %v2643
      %v2645 = vpop.f32.mrb[0].mxu0
      %v2646 = vpop.f32.mrb[0].mxu0
      %v2647 = vadd.f32 0.0, %v2646
      %v2648 = vpop.f32.mrb[0].mxu0
      %2649 = vmatprep.mubr.bf16.mxu0 0
      %2650 = vmatmul.mubr.bf16.gmra.mrb[0].mxu0 %v2381
      %v2651 = vpop.f32.mrb[0].mxu0
      %v2652 = vadd.f32 0.0, %v2651
      %v2653 = vpop.f32.mrb[0].mxu0
      %v2654 = vpop.f32.mrb[0].mxu0
      %v2655 = vadd.f32 0.0, %v2654
      %v2656 = vpop.f32.mrb[0].mxu0
      %2657 = vmatprep.mubr.bf16.mxu0 0
      %2658 = vmatmul.mubr.bf16.gmra.mrb[0].mxu0 %v2384
      %v2659 = vpop.f32.mrb[0].mxu0
      %v2660 = vadd.f32 0.0, %v2659
      %v2661 = vpop.f32.mrb[0].mxu0
      %v2662 = vpop.f32.mrb[0].mxu0
      %v2663 = vadd.f32 0.0, %v2662
      %v2664 = vpop.f32.mrb[0].mxu0
      %2665 = vmatprep.mubr.bf16.mxu0 0
      %2666 = vmatmul.mubr.bf16.gmra.mrb[0].mxu0 %v2387
      %v2667 = vpop.f32.mrb[0].mxu0
      %v2668 = vadd.f32 0.0, %v2667
      %v2669 = vpop.f32.mrb[0].mxu0
      %v2670 = vpop.f32.mrb[0].mxu0
      %v2671 = vadd.f32 0.0, %v2670
      %v2672 = vpop.f32.mrb[0].mxu0
      %2673 = vmatprep.mubr.bf16.mxu0 0
      %2674 = vmatmul.mubr.bf16.gmra.mrb[0].mxu0 %v2390
      %v2675 = vpop.f32.mrb[0].mxu0
      %v2676 = vadd.f32 0.0, %v2675
      %v2677 = vpop.f32.mrb[0].mxu0
      %v2678 = vpop.f32.mrb[0].mxu0
      %v2679 = vadd.f32 0.0, %v2678
      %v2680 = vpop.f32.mrb[0].mxu0
      %2681 = vmatprep.mubr.bf16.mxu0 0
      %2682 = vmatmul.mubr.bf16.gmra.mrb[0].mxu0 %v2393
      %v2683 = vpop.f32.mrb[0].mxu0
      %v2684 = vadd.f32 0.0, %v2683
      %v2685 = vpop.f32.mrb[0].mxu0
      %v2686 = vpop.f32.mrb[0].mxu0
      %v2687 = vadd.f32 0.0, %v2686
      %v2688 = vpop.f32.mrb[0].mxu0
      %2689 = vmatprep.mubr.bf16.mxu0 0
      %2690 = vmatmul.mubr.bf16.gmra.mrb[0].mxu0 %v2396
      %v2691 = vpop.f32.mrb[0].mxu0
      %v2692 = vadd.f32 0.0, %v2691
      %v2693 = vpop.f32.mrb[0].mxu0
      %v2694 = vpop.f32.mrb[0].mxu0
      %v2695 = vadd.f32 0.0, %v2694
      %v2696 = vpop.f32.mrb[0].mxu0
      %2697 = vmatprep.mubr.bf16.mxu0 0
      %2698 = vmatmul.mubr.bf16.gmra.mrb[0].mxu0 %v2399
      %v2699 = vpop.f32.mrb[0].mxu0
      %v2700 = vadd.f32 0.0, %v2699
      %v2701 = vpop.f32.mrb[0].mxu0
      %v2702 = vpop.f32.mrb[0].mxu0
      %v2703 = vadd.f32 0.0, %v2702
      %v2704 = vpop.f32.mrb[0].mxu0
      %2705 = vmatprep.mubr.bf16.mxu0 0
      %2706 = vmatmul.mubr.bf16.gmra.mrb[0].mxu0 %v2402
      %v2707 = vpop.f32.mrb[0].mxu0
      %v2708 = vadd.f32 0.0, %v2707
      %v2709 = vpop.f32.mrb[0].mxu0
      %v2710 = vpop.f32.mrb[0].mxu0
      %v2711 = vadd.f32 0.0, %v2710
      %v2712 = vpop.f32.mrb[0].mxu0
      %2713 = vmatprep.mubr.bf16.mxu0 0
      %2714 = vmatmul.mubr.bf16.gmra.mrb[0].mxu0 %v2405
      %v2715 = vpop.f32.mrb[0].mxu0
      %v2716 = vadd.f32 0.0, %v2715
      %v2717 = vpop.f32.mrb[0].mxu0
      %v2718 = vpop.f32.mrb[0].mxu0
      %v2719 = vadd.f32 0.0, %v2718
      %v2720 = vpop.f32.mrb[0].mxu0
      %2721 = vmatprep.mubr.bf16.mxu0 0
      %2722 = vmatmul.mubr.bf16.gmra.mrb[0].mxu0 %v2408
      %v2723 = vpop.f32.mrb[0].mxu0
      %v2724 = vadd.f32 0.0, %v2723
      %v2725 = vpop.f32.mrb[0].mxu0
      %v2726 = vpop.f32.mrb[0].mxu0
      %v2727 = vadd.f32 0.0, %v2726
      %v2728 = vpop.f32.mrb[0].mxu0
      %2729 = vmatprep.mubr.bf16.mxu0 0
      %2730 = vmatmul.mubr.bf16.gmra.mrb[0].mxu0 %v2411
      %v2731 = vpop.f32.mrb[0].mxu0
      %v2732 = vadd.f32 0.0, %v2731
      %v2733 = vpop.f32.mrb[0].mxu0
      %v2734 = vpop.f32.mrb[0].mxu0
      %v2735 = vadd.f32 0.0, %v2734
      %v2736 = vpop.f32.mrb[0].mxu0
      %2737 = vmatprep.mubr.bf16.mxu0 0
      %2738 = vmatmul.mubr.bf16.gmra.mrb[0].mxu0 %v2414
      %v2739 = vpop.f32.mrb[0].mxu0
      %v2740 = vadd.f32 0.0, %v2739
      %v2741 = vpop.f32.mrb[0].mxu0
      %v2742 = vpop.f32.mrb[0].mxu0
      %v2743 = vadd.f32 0.0, %v2742
      %v2744 = vpop.f32.mrb[0].mxu0
      %2745 = vmatprep.mubr.bf16.mxu0 0
      %2746 = vmatmul.mubr.bf16.gmra.mrb[0].mxu0 %v2417
      %v2747 = vpop.f32.mrb[0].mxu0
      %v2748 = vadd.f32 0.0, %v2747
      %v2749 = vpop.f32.mrb[0].mxu0
      %v2750 = vpop.f32.mrb[0].mxu0
      %v2751 = vadd.f32 0.0, %v2750
      %v2752 = vpop.f32.mrb[0].mxu0
      %2753 = vmatprep.mubr.bf16.mxu0 0
      %2754 = vmatmul.mubr.bf16.gmra.mrb[0].mxu0 %v2420
      %v2755 = vpop.f32.mrb[0].mxu0
      %v2756 = vadd.f32 0.0, %v2755
      %v2757 = vpop.f32.mrb[0].mxu0
      %v2758 = vpop.f32.mrb[0].mxu0
      %v2759 = vadd.f32 0.0, %v2758
      %v2760 = vpop.f32.mrb[0].mxu0
      %2761 = vmatprep.mubr.bf16.mxu0 0
      %2762 = vmatmul.mubr.bf16.gmra.mrb[0].mxu0 %v2423
      %v2763 = vpop.f32.mrb[0].mxu0
      %v2764 = vadd.f32 0.0, %v2763
      %v2765 = vpop.f32.mrb[0].mxu0
      %v2766 = vpop.f32.mrb[0].mxu0
      %v2767 = vadd.f32 0.0, %v2766
      %v2768 = vpop.f32.mrb[0].mxu0
      %2769 = vmatprep.mubr.bf16.mxu0 0
      %2770 = vmatmul.mubr.bf16.gmra.mrb[0].mxu0 %v2426
      %v2771 = vpop.f32.mrb[0].mxu0
      %v2772 = vadd.f32 0.0, %v2771
      %v2773 = vpop.f32.mrb[0].mxu0
      %v2774 = vpop.f32.mrb[0].mxu0
      %v2775 = vadd.f32 0.0, %v2774
      %v2776 = vpop.f32.mrb[0].mxu0
      %2777 = vmatprep.mubr.bf16.mxu0 0
      %2778 = vmatmul.mubr.bf16.gmra.mrb[0].mxu0 %v2429
      %v2779 = vpop.f32.mrb[0].mxu0
      %v2780 = vadd.f32 0.0, %v2779
      %v2781 = vpop.f32.mrb[0].mxu0
      %v2782 = vpop.f32.mrb[0].mxu0
      %v2783 = vadd.f32 0.0, %v2782
      %v2784 = vpop.f32.mrb[0].mxu0
      %2785 = vmatprep.mubr.bf16.mxu0 0
      %2786 = vmatmul.mubr.bf16.gmra.mrb[0].mxu0 %v2432
      %v2787 = vpop.f32.mrb[0].mxu0
      %v2788 = vadd.f32 0.0, %v2787
      %v2789 = vpop.f32.mrb[0].mxu0
      %v2790 = vpop.f32.mrb[0].mxu0
      %v2791 = vadd.f32 0.0, %v2790
      %v2792 = vpop.f32.mrb[0].mxu0
      %2793 = vmatprep.mubr.bf16.mxu0 0
      %2794 = vmatmul.mubr.bf16.gmra.mrb[0].mxu0 %v2435
      %v2795 = vpop.f32.mrb[0].mxu0
      %v2796 = vadd.f32 0.0, %v2795
      %v2797 = vpop.f32.mrb[0].mxu0
      %v2798 = vpop.f32.mrb[0].mxu0
      %v2799 = vadd.f32 0.0, %v2798
      %v2800 = vpop.f32.mrb[0].mxu0
      %2801 = vmatprep.mubr.bf16.mxu0 0
      %2802 = vmatmul.mubr.bf16.gmra.mrb[0].mxu0 %v2438
      %v2803 = vpop.f32.mrb[0].mxu0
      %v2804 = vadd.f32 0.0, %v2803
      %v2805 = vpop.f32.mrb[0].mxu0
      %v2806 = vpop.f32.mrb[0].mxu0
      %v2807 = vadd.f32 0.0, %v2806
      %v2808 = vpop.f32.mrb[0].mxu0
      %2809 = vmatprep.mubr.bf16.mxu0 0
      %2810 = vmatmul.mubr.bf16.gmra.mrb[0].mxu0 %v2441
      %v2811 = vpop.f32.mrb[0].mxu0
      %v2812 = vadd.f32 0.0, %v2811
      %v2813 = vpop.f32.mrb[0].mxu0
      %v2814 = vpop.f32.mrb[0].mxu0
      %v2815 = vadd.f32 0.0, %v2814
      %v2816 = vpop.f32.mrb[0].mxu0
      %2817 = vmatprep.mubr.bf16.mxu0 0
      %2818 = vmatmul.mubr.bf16.gmra.mrb[0].mxu0 %v2444
      %v2819 = vpop.f32.mrb[0].mxu0
      %v2820 = vadd.f32 0.0, %v2819
      %v2821 = vpop.f32.mrb[0].mxu0
      %v2822 = vpop.f32.mrb[0].mxu0
      %v2823 = vadd.f32 0.0, %v2822
      %v2824 = vpop.f32.mrb[0].mxu0
      %2825 = vmatprep.mubr.bf16.mxu0 0
      %2826 = vmatmul.mubr.bf16.gmra.mrb[0].mxu0 %v2447
      %v2827 = vpop.f32.mrb[0].mxu0
      %v2828 = vadd.f32 0.0, %v2827
      %v2829 = vpop.f32.mrb[0].mxu0
      %v2830 = vpop.f32.mrb[0].mxu0
      %v2831 = vadd.f32 0.0, %v2830
      %v2832 = vpop.f32.mrb[0].mxu0
      %2833 = vmatprep.mubr.bf16.mxu0 0
      %2834 = vmatmul.mubr.bf16.gmra.mrb[0].mxu0 %v2450
      %v2835 = vpop.f32.mrb[0].mxu0
      %v2836 = vadd.f32 0.0, %v2835
      %v2837 = vpop.f32.mrb[0].mxu0
      %v2838 = vpop.f32.mrb[0].mxu0
      %v2839 = vadd.f32 0.0, %v2838
      %v2840 = vpop.f32.mrb[0].mxu0
      %2841 = vmatprep.mubr.bf16.mxu0 0
      %2842 = vmatmul.mubr.bf16.gmra.mrb[0].mxu0 %v2453
      %v2843 = vpop.f32.mrb[0].mxu0
      %v2844 = vadd.f32 0.0, %v2843
      %v2845 = vpop.f32.mrb[0].mxu0
      %v2846 = vpop.f32.mrb[0].mxu0
      %v2847 = vadd.f32 0.0, %v2846
      %v2848 = vpop.f32.mrb[0].mxu0
      %2849 = vmatprep.mubr.bf16.mxu0 0
      %2850 = vmatmul.mubr.bf16.gmra.mrb[0].mxu0 %v2456
      %v2851 = vpop.f32.mrb[0].mxu0
      %v2852 = vadd.f32 0.0, %v2851
      %v2853 = vpop.f32.mrb[0].mxu0
      %v2854 = vpop.f32.mrb[0].mxu0
      %v2855 = vadd.f32 0.0, %v2854
      %v2856 = vpop.f32.mrb[0].mxu0
      %2857 = vmatprep.mubr.bf16.mxu0 0
      %2858 = vmatmul.mubr.bf16.gmra.mrb[0].mxu0 %v2459
      %v2859 = vpop.f32.mrb[0].mxu0
      %v2860 = vadd.f32 0.0, %v2859
      %v2861 = vpop.f32.mrb[0].mxu0
      %v2862 = vpop.f32.mrb[0].mxu0
      %v2863 = vadd.f32 0.0, %v2862
      %v2864 = vpop.f32.mrb[0].mxu0
      %2865 = vmatprep.mubr.bf16.mxu0 0
      %2866 = vmatmul.mubr.bf16.gmra.mrb[0].mxu0 %v2462
      %v2867 = vpop.f32.mrb[0].mxu0
      %v2868 = vadd.f32 0.0, %v2867
      %v2869 = vpop.f32.mrb[0].mxu0
      %v2870 = vpop.f32.mrb[0].mxu0
      %v2871 = vadd.f32 0.0, %v2870
      %v2872 = vpop.f32.mrb[0].mxu0
      %2873 = vmatprep.mubr.bf16.mxu0 0
      %2874 = vmatmul.mubr.bf16.gmra.mrb[0].mxu0 %v2465
      %v2875 = vpop.f32.mrb[0].mxu0
      %v2876 = vadd.f32 0.0, %v2875
      %v2877 = vpop.f32.mrb[0].mxu0
      %v2878 = vpop.f32.mrb[0].mxu0
      %v2879 = vadd.f32 0.0, %v2878
      %v2880 = vpop.f32.mrb[0].mxu0
      %2881 = vmatprep.mubr.bf16.mxu0 0
      %2882 = vmatmul.mubr.bf16.gmra.mrb[0].mxu0 %v2468
      %v2883 = vpop.f32.mrb[0].mxu0
      %v2884 = vadd.f32 0.0, %v2883
      %v2885 = vpop.f32.mrb[0].mxu0
      %v2886 = vpop.f32.mrb[0].mxu0
      %v2887 = vadd.f32 0.0, %v2886
      %v2888 = vpop.f32.mrb[0].mxu0
      %2889 = vmatprep.mubr.bf16.mxu0 0
      %2890 = vmatmul.mubr.bf16.gmra.mrb[0].mxu0 %v2471
      %v2891 = vpop.f32.mrb[0].mxu0
      %v2892 = vadd.f32 0.0, %v2891
      %v2893 = vpop.f32.mrb[0].mxu0
      %v2894 = vpop.f32.mrb[0].mxu0
      %v2895 = vadd.f32 0.0, %v2894
      %v2896 = vpop.f32.mrb[0].mxu0
      %2897 = vmatprep.mubr.bf16.mxu0 0
      %2898 = vmatmul.mubr.bf16.gmra.mrb[0].mxu0 %v2474
      %v2899 = vpop.f32.mrb[0].mxu0
      %v2900 = vadd.f32 0.0, %v2899
      %v2901 = vpop.f32.mrb[0].mxu0
      %v2902 = vpop.f32.mrb[0].mxu0
      %v2903 = vadd.f32 0.0, %v2902
      %v2904 = vpop.f32.mrb[0].mxu0
      %2905 = vmatprep.mubr.bf16.mxu0 0
      %2906 = vmatmul.mubr.bf16.gmra.mrb[0].mxu0 %v2477
      %v2907 = vpop.f32.mrb[0].mxu0
      %v2908 = vadd.f32 0.0, %v2907
      %v2909 = vpop.f32.mrb[0].mxu0
      %v2910 = vpop.f32.mrb[0].mxu0
      %v2911 = vadd.f32 0.0, %v2910
      %v2912 = vpop.f32.mrb[0].mxu0
      %2913 = vmatprep.mubr.bf16.mxu0 0
      %2914 = vmatmul.mubr.bf16.gmra.mrb[0].mxu0 %v2480
      %v2915 = vpop.f32.mrb[0].mxu0
      %v2916 = vadd.f32 0.0, %v2915
      %v2917 = vpop.f32.mrb[0].mxu0
      %v2918 = vpop.f32.mrb[0].mxu0
      %v2919 = vadd.f32 0.0, %v2918
      %v2920 = vpop.f32.mrb[0].mxu0
      %2921 = vmatprep.mubr.bf16.mxu0 0
      %2922 = vmatmul.mubr.bf16.gmra.mrb[0].mxu0 %v2483
      %v2923 = vpop.f32.mrb[0].mxu0
      %v2924 = vadd.f32 0.0, %v2923
      %v2925 = vpop.f32.mrb[0].mxu0
      %v2926 = vpop.f32.mrb[0].mxu0
      %v2927 = vadd.f32 0.0, %v2926
      %v2928 = vpop.f32.mrb[0].mxu0
      %2929 = vmatprep.mubr.bf16.mxu0 0
      %2930 = vmatmul.mubr.bf16.gmra.mrb[0].mxu0 %v2486
      %v2931 = vpop.f32.mrb[0].mxu0
      %v2932 = vadd.f32 0.0, %v2931
      %v2933 = vpop.f32.mrb[0].mxu0
      %v2934 = vpop.f32.mrb[0].mxu0
      %v2935 = vadd.f32 0.0, %v2934
      %v2936 = vpop.f32.mrb[0].mxu0
      %2937 = vmatprep.mubr.bf16.mxu0 0
      %2938 = vmatmul.mubr.bf16.gmra.mrb[0].mxu0 %v2489
      %v2939 = vpop.f32.mrb[0].mxu0
      %v2940 = vadd.f32 0.0, %v2939
      %v2941 = vpop.f32.mrb[0].mxu0
      %v2942 = vpop.f32.mrb[0].mxu0
      %v2943 = vadd.f32 0.0, %v2942
      %v2944 = vpop.f32.mrb[0].mxu0
      %2945 = vmatprep.mubr.bf16.mxu0 0
      %2946 = vmatmul.mubr.bf16.gmra.mrb[0].mxu0 %v2492
      %v2947 = vpop.f32.mrb[0].mxu0
      %v2948 = vadd.f32 0.0, %v2947
      %v2949 = vpop.f32.mrb[0].mxu0
      %v2950 = vpop.f32.mrb[0].mxu0
      %v2951 = vadd.f32 0.0, %v2950
      %v2952 = vpop.f32.mrb[0].mxu0
      %2953 = vmatprep.mubr.bf16.mxu0 0
      %2954 = vmatmul.mubr.bf16.gmra.mrb[0].mxu0 %v2495
      %v2955 = vpop.f32.mrb[0].mxu0
      %v2956 = vadd.f32 0.0, %v2955
      %v2957 = vpop.f32.mrb[0].mxu0
      %v2958 = vpop.f32.mrb[0].mxu0
      %v2959 = vadd.f32 0.0, %v2958
      %v2960 = vpop.f32.mrb[0].mxu0
      %2961 = vmatprep.mubr.bf16.mxu0 0
      %2962 = vmatmul.mubr.bf16.gmra.mrb[0].mxu0 %v2498
      %v2963 = vpop.f32.mrb[0].mxu0
      %v2964 = vadd.f32 0.0, %v2963
      %v2965 = vpop.f32.mrb[0].mxu0
      %v2966 = vpop.f32.mrb[0].mxu0
      %v2967 = vadd.f32 0.0, %v2966
      %v2968 = vpop.f32.mrb[0].mxu0
      %2969 = vmatprep.mubr.bf16.mxu0 0
      %2970 = vmatmul.mubr.bf16.gmra.mrb[0].mxu0 %v2501
      %v2971 = vpop.f32.mrb[0].mxu0
      %v2972 = vadd.f32 0.0, %v2971
      %v2973 = vpop.f32.mrb[0].mxu0
      %v2974 = vpop.f32.mrb[0].mxu0
      %v2975 = vadd.f32 0.0, %v2974
      %v2976 = vpop.f32.mrb[0].mxu0
      %2977 = vmatprep.mubr.bf16.mxu0 0
      %2978 = vmatmul.mubr.bf16.gmra.mrb[0].mxu0 %v2504
      %v2979 = vpop.f32.mrb[0].mxu0
      %v2980 = vadd.f32 0.0, %v2979
      %v2981 = vpop.f32.mrb[0].mxu0
      %v2982 = vpop.f32.mrb[0].mxu0
      %v2983 = vadd.f32 0.0, %v2982
      %v2984 = vpop.f32.mrb[0].mxu0
      %2985 = vmatprep.mubr.bf16.mxu0 0
      %2986 = vmatmul.mubr.bf16.gmra.mrb[0].mxu0 %v2507
      %v2987 = vpop.f32.mrb[0].mxu0
      %v2988 = vadd.f32 0.0, %v2987
      %v2989 = vpop.f32.mrb[0].mxu0
      %v2990 = vpop.f32.mrb[0].mxu0
      %v2991 = vadd.f32 0.0, %v2990
      %v2992 = vpop.f32.mrb[0].mxu0
      %2993 = vmatprep.mubr.bf16.mxu0 0
      %2994 = vmatmul.mubr.bf16.gmra.mrb[0].mxu0 %v2510
      %v2995 = vpop.f32.mrb[0].mxu0
      %v2996 = vadd.f32 0.0, %v2995
      %v2997 = vpop.f32.mrb[0].mxu0
      %v2998 = vpop.f32.mrb[0].mxu0
      %v2999 = vadd.f32 0.0, %v2998
      %v3000 = vpop.f32.mrb[0].mxu0
      %3001 = vmatprep.mubr.bf16.mxu0 0
      %3002 = vmatmul.mubr.bf16.gmra.mrb[0].mxu0 %v2513
      %v3003 = vpop.f32.mrb[0].mxu0
      %v3004 = vadd.f32 0.0, %v3003
      %v3005 = vpop.f32.mrb[0].mxu0
      %v3006 = vpop.f32.mrb[0].mxu0
      %v3007 = vadd.f32 0.0, %v3006
      %v3008 = vpop.f32.mrb[0].mxu0
      %3009 = vmatprep.mubr.bf16.mxu0 0
      %3010 = vmatmul.mubr.bf16.gmra.mrb[0].mxu0 %v2516
      %v3011 = vpop.f32.mrb[0].mxu0
      %v3012 = vadd.f32 0.0, %v3011
      %v3013 = vpop.f32.mrb[0].mxu0
      %v3014 = vpop.f32.mrb[0].mxu0
      %v3015 = vadd.f32 0.0, %v3014
      %v3016 = vpop.f32.mrb[0].mxu0
      %3017 = vmatprep.mubr.bf16.mxu0 0
      %3018 = vmatmul.mubr.bf16.gmra.mrb[0].mxu0 %v2519
      %v3019 = vpop.f32.mrb[0].mxu0
      %v3020 = vadd.f32 0.0, %v3019
      %v3021 = vpop.f32.mrb[0].mxu0
      %v3022 = vpop.f32.mrb[0].mxu0
      %v3023 = vadd.f32 0.0, %v3022
      %v3024 = vpop.f32.mrb[0].mxu0
      %3025 = vmatprep.mubr.bf16.mxu0 0
      %3026 = vmatmul.mubr.bf16.gmra.mrb[0].mxu0 %v2522
      %v3027 = vpop.f32.mrb[0].mxu0
      %v3028 = vadd.f32 0.0, %v3027
      %v3029 = vpop.f32.mrb[0].mxu0
      %v3030 = vpop.f32.mrb[0].mxu0
      %v3031 = vadd.f32 0.0, %v3030
      %v3032 = vpop.f32.mrb[0].mxu0
      %3033 = vmatprep.mubr.bf16.mxu0 0
      %3034 = vmatmul.mubr.bf16.gmra.mrb[0].mxu0 %v2525
      %v3035 = vpop.f32.mrb[0].mxu0
      %v3036 = vadd.f32 0.0, %v3035
      %v3037 = vpop.f32.mrb[0].mxu0
      %v3038 = vpop.f32.mrb[0].mxu0
      %v3039 = vadd.f32 0.0, %v3038
      %v3040 = vpop.f32.mrb[0].mxu0
      %3041 = vmatprep.mubr.bf16.mxu0 0
      %3042 = vmatmul.mubr.bf16.gmra.mrb[0].mxu0 %v2528
      %v3043 = vpop.f32.mrb[0].mxu0
      %v3044 = vadd.f32 0.0, %v3043
      %v3045 = vpop.f32.mrb[0].mxu0
      %v3046 = vpop.f32.mrb[0].mxu0
      %v3047 = vadd.f32 0.0, %v3046
      %v3048 = vpop.f32.mrb[0].mxu0
      %3049 = vmatprep.mubr.bf16.mxu0 0
      %3050 = vmatmul.mubr.bf16.gmra.mrb[0].mxu0 %v2531
      %v3051 = vpop.f32.mrb[0].mxu0
      %v3052 = vadd.f32 0.0, %v3051
      %v3053 = vpop.f32.mrb[0].mxu0
      %v3054 = vpop.f32.mrb[0].mxu0
      %v3055 = vadd.f32 0.0, %v3054
      %v3056 = vpop.f32.mrb[0].mxu0
      %3057 = vmatprep.mubr.bf16.mxu0 0
      %3058 = vmatmul.mubr.bf16.gmra.mrb[0].mxu0 %v2534
      %v3059 = vpop.f32.mrb[0].mxu0
      %v3060 = vadd.f32 0.0, %v3059
      %v3061 = vpop.f32.mrb[0].mxu0
      %v3062 = vpop.f32.mrb[0].mxu0
      %v3063 = vadd.f32 0.0, %v3062
      %v3064 = vpop.f32.mrb[0].mxu0
      %3065 = vmatprep.mubr.bf16.mxu0 0
      %3066 = vmatmul.mubr.bf16.gmra.mrb[0].mxu0 %v2537
      %v3067 = vpop.f32.mrb[0].mxu0
      %v3068 = vadd.f32 0.0, %v3067
      %v3069 = vpop.f32.mrb[0].mxu0
      %v3070 = vpop.f32.mrb[0].mxu0
      %v3071 = vadd.f32 0.0, %v3070
      %v3072 = vpop.f32.mrb[0].mxu0
      %3073 = vmatprep.mubr.bf16.mxu0 0
      %3074 = vmatmul.mubr.bf16.gmra.mrb[0].mxu0 %v2540
      %v3075 = vpop.f32.mrb[0].mxu0
      %v3076 = vadd.f32 0.0, %v3075
      %v3077 = vpop.f32.mrb[0].mxu0
      %v3078 = vpop.f32.mrb[0].mxu0
      %v3079 = vadd.f32 0.0, %v3078
      %v3080 = vpop.f32.mrb[0].mxu0
      %3081 = vmatprep.mubr.bf16.mxu0 0
      %3082 = vmatmul.mubr.bf16.gmra.mrb[0].mxu0 %v2543
      %v3083 = vpop.f32.mrb[0].mxu0
      %v3084 = vadd.f32 0.0, %v3083
      %v3085 = vpop.f32.mrb[0].mxu0
      %v3086 = vpop.f32.mrb[0].mxu0
      %v3087 = vadd.f32 0.0, %v3086
      %v3088 = vpop.f32.mrb[0].mxu0
      %3089 = vmatprep.mubr.bf16.mxu0 0
      %3090 = vmatmul.mubr.bf16.gmra.mrb[0].mxu0 %v2546
      %v3091 = vpop.f32.mrb[0].mxu0
      %v3092 = vadd.f32 0.0, %v3091
      %v3093 = vpop.f32.mrb[0].mxu0
      %v3094 = vpop.f32.mrb[0].mxu0
      %v3095 = vadd.f32 0.0, %v3094
      %v3096 = vpop.f32.mrb[0].mxu0
      %3097 = vmatprep.mubr.bf16.mxu0 0
      %3098 = vmatmul.mubr.bf16.gmra.mrb[0].mxu0 %v2549
      %v3099 = vpop.f32.mrb[0].mxu0
      %v3100 = vadd.f32 0.0, %v3099
      %v3101 = vpop.f32.mrb[0].mxu0
      %v3102 = vpop.f32.mrb[0].mxu0
      %v3103 = vadd.f32 0.0, %v3102
      %v3104 = vpop.f32.mrb[0].mxu0
      %3105 = vmatprep.mubr.bf16.mxu0 0
      %3106 = vmatmul.mubr.bf16.gmra.mrb[0].mxu0 %v2552
      %v3107 = vpop.f32.mrb[0].mxu0
      %v3108 = vadd.f32 0.0, %v3107
      %v3109 = vpop.f32.mrb[0].mxu0
      %v3110 = vpop.f32.mrb[0].mxu0
      %v3111 = vadd.f32 0.0, %v3110
      %v3112 = vpop.f32.mrb[0].mxu0
      %3113 = vmatprep.mubr.bf16.mxu0 0
      %3114 = vmatmul.mubr.bf16.gmra.mrb[0].mxu0 %v2555
      %v3115 = vpop.f32.mrb[0].mxu0
      %v3116 = vadd.f32 0.0, %v3115
      %v3117 = vpop.f32.mrb[0].mxu0
      %v3118 = vpop.f32.mrb[0].mxu0
      %v3119 = vadd.f32 0.0, %v3118
      %v3120 = vpop.f32.mrb[0].mxu0
      %3121 = vmatprep.mubr.bf16.mxu0 0
      %3122 = vmatmul.mubr.bf16.gmra.mrb[0].mxu0 %v2558
      %v3123 = vpop.f32.mrb[0].mxu0
      %v3124 = vadd.f32 0.0, %v3123
      %v3125 = vpop.f32.mrb[0].mxu0
      %v3126 = vpop.f32.mrb[0].mxu0
      %v3127 = vadd.f32 0.0, %v3126
      %v3128 = vpop.f32.mrb[0].mxu0
      %3129 = vmatprep.mubr.bf16.mxu0 0
      %3130 = vmatmul.mubr.bf16.gmra.mrb[0].mxu0 %v2561
      %v3131 = vpop.f32.mrb[0].mxu0
      %v3132 = vadd.f32 0.0, %v3131
      %v3133 = vpop.f32.mrb[0].mxu0
      %v3134 = vpop.f32.mrb[0].mxu0
      %v3135 = vadd.f32 0.0, %v3134
      %v3136 = vpop.f32.mrb[0].mxu0
      %3137 = vmatprep.mubr.bf16.mxu0 0
      %3138 = vmatmul.mubr.bf16.gmra.mrb[0].mxu0 %v2564
      %v3139 = vpop.f32.mrb[0].mxu0
      %v3140 = vadd.f32 0.0, %v3139
      %v3141 = vpop.f32.mrb[0].mxu0
      %v3142 = vpop.f32.mrb[0].mxu0
      %v3143 = vadd.f32 0.0, %v3142
      %v3144 = vpop.f32.mrb[0].mxu0
      %3145 = vdwg.mxu0
      %v3146 = vadd.f32 %v1614, %v2604
      %v3147 = vadd.f32 %v1617, %v2607
      %v3148 = vadd.f32 %v1622, %v2612
      %v3149 = vadd.f32 %v1625, %v2615
      %v3150 = vadd.f32 %v1630, %v2620
      %v3151 = vadd.f32 %v1633, %v2623
      %v3152 = vadd.f32 %v1638, %v2628
      %v3153 = vadd.f32 %v1641, %v2631
      %v3154 = vadd.f32 %v1646, %v2636
      %v3155 = vadd.f32 %v1649, %v2639
      %v3156 = vadd.f32 %v1654, %v2644
      %v3157 = vadd.f32 %v1657, %v2647
      %v3158 = vadd.f32 %v1662, %v2652
      %v3159 = vadd.f32 %v1665, %v2655
      %v3160 = vadd.f32 %v1670, %v2660
      %v3161 = vadd.f32 %v1673, %v2663
      %v3162 = vadd.f32 %v1678, %v2668
      %v3163 = vadd.f32 %v1681, %v2671
      %v3164 = vadd.f32 %v1686, %v2676
      %v3165 = vadd.f32 %v1689, %v2679
      %v3166 = vadd.f32 %v1694, %v2684
      %v3167 = vadd.f32 %v1697, %v2687
      %v3168 = vadd.f32 %v1702, %v2692
      %v3169 = vadd.f32 %v1705, %v2695
      %v3170 = vadd.f32 %v1710, %v2700
      %v3171 = vadd.f32 %v1713, %v2703
      %v3172 = vadd.f32 %v1718, %v2708
      %v3173 = vadd.f32 %v1721, %v2711
      %v3174 = vadd.f32 %v1726, %v2716
      %v3175 = vadd.f32 %v1729, %v2719
      %v3176 = vadd.f32 %v1734, %v2724
      %v3177 = vadd.f32 %v1737, %v2727
      %v3178 = vadd.f32 %v1742, %v2732
      %v3179 = vadd.f32 %v1745, %v2735
      %v3180 = vadd.f32 %v1750, %v2740
      %v3181 = vadd.f32 %v1753, %v2743
      %v3182 = vadd.f32 %v1758, %v2748
      %v3183 = vadd.f32 %v1761, %v2751
      %v3184 = vadd.f32 %v1766, %v2756
      %v3185 = vadd.f32 %v1769, %v2759
      %v3186 = vadd.f32 %v1774, %v2764
      %v3187 = vadd.f32 %v1777, %v2767
      %v3188 = vadd.f32 %v1782, %v2772
      %v3189 = vadd.f32 %v1785, %v2775
      %v3190 = vadd.f32 %v1790, %v2780
      %v3191 = vadd.f32 %v1793, %v2783
      %v3192 = vadd.f32 %v1798, %v2788
      %v3193 = vadd.f32 %v1801, %v2791
      %v3194 = vadd.f32 %v1806, %v2796
      %v3195 = vadd.f32 %v1809, %v2799
      %v3196 = vadd.f32 %v1814, %v2804
      %v3197 = vadd.f32 %v1817, %v2807
      %v3198 = vadd.f32 %v1822, %v2812
      %v3199 = vadd.f32 %v1825, %v2815
      %v3200 = vadd.f32 %v1830, %v2820
      %v3201 = vadd.f32 %v1833, %v2823
      %v3202 = vadd.f32 %v1838, %v2828
      %v3203 = vadd.f32 %v1841, %v2831
      %v3204 = vadd.f32 %v1846, %v2836
      %v3205 = vadd.f32 %v1849, %v2839
      %v3206 = vadd.f32 %v1854, %v2844
      %v3207 = vadd.f32 %v1857, %v2847
      %v3208 = vadd.f32 %v1862, %v2852
      %v3209 = vadd.f32 %v1865, %v2855
      %v3210 = vadd.f32 %v1870, %v2860
      %v3211 = vadd.f32 %v1873, %v2863
      %v3212 = vadd.f32 %v1878, %v2868
      %v3213 = vadd.f32 %v1881, %v2871
      %v3214 = vadd.f32 %v1886, %v2876
      %v3215 = vadd.f32 %v1889, %v2879
      %v3216 = vadd.f32 %v1894, %v2884
      %v3217 = vadd.f32 %v1897, %v2887
      %v3218 = vadd.f32 %v1902, %v2892
      %v3219 = vadd.f32 %v1905, %v2895
      %v3220 = vadd.f32 %v1910, %v2900
      %v3221 = vadd.f32 %v1913, %v2903
      %v3222 = vadd.f32 %v1918, %v2908
      %v3223 = vadd.f32 %v1921, %v2911
      %v3224 = vadd.f32 %v1926, %v2916
      %v3225 = vadd.f32 %v1929, %v2919
      %v3226 = vadd.f32 %v1934, %v2924
      %v3227 = vadd.f32 %v1937, %v2927
      %v3228 = vadd.f32 %v1942, %v2932
      %v3229 = vadd.f32 %v1945, %v2935
      %v3230 = vadd.f32 %v1950, %v2940
      %v3231 = vadd.f32 %v1953, %v2943
      %v3232 = vadd.f32 %v1958, %v2948
      %v3233 = vadd.f32 %v1961, %v2951
      %v3234 = vadd.f32 %v1966, %v2956
      %v3235 = vadd.f32 %v1969, %v2959
      %v3236 = vadd.f32 %v1974, %v2964
      %v3237 = vadd.f32 %v1977, %v2967
      %v3238 = vadd.f32 %v1982, %v2972
      %v3239 = vadd.f32 %v1985, %v2975
      %v3240 = vadd.f32 %v1990, %v2980
      %v3241 = vadd.f32 %v1993, %v2983
      %v3242 = vadd.f32 %v1998, %v2988
      %v3243 = vadd.f32 %v2001, %v2991
      %v3244 = vadd.f32 %v2006, %v2996
      %v3245 = vadd.f32 %v2009, %v2999
      %v3246 = vadd.f32 %v2014, %v3004
      %v3247 = vadd.f32 %v2017, %v3007
      %v3248 = vadd.f32 %v2022, %v3012
      %v3249 = vadd.f32 %v2025, %v3015
      %v3250 = vadd.f32 %v2030, %v3020
      %v3251 = vadd.f32 %v2033, %v3023
      %v3252 = vadd.f32 %v2038, %v3028
      %v3253 = vadd.f32 %v2041, %v3031
      %v3254 = vadd.f32 %v2046, %v3036
      %v3255 = vadd.f32 %v2049, %v3039
      %v3256 = vadd.f32 %v2054, %v3044
      %v3257 = vadd.f32 %v2057, %v3047
      %v3258 = vadd.f32 %v2062, %v3052
      %v3259 = vadd.f32 %v2065, %v3055
      %v3260 = vadd.f32 %v2070, %v3060
      %v3261 = vadd.f32 %v2073, %v3063
      %v3262 = vadd.f32 %v2078, %v3068
      %v3263 = vadd.f32 %v2081, %v3071
      %v3264 = vadd.f32 %v2086, %v3076
      %v3265 = vadd.f32 %v2089, %v3079
      %v3266 = vadd.f32 %v2094, %v3084
      %v3267 = vadd.f32 %v2097, %v3087
      %v3268 = vadd.f32 %v2102, %v3092
      %v3269 = vadd.f32 %v2105, %v3095
      %v3270 = vadd.f32 %v2110, %v3100
      %v3271 = vadd.f32 %v2113, %v3103
      %v3272 = vadd.f32 %v2118, %v3108
      %v3273 = vadd.f32 %v2121, %v3111
      %v3274 = vadd.f32 %v2126, %v3116
      %v3275 = vadd.f32 %v2129, %v3119
      %v3276 = vadd.f32 %v2134, %v3124
      %v3277 = vadd.f32 %v2137, %v3127
      %v3278 = vadd.f32 %v2142, %v3132
      %v3279 = vadd.f32 %v2145, %v3135
      %v3280 = vadd.f32 %v2150, %v3140
      %v3281 = vadd.f32 %v2153, %v3143
      %v3282 = vld [vmem:[%s165 + $0x22] sm:$0xff]
      %v3283 = vld [vmem:[%s165 + $0x2a] sm:$0xff]
      %v3284 = vld [vmem:[%s165 + $0x32] sm:$0xff]
      %v3285 = vld [vmem:[%s165 + $0x3a] sm:$0xff]
      %v3286 = vld [vmem:[%s165 + $0x42] sm:$0xff]
      %v3287 = vld [vmem:[%s165 + $0x4a] sm:$0xff]
      %v3288 = vld [vmem:[%s165 + $0x52] sm:$0xff]
      %v3289 = vld [vmem:[%s165 + $0x5a] sm:$0xff]
      %v3290 = vld [vmem:[%s165 + $0x62] sm:$0xff]
      %v3291 = vld [vmem:[%s165 + $0x6a] sm:$0xff]
      %v3292 = vld [vmem:[%s165 + $0x72] sm:$0xff]
      %v3293 = vld [vmem:[%s165 + $0x7a] sm:$0xff]
      %v3294 = vld [vmem:[%s165 + $0x82] sm:$0xff]
      %v3295 = vld [vmem:[%s165 + $0x8a] sm:$0xff]
      %v3296 = vld [vmem:[%s165 + $0x92] sm:$0xff]
      %v3297 = vld [vmem:[%s165 + $0x9a] sm:$0xff]
      %v3298 = vld [vmem:[%s165 + $0xa2] sm:$0xff]
      %v3299 = vld [vmem:[%s165 + $0xaa] sm:$0xff]
      %v3300 = vld [vmem:[%s165 + $0xb2] sm:$0xff]
      %v3301 = vld [vmem:[%s165 + $0xba] sm:$0xff]
      %v3302 = vld [vmem:[%s165 + $0xc2] sm:$0xff]
      %v3303 = vld [vmem:[%s165 + $0xca] sm:$0xff]
      %v3304 = vld [vmem:[%s165 + $0xd2] sm:$0xff]
      %v3305 = vld [vmem:[%s165 + $0xda] sm:$0xff]
      %v3306 = vld [vmem:[%s165 + $0xe2] sm:$0xff]
      %v3307 = vld [vmem:[%s165 + $0xea] sm:$0xff]
      %v3308 = vld [vmem:[%s165 + $0xf2] sm:$0xff]
      %v3309 = vld [vmem:[%s165 + $0xfa] sm:$0xff]
      %v3310 = vld [vmem:[%s165 + $0x102] sm:$0xff]
      %v3311 = vld [vmem:[%s165 + $0x10a] sm:$0xff]
      %v3312 = vld [vmem:[%s165 + $0x112] sm:$0xff]
      %v3313 = vld [vmem:[%s165 + $0x11a] sm:$0xff]
      %v3314 = vld [vmem:[%s165 + $0x122] sm:$0xff]
      %v3315 = vld [vmem:[%s165 + $0x12a] sm:$0xff]
      %v3316 = vld [vmem:[%s165 + $0x132] sm:$0xff]
      %v3317 = vld [vmem:[%s165 + $0x13a] sm:$0xff]
      %v3318 = vld [vmem:[%s165 + $0x142] sm:$0xff]
      %v3319 = vld [vmem:[%s165 + $0x14a] sm:$0xff]
      %v3320 = vld [vmem:[%s165 + $0x152] sm:$0xff]
      %v3321 = vld [vmem:[%s165 + $0x15a] sm:$0xff]
      %v3322 = vld [vmem:[%s165 + $0x162] sm:$0xff]
      %v3323 = vld [vmem:[%s165 + $0x16a] sm:$0xff]
      %v3324 = vld [vmem:[%s165 + $0x172] sm:$0xff]
      %v3325 = vld [vmem:[%s165 + $0x17a] sm:$0xff]
      %v3326 = vld [vmem:[%s165 + $0x182] sm:$0xff]
      %v3327 = vld [vmem:[%s165 + $0x18a] sm:$0xff]
      %v3328 = vld [vmem:[%s165 + $0x192] sm:$0xff]
      %v3329 = vld [vmem:[%s165 + $0x19a] sm:$0xff]
      %v3330 = vld [vmem:[%s165 + $0x1a2] sm:$0xff]
      %v3331 = vld [vmem:[%s165 + $0x1aa] sm:$0xff]
      %v3332 = vld [vmem:[%s165 + $0x1b2] sm:$0xff]
      %v3333 = vld [vmem:[%s165 + $0x1ba] sm:$0xff]
      %v3334 = vld [vmem:[%s165 + $0x1c2] sm:$0xff]
      %v3335 = vld [vmem:[%s165 + $0x1ca] sm:$0xff]
      %v3336 = vld [vmem:[%s165 + $0x1d2] sm:$0xff]
      %v3337 = vld [vmem:[%s165 + $0x1da] sm:$0xff]
      %v3338 = vld [vmem:[%s165 + $0x1e2] sm:$0xff]
      %v3339 = vld [vmem:[%s165 + $0x1ea] sm:$0xff]
      %v3340 = vld [vmem:[%s165 + $0x1f2] sm:$0xff]
      %v3341 = vld [vmem:[%s165 + $0x1fa] sm:$0xff]
      %v3342 = vld [vmem:[%s165 + $0x202] sm:$0xff]
      %v3343 = vld [vmem:[%s165 + $0x20a] sm:$0xff]
      %v3344 = vld [vmem:[%s165 + $0x212] sm:$0xff]
      %v3345 = vld [vmem:[%s165 + $0x21a] sm:$0xff]
      %v3346 = vld [vmem:[%s165 + $0x222] sm:$0xff]
      %v3347 = vld [vmem:[%s165 + $0x22a] sm:$0xff]
      %v3348 = vld [vmem:[%s165 + $0x232] sm:$0xff]
      %v3349 = vld [vmem:[%s165 + $0x23a] sm:$0xff]
      %v3350 = vld [vmem:[%s165 + $0x242] sm:$0xff]
      %v3351 = vld [vmem:[%s165 + $0x24a] sm:$0xff]
      %v3352 = vld [vmem:[%s165 + $0x252] sm:$0xff]
      %v3353 = vld [vmem:[%s165 + $0x25a] sm:$0xff]
      %v3354 = vld [vmem:[%s165 + $0x262] sm:$0xff]
      %v3355 = vld [vmem:[%s165 + $0x26a] sm:$0xff]
      %v3356 = vld [vmem:[%s165 + $0x272] sm:$0xff]
      %v3357 = vld [vmem:[%s165 + $0x27a] sm:$0xff]
      %v3358 = vld [vmem:[%s165 + $0x282] sm:$0xff]
      %v3359 = vld [vmem:[%s165 + $0x28a] sm:$0xff]
      %v3360 = vld [vmem:[%s165 + $0x292] sm:$0xff]
      %v3361 = vld [vmem:[%s165 + $0x29a] sm:$0xff]
      %v3362 = vld [vmem:[%s165 + $0x2a2] sm:$0xff]
      %v3363 = vld [vmem:[%s165 + $0x2aa] sm:$0xff]
      %v3364 = vld [vmem:[%s165 + $0x2b2] sm:$0xff]
      %v3365 = vld [vmem:[%s165 + $0x2ba] sm:$0xff]
      %v3366 = vld [vmem:[%s165 + $0x2c2] sm:$0xff]
      %v3367 = vld [vmem:[%s165 + $0x2ca] sm:$0xff]
      %v3368 = vld [vmem:[%s165 + $0x2d2] sm:$0xff]
      %v3369 = vld [vmem:[%s165 + $0x2da] sm:$0xff]
      %v3370 = vld [vmem:[%s165 + $0x2e2] sm:$0xff]
      %v3371 = vld [vmem:[%s165 + $0x2ea] sm:$0xff]
      %v3372 = vld [vmem:[%s165 + $0x2f2] sm:$0xff]
      %v3373 = vld [vmem:[%s165 + $0x2fa] sm:$0xff]
      %v3374 = vld [vmem:[%s165 + $0x302] sm:$0xff]
      %v3375 = vld [vmem:[%s165 + $0x30a] sm:$0xff]
      %v3376 = vld [vmem:[%s165 + $0x312] sm:$0xff]
      %v3377 = vld [vmem:[%s165 + $0x31a] sm:$0xff]
      %v3378 = vld [vmem:[%s165 + $0x322] sm:$0xff]
      %v3379 = vld [vmem:[%s165 + $0x32a] sm:$0xff]
      %v3380 = vld [vmem:[%s165 + $0x332] sm:$0xff]
      %v3381 = vld [vmem:[%s165 + $0x33a] sm:$0xff]
      %v3382 = vld [vmem:[%s165 + $0x342] sm:$0xff]
      %v3383 = vld [vmem:[%s165 + $0x34a] sm:$0xff]
      %v3384 = vld [vmem:[%s165 + $0x352] sm:$0xff]
      %v3385 = vld [vmem:[%s165 + $0x35a] sm:$0xff]
      %v3386 = vld [vmem:[%s165 + $0x362] sm:$0xff]
      %v3387 = vld [vmem:[%s165 + $0x36a] sm:$0xff]
      %v3388 = vld [vmem:[%s165 + $0x372] sm:$0xff]
      %v3389 = vld [vmem:[%s165 + $0x37a] sm:$0xff]
      %v3390 = vld [vmem:[%s165 + $0x382] sm:$0xff]
      %v3391 = vld [vmem:[%s165 + $0x38a] sm:$0xff]
      %v3392 = vld [vmem:[%s165 + $0x392] sm:$0xff]
      %v3393 = vld [vmem:[%s165 + $0x39a] sm:$0xff]
      %v3394 = vld [vmem:[%s165 + $0x3a2] sm:$0xff]
      %v3395 = vld [vmem:[%s165 + $0x3aa] sm:$0xff]
      %v3396 = vld [vmem:[%s165 + $0x3b2] sm:$0xff]
      %v3397 = vld [vmem:[%s165 + $0x3ba] sm:$0xff]
      %v3398 = vld [vmem:[%s165 + $0x3c2] sm:$0xff]
      %v3399 = vld [vmem:[%s165 + $0x3ca] sm:$0xff]
      %v3400 = vld [vmem:[%s165 + $0x3d2] sm:$0xff]
      %v3401 = vld [vmem:[%s165 + $0x3da] sm:$0xff]
      %v3402 = vld [vmem:[%s165 + $0x3e2] sm:$0xff]
      %v3403 = vld [vmem:[%s165 + $0x3ea] sm:$0xff]
      %v3404 = vld [vmem:[%s165 + $0x3f2] sm:$0xff]
      %v3405 = vld [vmem:[%s165 + $0x3fa] sm:$0xff]
      %v3406 = vld [vmem:[%s165 + $0x402] sm:$0xff]
      %v3407 = vld [vmem:[%s165 + $0x40a] sm:$0xff]
      %v3408 = vld [vmem:[%s165 + $0x412] sm:$0xff]
      %v3409 = vld [vmem:[%s165 + $0x41a] sm:$0xff]
      %v3410 = vld [vmem:[%s165 + $0x422] sm:$0xff]
      %v3411 = vld [vmem:[%s165 + $0x42a] sm:$0xff]
      %v3412 = vld [vmem:[%s165 + $0x432] sm:$0xff]
      %v3413 = vld [vmem:[%s165 + $0x43a] sm:$0xff]
      %v3414 = vld [vmem:[%s165 + $0x442] sm:$0xff]
      %v3415 = vld [vmem:[%s165 + $0x44a] sm:$0xff]
      %v3416 = vld [vmem:[%s165 + $0x452] sm:$0xff]
      %v3417 = vld [vmem:[%s165 + $0x45a] sm:$0xff]
      %v3418 = vpack.c.bf16 %v3283, %v3282
      %v3419 = vpack.c.bf16 %v3285, %v3284
      %v3420 = vpack.c.bf16 %v3287, %v3286
      %v3421 = vpack.c.bf16 %v3289, %v3288
      %v3422 = vpack.c.bf16 %v3291, %v3290
      %v3423 = vpack.c.bf16 %v3293, %v3292
      %v3424 = vpack.c.bf16 %v3295, %v3294
      %v3425 = vpack.c.bf16 %v3297, %v3296
      %v3426 = vpack.c.bf16 %v3299, %v3298
      %v3427 = vpack.c.bf16 %v3301, %v3300
      %v3428 = vpack.c.bf16 %v3303, %v3302
      %v3429 = vpack.c.bf16 %v3305, %v3304
      %v3430 = vpack.c.bf16 %v3307, %v3306
      %v3431 = vpack.c.bf16 %v3309, %v3308
      %v3432 = vpack.c.bf16 %v3311, %v3310
      %v3433 = vpack.c.bf16 %v3313, %v3312
      %v3434 = vpack.c.bf16 %v3315, %v3314
      %v3435 = vpack.c.bf16 %v3317, %v3316
      %v3436 = vpack.c.bf16 %v3319, %v3318
      %v3437 = vpack.c.bf16 %v3321, %v3320
      %v3438 = vpack.c.bf16 %v3323, %v3322
      %v3439 = vpack.c.bf16 %v3325, %v3324
      %v3440 = vpack.c.bf16 %v3327, %v3326
      %v3441 = vpack.c.bf16 %v3329, %v3328
      %v3442 = vpack.c.bf16 %v3331, %v3330
      %v3443 = vpack.c.bf16 %v3333, %v3332
      %v3444 = vpack.c.bf16 %v3335, %v3334
      %v3445 = vpack.c.bf16 %v3337, %v3336
      %v3446 = vpack.c.bf16 %v3339, %v3338
      %v3447 = vpack.c.bf16 %v3341, %v3340
      %v3448 = vpack.c.bf16 %v3343, %v3342
      %v3449 = vpack.c.bf16 %v3345, %v3344
      %v3450 = vpack.c.bf16 %v3347, %v3346
      %v3451 = vpack.c.bf16 %v3349, %v3348
      %v3452 = vpack.c.bf16 %v3351, %v3350
      %v3453 = vpack.c.bf16 %v3353, %v3352
      %v3454 = vpack.c.bf16 %v3355, %v3354
      %v3455 = vpack.c.bf16 %v3357, %v3356
      %v3456 = vpack.c.bf16 %v3359, %v3358
      %v3457 = vpack.c.bf16 %v3361, %v3360
      %v3458 = vpack.c.bf16 %v3363, %v3362
      %v3459 = vpack.c.bf16 %v3365, %v3364
      %v3460 = vpack.c.bf16 %v3367, %v3366
      %v3461 = vpack.c.bf16 %v3369, %v3368
      %v3462 = vpack.c.bf16 %v3371, %v3370
      %v3463 = vpack.c.bf16 %v3373, %v3372
      %v3464 = vpack.c.bf16 %v3375, %v3374
      %v3465 = vpack.c.bf16 %v3377, %v3376
      %v3466 = vpack.c.bf16 %v3379, %v3378
      %v3467 = vpack.c.bf16 %v3381, %v3380
      %v3468 = vpack.c.bf16 %v3383, %v3382
      %v3469 = vpack.c.bf16 %v3385, %v3384
      %v3470 = vpack.c.bf16 %v3387, %v3386
      %v3471 = vpack.c.bf16 %v3389, %v3388
      %v3472 = vpack.c.bf16 %v3391, %v3390
      %v3473 = vpack.c.bf16 %v3393, %v3392
      %v3474 = vpack.c.bf16 %v3395, %v3394
      %v3475 = vpack.c.bf16 %v3397, %v3396
      %v3476 = vpack.c.bf16 %v3399, %v3398
      %v3477 = vpack.c.bf16 %v3401, %v3400
      %v3478 = vpack.c.bf16 %v3403, %v3402
      %v3479 = vpack.c.bf16 %v3405, %v3404
      %v3480 = vpack.c.bf16 %v3407, %v3406
      %v3481 = vpack.c.bf16 %v3409, %v3408
      %v3482 = vpack.c.bf16 %v3411, %v3410
      %v3483 = vpack.c.bf16 %v3413, %v3412
      %v3484 = vpack.c.bf16 %v3415, %v3414
      %v3485 = vpack.c.bf16 %v3417, %v3416
      %s3486 = scalar_lea.vmem %s1, 6
      %v3487 = vld [vmem:[%s3486] sm:$0x3]
      %v3489 = vsel %vm583, %v3418, 0
      %v3492 = vsel %vm583, %v3419, 0
      %v3495 = vsel %vm583, %v3420, 0
      %v3498 = vsel %vm583, %v3421, 0
      %v3501 = vsel %vm583, %v3422, 0
      %v3504 = vsel %vm583, %v3423, 0
      %v3507 = vsel %vm583, %v3424, 0
      %v3510 = vsel %vm583, %v3425, 0
      %v3513 = vsel %vm583, %v3426, 0
      %v3516 = vsel %vm583, %v3427, 0
      %v3519 = vsel %vm583, %v3428, 0
      %v3522 = vsel %vm583, %v3429, 0
      %v3525 = vsel %vm583, %v3430, 0
      %v3528 = vsel %vm583, %v3431, 0
      %v3531 = vsel %vm583, %v3432, 0
      %v3534 = vsel %vm583, %v3433, 0
      %v3537 = vsel %vm583, %v3434, 0
      %v3540 = vsel %vm583, %v3435, 0
      %v3543 = vsel %vm583, %v3436, 0
      %v3546 = vsel %vm583, %v3437, 0
      %v3549 = vsel %vm583, %v3438, 0
      %v3552 = vsel %vm583, %v3439, 0
      %v3555 = vsel %vm583, %v3440, 0
      %v3558 = vsel %vm583, %v3441, 0
      %v3561 = vsel %vm583, %v3442, 0
      %v3564 = vsel %vm583, %v3443, 0
      %v3567 = vsel %vm583, %v3444, 0
      %v3570 = vsel %vm583, %v3445, 0
      %v3573 = vsel %vm583, %v3446, 0
      %v3576 = vsel %vm583, %v3447, 0
      %v3579 = vsel %vm583, %v3448, 0
      %v3582 = vsel %vm583, %v3449, 0
      %v3585 = vsel %vm583, %v3450, 0
      %v3588 = vsel %vm583, %v3451, 0
      %v3591 = vsel %vm583, %v3452, 0
      %v3594 = vsel %vm583, %v3453, 0
      %v3597 = vsel %vm583, %v3454, 0
      %v3600 = vsel %vm583, %v3455, 0
      %v3603 = vsel %vm583, %v3456, 0
      %v3606 = vsel %vm583, %v3457, 0
      %v3609 = vsel %vm583, %v3458, 0
      %v3612 = vsel %vm583, %v3459, 0
      %v3615 = vsel %vm583, %v3460, 0
      %v3618 = vsel %vm583, %v3461, 0
      %v3621 = vsel %vm583, %v3462, 0
      %v3624 = vsel %vm583, %v3463, 0
      %v3627 = vsel %vm583, %v3464, 0
      %v3630 = vsel %vm583, %v3465, 0
      %v3633 = vsel %vm583, %v3466, 0
      %v3636 = vsel %vm583, %v3467, 0
      %v3639 = vsel %vm583, %v3468, 0
      %v3642 = vsel %vm583, %v3469, 0
      %v3645 = vsel %vm583, %v3470, 0
      %v3648 = vsel %vm583, %v3471, 0
      %v3651 = vsel %vm583, %v3472, 0
      %v3654 = vsel %vm583, %v3473, 0
      %v3657 = vsel %vm583, %v3474, 0
      %v3660 = vsel %vm583, %v3475, 0
      %v3663 = vsel %vm583, %v3476, 0
      %v3666 = vsel %vm583, %v3477, 0
      %v3669 = vsel %vm583, %v3478, 0
      %v3672 = vsel %vm583, %v3479, 0
      %v3675 = vsel %vm583, %v3480, 0
      %v3678 = vsel %vm583, %v3481, 0
      %v3681 = vsel %vm583, %v3482, 0
      %v3684 = vsel %vm583, %v3483, 0
      %v3687 = vsel %vm583, %v3484, 0
      %v3690 = vsel %vm583, %v3485, 0
      %v3693 = vand.u32 %v3487, %v791
      %3695 = vmatprep.subr.bf16.mxu0 0
      %3696 = vmatpush1.bf16.msra.mxu0 %v3693
      %3697 = vmatprep.subr.bf16.mxu0 0
      %3698 = vmatpush1.bf16.msra.mxu0 0
      %3699 = vmatprep.subr.bf16.mxu0 0
      %3700 = vmatpush1.bf16.msra.mxu0 0
      %3701 = vmatprep.subr.bf16.mxu0 0
      %3702 = vmatpush1.bf16.msra.mxu0 0
      %3703 = vmatprep.subr.bf16.mxu0 0
      %3704 = vmatpush1.bf16.msra.mxu0 0
      %3705 = vmatprep.subr.bf16.mxu0 0
      %3706 = vmatpush1.bf16.msra.mxu0 0
      %3707 = vmatprep.subr.bf16.mxu0 0
      %3708 = vmatpush1.bf16.msra.mxu0 0
      %3709 = vmatprep.subr.bf16.mxu0 0
      %3710 = vmatpush1.bf16.msra.mxu0 0
      %3711 = vmatprep.subr.bf16.mxu0 0
      %3712 = vmatpush1.bf16.msra.mxu0 0
      %3713 = vmatprep.subr.bf16.mxu0 0
      %3714 = vmatpush1.bf16.msra.mxu0 0
      %3715 = vmatprep.subr.bf16.mxu0 0
      %3716 = vmatpush1.bf16.msra.mxu0 0
      %3717 = vmatprep.subr.bf16.mxu0 0
      %3718 = vmatpush1.bf16.msra.mxu0 0
      %3719 = vmatprep.subr.bf16.mxu0 0
      %3720 = vmatpush1.bf16.msra.mxu0 0
      %3721 = vmatprep.subr.bf16.mxu0 0
      %3722 = vmatpush1.bf16.msra.mxu0 0
      %3723 = vmatprep.subr.bf16.mxu0 0
      %3724 = vmatpush1.bf16.msra.mxu0 0
      %3725 = vmatprep.subr.bf16.mxu0 0
      %3726 = vmatpush1.bf16.msra.mxu0 0
      %3727 = vmatprep.mubr.bf16.mxu0 0
      %3728 = vmatmul.mubr.bf16.gmra.mrb[0].mxu0 %v3489
      %v3729 = vpop.f32.mrb[0].mxu0
      %v3730 = vadd.f32 0.0, %v3729
      %v3731 = vpop.f32.mrb[0].mxu0
      %v3732 = vpop.f32.mrb[0].mxu0
      %v3733 = vadd.f32 0.0, %v3732
      %v3734 = vpop.f32.mrb[0].mxu0
      %3735 = vmatprep.mubr.bf16.mxu0 0
      %3736 = vmatmul.mubr.bf16.gmra.mrb[0].mxu0 %v3492
      %v3737 = vpop.f32.mrb[0].mxu0
      %v3738 = vadd.f32 0.0, %v3737
      %v3739 = vpop.f32.mrb[0].mxu0
      %v3740 = vpop.f32.mrb[0].mxu0
      %v3741 = vadd.f32 0.0, %v3740
      %v3742 = vpop.f32.mrb[0].mxu0
      %3743 = vmatprep.mubr.bf16.mxu0 0
      %3744 = vmatmul.mubr.bf16.gmra.mrb[0].mxu0 %v3495
      %v3745 = vpop.f32.mrb[0].mxu0
      %v3746 = vadd.f32 0.0, %v3745
      %v3747 = vpop.f32.mrb[0].mxu0
      %v3748 = vpop.f32.mrb[0].mxu0
      %v3749 = vadd.f32 0.0, %v3748
      %v3750 = vpop.f32.mrb[0].mxu0
      %3751 = vmatprep.mubr.bf16.mxu0 0
      %3752 = vmatmul.mubr.bf16.gmra.mrb[0].mxu0 %v3498
      %v3753 = vpop.f32.mrb[0].mxu0
      %v3754 = vadd.f32 0.0, %v3753
      %v3755 = vpop.f32.mrb[0].mxu0
      %v3756 = vpop.f32.mrb[0].mxu0
      %v3757 = vadd.f32 0.0, %v3756
      %v3758 = vpop.f32.mrb[0].mxu0
      %3759 = vmatprep.mubr.bf16.mxu0 0
      %3760 = vmatmul.mubr.bf16.gmra.mrb[0].mxu0 %v3501
      %v3761 = vpop.f32.mrb[0].mxu0
      %v3762 = vadd.f32 0.0, %v3761
      %v3763 = vpop.f32.mrb[0].mxu0
      %v3764 = vpop.f32.mrb[0].mxu0
      %v3765 = vadd.f32 0.0, %v3764
      %v3766 = vpop.f32.mrb[0].mxu0
      %3767 = vmatprep.mubr.bf16.mxu0 0
      %3768 = vmatmul.mubr.bf16.gmra.mrb[0].mxu0 %v3504
      %v3769 = vpop.f32.mrb[0].mxu0
      %v3770 = vadd.f32 0.0, %v3769
      %v3771 = vpop.f32.mrb[0].mxu0
      %v3772 = vpop.f32.mrb[0].mxu0
      %v3773 = vadd.f32 0.0, %v3772
      %v3774 = vpop.f32.mrb[0].mxu0
      %3775 = vmatprep.mubr.bf16.mxu0 0
      %3776 = vmatmul.mubr.bf16.gmra.mrb[0].mxu0 %v3507
      %v3777 = vpop.f32.mrb[0].mxu0
      %v3778 = vadd.f32 0.0, %v3777
      %v3779 = vpop.f32.mrb[0].mxu0
      %v3780 = vpop.f32.mrb[0].mxu0
      %v3781 = vadd.f32 0.0, %v3780
      %v3782 = vpop.f32.mrb[0].mxu0
      %3783 = vmatprep.mubr.bf16.mxu0 0
      %3784 = vmatmul.mubr.bf16.gmra.mrb[0].mxu0 %v3510
      %v3785 = vpop.f32.mrb[0].mxu0
      %v3786 = vadd.f32 0.0, %v3785
      %v3787 = vpop.f32.mrb[0].mxu0
      %v3788 = vpop.f32.mrb[0].mxu0
      %v3789 = vadd.f32 0.0, %v3788
      %v3790 = vpop.f32.mrb[0].mxu0
      %3791 = vmatprep.mubr.bf16.mxu0 0
      %3792 = vmatmul.mubr.bf16.gmra.mrb[0].mxu0 %v3513
      %v3793 = vpop.f32.mrb[0].mxu0
      %v3794 = vadd.f32 0.0, %v3793
      %v3795 = vpop.f32.mrb[0].mxu0
      %v3796 = vpop.f32.mrb[0].mxu0
      %v3797 = vadd.f32 0.0, %v3796
      %v3798 = vpop.f32.mrb[0].mxu0
      %3799 = vmatprep.mubr.bf16.mxu0 0
      %3800 = vmatmul.mubr.bf16.gmra.mrb[0].mxu0 %v3516
      %v3801 = vpop.f32.mrb[0].mxu0
      %v3802 = vadd.f32 0.0, %v3801
      %v3803 = vpop.f32.mrb[0].mxu0
      %v3804 = vpop.f32.mrb[0].mxu0
      %v3805 = vadd.f32 0.0, %v3804
      %v3806 = vpop.f32.mrb[0].mxu0
      %3807 = vmatprep.mubr.bf16.mxu0 0
      %3808 = vmatmul.mubr.bf16.gmra.mrb[0].mxu0 %v3519
      %v3809 = vpop.f32.mrb[0].mxu0
      %v3810 = vadd.f32 0.0, %v3809
      %v3811 = vpop.f32.mrb[0].mxu0
      %v3812 = vpop.f32.mrb[0].mxu0
      %v3813 = vadd.f32 0.0, %v3812
      %v3814 = vpop.f32.mrb[0].mxu0
      %3815 = vmatprep.mubr.bf16.mxu0 0
      %3816 = vmatmul.mubr.bf16.gmra.mrb[0].mxu0 %v3522
      %v3817 = vpop.f32.mrb[0].mxu0
      %v3818 = vadd.f32 0.0, %v3817
      %v3819 = vpop.f32.mrb[0].mxu0
      %v3820 = vpop.f32.mrb[0].mxu0
      %v3821 = vadd.f32 0.0, %v3820
      %v3822 = vpop.f32.mrb[0].mxu0
      %3823 = vmatprep.mubr.bf16.mxu0 0
      %3824 = vmatmul.mubr.bf16.gmra.mrb[0].mxu0 %v3525
      %v3825 = vpop.f32.mrb[0].mxu0
      %v3826 = vadd.f32 0.0, %v3825
      %v3827 = vpop.f32.mrb[0].mxu0
      %v3828 = vpop.f32.mrb[0].mxu0
      %v3829 = vadd.f32 0.0, %v3828
      %v3830 = vpop.f32.mrb[0].mxu0
      %3831 = vmatprep.mubr.bf16.mxu0 0
      %3832 = vmatmul.mubr.bf16.gmra.mrb[0].mxu0 %v3528
      %v3833 = vpop.f32.mrb[0].mxu0
      %v3834 = vadd.f32 0.0, %v3833
      %v3835 = vpop.f32.mrb[0].mxu0
      %v3836 = vpop.f32.mrb[0].mxu0
      %v3837 = vadd.f32 0.0, %v3836
      %v3838 = vpop.f32.mrb[0].mxu0
      %3839 = vmatprep.mubr.bf16.mxu0 0
      %3840 = vmatmul.mubr.bf16.gmra.mrb[0].mxu0 %v3531
      %v3841 = vpop.f32.mrb[0].mxu0
      %v3842 = vadd.f32 0.0, %v3841
      %v3843 = vpop.f32.mrb[0].mxu0
      %v3844 = vpop.f32.mrb[0].mxu0
      %v3845 = vadd.f32 0.0, %v3844
      %v3846 = vpop.f32.mrb[0].mxu0
      %3847 = vmatprep.mubr.bf16.mxu0 0
      %3848 = vmatmul.mubr.bf16.gmra.mrb[0].mxu0 %v3534
      %v3849 = vpop.f32.mrb[0].mxu0
      %v3850 = vadd.f32 0.0, %v3849
      %v3851 = vpop.f32.mrb[0].mxu0
      %v3852 = vpop.f32.mrb[0].mxu0
      %v3853 = vadd.f32 0.0, %v3852
      %v3854 = vpop.f32.mrb[0].mxu0
      %3855 = vmatprep.mubr.bf16.mxu0 0
      %3856 = vmatmul.mubr.bf16.gmra.mrb[0].mxu0 %v3537
      %v3857 = vpop.f32.mrb[0].mxu0
      %v3858 = vadd.f32 0.0, %v3857
      %v3859 = vpop.f32.mrb[0].mxu0
      %v3860 = vpop.f32.mrb[0].mxu0
      %v3861 = vadd.f32 0.0, %v3860
      %v3862 = vpop.f32.mrb[0].mxu0
      %3863 = vmatprep.mubr.bf16.mxu0 0
      %3864 = vmatmul.mubr.bf16.gmra.mrb[0].mxu0 %v3540
      %v3865 = vpop.f32.mrb[0].mxu0
      %v3866 = vadd.f32 0.0, %v3865
      %v3867 = vpop.f32.mrb[0].mxu0
      %v3868 = vpop.f32.mrb[0].mxu0
      %v3869 = vadd.f32 0.0, %v3868
      %v3870 = vpop.f32.mrb[0].mxu0
      %3871 = vmatprep.mubr.bf16.mxu0 0
      %3872 = vmatmul.mubr.bf16.gmra.mrb[0].mxu0 %v3543
      %v3873 = vpop.f32.mrb[0].mxu0
      %v3874 = vadd.f32 0.0, %v3873
      %v3875 = vpop.f32.mrb[0].mxu0
      %v3876 = vpop.f32.mrb[0].mxu0
      %v3877 = vadd.f32 0.0, %v3876
      %v3878 = vpop.f32.mrb[0].mxu0
      %3879 = vmatprep.mubr.bf16.mxu0 0
      %3880 = vmatmul.mubr.bf16.gmra.mrb[0].mxu0 %v3546
      %v3881 = vpop.f32.mrb[0].mxu0
      %v3882 = vadd.f32 0.0, %v3881
      %v3883 = vpop.f32.mrb[0].mxu0
      %v3884 = vpop.f32.mrb[0].mxu0
      %v3885 = vadd.f32 0.0, %v3884
      %v3886 = vpop.f32.mrb[0].mxu0
      %3887 = vmatprep.mubr.bf16.mxu0 0
      %3888 = vmatmul.mubr.bf16.gmra.mrb[0].mxu0 %v3549
      %v3889 = vpop.f32.mrb[0].mxu0
      %v3890 = vadd.f32 0.0, %v3889
      %v3891 = vpop.f32.mrb[0].mxu0
      %v3892 = vpop.f32.mrb[0].mxu0
      %v3893 = vadd.f32 0.0, %v3892
      %v3894 = vpop.f32.mrb[0].mxu0
      %3895 = vmatprep.mubr.bf16.mxu0 0
      %3896 = vmatmul.mubr.bf16.gmra.mrb[0].mxu0 %v3552
      %v3897 = vpop.f32.mrb[0].mxu0
      %v3898 = vadd.f32 0.0, %v3897
      %v3899 = vpop.f32.mrb[0].mxu0
      %v3900 = vpop.f32.mrb[0].mxu0
      %v3901 = vadd.f32 0.0, %v3900
      %v3902 = vpop.f32.mrb[0].mxu0
      %3903 = vmatprep.mubr.bf16.mxu0 0
      %3904 = vmatmul.mubr.bf16.gmra.mrb[0].mxu0 %v3555
      %v3905 = vpop.f32.mrb[0].mxu0
      %v3906 = vadd.f32 0.0, %v3905
      %v3907 = vpop.f32.mrb[0].mxu0
      %v3908 = vpop.f32.mrb[0].mxu0
      %v3909 = vadd.f32 0.0, %v3908
      %v3910 = vpop.f32.mrb[0].mxu0
      %3911 = vmatprep.mubr.bf16.mxu0 0
      %3912 = vmatmul.mubr.bf16.gmra.mrb[0].mxu0 %v3558
      %v3913 = vpop.f32.mrb[0].mxu0
      %v3914 = vadd.f32 0.0, %v3913
      %v3915 = vpop.f32.mrb[0].mxu0
      %v3916 = vpop.f32.mrb[0].mxu0
      %v3917 = vadd.f32 0.0, %v3916
      %v3918 = vpop.f32.mrb[0].mxu0
      %3919 = vmatprep.mubr.bf16.mxu0 0
      %3920 = vmatmul.mubr.bf16.gmra.mrb[0].mxu0 %v3561
      %v3921 = vpop.f32.mrb[0].mxu0
      %v3922 = vadd.f32 0.0, %v3921
      %v3923 = vpop.f32.mrb[0].mxu0
      %v3924 = vpop.f32.mrb[0].mxu0
      %v3925 = vadd.f32 0.0, %v3924
      %v3926 = vpop.f32.mrb[0].mxu0
      %3927 = vmatprep.mubr.bf16.mxu0 0
      %3928 = vmatmul.mubr.bf16.gmra.mrb[0].mxu0 %v3564
      %v3929 = vpop.f32.mrb[0].mxu0
      %v3930 = vadd.f32 0.0, %v3929
      %v3931 = vpop.f32.mrb[0].mxu0
      %v3932 = vpop.f32.mrb[0].mxu0
      %v3933 = vadd.f32 0.0, %v3932
      %v3934 = vpop.f32.mrb[0].mxu0
      %3935 = vmatprep.mubr.bf16.mxu0 0
      %3936 = vmatmul.mubr.bf16.gmra.mrb[0].mxu0 %v3567
      %v3937 = vpop.f32.mrb[0].mxu0
      %v3938 = vadd.f32 0.0, %v3937
      %v3939 = vpop.f32.mrb[0].mxu0
      %v3940 = vpop.f32.mrb[0].mxu0
      %v3941 = vadd.f32 0.0, %v3940
      %v3942 = vpop.f32.mrb[0].mxu0
      %3943 = vmatprep.mubr.bf16.mxu0 0
      %3944 = vmatmul.mubr.bf16.gmra.mrb[0].mxu0 %v3570
      %v3945 = vpop.f32.mrb[0].mxu0
      %v3946 = vadd.f32 0.0, %v3945
      %v3947 = vpop.f32.mrb[0].mxu0
      %v3948 = vpop.f32.mrb[0].mxu0
      %v3949 = vadd.f32 0.0, %v3948
      %v3950 = vpop.f32.mrb[0].mxu0
      %3951 = vmatprep.mubr.bf16.mxu0 0
      %3952 = vmatmul.mubr.bf16.gmra.mrb[0].mxu0 %v3573
      %v3953 = vpop.f32.mrb[0].mxu0
      %v3954 = vadd.f32 0.0, %v3953
      %v3955 = vpop.f32.mrb[0].mxu0
      %v3956 = vpop.f32.mrb[0].mxu0
      %v3957 = vadd.f32 0.0, %v3956
      %v3958 = vpop.f32.mrb[0].mxu0
      %3959 = vmatprep.mubr.bf16.mxu0 0
      %3960 = vmatmul.mubr.bf16.gmra.mrb[0].mxu0 %v3576
      %v3961 = vpop.f32.mrb[0].mxu0
      %v3962 = vadd.f32 0.0, %v3961
      %v3963 = vpop.f32.mrb[0].mxu0
      %v3964 = vpop.f32.mrb[0].mxu0
      %v3965 = vadd.f32 0.0, %v3964
      %v3966 = vpop.f32.mrb[0].mxu0
      %3967 = vmatprep.mubr.bf16.mxu0 0
      %3968 = vmatmul.mubr.bf16.gmra.mrb[0].mxu0 %v3579
      %v3969 = vpop.f32.mrb[0].mxu0
      %v3970 = vadd.f32 0.0, %v3969
      %v3971 = vpop.f32.mrb[0].mxu0
      %v3972 = vpop.f32.mrb[0].mxu0
      %v3973 = vadd.f32 0.0, %v3972
      %v3974 = vpop.f32.mrb[0].mxu0
      %3975 = vmatprep.mubr.bf16.mxu0 0
      %3976 = vmatmul.mubr.bf16.gmra.mrb[0].mxu0 %v3582
      %v3977 = vpop.f32.mrb[0].mxu0
      %v3978 = vadd.f32 0.0, %v3977
      %v3979 = vpop.f32.mrb[0].mxu0
      %v3980 = vpop.f32.mrb[0].mxu0
      %v3981 = vadd.f32 0.0, %v3980
      %v3982 = vpop.f32.mrb[0].mxu0
      %3983 = vmatprep.mubr.bf16.mxu0 0
      %3984 = vmatmul.mubr.bf16.gmra.mrb[0].mxu0 %v3585
      %v3985 = vpop.f32.mrb[0].mxu0
      %v3986 = vadd.f32 0.0, %v3985
      %v3987 = vpop.f32.mrb[0].mxu0
      %v3988 = vpop.f32.mrb[0].mxu0
      %v3989 = vadd.f32 0.0, %v3988
      %v3990 = vpop.f32.mrb[0].mxu0
      %3991 = vmatprep.mubr.bf16.mxu0 0
      %3992 = vmatmul.mubr.bf16.gmra.mrb[0].mxu0 %v3588
      %v3993 = vpop.f32.mrb[0].mxu0
      %v3994 = vadd.f32 0.0, %v3993
      %v3995 = vpop.f32.mrb[0].mxu0
      %v3996 = vpop.f32.mrb[0].mxu0
      %v3997 = vadd.f32 0.0, %v3996
      %v3998 = vpop.f32.mrb[0].mxu0
      %3999 = vmatprep.mubr.bf16.mxu0 0
      %4000 = vmatmul.mubr.bf16.gmra.mrb[0].mxu0 %v3591
      %v4001 = vpop.f32.mrb[0].mxu0
      %v4002 = vadd.f32 0.0, %v4001
      %v4003 = vpop.f32.mrb[0].mxu0
      %v4004 = vpop.f32.mrb[0].mxu0
      %v4005 = vadd.f32 0.0, %v4004
      %v4006 = vpop.f32.mrb[0].mxu0
      %4007 = vmatprep.mubr.bf16.mxu0 0
      %4008 = vmatmul.mubr.bf16.gmra.mrb[0].mxu0 %v3594
      %v4009 = vpop.f32.mrb[0].mxu0
      %v4010 = vadd.f32 0.0, %v4009
      %v4011 = vpop.f32.mrb[0].mxu0
      %v4012 = vpop.f32.mrb[0].mxu0
      %v4013 = vadd.f32 0.0, %v4012
      %v4014 = vpop.f32.mrb[0].mxu0
      %4015 = vmatprep.mubr.bf16.mxu0 0
      %4016 = vmatmul.mubr.bf16.gmra.mrb[0].mxu0 %v3597
      %v4017 = vpop.f32.mrb[0].mxu0
      %v4018 = vadd.f32 0.0, %v4017
      %v4019 = vpop.f32.mrb[0].mxu0
      %v4020 = vpop.f32.mrb[0].mxu0
      %v4021 = vadd.f32 0.0, %v4020
      %v4022 = vpop.f32.mrb[0].mxu0
      %4023 = vmatprep.mubr.bf16.mxu0 0
      %4024 = vmatmul.mubr.bf16.gmra.mrb[0].mxu0 %v3600
      %v4025 = vpop.f32.mrb[0].mxu0
      %v4026 = vadd.f32 0.0, %v4025
      %v4027 = vpop.f32.mrb[0].mxu0
      %v4028 = vpop.f32.mrb[0].mxu0
      %v4029 = vadd.f32 0.0, %v4028
      %v4030 = vpop.f32.mrb[0].mxu0
      %4031 = vmatprep.mubr.bf16.mxu0 0
      %4032 = vmatmul.mubr.bf16.gmra.mrb[0].mxu0 %v3603
      %v4033 = vpop.f32.mrb[0].mxu0
      %v4034 = vadd.f32 0.0, %v4033
      %v4035 = vpop.f32.mrb[0].mxu0
      %v4036 = vpop.f32.mrb[0].mxu0
      %v4037 = vadd.f32 0.0, %v4036
      %v4038 = vpop.f32.mrb[0].mxu0
      %4039 = vmatprep.mubr.bf16.mxu0 0
      %4040 = vmatmul.mubr.bf16.gmra.mrb[0].mxu0 %v3606
      %v4041 = vpop.f32.mrb[0].mxu0
      %v4042 = vadd.f32 0.0, %v4041
      %v4043 = vpop.f32.mrb[0].mxu0
      %v4044 = vpop.f32.mrb[0].mxu0
      %v4045 = vadd.f32 0.0, %v4044
      %v4046 = vpop.f32.mrb[0].mxu0
      %4047 = vmatprep.mubr.bf16.mxu0 0
      %4048 = vmatmul.mubr.bf16.gmra.mrb[0].mxu0 %v3609
      %v4049 = vpop.f32.mrb[0].mxu0
      %v4050 = vadd.f32 0.0, %v4049
      %v4051 = vpop.f32.mrb[0].mxu0
      %v4052 = vpop.f32.mrb[0].mxu0
      %v4053 = vadd.f32 0.0, %v4052
      %v4054 = vpop.f32.mrb[0].mxu0
      %4055 = vmatprep.mubr.bf16.mxu0 0
      %4056 = vmatmul.mubr.bf16.gmra.mrb[0].mxu0 %v3612
      %v4057 = vpop.f32.mrb[0].mxu0
      %v4058 = vadd.f32 0.0, %v4057
      %v4059 = vpop.f32.mrb[0].mxu0
      %v4060 = vpop.f32.mrb[0].mxu0
      %v4061 = vadd.f32 0.0, %v4060
      %v4062 = vpop.f32.mrb[0].mxu0
      %4063 = vmatprep.mubr.bf16.mxu0 0
      %4064 = vmatmul.mubr.bf16.gmra.mrb[0].mxu0 %v3615
      %v4065 = vpop.f32.mrb[0].mxu0
      %v4066 = vadd.f32 0.0, %v4065
      %v4067 = vpop.f32.mrb[0].mxu0
      %v4068 = vpop.f32.mrb[0].mxu0
      %v4069 = vadd.f32 0.0, %v4068
      %v4070 = vpop.f32.mrb[0].mxu0
      %4071 = vmatprep.mubr.bf16.mxu0 0
      %4072 = vmatmul.mubr.bf16.gmra.mrb[0].mxu0 %v3618
      %v4073 = vpop.f32.mrb[0].mxu0
      %v4074 = vadd.f32 0.0, %v4073
      %v4075 = vpop.f32.mrb[0].mxu0
      %v4076 = vpop.f32.mrb[0].mxu0
      %v4077 = vadd.f32 0.0, %v4076
      %v4078 = vpop.f32.mrb[0].mxu0
      %4079 = vmatprep.mubr.bf16.mxu0 0
      %4080 = vmatmul.mubr.bf16.gmra.mrb[0].mxu0 %v3621
      %v4081 = vpop.f32.mrb[0].mxu0
      %v4082 = vadd.f32 0.0, %v4081
      %v4083 = vpop.f32.mrb[0].mxu0
      %v4084 = vpop.f32.mrb[0].mxu0
      %v4085 = vadd.f32 0.0, %v4084
      %v4086 = vpop.f32.mrb[0].mxu0
      %4087 = vmatprep.mubr.bf16.mxu0 0
      %4088 = vmatmul.mubr.bf16.gmra.mrb[0].mxu0 %v3624
      %v4089 = vpop.f32.mrb[0].mxu0
      %v4090 = vadd.f32 0.0, %v4089
      %v4091 = vpop.f32.mrb[0].mxu0
      %v4092 = vpop.f32.mrb[0].mxu0
      %v4093 = vadd.f32 0.0, %v4092
      %v4094 = vpop.f32.mrb[0].mxu0
      %4095 = vmatprep.mubr.bf16.mxu0 0
      %4096 = vmatmul.mubr.bf16.gmra.mrb[0].mxu0 %v3627
      %v4097 = vpop.f32.mrb[0].mxu0
      %v4098 = vadd.f32 0.0, %v4097
      %v4099 = vpop.f32.mrb[0].mxu0
      %v4100 = vpop.f32.mrb[0].mxu0
      %v4101 = vadd.f32 0.0, %v4100
      %v4102 = vpop.f32.mrb[0].mxu0
      %4103 = vmatprep.mubr.bf16.mxu0 0
      %4104 = vmatmul.mubr.bf16.gmra.mrb[0].mxu0 %v3630
      %v4105 = vpop.f32.mrb[0].mxu0
      %v4106 = vadd.f32 0.0, %v4105
      %v4107 = vpop.f32.mrb[0].mxu0
      %v4108 = vpop.f32.mrb[0].mxu0
      %v4109 = vadd.f32 0.0, %v4108
      %v4110 = vpop.f32.mrb[0].mxu0
      %4111 = vmatprep.mubr.bf16.mxu0 0
      %4112 = vmatmul.mubr.bf16.gmra.mrb[0].mxu0 %v3633
      %v4113 = vpop.f32.mrb[0].mxu0
      %v4114 = vadd.f32 0.0, %v4113
      %v4115 = vpop.f32.mrb[0].mxu0
      %v4116 = vpop.f32.mrb[0].mxu0
      %v4117 = vadd.f32 0.0, %v4116
      %v4118 = vpop.f32.mrb[0].mxu0
      %4119 = vmatprep.mubr.bf16.mxu0 0
      %4120 = vmatmul.mubr.bf16.gmra.mrb[0].mxu0 %v3636
      %v4121 = vpop.f32.mrb[0].mxu0
      %v4122 = vadd.f32 0.0, %v4121
      %v4123 = vpop.f32.mrb[0].mxu0
      %v4124 = vpop.f32.mrb[0].mxu0
      %v4125 = vadd.f32 0.0, %v4124
      %v4126 = vpop.f32.mrb[0].mxu0
      %4127 = vmatprep.mubr.bf16.mxu0 0
      %4128 = vmatmul.mubr.bf16.gmra.mrb[0].mxu0 %v3639
      %v4129 = vpop.f32.mrb[0].mxu0
      %v4130 = vadd.f32 0.0, %v4129
      %v4131 = vpop.f32.mrb[0].mxu0
      %v4132 = vpop.f32.mrb[0].mxu0
      %v4133 = vadd.f32 0.0, %v4132
      %v4134 = vpop.f32.mrb[0].mxu0
      %4135 = vmatprep.mubr.bf16.mxu0 0
      %4136 = vmatmul.mubr.bf16.gmra.mrb[0].mxu0 %v3642
      %v4137 = vpop.f32.mrb[0].mxu0
      %v4138 = vadd.f32 0.0, %v4137
      %v4139 = vpop.f32.mrb[0].mxu0
      %v4140 = vpop.f32.mrb[0].mxu0
      %v4141 = vadd.f32 0.0, %v4140
      %v4142 = vpop.f32.mrb[0].mxu0
      %4143 = vmatprep.mubr.bf16.mxu0 0
      %4144 = vmatmul.mubr.bf16.gmra.mrb[0].mxu0 %v3645
      %v4145 = vpop.f32.mrb[0].mxu0
      %v4146 = vadd.f32 0.0, %v4145
      %v4147 = vpop.f32.mrb[0].mxu0
      %v4148 = vpop.f32.mrb[0].mxu0
      %v4149 = vadd.f32 0.0, %v4148
      %v4150 = vpop.f32.mrb[0].mxu0
      %4151 = vmatprep.mubr.bf16.mxu0 0
      %4152 = vmatmul.mubr.bf16.gmra.mrb[0].mxu0 %v3648
      %v4153 = vpop.f32.mrb[0].mxu0
      %v4154 = vadd.f32 0.0, %v4153
      %v4155 = vpop.f32.mrb[0].mxu0
      %v4156 = vpop.f32.mrb[0].mxu0
      %v4157 = vadd.f32 0.0, %v4156
      %v4158 = vpop.f32.mrb[0].mxu0
      %4159 = vmatprep.mubr.bf16.mxu0 0
      %4160 = vmatmul.mubr.bf16.gmra.mrb[0].mxu0 %v3651
      %v4161 = vpop.f32.mrb[0].mxu0
      %v4162 = vadd.f32 0.0, %v4161
      %v4163 = vpop.f32.mrb[0].mxu0
      %v4164 = vpop.f32.mrb[0].mxu0
      %v4165 = vadd.f32 0.0, %v4164
      %v4166 = vpop.f32.mrb[0].mxu0
      %4167 = vmatprep.mubr.bf16.mxu0 0
      %4168 = vmatmul.mubr.bf16.gmra.mrb[0].mxu0 %v3654
      %v4169 = vpop.f32.mrb[0].mxu0
      %v4170 = vadd.f32 0.0, %v4169
      %v4171 = vpop.f32.mrb[0].mxu0
      %v4172 = vpop.f32.mrb[0].mxu0
      %v4173 = vadd.f32 0.0, %v4172
      %v4174 = vpop.f32.mrb[0].mxu0
      %4175 = vmatprep.mubr.bf16.mxu0 0
      %4176 = vmatmul.mubr.bf16.gmra.mrb[0].mxu0 %v3657
      %v4177 = vpop.f32.mrb[0].mxu0
      %v4178 = vadd.f32 0.0, %v4177
      %v4179 = vpop.f32.mrb[0].mxu0
      %v4180 = vpop.f32.mrb[0].mxu0
      %v4181 = vadd.f32 0.0, %v4180
      %v4182 = vpop.f32.mrb[0].mxu0
      %4183 = vmatprep.mubr.bf16.mxu0 0
      %4184 = vmatmul.mubr.bf16.gmra.mrb[0].mxu0 %v3660
      %v4185 = vpop.f32.mrb[0].mxu0
      %v4186 = vadd.f32 0.0, %v4185
      %v4187 = vpop.f32.mrb[0].mxu0
      %v4188 = vpop.f32.mrb[0].mxu0
      %v4189 = vadd.f32 0.0, %v4188
      %v4190 = vpop.f32.mrb[0].mxu0
      %4191 = vmatprep.mubr.bf16.mxu0 0
      %4192 = vmatmul.mubr.bf16.gmra.mrb[0].mxu0 %v3663
      %v4193 = vpop.f32.mrb[0].mxu0
      %v4194 = vadd.f32 0.0, %v4193
      %v4195 = vpop.f32.mrb[0].mxu0
      %v4196 = vpop.f32.mrb[0].mxu0
      %v4197 = vadd.f32 0.0, %v4196
      %v4198 = vpop.f32.mrb[0].mxu0
      %4199 = vmatprep.mubr.bf16.mxu0 0
      %4200 = vmatmul.mubr.bf16.gmra.mrb[0].mxu0 %v3666
      %v4201 = vpop.f32.mrb[0].mxu0
      %v4202 = vadd.f32 0.0, %v4201
      %v4203 = vpop.f32.mrb[0].mxu0
      %v4204 = vpop.f32.mrb[0].mxu0
      %v4205 = vadd.f32 0.0, %v4204
      %v4206 = vpop.f32.mrb[0].mxu0
      %4207 = vmatprep.mubr.bf16.mxu0 0
      %4208 = vmatmul.mubr.bf16.gmra.mrb[0].mxu0 %v3669
      %v4209 = vpop.f32.mrb[0].mxu0
      %v4210 = vadd.f32 0.0, %v4209
      %v4211 = vpop.f32.mrb[0].mxu0
      %v4212 = vpop.f32.mrb[0].mxu0
      %v4213 = vadd.f32 0.0, %v4212
      %v4214 = vpop.f32.mrb[0].mxu0
      %4215 = vmatprep.mubr.bf16.mxu0 0
      %4216 = vmatmul.mubr.bf16.gmra.mrb[0].mxu0 %v3672
      %v4217 = vpop.f32.mrb[0].mxu0
      %v4218 = vadd.f32 0.0, %v4217
      %v4219 = vpop.f32.mrb[0].mxu0
      %v4220 = vpop.f32.mrb[0].mxu0
      %v4221 = vadd.f32 0.0, %v4220
      %v4222 = vpop.f32.mrb[0].mxu0
      %4223 = vmatprep.mubr.bf16.mxu0 0
      %4224 = vmatmul.mubr.bf16.gmra.mrb[0].mxu0 %v3675
      %v4225 = vpop.f32.mrb[0].mxu0
      %v4226 = vadd.f32 0.0, %v4225
      %v4227 = vpop.f32.mrb[0].mxu0
      %v4228 = vpop.f32.mrb[0].mxu0
      %v4229 = vadd.f32 0.0, %v4228
      %v4230 = vpop.f32.mrb[0].mxu0
      %4231 = vmatprep.mubr.bf16.mxu0 0
      %4232 = vmatmul.mubr.bf16.gmra.mrb[0].mxu0 %v3678
      %v4233 = vpop.f32.mrb[0].mxu0
      %v4234 = vadd.f32 0.0, %v4233
      %v4235 = vpop.f32.mrb[0].mxu0
      %v4236 = vpop.f32.mrb[0].mxu0
      %v4237 = vadd.f32 0.0, %v4236
      %v4238 = vpop.f32.mrb[0].mxu0
      %4239 = vmatprep.mubr.bf16.mxu0 0
      %4240 = vmatmul.mubr.bf16.gmra.mrb[0].mxu0 %v3681
      %v4241 = vpop.f32.mrb[0].mxu0
      %v4242 = vadd.f32 0.0, %v4241
      %v4243 = vpop.f32.mrb[0].mxu0
      %v4244 = vpop.f32.mrb[0].mxu0
      %v4245 = vadd.f32 0.0, %v4244
      %v4246 = vpop.f32.mrb[0].mxu0
      %4247 = vmatprep.mubr.bf16.mxu0 0
      %4248 = vmatmul.mubr.bf16.gmra.mrb[0].mxu0 %v3684
      %v4249 = vpop.f32.mrb[0].mxu0
      %v4250 = vadd.f32 0.0, %v4249
      %v4251 = vpop.f32.mrb[0].mxu0
      %v4252 = vpop.f32.mrb[0].mxu0
      %v4253 = vadd.f32 0.0, %v4252
      %v4254 = vpop.f32.mrb[0].mxu0
      %4255 = vmatprep.mubr.bf16.mxu0 0
      %4256 = vmatmul.mubr.bf16.gmra.mrb[0].mxu0 %v3687
      %v4257 = vpop.f32.mrb[0].mxu0
      %v4258 = vadd.f32 0.0, %v4257
      %v4259 = vpop.f32.mrb[0].mxu0
      %v4260 = vpop.f32.mrb[0].mxu0
      %v4261 = vadd.f32 0.0, %v4260
      %v4262 = vpop.f32.mrb[0].mxu0
      %4263 = vmatprep.mubr.bf16.mxu0 0
      %4264 = vmatmul.mubr.bf16.gmra.mrb[0].mxu0 %v3690
      %v4265 = vpop.f32.mrb[0].mxu0
      %v4266 = vadd.f32 0.0, %v4265
      %v4267 = vpop.f32.mrb[0].mxu0
      %v4268 = vpop.f32.mrb[0].mxu0
      %v4269 = vadd.f32 0.0, %v4268
      %v4270 = vpop.f32.mrb[0].mxu0
      %4271 = vdwg.mxu0
      %v4272 = vadd.f32 %v3146, %v3730
      %v4273 = vadd.f32 %v3147, %v3733
      %v4274 = vadd.f32 %v3148, %v3738
      %v4275 = vadd.f32 %v3149, %v3741
      %v4276 = vadd.f32 %v3150, %v3746
      %v4277 = vadd.f32 %v3151, %v3749
      %v4278 = vadd.f32 %v3152, %v3754
      %v4279 = vadd.f32 %v3153, %v3757
      %v4280 = vadd.f32 %v3154, %v3762
      %v4281 = vadd.f32 %v3155, %v3765
      %v4282 = vadd.f32 %v3156, %v3770
      %v4283 = vadd.f32 %v3157, %v3773
      %v4284 = vadd.f32 %v3158, %v3778
      %v4285 = vadd.f32 %v3159, %v3781
      %v4286 = vadd.f32 %v3160, %v3786
      %v4287 = vadd.f32 %v3161, %v3789
      %v4288 = vadd.f32 %v3162, %v3794
      %v4289 = vadd.f32 %v3163, %v3797
      %v4290 = vadd.f32 %v3164, %v3802
      %v4291 = vadd.f32 %v3165, %v3805
      %v4292 = vadd.f32 %v3166, %v3810
      %v4293 = vadd.f32 %v3167, %v3813
      %v4294 = vadd.f32 %v3168, %v3818
      %v4295 = vadd.f32 %v3169, %v3821
      %v4296 = vadd.f32 %v3170, %v3826
      %v4297 = vadd.f32 %v3171, %v3829
      %v4298 = vadd.f32 %v3172, %v3834
      %v4299 = vadd.f32 %v3173, %v3837
      %v4300 = vadd.f32 %v3174, %v3842
      %v4301 = vadd.f32 %v3175, %v3845
      %v4302 = vadd.f32 %v3176, %v3850
      %v4303 = vadd.f32 %v3177, %v3853
      %v4304 = vadd.f32 %v3178, %v3858
      %v4305 = vadd.f32 %v3179, %v3861
      %v4306 = vadd.f32 %v3180, %v3866
      %v4307 = vadd.f32 %v3181, %v3869
      %v4308 = vadd.f32 %v3182, %v3874
      %v4309 = vadd.f32 %v3183, %v3877
      %v4310 = vadd.f32 %v3184, %v3882
      %v4311 = vadd.f32 %v3185, %v3885
      %v4312 = vadd.f32 %v3186, %v3890
      %v4313 = vadd.f32 %v3187, %v3893
      %v4314 = vadd.f32 %v3188, %v3898
      %v4315 = vadd.f32 %v3189, %v3901
      %v4316 = vadd.f32 %v3190, %v3906
      %v4317 = vadd.f32 %v3191, %v3909
      %v4318 = vadd.f32 %v3192, %v3914
      %v4319 = vadd.f32 %v3193, %v3917
      %v4320 = vadd.f32 %v3194, %v3922
      %v4321 = vadd.f32 %v3195, %v3925
      %v4322 = vadd.f32 %v3196, %v3930
      %v4323 = vadd.f32 %v3197, %v3933
      %v4324 = vadd.f32 %v3198, %v3938
      %v4325 = vadd.f32 %v3199, %v3941
      %v4326 = vadd.f32 %v3200, %v3946
      %v4327 = vadd.f32 %v3201, %v3949
      %v4328 = vadd.f32 %v3202, %v3954
      %v4329 = vadd.f32 %v3203, %v3957
      %v4330 = vadd.f32 %v3204, %v3962
      %v4331 = vadd.f32 %v3205, %v3965
      %v4332 = vadd.f32 %v3206, %v3970
      %v4333 = vadd.f32 %v3207, %v3973
      %v4334 = vadd.f32 %v3208, %v3978
      %v4335 = vadd.f32 %v3209, %v3981
      %v4336 = vadd.f32 %v3210, %v3986
      %v4337 = vadd.f32 %v3211, %v3989
      %v4338 = vadd.f32 %v3212, %v3994
      %v4339 = vadd.f32 %v3213, %v3997
      %v4340 = vadd.f32 %v3214, %v4002
      %v4341 = vadd.f32 %v3215, %v4005
      %v4342 = vadd.f32 %v3216, %v4010
      %v4343 = vadd.f32 %v3217, %v4013
      %v4344 = vadd.f32 %v3218, %v4018
      %v4345 = vadd.f32 %v3219, %v4021
      %v4346 = vadd.f32 %v3220, %v4026
      %v4347 = vadd.f32 %v3221, %v4029
      %v4348 = vadd.f32 %v3222, %v4034
      %v4349 = vadd.f32 %v3223, %v4037
      %v4350 = vadd.f32 %v3224, %v4042
      %v4351 = vadd.f32 %v3225, %v4045
      %v4352 = vadd.f32 %v3226, %v4050
      %v4353 = vadd.f32 %v3227, %v4053
      %v4354 = vadd.f32 %v3228, %v4058
      %v4355 = vadd.f32 %v3229, %v4061
      %v4356 = vadd.f32 %v3230, %v4066
      %v4357 = vadd.f32 %v3231, %v4069
      %v4358 = vadd.f32 %v3232, %v4074
      %v4359 = vadd.f32 %v3233, %v4077
      %v4360 = vadd.f32 %v3234, %v4082
      %v4361 = vadd.f32 %v3235, %v4085
      %v4362 = vadd.f32 %v3236, %v4090
      %v4363 = vadd.f32 %v3237, %v4093
      %v4364 = vadd.f32 %v3238, %v4098
      %v4365 = vadd.f32 %v3239, %v4101
      %v4366 = vadd.f32 %v3240, %v4106
      %v4367 = vadd.f32 %v3241, %v4109
      %v4368 = vadd.f32 %v3242, %v4114
      %v4369 = vadd.f32 %v3243, %v4117
      %v4370 = vadd.f32 %v3244, %v4122
      %v4371 = vadd.f32 %v3245, %v4125
      %v4372 = vadd.f32 %v3246, %v4130
      %v4373 = vadd.f32 %v3247, %v4133
      %v4374 = vadd.f32 %v3248, %v4138
      %v4375 = vadd.f32 %v3249, %v4141
      %v4376 = vadd.f32 %v3250, %v4146
      %v4377 = vadd.f32 %v3251, %v4149
      %v4378 = vadd.f32 %v3252, %v4154
      %v4379 = vadd.f32 %v3253, %v4157
      %v4380 = vadd.f32 %v3254, %v4162
      %v4381 = vadd.f32 %v3255, %v4165
      %v4382 = vadd.f32 %v3256, %v4170
      %v4383 = vadd.f32 %v3257, %v4173
      %v4384 = vadd.f32 %v3258, %v4178
      %v4385 = vadd.f32 %v3259, %v4181
      %v4386 = vadd.f32 %v3260, %v4186
      %v4387 = vadd.f32 %v3261, %v4189
      %v4388 = vadd.f32 %v3262, %v4194
      %v4389 = vadd.f32 %v3263, %v4197
      %v4390 = vadd.f32 %v3264, %v4202
      %v4391 = vadd.f32 %v3265, %v4205
      %v4392 = vadd.f32 %v3266, %v4210
      %v4393 = vadd.f32 %v3267, %v4213
      %v4394 = vadd.f32 %v3268, %v4218
      %v4395 = vadd.f32 %v3269, %v4221
      %v4396 = vadd.f32 %v3270, %v4226
      %v4397 = vadd.f32 %v3271, %v4229
      %v4398 = vadd.f32 %v3272, %v4234
      %v4399 = vadd.f32 %v3273, %v4237
      %v4400 = vadd.f32 %v3274, %v4242
      %v4401 = vadd.f32 %v3275, %v4245
      %v4402 = vadd.f32 %v3276, %v4250
      %v4403 = vadd.f32 %v3277, %v4253
      %v4404 = vadd.f32 %v3278, %v4258
      %v4405 = vadd.f32 %v3279, %v4261
      %v4406 = vadd.f32 %v3280, %v4266
      %v4407 = vadd.f32 %v3281, %v4269
      %v4408 = vld [vmem:[%s165 + $0x23] sm:$0xff]
      %v4409 = vld [vmem:[%s165 + $0x2b] sm:$0xff]
      %v4410 = vld [vmem:[%s165 + $0x33] sm:$0xff]
      %v4411 = vld [vmem:[%s165 + $0x3b] sm:$0xff]
      %v4412 = vld [vmem:[%s165 + $0x43] sm:$0xff]
      %v4413 = vld [vmem:[%s165 + $0x4b] sm:$0xff]
      %v4414 = vld [vmem:[%s165 + $0x53] sm:$0xff]
      %v4415 = vld [vmem:[%s165 + $0x5b] sm:$0xff]
      %v4416 = vld [vmem:[%s165 + $0x63] sm:$0xff]
      %v4417 = vld [vmem:[%s165 + $0x6b] sm:$0xff]
      %v4418 = vld [vmem:[%s165 + $0x73] sm:$0xff]
      %v4419 = vld [vmem:[%s165 + $0x7b] sm:$0xff]
      %v4420 = vld [vmem:[%s165 + $0x83] sm:$0xff]
      %v4421 = vld [vmem:[%s165 + $0x8b] sm:$0xff]
      %v4422 = vld [vmem:[%s165 + $0x93] sm:$0xff]
      %v4423 = vld [vmem:[%s165 + $0x9b] sm:$0xff]
      %v4424 = vld [vmem:[%s165 + $0xa3] sm:$0xff]
      %v4425 = vld [vmem:[%s165 + $0xab] sm:$0xff]
      %v4426 = vld [vmem:[%s165 + $0xb3] sm:$0xff]
      %v4427 = vld [vmem:[%s165 + $0xbb] sm:$0xff]
      %v4428 = vld [vmem:[%s165 + $0xc3] sm:$0xff]
      %v4429 = vld [vmem:[%s165 + $0xcb] sm:$0xff]
      %v4430 = vld [vmem:[%s165 + $0xd3] sm:$0xff]
      %v4431 = vld [vmem:[%s165 + $0xdb] sm:$0xff]
      %v4432 = vld [vmem:[%s165 + $0xe3] sm:$0xff]
      %v4433 = vld [vmem:[%s165 + $0xeb] sm:$0xff]
      %v4434 = vld [vmem:[%s165 + $0xf3] sm:$0xff]
      %v4435 = vld [vmem:[%s165 + $0xfb] sm:$0xff]
      %v4436 = vld [vmem:[%s165 + $0x103] sm:$0xff]
      %v4437 = vld [vmem:[%s165 + $0x10b] sm:$0xff]
      %v4438 = vld [vmem:[%s165 + $0x113] sm:$0xff]
      %v4439 = vld [vmem:[%s165 + $0x11b] sm:$0xff]
      %v4440 = vld [vmem:[%s165 + $0x123] sm:$0xff]
      %v4441 = vld [vmem:[%s165 + $0x12b] sm:$0xff]
      %v4442 = vld [vmem:[%s165 + $0x133] sm:$0xff]
      %v4443 = vld [vmem:[%s165 + $0x13b] sm:$0xff]
      %v4444 = vld [vmem:[%s165 + $0x143] sm:$0xff]
      %v4445 = vld [vmem:[%s165 + $0x14b] sm:$0xff]
      %v4446 = vld [vmem:[%s165 + $0x153] sm:$0xff]
      %v4447 = vld [vmem:[%s165 + $0x15b] sm:$0xff]
      %v4448 = vld [vmem:[%s165 + $0x163] sm:$0xff]
      %v4449 = vld [vmem:[%s165 + $0x16b] sm:$0xff]
      %v4450 = vld [vmem:[%s165 + $0x173] sm:$0xff]
      %v4451 = vld [vmem:[%s165 + $0x17b] sm:$0xff]
      %v4452 = vld [vmem:[%s165 + $0x183] sm:$0xff]
      %v4453 = vld [vmem:[%s165 + $0x18b] sm:$0xff]
      %v4454 = vld [vmem:[%s165 + $0x193] sm:$0xff]
      %v4455 = vld [vmem:[%s165 + $0x19b] sm:$0xff]
      %v4456 = vld [vmem:[%s165 + $0x1a3] sm:$0xff]
      %v4457 = vld [vmem:[%s165 + $0x1ab] sm:$0xff]
      %v4458 = vld [vmem:[%s165 + $0x1b3] sm:$0xff]
      %v4459 = vld [vmem:[%s165 + $0x1bb] sm:$0xff]
      %v4460 = vld [vmem:[%s165 + $0x1c3] sm:$0xff]
      %v4461 = vld [vmem:[%s165 + $0x1cb] sm:$0xff]
      %v4462 = vld [vmem:[%s165 + $0x1d3] sm:$0xff]
      %v4463 = vld [vmem:[%s165 + $0x1db] sm:$0xff]
      %v4464 = vld [vmem:[%s165 + $0x1e3] sm:$0xff]
      %v4465 = vld [vmem:[%s165 + $0x1eb] sm:$0xff]
      %v4466 = vld [vmem:[%s165 + $0x1f3] sm:$0xff]
      %v4467 = vld [vmem:[%s165 + $0x1fb] sm:$0xff]
      %v4468 = vld [vmem:[%s165 + $0x203] sm:$0xff]
      %v4469 = vld [vmem:[%s165 + $0x20b] sm:$0xff]
      %v4470 = vld [vmem:[%s165 + $0x213] sm:$0xff]
      %v4471 = vld [vmem:[%s165 + $0x21b] sm:$0xff]
      %v4472 = vld [vmem:[%s165 + $0x223] sm:$0xff]
      %v4473 = vld [vmem:[%s165 + $0x22b] sm:$0xff]
      %v4474 = vld [vmem:[%s165 + $0x233] sm:$0xff]
      %v4475 = vld [vmem:[%s165 + $0x23b] sm:$0xff]
      %v4476 = vld [vmem:[%s165 + $0x243] sm:$0xff]
      %v4477 = vld [vmem:[%s165 + $0x24b] sm:$0xff]
      %v4478 = vld [vmem:[%s165 + $0x253] sm:$0xff]
      %v4479 = vld [vmem:[%s165 + $0x25b] sm:$0xff]
      %v4480 = vld [vmem:[%s165 + $0x263] sm:$0xff]
      %v4481 = vld [vmem:[%s165 + $0x26b] sm:$0xff]
      %v4482 = vld [vmem:[%s165 + $0x273] sm:$0xff]
      %v4483 = vld [vmem:[%s165 + $0x27b] sm:$0xff]
      %v4484 = vld [vmem:[%s165 + $0x283] sm:$0xff]
      %v4485 = vld [vmem:[%s165 + $0x28b] sm:$0xff]
      %v4486 = vld [vmem:[%s165 + $0x293] sm:$0xff]
      %v4487 = vld [vmem:[%s165 + $0x29b] sm:$0xff]
      %v4488 = vld [vmem:[%s165 + $0x2a3] sm:$0xff]
      %v4489 = vld [vmem:[%s165 + $0x2ab] sm:$0xff]
      %v4490 = vld [vmem:[%s165 + $0x2b3] sm:$0xff]
      %v4491 = vld [vmem:[%s165 + $0x2bb] sm:$0xff]
      %v4492 = vld [vmem:[%s165 + $0x2c3] sm:$0xff]
      %v4493 = vld [vmem:[%s165 + $0x2cb] sm:$0xff]
      %v4494 = vld [vmem:[%s165 + $0x2d3] sm:$0xff]
      %v4495 = vld [vmem:[%s165 + $0x2db] sm:$0xff]
      %v4496 = vld [vmem:[%s165 + $0x2e3] sm:$0xff]
      %v4497 = vld [vmem:[%s165 + $0x2eb] sm:$0xff]
      %v4498 = vld [vmem:[%s165 + $0x2f3] sm:$0xff]
      %v4499 = vld [vmem:[%s165 + $0x2fb] sm:$0xff]
      %v4500 = vld [vmem:[%s165 + $0x303] sm:$0xff]
      %v4501 = vld [vmem:[%s165 + $0x30b] sm:$0xff]
      %v4502 = vld [vmem:[%s165 + $0x313] sm:$0xff]
      %v4503 = vld [vmem:[%s165 + $0x31b] sm:$0xff]
      %v4504 = vld [vmem:[%s165 + $0x323] sm:$0xff]
      %v4505 = vld [vmem:[%s165 + $0x32b] sm:$0xff]
      %v4506 = vld [vmem:[%s165 + $0x333] sm:$0xff]
      %v4507 = vld [vmem:[%s165 + $0x33b] sm:$0xff]
      %v4508 = vld [vmem:[%s165 + $0x343] sm:$0xff]
      %v4509 = vld [vmem:[%s165 + $0x34b] sm:$0xff]
      %v4510 = vld [vmem:[%s165 + $0x353] sm:$0xff]
      %v4511 = vld [vmem:[%s165 + $0x35b] sm:$0xff]
      %v4512 = vld [vmem:[%s165 + $0x363] sm:$0xff]
      %v4513 = vld [vmem:[%s165 + $0x36b] sm:$0xff]
      %v4514 = vld [vmem:[%s165 + $0x373] sm:$0xff]
      %v4515 = vld [vmem:[%s165 + $0x37b] sm:$0xff]
      %v4516 = vld [vmem:[%s165 + $0x383] sm:$0xff]
      %v4517 = vld [vmem:[%s165 + $0x38b] sm:$0xff]
      %v4518 = vld [vmem:[%s165 + $0x393] sm:$0xff]
      %v4519 = vld [vmem:[%s165 + $0x39b] sm:$0xff]
      %v4520 = vld [vmem:[%s165 + $0x3a3] sm:$0xff]
      %v4521 = vld [vmem:[%s165 + $0x3ab] sm:$0xff]
      %v4522 = vld [vmem:[%s165 + $0x3b3] sm:$0xff]
      %v4523 = vld [vmem:[%s165 + $0x3bb] sm:$0xff]
      %v4524 = vld [vmem:[%s165 + $0x3c3] sm:$0xff]
      %v4525 = vld [vmem:[%s165 + $0x3cb] sm:$0xff]
      %v4526 = vld [vmem:[%s165 + $0x3d3] sm:$0xff]
      %v4527 = vld [vmem:[%s165 + $0x3db] sm:$0xff]
      %v4528 = vld [vmem:[%s165 + $0x3e3] sm:$0xff]
      %v4529 = vld [vmem:[%s165 + $0x3eb] sm:$0xff]
      %v4530 = vld [vmem:[%s165 + $0x3f3] sm:$0xff]
      %v4531 = vld [vmem:[%s165 + $0x3fb] sm:$0xff]
      %v4532 = vld [vmem:[%s165 + $0x403] sm:$0xff]
      %v4533 = vld [vmem:[%s165 + $0x40b] sm:$0xff]
      %v4534 = vld [vmem:[%s165 + $0x413] sm:$0xff]
      %v4535 = vld [vmem:[%s165 + $0x41b] sm:$0xff]
      %v4536 = vld [vmem:[%s165 + $0x423] sm:$0xff]
      %v4537 = vld [vmem:[%s165 + $0x42b] sm:$0xff]
      %v4538 = vld [vmem:[%s165 + $0x433] sm:$0xff]
      %v4539 = vld [vmem:[%s165 + $0x43b] sm:$0xff]
      %v4540 = vld [vmem:[%s165 + $0x443] sm:$0xff]
      %v4541 = vld [vmem:[%s165 + $0x44b] sm:$0xff]
      %v4542 = vld [vmem:[%s165 + $0x453] sm:$0xff]
      %v4543 = vld [vmem:[%s165 + $0x45b] sm:$0xff]
      %v4544 = vpack.c.bf16 %v4409, %v4408
      %v4545 = vpack.c.bf16 %v4411, %v4410
      %v4546 = vpack.c.bf16 %v4413, %v4412
      %v4547 = vpack.c.bf16 %v4415, %v4414
      %v4548 = vpack.c.bf16 %v4417, %v4416
      %v4549 = vpack.c.bf16 %v4419, %v4418
      %v4550 = vpack.c.bf16 %v4421, %v4420
      %v4551 = vpack.c.bf16 %v4423, %v4422
      %v4552 = vpack.c.bf16 %v4425, %v4424
      %v4553 = vpack.c.bf16 %v4427, %v4426
      %v4554 = vpack.c.bf16 %v4429, %v4428
      %v4555 = vpack.c.bf16 %v4431, %v4430
      %v4556 = vpack.c.bf16 %v4433, %v4432
      %v4557 = vpack.c.bf16 %v4435, %v4434
      %v4558 = vpack.c.bf16 %v4437, %v4436
      %v4559 = vpack.c.bf16 %v4439, %v4438
      %v4560 = vpack.c.bf16 %v4441, %v4440
      %v4561 = vpack.c.bf16 %v4443, %v4442
      %v4562 = vpack.c.bf16 %v4445, %v4444
      %v4563 = vpack.c.bf16 %v4447, %v4446
      %v4564 = vpack.c.bf16 %v4449, %v4448
      %v4565 = vpack.c.bf16 %v4451, %v4450
      %v4566 = vpack.c.bf16 %v4453, %v4452
      %v4567 = vpack.c.bf16 %v4455, %v4454
      %v4568 = vpack.c.bf16 %v4457, %v4456
      %v4569 = vpack.c.bf16 %v4459, %v4458
      %v4570 = vpack.c.bf16 %v4461, %v4460
      %v4571 = vpack.c.bf16 %v4463, %v4462
      %v4572 = vpack.c.bf16 %v4465, %v4464
      %v4573 = vpack.c.bf16 %v4467, %v4466
      %v4574 = vpack.c.bf16 %v4469, %v4468
      %v4575 = vpack.c.bf16 %v4471, %v4470
      %v4576 = vpack.c.bf16 %v4473, %v4472
      %v4577 = vpack.c.bf16 %v4475, %v4474
      %v4578 = vpack.c.bf16 %v4477, %v4476
      %v4579 = vpack.c.bf16 %v4479, %v4478
      %v4580 = vpack.c.bf16 %v4481, %v4480
      %v4581 = vpack.c.bf16 %v4483, %v4482
      %v4582 = vpack.c.bf16 %v4485, %v4484
      %v4583 = vpack.c.bf16 %v4487, %v4486
      %v4584 = vpack.c.bf16 %v4489, %v4488
      %v4585 = vpack.c.bf16 %v4491, %v4490
      %v4586 = vpack.c.bf16 %v4493, %v4492
      %v4587 = vpack.c.bf16 %v4495, %v4494
      %v4588 = vpack.c.bf16 %v4497, %v4496
      %v4589 = vpack.c.bf16 %v4499, %v4498
      %v4590 = vpack.c.bf16 %v4501, %v4500
      %v4591 = vpack.c.bf16 %v4503, %v4502
      %v4592 = vpack.c.bf16 %v4505, %v4504
      %v4593 = vpack.c.bf16 %v4507, %v4506
      %v4594 = vpack.c.bf16 %v4509, %v4508
      %v4595 = vpack.c.bf16 %v4511, %v4510
      %v4596 = vpack.c.bf16 %v4513, %v4512
      %v4597 = vpack.c.bf16 %v4515, %v4514
      %v4598 = vpack.c.bf16 %v4517, %v4516
      %v4599 = vpack.c.bf16 %v4519, %v4518
      %v4600 = vpack.c.bf16 %v4521, %v4520
      %v4601 = vpack.c.bf16 %v4523, %v4522
      %v4602 = vpack.c.bf16 %v4525, %v4524
      %v4603 = vpack.c.bf16 %v4527, %v4526
      %v4604 = vpack.c.bf16 %v4529, %v4528
      %v4605 = vpack.c.bf16 %v4531, %v4530
      %v4606 = vpack.c.bf16 %v4533, %v4532
      %v4607 = vpack.c.bf16 %v4535, %v4534
      %v4608 = vpack.c.bf16 %v4537, %v4536
      %v4609 = vpack.c.bf16 %v4539, %v4538
      %v4610 = vpack.c.bf16 %v4541, %v4540
      %v4611 = vpack.c.bf16 %v4543, %v4542
      %s4612 = scalar_lea.vmem %s1, 8
      %v4613 = vld [vmem:[%s4612] sm:$0x3]
      %v4615 = vsel %vm583, %v4544, 0
      %v4618 = vsel %vm583, %v4545, 0
      %v4621 = vsel %vm583, %v4546, 0
      %v4624 = vsel %vm583, %v4547, 0
      %v4627 = vsel %vm583, %v4548, 0
      %v4630 = vsel %vm583, %v4549, 0
      %v4633 = vsel %vm583, %v4550, 0
      %v4636 = vsel %vm583, %v4551, 0
      %v4639 = vsel %vm583, %v4552, 0
      %v4642 = vsel %vm583, %v4553, 0
      %v4645 = vsel %vm583, %v4554, 0
      %v4648 = vsel %vm583, %v4555, 0
      %v4651 = vsel %vm583, %v4556, 0
      %v4654 = vsel %vm583, %v4557, 0
      %v4657 = vsel %vm583, %v4558, 0
      %v4660 = vsel %vm583, %v4559, 0
      %v4663 = vsel %vm583, %v4560, 0
      %v4666 = vsel %vm583, %v4561, 0
      %v4669 = vsel %vm583, %v4562, 0
      %v4672 = vsel %vm583, %v4563, 0
      %v4675 = vsel %vm583, %v4564, 0
      %v4678 = vsel %vm583, %v4565, 0
      %v4681 = vsel %vm583, %v4566, 0
      %v4684 = vsel %vm583, %v4567, 0
      %v4687 = vsel %vm583, %v4568, 0
      %v4690 = vsel %vm583, %v4569, 0
      %v4693 = vsel %vm583, %v4570, 0
      %v4696 = vsel %vm583, %v4571, 0
      %v4699 = vsel %vm583, %v4572, 0
      %v4702 = vsel %vm583, %v4573, 0
      %v4705 = vsel %vm583, %v4574, 0
      %v4708 = vsel %vm583, %v4575, 0
      %v4711 = vsel %vm583, %v4576, 0
      %v4714 = vsel %vm583, %v4577, 0
      %v4717 = vsel %vm583, %v4578, 0
      %v4720 = vsel %vm583, %v4579, 0
      %v4723 = vsel %vm583, %v4580, 0
      %v4726 = vsel %vm583, %v4581, 0
      %v4729 = vsel %vm583, %v4582, 0
      %v4732 = vsel %vm583, %v4583, 0
      %v4735 = vsel %vm583, %v4584, 0
      %v4738 = vsel %vm583, %v4585, 0
      %v4741 = vsel %vm583, %v4586, 0
      %v4744 = vsel %vm583, %v4587, 0
      %v4747 = vsel %vm583, %v4588, 0
      %v4750 = vsel %vm583, %v4589, 0
      %v4753 = vsel %vm583, %v4590, 0
      %v4756 = vsel %vm583, %v4591, 0
      %v4759 = vsel %vm583, %v4592, 0
      %v4762 = vsel %vm583, %v4593, 0
      %v4765 = vsel %vm583, %v4594, 0
      %v4768 = vsel %vm583, %v4595, 0
      %v4771 = vsel %vm583, %v4596, 0
      %v4774 = vsel %vm583, %v4597, 0
      %v4777 = vsel %vm583, %v4598, 0
      %v4780 = vsel %vm583, %v4599, 0
      %v4783 = vsel %vm583, %v4600, 0
      %v4786 = vsel %vm583, %v4601, 0
      %v4789 = vsel %vm583, %v4602, 0
      %v4792 = vsel %vm583, %v4603, 0
      %v4795 = vsel %vm583, %v4604, 0
      %v4798 = vsel %vm583, %v4605, 0
      %v4801 = vsel %vm583, %v4606, 0
      %v4804 = vsel %vm583, %v4607, 0
      %v4807 = vsel %vm583, %v4608, 0
      %v4810 = vsel %vm583, %v4609, 0
      %v4813 = vsel %vm583, %v4610, 0
      %v4816 = vsel %vm583, %v4611, 0
      %v4819 = vand.u32 %v4613, %v791
      %4821 = vmatprep.subr.bf16.mxu0 0
      %4822 = vmatpush1.bf16.msra.mxu0 %v4819
      %4823 = vmatprep.subr.bf16.mxu0 0
      %4824 = vmatpush1.bf16.msra.mxu0 0
      %4825 = vmatprep.subr.bf16.mxu0 0
      %4826 = vmatpush1.bf16.msra.mxu0 0
      %4827 = vmatprep.subr.bf16.mxu0 0
      %4828 = vmatpush1.bf16.msra.mxu0 0
      %4829 = vmatprep.subr.bf16.mxu0 0
      %4830 = vmatpush1.bf16.msra.mxu0 0
      %4831 = vmatprep.subr.bf16.mxu0 0
      %4832 = vmatpush1.bf16.msra.mxu0 0
      %4833 = vmatprep.subr.bf16.mxu0 0
      %4834 = vmatpush1.bf16.msra.mxu0 0
      %4835 = vmatprep.subr.bf16.mxu0 0
      %4836 = vmatpush1.bf16.msra.mxu0 0
      %4837 = vmatprep.subr.bf16.mxu0 0
      %4838 = vmatpush1.bf16.msra.mxu0 0
      %4839 = vmatprep.subr.bf16.mxu0 0
      %4840 = vmatpush1.bf16.msra.mxu0 0
      %4841 = vmatprep.subr.bf16.mxu0 0
      %4842 = vmatpush1.bf16.msra.mxu0 0
      %4843 = vmatprep.subr.bf16.mxu0 0
      %4844 = vmatpush1.bf16.msra.mxu0 0
      %4845 = vmatprep.subr.bf16.mxu0 0
      %4846 = vmatpush1.bf16.msra.mxu0 0
      %4847 = vmatprep.subr.bf16.mxu0 0
      %4848 = vmatpush1.bf16.msra.mxu0 0
      %4849 = vmatprep.subr.bf16.mxu0 0
      %4850 = vmatpush1.bf16.msra.mxu0 0
      %4851 = vmatprep.subr.bf16.mxu0 0
      %4852 = vmatpush1.bf16.msra.mxu0 0
      %4853 = vmatprep.mubr.bf16.mxu0 0
      %4854 = vmatmul.mubr.bf16.gmra.mrb[0].mxu0 %v4615
      %v4855 = vpop.f32.mrb[0].mxu0
      %v4856 = vadd.f32 0.0, %v4855
      %v4857 = vpop.f32.mrb[0].mxu0
      %v4858 = vpop.f32.mrb[0].mxu0
      %v4859 = vadd.f32 0.0, %v4858
      %v4860 = vpop.f32.mrb[0].mxu0
      %4861 = vmatprep.mubr.bf16.mxu0 0
      %4862 = vmatmul.mubr.bf16.gmra.mrb[0].mxu0 %v4618
      %v4863 = vpop.f32.mrb[0].mxu0
      %v4864 = vadd.f32 0.0, %v4863
      %v4865 = vpop.f32.mrb[0].mxu0
      %v4866 = vpop.f32.mrb[0].mxu0
      %v4867 = vadd.f32 0.0, %v4866
      %v4868 = vpop.f32.mrb[0].mxu0
      %4869 = vmatprep.mubr.bf16.mxu0 0
      %4870 = vmatmul.mubr.bf16.gmra.mrb[0].mxu0 %v4621
      %v4871 = vpop.f32.mrb[0].mxu0
      %v4872 = vadd.f32 0.0, %v4871
      %v4873 = vpop.f32.mrb[0].mxu0
      %v4874 = vpop.f32.mrb[0].mxu0
      %v4875 = vadd.f32 0.0, %v4874
      %v4876 = vpop.f32.mrb[0].mxu0
      %4877 = vmatprep.mubr.bf16.mxu0 0
      %4878 = vmatmul.mubr.bf16.gmra.mrb[0].mxu0 %v4624
      %v4879 = vpop.f32.mrb[0].mxu0
      %v4880 = vadd.f32 0.0, %v4879
      %v4881 = vpop.f32.mrb[0].mxu0
      %v4882 = vpop.f32.mrb[0].mxu0
      %v4883 = vadd.f32 0.0, %v4882
      %v4884 = vpop.f32.mrb[0].mxu0
      %4885 = vmatprep.mubr.bf16.mxu0 0
      %4886 = vmatmul.mubr.bf16.gmra.mrb[0].mxu0 %v4627
      %v4887 = vpop.f32.mrb[0].mxu0
      %v4888 = vadd.f32 0.0, %v4887
      %v4889 = vpop.f32.mrb[0].mxu0
      %v4890 = vpop.f32.mrb[0].mxu0
      %v4891 = vadd.f32 0.0, %v4890
      %v4892 = vpop.f32.mrb[0].mxu0
      %4893 = vmatprep.mubr.bf16.mxu0 0
      %4894 = vmatmul.mubr.bf16.gmra.mrb[0].mxu0 %v4630
      %v4895 = vpop.f32.mrb[0].mxu0
      %v4896 = vadd.f32 0.0, %v4895
      %v4897 = vpop.f32.mrb[0].mxu0
      %v4898 = vpop.f32.mrb[0].mxu0
      %v4899 = vadd.f32 0.0, %v4898
      %v4900 = vpop.f32.mrb[0].mxu0
      %4901 = vmatprep.mubr.bf16.mxu0 0
      %4902 = vmatmul.mubr.bf16.gmra.mrb[0].mxu0 %v4633
      %v4903 = vpop.f32.mrb[0].mxu0
      %v4904 = vadd.f32 0.0, %v4903
      %v4905 = vpop.f32.mrb[0].mxu0
      %v4906 = vpop.f32.mrb[0].mxu0
      %v4907 = vadd.f32 0.0, %v4906
      %v4908 = vpop.f32.mrb[0].mxu0
      %4909 = vmatprep.mubr.bf16.mxu0 0
      %4910 = vmatmul.mubr.bf16.gmra.mrb[0].mxu0 %v4636
      %v4911 = vpop.f32.mrb[0].mxu0
      %v4912 = vadd.f32 0.0, %v4911
      %v4913 = vpop.f32.mrb[0].mxu0
      %v4914 = vpop.f32.mrb[0].mxu0
      %v4915 = vadd.f32 0.0, %v4914
      %v4916 = vpop.f32.mrb[0].mxu0
      %4917 = vmatprep.mubr.bf16.mxu0 0
      %4918 = vmatmul.mubr.bf16.gmra.mrb[0].mxu0 %v4639
      %v4919 = vpop.f32.mrb[0].mxu0
      %v4920 = vadd.f32 0.0, %v4919
      %v4921 = vpop.f32.mrb[0].mxu0
      %v4922 = vpop.f32.mrb[0].mxu0
      %v4923 = vadd.f32 0.0, %v4922
      %v4924 = vpop.f32.mrb[0].mxu0
      %4925 = vmatprep.mubr.bf16.mxu0 0
      %4926 = vmatmul.mubr.bf16.gmra.mrb[0].mxu0 %v4642
      %v4927 = vpop.f32.mrb[0].mxu0
      %v4928 = vadd.f32 0.0, %v4927
      %v4929 = vpop.f32.mrb[0].mxu0
      %v4930 = vpop.f32.mrb[0].mxu0
      %v4931 = vadd.f32 0.0, %v4930
      %v4932 = vpop.f32.mrb[0].mxu0
      %4933 = vmatprep.mubr.bf16.mxu0 0
      %4934 = vmatmul.mubr.bf16.gmra.mrb[0].mxu0 %v4645
      %v4935 = vpop.f32.mrb[0].mxu0
      %v4936 = vadd.f32 0.0, %v4935
      %v4937 = vpop.f32.mrb[0].mxu0
      %v4938 = vpop.f32.mrb[0].mxu0
      %v4939 = vadd.f32 0.0, %v4938
      %v4940 = vpop.f32.mrb[0].mxu0
      %4941 = vmatprep.mubr.bf16.mxu0 0
      %4942 = vmatmul.mubr.bf16.gmra.mrb[0].mxu0 %v4648
      %v4943 = vpop.f32.mrb[0].mxu0
      %v4944 = vadd.f32 0.0, %v4943
      %v4945 = vpop.f32.mrb[0].mxu0
      %v4946 = vpop.f32.mrb[0].mxu0
      %v4947 = vadd.f32 0.0, %v4946
      %v4948 = vpop.f32.mrb[0].mxu0
      %4949 = vmatprep.mubr.bf16.mxu0 0
      %4950 = vmatmul.mubr.bf16.gmra.mrb[0].mxu0 %v4651
      %v4951 = vpop.f32.mrb[0].mxu0
      %v4952 = vadd.f32 0.0, %v4951
      %v4953 = vpop.f32.mrb[0].mxu0
      %v4954 = vpop.f32.mrb[0].mxu0
      %v4955 = vadd.f32 0.0, %v4954
      %v4956 = vpop.f32.mrb[0].mxu0
      %4957 = vmatprep.mubr.bf16.mxu0 0
      %4958 = vmatmul.mubr.bf16.gmra.mrb[0].mxu0 %v4654
      %v4959 = vpop.f32.mrb[0].mxu0
      %v4960 = vadd.f32 0.0, %v4959
      %v4961 = vpop.f32.mrb[0].mxu0
      %v4962 = vpop.f32.mrb[0].mxu0
      %v4963 = vadd.f32 0.0, %v4962
      %v4964 = vpop.f32.mrb[0].mxu0
      %4965 = vmatprep.mubr.bf16.mxu0 0
      %4966 = vmatmul.mubr.bf16.gmra.mrb[0].mxu0 %v4657
      %v4967 = vpop.f32.mrb[0].mxu0
      %v4968 = vadd.f32 0.0, %v4967
      %v4969 = vpop.f32.mrb[0].mxu0
      %v4970 = vpop.f32.mrb[0].mxu0
      %v4971 = vadd.f32 0.0, %v4970
      %v4972 = vpop.f32.mrb[0].mxu0
      %4973 = vmatprep.mubr.bf16.mxu0 0
      %4974 = vmatmul.mubr.bf16.gmra.mrb[0].mxu0 %v4660
      %v4975 = vpop.f32.mrb[0].mxu0
      %v4976 = vadd.f32 0.0, %v4975
      %v4977 = vpop.f32.mrb[0].mxu0
      %v4978 = vpop.f32.mrb[0].mxu0
      %v4979 = vadd.f32 0.0, %v4978
      %v4980 = vpop.f32.mrb[0].mxu0
      %4981 = vmatprep.mubr.bf16.mxu0 0
      %4982 = vmatmul.mubr.bf16.gmra.mrb[0].mxu0 %v4663
      %v4983 = vpop.f32.mrb[0].mxu0
      %v4984 = vadd.f32 0.0, %v4983
      %v4985 = vpop.f32.mrb[0].mxu0
      %v4986 = vpop.f32.mrb[0].mxu0
      %v4987 = vadd.f32 0.0, %v4986
      %v4988 = vpop.f32.mrb[0].mxu0
      %4989 = vmatprep.mubr.bf16.mxu0 0
      %4990 = vmatmul.mubr.bf16.gmra.mrb[0].mxu0 %v4666
      %v4991 = vpop.f32.mrb[0].mxu0
      %v4992 = vadd.f32 0.0, %v4991
      %v4993 = vpop.f32.mrb[0].mxu0
      %v4994 = vpop.f32.mrb[0].mxu0
      %v4995 = vadd.f32 0.0, %v4994
      %v4996 = vpop.f32.mrb[0].mxu0
      %4997 = vmatprep.mubr.bf16.mxu0 0
      %4998 = vmatmul.mubr.bf16.gmra.mrb[0].mxu0 %v4669
      %v4999 = vpop.f32.mrb[0].mxu0
      %v5000 = vadd.f32 0.0, %v4999
      %v5001 = vpop.f32.mrb[0].mxu0
      %v5002 = vpop.f32.mrb[0].mxu0
      %v5003 = vadd.f32 0.0, %v5002
      %v5004 = vpop.f32.mrb[0].mxu0
      %5005 = vmatprep.mubr.bf16.mxu0 0
      %5006 = vmatmul.mubr.bf16.gmra.mrb[0].mxu0 %v4672
      %v5007 = vpop.f32.mrb[0].mxu0
      %v5008 = vadd.f32 0.0, %v5007
      %v5009 = vpop.f32.mrb[0].mxu0
      %v5010 = vpop.f32.mrb[0].mxu0
      %v5011 = vadd.f32 0.0, %v5010
      %v5012 = vpop.f32.mrb[0].mxu0
      %5013 = vmatprep.mubr.bf16.mxu0 0
      %5014 = vmatmul.mubr.bf16.gmra.mrb[0].mxu0 %v4675
      %v5015 = vpop.f32.mrb[0].mxu0
      %v5016 = vadd.f32 0.0, %v5015
      %v5017 = vpop.f32.mrb[0].mxu0
      %v5018 = vpop.f32.mrb[0].mxu0
      %v5019 = vadd.f32 0.0, %v5018
      %v5020 = vpop.f32.mrb[0].mxu0
      %5021 = vmatprep.mubr.bf16.mxu0 0
      %5022 = vmatmul.mubr.bf16.gmra.mrb[0].mxu0 %v4678
      %v5023 = vpop.f32.mrb[0].mxu0
      %v5024 = vadd.f32 0.0, %v5023
      %v5025 = vpop.f32.mrb[0].mxu0
      %v5026 = vpop.f32.mrb[0].mxu0
      %v5027 = vadd.f32 0.0, %v5026
      %v5028 = vpop.f32.mrb[0].mxu0
      %5029 = vmatprep.mubr.bf16.mxu0 0
      %5030 = vmatmul.mubr.bf16.gmra.mrb[0].mxu0 %v4681
      %v5031 = vpop.f32.mrb[0].mxu0
      %v5032 = vadd.f32 0.0, %v5031
      %v5033 = vpop.f32.mrb[0].mxu0
      %v5034 = vpop.f32.mrb[0].mxu0
      %v5035 = vadd.f32 0.0, %v5034
      %v5036 = vpop.f32.mrb[0].mxu0
      %5037 = vmatprep.mubr.bf16.mxu0 0
      %5038 = vmatmul.mubr.bf16.gmra.mrb[0].mxu0 %v4684
      %v5039 = vpop.f32.mrb[0].mxu0
      %v5040 = vadd.f32 0.0, %v5039
      %v5041 = vpop.f32.mrb[0].mxu0
      %v5042 = vpop.f32.mrb[0].mxu0
      %v5043 = vadd.f32 0.0, %v5042
      %v5044 = vpop.f32.mrb[0].mxu0
      %5045 = vmatprep.mubr.bf16.mxu0 0
      %5046 = vmatmul.mubr.bf16.gmra.mrb[0].mxu0 %v4687
      %v5047 = vpop.f32.mrb[0].mxu0
      %v5048 = vadd.f32 0.0, %v5047
      %v5049 = vpop.f32.mrb[0].mxu0
      %v5050 = vpop.f32.mrb[0].mxu0
      %v5051 = vadd.f32 0.0, %v5050
      %v5052 = vpop.f32.mrb[0].mxu0
      %5053 = vmatprep.mubr.bf16.mxu0 0
      %5054 = vmatmul.mubr.bf16.gmra.mrb[0].mxu0 %v4690
      %v5055 = vpop.f32.mrb[0].mxu0
      %v5056 = vadd.f32 0.0, %v5055
      %v5057 = vpop.f32.mrb[0].mxu0
      %v5058 = vpop.f32.mrb[0].mxu0
      %v5059 = vadd.f32 0.0, %v5058
      %v5060 = vpop.f32.mrb[0].mxu0
      %5061 = vmatprep.mubr.bf16.mxu0 0
      %5062 = vmatmul.mubr.bf16.gmra.mrb[0].mxu0 %v4693
      %v5063 = vpop.f32.mrb[0].mxu0
      %v5064 = vadd.f32 0.0, %v5063
      %v5065 = vpop.f32.mrb[0].mxu0
      %v5066 = vpop.f32.mrb[0].mxu0
      %v5067 = vadd.f32 0.0, %v5066
      %v5068 = vpop.f32.mrb[0].mxu0
      %5069 = vmatprep.mubr.bf16.mxu0 0
      %5070 = vmatmul.mubr.bf16.gmra.mrb[0].mxu0 %v4696
      %v5071 = vpop.f32.mrb[0].mxu0
      %v5072 = vadd.f32 0.0, %v5071
      %v5073 = vpop.f32.mrb[0].mxu0
      %v5074 = vpop.f32.mrb[0].mxu0
      %v5075 = vadd.f32 0.0, %v5074
      %v5076 = vpop.f32.mrb[0].mxu0
      %5077 = vmatprep.mubr.bf16.mxu0 0
      %5078 = vmatmul.mubr.bf16.gmra.mrb[0].mxu0 %v4699
      %v5079 = vpop.f32.mrb[0].mxu0
      %v5080 = vadd.f32 0.0, %v5079
      %v5081 = vpop.f32.mrb[0].mxu0
      %v5082 = vpop.f32.mrb[0].mxu0
      %v5083 = vadd.f32 0.0, %v5082
      %v5084 = vpop.f32.mrb[0].mxu0
      %5085 = vmatprep.mubr.bf16.mxu0 0
      %5086 = vmatmul.mubr.bf16.gmra.mrb[0].mxu0 %v4702
      %v5087 = vpop.f32.mrb[0].mxu0
      %v5088 = vadd.f32 0.0, %v5087
      %v5089 = vpop.f32.mrb[0].mxu0
      %v5090 = vpop.f32.mrb[0].mxu0
      %v5091 = vadd.f32 0.0, %v5090
      %v5092 = vpop.f32.mrb[0].mxu0
      %5093 = vmatprep.mubr.bf16.mxu0 0
      %5094 = vmatmul.mubr.bf16.gmra.mrb[0].mxu0 %v4705
      %v5095 = vpop.f32.mrb[0].mxu0
      %v5096 = vadd.f32 0.0, %v5095
      %v5097 = vpop.f32.mrb[0].mxu0
      %v5098 = vpop.f32.mrb[0].mxu0
      %v5099 = vadd.f32 0.0, %v5098
      %v5100 = vpop.f32.mrb[0].mxu0
      %5101 = vmatprep.mubr.bf16.mxu0 0
      %5102 = vmatmul.mubr.bf16.gmra.mrb[0].mxu0 %v4708
      %v5103 = vpop.f32.mrb[0].mxu0
      %v5104 = vadd.f32 0.0, %v5103
      %v5105 = vpop.f32.mrb[0].mxu0
      %v5106 = vpop.f32.mrb[0].mxu0
      %v5107 = vadd.f32 0.0, %v5106
      %v5108 = vpop.f32.mrb[0].mxu0
      %5109 = vmatprep.mubr.bf16.mxu0 0
      %5110 = vmatmul.mubr.bf16.gmra.mrb[0].mxu0 %v4711
      %v5111 = vpop.f32.mrb[0].mxu0
      %v5112 = vadd.f32 0.0, %v5111
      %v5113 = vpop.f32.mrb[0].mxu0
      %v5114 = vpop.f32.mrb[0].mxu0
      %v5115 = vadd.f32 0.0, %v5114
      %v5116 = vpop.f32.mrb[0].mxu0
      %5117 = vmatprep.mubr.bf16.mxu0 0
      %5118 = vmatmul.mubr.bf16.gmra.mrb[0].mxu0 %v4714
      %v5119 = vpop.f32.mrb[0].mxu0
      %v5120 = vadd.f32 0.0, %v5119
      %v5121 = vpop.f32.mrb[0].mxu0
      %v5122 = vpop.f32.mrb[0].mxu0
      %v5123 = vadd.f32 0.0, %v5122
      %v5124 = vpop.f32.mrb[0].mxu0
      %5125 = vmatprep.mubr.bf16.mxu0 0
      %5126 = vmatmul.mubr.bf16.gmra.mrb[0].mxu0 %v4717
      %v5127 = vpop.f32.mrb[0].mxu0
      %v5128 = vadd.f32 0.0, %v5127
      %v5129 = vpop.f32.mrb[0].mxu0
      %v5130 = vpop.f32.mrb[0].mxu0
      %v5131 = vadd.f32 0.0, %v5130
      %v5132 = vpop.f32.mrb[0].mxu0
      %5133 = vmatprep.mubr.bf16.mxu0 0
      %5134 = vmatmul.mubr.bf16.gmra.mrb[0].mxu0 %v4720
      %v5135 = vpop.f32.mrb[0].mxu0
      %v5136 = vadd.f32 0.0, %v5135
      %v5137 = vpop.f32.mrb[0].mxu0
      %v5138 = vpop.f32.mrb[0].mxu0
      %v5139 = vadd.f32 0.0, %v5138
      %v5140 = vpop.f32.mrb[0].mxu0
      %5141 = vmatprep.mubr.bf16.mxu0 0
      %5142 = vmatmul.mubr.bf16.gmra.mrb[0].mxu0 %v4723
      %v5143 = vpop.f32.mrb[0].mxu0
      %v5144 = vadd.f32 0.0, %v5143
      %v5145 = vpop.f32.mrb[0].mxu0
      %v5146 = vpop.f32.mrb[0].mxu0
      %v5147 = vadd.f32 0.0, %v5146
      %v5148 = vpop.f32.mrb[0].mxu0
      %5149 = vmatprep.mubr.bf16.mxu0 0
      %5150 = vmatmul.mubr.bf16.gmra.mrb[0].mxu0 %v4726
      %v5151 = vpop.f32.mrb[0].mxu0
      %v5152 = vadd.f32 0.0, %v5151
      %v5153 = vpop.f32.mrb[0].mxu0
      %v5154 = vpop.f32.mrb[0].mxu0
      %v5155 = vadd.f32 0.0, %v5154
      %v5156 = vpop.f32.mrb[0].mxu0
      %5157 = vmatprep.mubr.bf16.mxu0 0
      %5158 = vmatmul.mubr.bf16.gmra.mrb[0].mxu0 %v4729
      %v5159 = vpop.f32.mrb[0].mxu0
      %v5160 = vadd.f32 0.0, %v5159
      %v5161 = vpop.f32.mrb[0].mxu0
      %v5162 = vpop.f32.mrb[0].mxu0
      %v5163 = vadd.f32 0.0, %v5162
      %v5164 = vpop.f32.mrb[0].mxu0
      %5165 = vmatprep.mubr.bf16.mxu0 0
      %5166 = vmatmul.mubr.bf16.gmra.mrb[0].mxu0 %v4732
      %v5167 = vpop.f32.mrb[0].mxu0
      %v5168 = vadd.f32 0.0, %v5167
      %v5169 = vpop.f32.mrb[0].mxu0
      %v5170 = vpop.f32.mrb[0].mxu0
      %v5171 = vadd.f32 0.0, %v5170
      %v5172 = vpop.f32.mrb[0].mxu0
      %5173 = vmatprep.mubr.bf16.mxu0 0
      %5174 = vmatmul.mubr.bf16.gmra.mrb[0].mxu0 %v4735
      %v5175 = vpop.f32.mrb[0].mxu0
      %v5176 = vadd.f32 0.0, %v5175
      %v5177 = vpop.f32.mrb[0].mxu0
      %v5178 = vpop.f32.mrb[0].mxu0
      %v5179 = vadd.f32 0.0, %v5178
      %v5180 = vpop.f32.mrb[0].mxu0
      %5181 = vmatprep.mubr.bf16.mxu0 0
      %5182 = vmatmul.mubr.bf16.gmra.mrb[0].mxu0 %v4738
      %v5183 = vpop.f32.mrb[0].mxu0
      %v5184 = vadd.f32 0.0, %v5183
      %v5185 = vpop.f32.mrb[0].mxu0
      %v5186 = vpop.f32.mrb[0].mxu0
      %v5187 = vadd.f32 0.0, %v5186
      %v5188 = vpop.f32.mrb[0].mxu0
      %5189 = vmatprep.mubr.bf16.mxu0 0
      %5190 = vmatmul.mubr.bf16.gmra.mrb[0].mxu0 %v4741
      %v5191 = vpop.f32.mrb[0].mxu0
      %v5192 = vadd.f32 0.0, %v5191
      %v5193 = vpop.f32.mrb[0].mxu0
      %v5194 = vpop.f32.mrb[0].mxu0
      %v5195 = vadd.f32 0.0, %v5194
      %v5196 = vpop.f32.mrb[0].mxu0
      %5197 = vmatprep.mubr.bf16.mxu0 0
      %5198 = vmatmul.mubr.bf16.gmra.mrb[0].mxu0 %v4744
      %v5199 = vpop.f32.mrb[0].mxu0
      %v5200 = vadd.f32 0.0, %v5199
      %v5201 = vpop.f32.mrb[0].mxu0
      %v5202 = vpop.f32.mrb[0].mxu0
      %v5203 = vadd.f32 0.0, %v5202
      %v5204 = vpop.f32.mrb[0].mxu0
      %5205 = vmatprep.mubr.bf16.mxu0 0
      %5206 = vmatmul.mubr.bf16.gmra.mrb[0].mxu0 %v4747
      %v5207 = vpop.f32.mrb[0].mxu0
      %v5208 = vadd.f32 0.0, %v5207
      %v5209 = vpop.f32.mrb[0].mxu0
      %v5210 = vpop.f32.mrb[0].mxu0
      %v5211 = vadd.f32 0.0, %v5210
      %v5212 = vpop.f32.mrb[0].mxu0
      %5213 = vmatprep.mubr.bf16.mxu0 0
      %5214 = vmatmul.mubr.bf16.gmra.mrb[0].mxu0 %v4750
      %v5215 = vpop.f32.mrb[0].mxu0
      %v5216 = vadd.f32 0.0, %v5215
      %v5217 = vpop.f32.mrb[0].mxu0
      %v5218 = vpop.f32.mrb[0].mxu0
      %v5219 = vadd.f32 0.0, %v5218
      %v5220 = vpop.f32.mrb[0].mxu0
      %5221 = vmatprep.mubr.bf16.mxu0 0
      %5222 = vmatmul.mubr.bf16.gmra.mrb[0].mxu0 %v4753
      %v5223 = vpop.f32.mrb[0].mxu0
      %v5224 = vadd.f32 0.0, %v5223
      %v5225 = vpop.f32.mrb[0].mxu0
      %v5226 = vpop.f32.mrb[0].mxu0
      %v5227 = vadd.f32 0.0, %v5226
      %v5228 = vpop.f32.mrb[0].mxu0
      %5229 = vmatprep.mubr.bf16.mxu0 0
      %5230 = vmatmul.mubr.bf16.gmra.mrb[0].mxu0 %v4756
      %v5231 = vpop.f32.mrb[0].mxu0
      %v5232 = vadd.f32 0.0, %v5231
      %v5233 = vpop.f32.mrb[0].mxu0
      %v5234 = vpop.f32.mrb[0].mxu0
      %v5235 = vadd.f32 0.0, %v5234
      %v5236 = vpop.f32.mrb[0].mxu0
      %5237 = vmatprep.mubr.bf16.mxu0 0
      %5238 = vmatmul.mubr.bf16.gmra.mrb[0].mxu0 %v4759
      %v5239 = vpop.f32.mrb[0].mxu0
      %v5240 = vadd.f32 0.0, %v5239
      %v5241 = vpop.f32.mrb[0].mxu0
      %v5242 = vpop.f32.mrb[0].mxu0
      %v5243 = vadd.f32 0.0, %v5242
      %v5244 = vpop.f32.mrb[0].mxu0
      %5245 = vmatprep.mubr.bf16.mxu0 0
      %5246 = vmatmul.mubr.bf16.gmra.mrb[0].mxu0 %v4762
      %v5247 = vpop.f32.mrb[0].mxu0
      %v5248 = vadd.f32 0.0, %v5247
      %v5249 = vpop.f32.mrb[0].mxu0
      %v5250 = vpop.f32.mrb[0].mxu0
      %v5251 = vadd.f32 0.0, %v5250
      %v5252 = vpop.f32.mrb[0].mxu0
      %5253 = vmatprep.mubr.bf16.mxu0 0
      %5254 = vmatmul.mubr.bf16.gmra.mrb[0].mxu0 %v4765
      %v5255 = vpop.f32.mrb[0].mxu0
      %v5256 = vadd.f32 0.0, %v5255
      %v5257 = vpop.f32.mrb[0].mxu0
      %v5258 = vpop.f32.mrb[0].mxu0
      %v5259 = vadd.f32 0.0, %v5258
      %v5260 = vpop.f32.mrb[0].mxu0
      %5261 = vmatprep.mubr.bf16.mxu0 0
      %5262 = vmatmul.mubr.bf16.gmra.mrb[0].mxu0 %v4768
      %v5263 = vpop.f32.mrb[0].mxu0
      %v5264 = vadd.f32 0.0, %v5263
      %v5265 = vpop.f32.mrb[0].mxu0
      %v5266 = vpop.f32.mrb[0].mxu0
      %v5267 = vadd.f32 0.0, %v5266
      %v5268 = vpop.f32.mrb[0].mxu0
      %5269 = vmatprep.mubr.bf16.mxu0 0
      %5270 = vmatmul.mubr.bf16.gmra.mrb[0].mxu0 %v4771
      %v5271 = vpop.f32.mrb[0].mxu0
      %v5272 = vadd.f32 0.0, %v5271
      %v5273 = vpop.f32.mrb[0].mxu0
      %v5274 = vpop.f32.mrb[0].mxu0
      %v5275 = vadd.f32 0.0, %v5274
      %v5276 = vpop.f32.mrb[0].mxu0
      %5277 = vmatprep.mubr.bf16.mxu0 0
      %5278 = vmatmul.mubr.bf16.gmra.mrb[0].mxu0 %v4774
      %v5279 = vpop.f32.mrb[0].mxu0
      %v5280 = vadd.f32 0.0, %v5279
      %v5281 = vpop.f32.mrb[0].mxu0
      %v5282 = vpop.f32.mrb[0].mxu0
      %v5283 = vadd.f32 0.0, %v5282
      %v5284 = vpop.f32.mrb[0].mxu0
      %5285 = vmatprep.mubr.bf16.mxu0 0
      %5286 = vmatmul.mubr.bf16.gmra.mrb[0].mxu0 %v4777
      %v5287 = vpop.f32.mrb[0].mxu0
      %v5288 = vadd.f32 0.0, %v5287
      %v5289 = vpop.f32.mrb[0].mxu0
      %v5290 = vpop.f32.mrb[0].mxu0
      %v5291 = vadd.f32 0.0, %v5290
      %v5292 = vpop.f32.mrb[0].mxu0
      %5293 = vmatprep.mubr.bf16.mxu0 0
      %5294 = vmatmul.mubr.bf16.gmra.mrb[0].mxu0 %v4780
      %v5295 = vpop.f32.mrb[0].mxu0
      %v5296 = vadd.f32 0.0, %v5295
      %v5297 = vpop.f32.mrb[0].mxu0
      %v5298 = vpop.f32.mrb[0].mxu0
      %v5299 = vadd.f32 0.0, %v5298
      %v5300 = vpop.f32.mrb[0].mxu0
      %5301 = vmatprep.mubr.bf16.mxu0 0
      %5302 = vmatmul.mubr.bf16.gmra.mrb[0].mxu0 %v4783
      %v5303 = vpop.f32.mrb[0].mxu0
      %v5304 = vadd.f32 0.0, %v5303
      %v5305 = vpop.f32.mrb[0].mxu0
      %v5306 = vpop.f32.mrb[0].mxu0
      %v5307 = vadd.f32 0.0, %v5306
      %v5308 = vpop.f32.mrb[0].mxu0
      %5309 = vmatprep.mubr.bf16.mxu0 0
      %5310 = vmatmul.mubr.bf16.gmra.mrb[0].mxu0 %v4786
      %v5311 = vpop.f32.mrb[0].mxu0
      %v5312 = vadd.f32 0.0, %v5311
      %v5313 = vpop.f32.mrb[0].mxu0
      %v5314 = vpop.f32.mrb[0].mxu0
      %v5315 = vadd.f32 0.0, %v5314
      %v5316 = vpop.f32.mrb[0].mxu0
      %5317 = vmatprep.mubr.bf16.mxu0 0
      %5318 = vmatmul.mubr.bf16.gmra.mrb[0].mxu0 %v4789
      %v5319 = vpop.f32.mrb[0].mxu0
      %v5320 = vadd.f32 0.0, %v5319
      %v5321 = vpop.f32.mrb[0].mxu0
      %v5322 = vpop.f32.mrb[0].mxu0
      %v5323 = vadd.f32 0.0, %v5322
      %v5324 = vpop.f32.mrb[0].mxu0
      %5325 = vmatprep.mubr.bf16.mxu0 0
      %5326 = vmatmul.mubr.bf16.gmra.mrb[0].mxu0 %v4792
      %v5327 = vpop.f32.mrb[0].mxu0
      %v5328 = vadd.f32 0.0, %v5327
      %v5329 = vpop.f32.mrb[0].mxu0
      %v5330 = vpop.f32.mrb[0].mxu0
      %v5331 = vadd.f32 0.0, %v5330
      %v5332 = vpop.f32.mrb[0].mxu0
      %5333 = vmatprep.mubr.bf16.mxu0 0
      %5334 = vmatmul.mubr.bf16.gmra.mrb[0].mxu0 %v4795
      %v5335 = vpop.f32.mrb[0].mxu0
      %v5336 = vadd.f32 0.0, %v5335
      %v5337 = vpop.f32.mrb[0].mxu0
      %v5338 = vpop.f32.mrb[0].mxu0
      %v5339 = vadd.f32 0.0, %v5338
      %v5340 = vpop.f32.mrb[0].mxu0
      %5341 = vmatprep.mubr.bf16.mxu0 0
      %5342 = vmatmul.mubr.bf16.gmra.mrb[0].mxu0 %v4798
      %v5343 = vpop.f32.mrb[0].mxu0
      %v5344 = vadd.f32 0.0, %v5343
      %v5345 = vpop.f32.mrb[0].mxu0
      %v5346 = vpop.f32.mrb[0].mxu0
      %v5347 = vadd.f32 0.0, %v5346
      %v5348 = vpop.f32.mrb[0].mxu0
      %5349 = vmatprep.mubr.bf16.mxu0 0
      %5350 = vmatmul.mubr.bf16.gmra.mrb[0].mxu0 %v4801
      %v5351 = vpop.f32.mrb[0].mxu0
      %v5352 = vadd.f32 0.0, %v5351
      %v5353 = vpop.f32.mrb[0].mxu0
      %v5354 = vpop.f32.mrb[0].mxu0
      %v5355 = vadd.f32 0.0, %v5354
      %v5356 = vpop.f32.mrb[0].mxu0
      %5357 = vmatprep.mubr.bf16.mxu0 0
      %5358 = vmatmul.mubr.bf16.gmra.mrb[0].mxu0 %v4804
      %v5359 = vpop.f32.mrb[0].mxu0
      %v5360 = vadd.f32 0.0, %v5359
      %v5361 = vpop.f32.mrb[0].mxu0
      %v5362 = vpop.f32.mrb[0].mxu0
      %v5363 = vadd.f32 0.0, %v5362
      %v5364 = vpop.f32.mrb[0].mxu0
      %5365 = vmatprep.mubr.bf16.mxu0 0
      %5366 = vmatmul.mubr.bf16.gmra.mrb[0].mxu0 %v4807
      %v5367 = vpop.f32.mrb[0].mxu0
      %v5368 = vadd.f32 0.0, %v5367
      %v5369 = vpop.f32.mrb[0].mxu0
      %v5370 = vpop.f32.mrb[0].mxu0
      %v5371 = vadd.f32 0.0, %v5370
      %v5372 = vpop.f32.mrb[0].mxu0
      %5373 = vmatprep.mubr.bf16.mxu0 0
      %5374 = vmatmul.mubr.bf16.gmra.mrb[0].mxu0 %v4810
      %v5375 = vpop.f32.mrb[0].mxu0
      %v5376 = vadd.f32 0.0, %v5375
      %v5377 = vpop.f32.mrb[0].mxu0
      %v5378 = vpop.f32.mrb[0].mxu0
      %v5379 = vadd.f32 0.0, %v5378
      %v5380 = vpop.f32.mrb[0].mxu0
      %5381 = vmatprep.mubr.bf16.mxu0 0
      %5382 = vmatmul.mubr.bf16.gmra.mrb[0].mxu0 %v4813
      %v5383 = vpop.f32.mrb[0].mxu0
      %v5384 = vadd.f32 0.0, %v5383
      %v5385 = vpop.f32.mrb[0].mxu0
      %v5386 = vpop.f32.mrb[0].mxu0
      %v5387 = vadd.f32 0.0, %v5386
      %v5388 = vpop.f32.mrb[0].mxu0
      %5389 = vmatprep.mubr.bf16.mxu0 0
      %5390 = vmatmul.mubr.bf16.gmra.mrb[0].mxu0 %v4816
      %v5391 = vpop.f32.mrb[0].mxu0
      %v5392 = vadd.f32 0.0, %v5391
      %v5393 = vpop.f32.mrb[0].mxu0
      %v5394 = vpop.f32.mrb[0].mxu0
      %v5395 = vadd.f32 0.0, %v5394
      %v5396 = vpop.f32.mrb[0].mxu0
      %5397 = vdwg.mxu0
      %v5398 = vadd.f32 %v4272, %v4856
      %v5399 = vadd.f32 %v4273, %v4859
      %v5400 = vadd.f32 %v4274, %v4864
      %v5401 = vadd.f32 %v4275, %v4867
      %v5402 = vadd.f32 %v4276, %v4872
      %v5403 = vadd.f32 %v4277, %v4875
      %v5404 = vadd.f32 %v4278, %v4880
      %v5405 = vadd.f32 %v4279, %v4883
      %v5406 = vadd.f32 %v4280, %v4888
      %v5407 = vadd.f32 %v4281, %v4891
      %v5408 = vadd.f32 %v4282, %v4896
      %v5409 = vadd.f32 %v4283, %v4899
      %v5410 = vadd.f32 %v4284, %v4904
      %v5411 = vadd.f32 %v4285, %v4907
      %v5412 = vadd.f32 %v4286, %v4912
      %v5413 = vadd.f32 %v4287, %v4915
      %v5414 = vadd.f32 %v4288, %v4920
      %v5415 = vadd.f32 %v4289, %v4923
      %v5416 = vadd.f32 %v4290, %v4928
      %v5417 = vadd.f32 %v4291, %v4931
      %v5418 = vadd.f32 %v4292, %v4936
      %v5419 = vadd.f32 %v4293, %v4939
      %v5420 = vadd.f32 %v4294, %v4944
      %v5421 = vadd.f32 %v4295, %v4947
      %v5422 = vadd.f32 %v4296, %v4952
      %v5423 = vadd.f32 %v4297, %v4955
      %v5424 = vadd.f32 %v4298, %v4960
      %v5425 = vadd.f32 %v4299, %v4963
      %v5426 = vadd.f32 %v4300, %v4968
      %v5427 = vadd.f32 %v4301, %v4971
      %v5428 = vadd.f32 %v4302, %v4976
      %v5429 = vadd.f32 %v4303, %v4979
      %v5430 = vadd.f32 %v4304, %v4984
      %v5431 = vadd.f32 %v4305, %v4987
      %v5432 = vadd.f32 %v4306, %v4992
      %v5433 = vadd.f32 %v4307, %v4995
      %v5434 = vadd.f32 %v4308, %v5000
      %v5435 = vadd.f32 %v4309, %v5003
      %v5436 = vadd.f32 %v4310, %v5008
      %v5437 = vadd.f32 %v4311, %v5011
      %v5438 = vadd.f32 %v4312, %v5016
      %v5439 = vadd.f32 %v4313, %v5019
      %v5440 = vadd.f32 %v4314, %v5024
      %v5441 = vadd.f32 %v4315, %v5027
      %v5442 = vadd.f32 %v4316, %v5032
      %v5443 = vadd.f32 %v4317, %v5035
      %v5444 = vadd.f32 %v4318, %v5040
      %v5445 = vadd.f32 %v4319, %v5043
      %v5446 = vadd.f32 %v4320, %v5048
      %v5447 = vadd.f32 %v4321, %v5051
      %v5448 = vadd.f32 %v4322, %v5056
      %v5449 = vadd.f32 %v4323, %v5059
      %v5450 = vadd.f32 %v4324, %v5064
      %v5451 = vadd.f32 %v4325, %v5067
      %v5452 = vadd.f32 %v4326, %v5072
      %v5453 = vadd.f32 %v4327, %v5075
      %v5454 = vadd.f32 %v4328, %v5080
      %v5455 = vadd.f32 %v4329, %v5083
      %v5456 = vadd.f32 %v4330, %v5088
      %v5457 = vadd.f32 %v4331, %v5091
      %v5458 = vadd.f32 %v4332, %v5096
      %v5459 = vadd.f32 %v4333, %v5099
      %v5460 = vadd.f32 %v4334, %v5104
      %v5461 = vadd.f32 %v4335, %v5107
      %v5462 = vadd.f32 %v4336, %v5112
      %v5463 = vadd.f32 %v4337, %v5115
      %v5464 = vadd.f32 %v4338, %v5120
      %v5465 = vadd.f32 %v4339, %v5123
      %v5466 = vadd.f32 %v4340, %v5128
      %v5467 = vadd.f32 %v4341, %v5131
      %v5468 = vadd.f32 %v4342, %v5136
      %v5469 = vadd.f32 %v4343, %v5139
      %v5470 = vadd.f32 %v4344, %v5144
      %v5471 = vadd.f32 %v4345, %v5147
      %v5472 = vadd.f32 %v4346, %v5152
      %v5473 = vadd.f32 %v4347, %v5155
      %v5474 = vadd.f32 %v4348, %v5160
      %v5475 = vadd.f32 %v4349, %v5163
      %v5476 = vadd.f32 %v4350, %v5168
      %v5477 = vadd.f32 %v4351, %v5171
      %v5478 = vadd.f32 %v4352, %v5176
      %v5479 = vadd.f32 %v4353, %v5179
      %v5480 = vadd.f32 %v4354, %v5184
      %v5481 = vadd.f32 %v4355, %v5187
      %v5482 = vadd.f32 %v4356, %v5192
      %v5483 = vadd.f32 %v4357, %v5195
      %v5484 = vadd.f32 %v4358, %v5200
      %v5485 = vadd.f32 %v4359, %v5203
      %v5486 = vadd.f32 %v4360, %v5208
      %v5487 = vadd.f32 %v4361, %v5211
      %v5488 = vadd.f32 %v4362, %v5216
      %v5489 = vadd.f32 %v4363, %v5219
      %v5490 = vadd.f32 %v4364, %v5224
      %v5491 = vadd.f32 %v4365, %v5227
      %v5492 = vadd.f32 %v4366, %v5232
      %v5493 = vadd.f32 %v4367, %v5235
      %v5494 = vadd.f32 %v4368, %v5240
      %v5495 = vadd.f32 %v4369, %v5243
      %v5496 = vadd.f32 %v4370, %v5248
      %v5497 = vadd.f32 %v4371, %v5251
      %v5498 = vadd.f32 %v4372, %v5256
      %v5499 = vadd.f32 %v4373, %v5259
      %v5500 = vadd.f32 %v4374, %v5264
      %v5501 = vadd.f32 %v4375, %v5267
      %v5502 = vadd.f32 %v4376, %v5272
      %v5503 = vadd.f32 %v4377, %v5275
      %v5504 = vadd.f32 %v4378, %v5280
      %v5505 = vadd.f32 %v4379, %v5283
      %v5506 = vadd.f32 %v4380, %v5288
      %v5507 = vadd.f32 %v4381, %v5291
      %v5508 = vadd.f32 %v4382, %v5296
      %v5509 = vadd.f32 %v4383, %v5299
      %v5510 = vadd.f32 %v4384, %v5304
      %v5511 = vadd.f32 %v4385, %v5307
      %v5512 = vadd.f32 %v4386, %v5312
      %v5513 = vadd.f32 %v4387, %v5315
      %v5514 = vadd.f32 %v4388, %v5320
      %v5515 = vadd.f32 %v4389, %v5323
      %v5516 = vadd.f32 %v4390, %v5328
      %v5517 = vadd.f32 %v4391, %v5331
      %v5518 = vadd.f32 %v4392, %v5336
      %v5519 = vadd.f32 %v4393, %v5339
      %v5520 = vadd.f32 %v4394, %v5344
      %v5521 = vadd.f32 %v4395, %v5347
      %v5522 = vadd.f32 %v4396, %v5352
      %v5523 = vadd.f32 %v4397, %v5355
      %v5524 = vadd.f32 %v4398, %v5360
      %v5525 = vadd.f32 %v4399, %v5363
      %v5526 = vadd.f32 %v4400, %v5368
      %v5527 = vadd.f32 %v4401, %v5371
      %v5528 = vadd.f32 %v4402, %v5376
      %v5529 = vadd.f32 %v4403, %v5379
      %v5530 = vadd.f32 %v4404, %v5384
      %v5531 = vadd.f32 %v4405, %v5387
      %v5532 = vadd.f32 %v4406, %v5392
      %v5533 = vadd.f32 %v4407, %v5395
      %v5534 = vld [vmem:[%s165 + $0x24] sm:$0xff]
      %v5535 = vld [vmem:[%s165 + $0x2c] sm:$0xff]
      %v5536 = vld [vmem:[%s165 + $0x34] sm:$0xff]
      %v5537 = vld [vmem:[%s165 + $0x3c] sm:$0xff]
      %v5538 = vld [vmem:[%s165 + $0x44] sm:$0xff]
      %v5539 = vld [vmem:[%s165 + $0x4c] sm:$0xff]
      %v5540 = vld [vmem:[%s165 + $0x54] sm:$0xff]
      %v5541 = vld [vmem:[%s165 + $0x5c] sm:$0xff]
      %v5542 = vld [vmem:[%s165 + $0x64] sm:$0xff]
      %v5543 = vld [vmem:[%s165 + $0x6c] sm:$0xff]
      %v5544 = vld [vmem:[%s165 + $0x74] sm:$0xff]
      %v5545 = vld [vmem:[%s165 + $0x7c] sm:$0xff]
      %v5546 = vld [vmem:[%s165 + $0x84] sm:$0xff]
      %v5547 = vld [vmem:[%s165 + $0x8c] sm:$0xff]
      %v5548 = vld [vmem:[%s165 + $0x94] sm:$0xff]
      %v5549 = vld [vmem:[%s165 + $0x9c] sm:$0xff]
      %v5550 = vld [vmem:[%s165 + $0xa4] sm:$0xff]
      %v5551 = vld [vmem:[%s165 + $0xac] sm:$0xff]
      %v5552 = vld [vmem:[%s165 + $0xb4] sm:$0xff]
      %v5553 = vld [vmem:[%s165 + $0xbc] sm:$0xff]
      %v5554 = vld [vmem:[%s165 + $0xc4] sm:$0xff]
      %v5555 = vld [vmem:[%s165 + $0xcc] sm:$0xff]
      %v5556 = vld [vmem:[%s165 + $0xd4] sm:$0xff]
      %v5557 = vld [vmem:[%s165 + $0xdc] sm:$0xff]
      %v5558 = vld [vmem:[%s165 + $0xe4] sm:$0xff]
      %v5559 = vld [vmem:[%s165 + $0xec] sm:$0xff]
      %v5560 = vld [vmem:[%s165 + $0xf4] sm:$0xff]
      %v5561 = vld [vmem:[%s165 + $0xfc] sm:$0xff]
      %v5562 = vld [vmem:[%s165 + $0x104] sm:$0xff]
      %v5563 = vld [vmem:[%s165 + $0x10c] sm:$0xff]
      %v5564 = vld [vmem:[%s165 + $0x114] sm:$0xff]
      %v5565 = vld [vmem:[%s165 + $0x11c] sm:$0xff]
      %v5566 = vld [vmem:[%s165 + $0x124] sm:$0xff]
      %v5567 = vld [vmem:[%s165 + $0x12c] sm:$0xff]
      %v5568 = vld [vmem:[%s165 + $0x134] sm:$0xff]
      %v5569 = vld [vmem:[%s165 + $0x13c] sm:$0xff]
      %v5570 = vld [vmem:[%s165 + $0x144] sm:$0xff]
      %v5571 = vld [vmem:[%s165 + $0x14c] sm:$0xff]
      %v5572 = vld [vmem:[%s165 + $0x154] sm:$0xff]
      %v5573 = vld [vmem:[%s165 + $0x15c] sm:$0xff]
      %v5574 = vld [vmem:[%s165 + $0x164] sm:$0xff]
      %v5575 = vld [vmem:[%s165 + $0x16c] sm:$0xff]
      %v5576 = vld [vmem:[%s165 + $0x174] sm:$0xff]
      %v5577 = vld [vmem:[%s165 + $0x17c] sm:$0xff]
      %v5578 = vld [vmem:[%s165 + $0x184] sm:$0xff]
      %v5579 = vld [vmem:[%s165 + $0x18c] sm:$0xff]
      %v5580 = vld [vmem:[%s165 + $0x194] sm:$0xff]
      %v5581 = vld [vmem:[%s165 + $0x19c] sm:$0xff]
      %v5582 = vld [vmem:[%s165 + $0x1a4] sm:$0xff]
      %v5583 = vld [vmem:[%s165 + $0x1ac] sm:$0xff]
      %v5584 = vld [vmem:[%s165 + $0x1b4] sm:$0xff]
      %v5585 = vld [vmem:[%s165 + $0x1bc] sm:$0xff]
      %v5586 = vld [vmem:[%s165 + $0x1c4] sm:$0xff]
      %v5587 = vld [vmem:[%s165 + $0x1cc] sm:$0xff]
      %v5588 = vld [vmem:[%s165 + $0x1d4] sm:$0xff]
      %v5589 = vld [vmem:[%s165 + $0x1dc] sm:$0xff]
      %v5590 = vld [vmem:[%s165 + $0x1e4] sm:$0xff]
      %v5591 = vld [vmem:[%s165 + $0x1ec] sm:$0xff]
      %v5592 = vld [vmem:[%s165 + $0x1f4] sm:$0xff]
      %v5593 = vld [vmem:[%s165 + $0x1fc] sm:$0xff]
      %v5594 = vld [vmem:[%s165 + $0x204] sm:$0xff]
      %v5595 = vld [vmem:[%s165 + $0x20c] sm:$0xff]
      %v5596 = vld [vmem:[%s165 + $0x214] sm:$0xff]
      %v5597 = vld [vmem:[%s165 + $0x21c] sm:$0xff]
      %v5598 = vld [vmem:[%s165 + $0x224] sm:$0xff]
      %v5599 = vld [vmem:[%s165 + $0x22c] sm:$0xff]
      %v5600 = vld [vmem:[%s165 + $0x234] sm:$0xff]
      %v5601 = vld [vmem:[%s165 + $0x23c] sm:$0xff]
      %v5602 = vld [vmem:[%s165 + $0x244] sm:$0xff]
      %v5603 = vld [vmem:[%s165 + $0x24c] sm:$0xff]
      %v5604 = vld [vmem:[%s165 + $0x254] sm:$0xff]
      %v5605 = vld [vmem:[%s165 + $0x25c] sm:$0xff]
      %v5606 = vld [vmem:[%s165 + $0x264] sm:$0xff]
      %v5607 = vld [vmem:[%s165 + $0x26c] sm:$0xff]
      %v5608 = vld [vmem:[%s165 + $0x274] sm:$0xff]
      %v5609 = vld [vmem:[%s165 + $0x27c] sm:$0xff]
      %v5610 = vld [vmem:[%s165 + $0x284] sm:$0xff]
      %v5611 = vld [vmem:[%s165 + $0x28c] sm:$0xff]
      %v5612 = vld [vmem:[%s165 + $0x294] sm:$0xff]
      %v5613 = vld [vmem:[%s165 + $0x29c] sm:$0xff]
      %v5614 = vld [vmem:[%s165 + $0x2a4] sm:$0xff]
      %v5615 = vld [vmem:[%s165 + $0x2ac] sm:$0xff]
      %v5616 = vld [vmem:[%s165 + $0x2b4] sm:$0xff]
      %v5617 = vld [vmem:[%s165 + $0x2bc] sm:$0xff]
      %v5618 = vld [vmem:[%s165 + $0x2c4] sm:$0xff]
      %v5619 = vld [vmem:[%s165 + $0x2cc] sm:$0xff]
      %v5620 = vld [vmem:[%s165 + $0x2d4] sm:$0xff]
      %v5621 = vld [vmem:[%s165 + $0x2dc] sm:$0xff]
      %v5622 = vld [vmem:[%s165 + $0x2e4] sm:$0xff]
      %v5623 = vld [vmem:[%s165 + $0x2ec] sm:$0xff]
      %v5624 = vld [vmem:[%s165 + $0x2f4] sm:$0xff]
      %v5625 = vld [vmem:[%s165 + $0x2fc] sm:$0xff]
      %v5626 = vld [vmem:[%s165 + $0x304] sm:$0xff]
      %v5627 = vld [vmem:[%s165 + $0x30c] sm:$0xff]
      %v5628 = vld [vmem:[%s165 + $0x314] sm:$0xff]
      %v5629 = vld [vmem:[%s165 + $0x31c] sm:$0xff]
      %v5630 = vld [vmem:[%s165 + $0x324] sm:$0xff]
      %v5631 = vld [vmem:[%s165 + $0x32c] sm:$0xff]
      %v5632 = vld [vmem:[%s165 + $0x334] sm:$0xff]
      %v5633 = vld [vmem:[%s165 + $0x33c] sm:$0xff]
      %v5634 = vld [vmem:[%s165 + $0x344] sm:$0xff]
      %v5635 = vld [vmem:[%s165 + $0x34c] sm:$0xff]
      %v5636 = vld [vmem:[%s165 + $0x354] sm:$0xff]
      %v5637 = vld [vmem:[%s165 + $0x35c] sm:$0xff]
      %v5638 = vld [vmem:[%s165 + $0x364] sm:$0xff]
      %v5639 = vld [vmem:[%s165 + $0x36c] sm:$0xff]
      %v5640 = vld [vmem:[%s165 + $0x374] sm:$0xff]
      %v5641 = vld [vmem:[%s165 + $0x37c] sm:$0xff]
      %v5642 = vld [vmem:[%s165 + $0x384] sm:$0xff]
      %v5643 = vld [vmem:[%s165 + $0x38c] sm:$0xff]
      %v5644 = vld [vmem:[%s165 + $0x394] sm:$0xff]
      %v5645 = vld [vmem:[%s165 + $0x39c] sm:$0xff]
      %v5646 = vld [vmem:[%s165 + $0x3a4] sm:$0xff]
      %v5647 = vld [vmem:[%s165 + $0x3ac] sm:$0xff]
      %v5648 = vld [vmem:[%s165 + $0x3b4] sm:$0xff]
      %v5649 = vld [vmem:[%s165 + $0x3bc] sm:$0xff]
      %v5650 = vld [vmem:[%s165 + $0x3c4] sm:$0xff]
      %v5651 = vld [vmem:[%s165 + $0x3cc] sm:$0xff]
      %v5652 = vld [vmem:[%s165 + $0x3d4] sm:$0xff]
      %v5653 = vld [vmem:[%s165 + $0x3dc] sm:$0xff]
      %v5654 = vld [vmem:[%s165 + $0x3e4] sm:$0xff]
      %v5655 = vld [vmem:[%s165 + $0x3ec] sm:$0xff]
      %v5656 = vld [vmem:[%s165 + $0x3f4] sm:$0xff]
      %v5657 = vld [vmem:[%s165 + $0x3fc] sm:$0xff]
      %v5658 = vld [vmem:[%s165 + $0x404] sm:$0xff]
      %v5659 = vld [vmem:[%s165 + $0x40c] sm:$0xff]
      %v5660 = vld [vmem:[%s165 + $0x414] sm:$0xff]
      %v5661 = vld [vmem:[%s165 + $0x41c] sm:$0xff]
      %v5662 = vld [vmem:[%s165 + $0x424] sm:$0xff]
      %v5663 = vld [vmem:[%s165 + $0x42c] sm:$0xff]
      %v5664 = vld [vmem:[%s165 + $0x434] sm:$0xff]
      %v5665 = vld [vmem:[%s165 + $0x43c] sm:$0xff]
      %v5666 = vld [vmem:[%s165 + $0x444] sm:$0xff]
      %v5667 = vld [vmem:[%s165 + $0x44c] sm:$0xff]
      %v5668 = vld [vmem:[%s165 + $0x454] sm:$0xff]
      %v5669 = vld [vmem:[%s165 + $0x45c] sm:$0xff]
      %v5670 = vpack.c.bf16 %v5535, %v5534
      %v5671 = vpack.c.bf16 %v5537, %v5536
      %v5672 = vpack.c.bf16 %v5539, %v5538
      %v5673 = vpack.c.bf16 %v5541, %v5540
      %v5674 = vpack.c.bf16 %v5543, %v5542
      %v5675 = vpack.c.bf16 %v5545, %v5544
      %v5676 = vpack.c.bf16 %v5547, %v5546
      %v5677 = vpack.c.bf16 %v5549, %v5548
      %v5678 = vpack.c.bf16 %v5551, %v5550
      %v5679 = vpack.c.bf16 %v5553, %v5552
      %v5680 = vpack.c.bf16 %v5555, %v5554
      %v5681 = vpack.c.bf16 %v5557, %v5556
      %v5682 = vpack.c.bf16 %v5559, %v5558
      %v5683 = vpack.c.bf16 %v5561, %v5560
      %v5684 = vpack.c.bf16 %v5563, %v5562
      %v5685 = vpack.c.bf16 %v5565, %v5564
      %v5686 = vpack.c.bf16 %v5567, %v5566
      %v5687 = vpack.c.bf16 %v5569, %v5568
      %v5688 = vpack.c.bf16 %v5571, %v5570
      %v5689 = vpack.c.bf16 %v5573, %v5572
      %v5690 = vpack.c.bf16 %v5575, %v5574
      %v5691 = vpack.c.bf16 %v5577, %v5576
      %v5692 = vpack.c.bf16 %v5579, %v5578
      %v5693 = vpack.c.bf16 %v5581, %v5580
      %v5694 = vpack.c.bf16 %v5583, %v5582
      %v5695 = vpack.c.bf16 %v5585, %v5584
      %v5696 = vpack.c.bf16 %v5587, %v5586
      %v5697 = vpack.c.bf16 %v5589, %v5588
      %v5698 = vpack.c.bf16 %v5591, %v5590
      %v5699 = vpack.c.bf16 %v5593, %v5592
      %v5700 = vpack.c.bf16 %v5595, %v5594
      %v5701 = vpack.c.bf16 %v5597, %v5596
      %v5702 = vpack.c.bf16 %v5599, %v5598
      %v5703 = vpack.c.bf16 %v5601, %v5600
      %v5704 = vpack.c.bf16 %v5603, %v5602
      %v5705 = vpack.c.bf16 %v5605, %v5604
      %v5706 = vpack.c.bf16 %v5607, %v5606
      %v5707 = vpack.c.bf16 %v5609, %v5608
      %v5708 = vpack.c.bf16 %v5611, %v5610
      %v5709 = vpack.c.bf16 %v5613, %v5612
      %v5710 = vpack.c.bf16 %v5615, %v5614
      %v5711 = vpack.c.bf16 %v5617, %v5616
      %v5712 = vpack.c.bf16 %v5619, %v5618
      %v5713 = vpack.c.bf16 %v5621, %v5620
      %v5714 = vpack.c.bf16 %v5623, %v5622
      %v5715 = vpack.c.bf16 %v5625, %v5624
      %v5716 = vpack.c.bf16 %v5627, %v5626
      %v5717 = vpack.c.bf16 %v5629, %v5628
      %v5718 = vpack.c.bf16 %v5631, %v5630
      %v5719 = vpack.c.bf16 %v5633, %v5632
      %v5720 = vpack.c.bf16 %v5635, %v5634
      %v5721 = vpack.c.bf16 %v5637, %v5636
      %v5722 = vpack.c.bf16 %v5639, %v5638
      %v5723 = vpack.c.bf16 %v5641, %v5640
      %v5724 = vpack.c.bf16 %v5643, %v5642
      %v5725 = vpack.c.bf16 %v5645, %v5644
      %v5726 = vpack.c.bf16 %v5647, %v5646
      %v5727 = vpack.c.bf16 %v5649, %v5648
      %v5728 = vpack.c.bf16 %v5651, %v5650
      %v5729 = vpack.c.bf16 %v5653, %v5652
      %v5730 = vpack.c.bf16 %v5655, %v5654
      %v5731 = vpack.c.bf16 %v5657, %v5656
      %v5732 = vpack.c.bf16 %v5659, %v5658
      %v5733 = vpack.c.bf16 %v5661, %v5660
      %v5734 = vpack.c.bf16 %v5663, %v5662
      %v5735 = vpack.c.bf16 %v5665, %v5664
      %v5736 = vpack.c.bf16 %v5667, %v5666
      %v5737 = vpack.c.bf16 %v5669, %v5668
      %s5738 = scalar_lea.vmem %s1, 10
      %v5739 = vld [vmem:[%s5738] sm:$0x3]
      %v5741 = vsel %vm583, %v5670, 0
      %v5744 = vsel %vm583, %v5671, 0
      %v5747 = vsel %vm583, %v5672, 0
      %v5750 = vsel %vm583, %v5673, 0
      %v5753 = vsel %vm583, %v5674, 0
      %v5756 = vsel %vm583, %v5675, 0
      %v5759 = vsel %vm583, %v5676, 0
      %v5762 = vsel %vm583, %v5677, 0
      %v5765 = vsel %vm583, %v5678, 0
      %v5768 = vsel %vm583, %v5679, 0
      %v5771 = vsel %vm583, %v5680, 0
      %v5774 = vsel %vm583, %v5681, 0
      %v5777 = vsel %vm583, %v5682, 0
      %v5780 = vsel %vm583, %v5683, 0
      %v5783 = vsel %vm583, %v5684, 0
      %v5786 = vsel %vm583, %v5685, 0
      %v5789 = vsel %vm583, %v5686, 0
      %v5792 = vsel %vm583, %v5687, 0
      %v5795 = vsel %vm583, %v5688, 0
      %v5798 = vsel %vm583, %v5689, 0
      %v5801 = vsel %vm583, %v5690, 0
      %v5804 = vsel %vm583, %v5691, 0
      %v5807 = vsel %vm583, %v5692, 0
      %v5810 = vsel %vm583, %v5693, 0
      %v5813 = vsel %vm583, %v5694, 0
      %v5816 = vsel %vm583, %v5695, 0
      %v5819 = vsel %vm583, %v5696, 0
      %v5822 = vsel %vm583, %v5697, 0
      %v5825 = vsel %vm583, %v5698, 0
      %v5828 = vsel %vm583, %v5699, 0
      %v5831 = vsel %vm583, %v5700, 0
      %v5834 = vsel %vm583, %v5701, 0
      %v5837 = vsel %vm583, %v5702, 0
      %v5840 = vsel %vm583, %v5703, 0
      %v5843 = vsel %vm583, %v5704, 0
      %v5846 = vsel %vm583, %v5705, 0
      %v5849 = vsel %vm583, %v5706, 0
      %v5852 = vsel %vm583, %v5707, 0
      %v5855 = vsel %vm583, %v5708, 0
      %v5858 = vsel %vm583, %v5709, 0
      %v5861 = vsel %vm583, %v5710, 0
      %v5864 = vsel %vm583, %v5711, 0
      %v5867 = vsel %vm583, %v5712, 0
      %v5870 = vsel %vm583, %v5713, 0
      %v5873 = vsel %vm583, %v5714, 0
      %v5876 = vsel %vm583, %v5715, 0
      %v5879 = vsel %vm583, %v5716, 0
      %v5882 = vsel %vm583, %v5717, 0
      %v5885 = vsel %vm583, %v5718, 0
      %v5888 = vsel %vm583, %v5719, 0
      %v5891 = vsel %vm583, %v5720, 0
      %v5894 = vsel %vm583, %v5721, 0
      %v5897 = vsel %vm583, %v5722, 0
      %v5900 = vsel %vm583, %v5723, 0
      %v5903 = vsel %vm583, %v5724, 0
      %v5906 = vsel %vm583, %v5725, 0
      %v5909 = vsel %vm583, %v5726, 0
      %v5912 = vsel %vm583, %v5727, 0
      %v5915 = vsel %vm583, %v5728, 0
      %v5918 = vsel %vm583, %v5729, 0
      %v5921 = vsel %vm583, %v5730, 0
      %v5924 = vsel %vm583, %v5731, 0
      %v5927 = vsel %vm583, %v5732, 0
      %v5930 = vsel %vm583, %v5733, 0
      %v5933 = vsel %vm583, %v5734, 0
      %v5936 = vsel %vm583, %v5735, 0
      %v5939 = vsel %vm583, %v5736, 0
      %v5942 = vsel %vm583, %v5737, 0
      %v5945 = vand.u32 %v5739, %v791
      %5947 = vmatprep.subr.bf16.mxu0 0
      %5948 = vmatpush1.bf16.msra.mxu0 %v5945
      %5949 = vmatprep.subr.bf16.mxu0 0
      %5950 = vmatpush1.bf16.msra.mxu0 0
      %5951 = vmatprep.subr.bf16.mxu0 0
      %5952 = vmatpush1.bf16.msra.mxu0 0
      %5953 = vmatprep.subr.bf16.mxu0 0
      %5954 = vmatpush1.bf16.msra.mxu0 0
      %5955 = vmatprep.subr.bf16.mxu0 0
      %5956 = vmatpush1.bf16.msra.mxu0 0
      %5957 = vmatprep.subr.bf16.mxu0 0
      %5958 = vmatpush1.bf16.msra.mxu0 0
      %5959 = vmatprep.subr.bf16.mxu0 0
      %5960 = vmatpush1.bf16.msra.mxu0 0
      %5961 = vmatprep.subr.bf16.mxu0 0
      %5962 = vmatpush1.bf16.msra.mxu0 0
      %5963 = vmatprep.subr.bf16.mxu0 0
      %5964 = vmatpush1.bf16.msra.mxu0 0
      %5965 = vmatprep.subr.bf16.mxu0 0
      %5966 = vmatpush1.bf16.msra.mxu0 0
      %5967 = vmatprep.subr.bf16.mxu0 0
      %5968 = vmatpush1.bf16.msra.mxu0 0
      %5969 = vmatprep.subr.bf16.mxu0 0
      %5970 = vmatpush1.bf16.msra.mxu0 0
      %5971 = vmatprep.subr.bf16.mxu0 0
      %5972 = vmatpush1.bf16.msra.mxu0 0
      %5973 = vmatprep.subr.bf16.mxu0 0
      %5974 = vmatpush1.bf16.msra.mxu0 0
      %5975 = vmatprep.subr.bf16.mxu0 0
      %5976 = vmatpush1.bf16.msra.mxu0 0
      %5977 = vmatprep.subr.bf16.mxu0 0
      %5978 = vmatpush1.bf16.msra.mxu0 0
      %5979 = vmatprep.mubr.bf16.mxu0 0
      %5980 = vmatmul.mubr.bf16.gmra.mrb[0].mxu0 %v5741
      %v5981 = vpop.f32.mrb[0].mxu0
      %v5982 = vadd.f32 0.0, %v5981
      %v5983 = vpop.f32.mrb[0].mxu0
      %v5984 = vpop.f32.mrb[0].mxu0
      %v5985 = vadd.f32 0.0, %v5984
      %v5986 = vpop.f32.mrb[0].mxu0
      %5987 = vmatprep.mubr.bf16.mxu0 0
      %5988 = vmatmul.mubr.bf16.gmra.mrb[0].mxu0 %v5744
      %v5989 = vpop.f32.mrb[0].mxu0
      %v5990 = vadd.f32 0.0, %v5989
      %v5991 = vpop.f32.mrb[0].mxu0
      %v5992 = vpop.f32.mrb[0].mxu0
      %v5993 = vadd.f32 0.0, %v5992
      %v5994 = vpop.f32.mrb[0].mxu0
      %5995 = vmatprep.mubr.bf16.mxu0 0
      %5996 = vmatmul.mubr.bf16.gmra.mrb[0].mxu0 %v5747
      %v5997 = vpop.f32.mrb[0].mxu0
      %v5998 = vadd.f32 0.0, %v5997
      %v5999 = vpop.f32.mrb[0].mxu0
      %v6000 = vpop.f32.mrb[0].mxu0
      %v6001 = vadd.f32 0.0, %v6000
      %v6002 = vpop.f32.mrb[0].mxu0
      %6003 = vmatprep.mubr.bf16.mxu0 0
      %6004 = vmatmul.mubr.bf16.gmra.mrb[0].mxu0 %v5750
      %v6005 = vpop.f32.mrb[0].mxu0
      %v6006 = vadd.f32 0.0, %v6005
      %v6007 = vpop.f32.mrb[0].mxu0
      %v6008 = vpop.f32.mrb[0].mxu0
      %v6009 = vadd.f32 0.0, %v6008
      %v6010 = vpop.f32.mrb[0].mxu0
      %6011 = vmatprep.mubr.bf16.mxu0 0
      %6012 = vmatmul.mubr.bf16.gmra.mrb[0].mxu0 %v5753
      %v6013 = vpop.f32.mrb[0].mxu0
      %v6014 = vadd.f32 0.0, %v6013
      %v6015 = vpop.f32.mrb[0].mxu0
      %v6016 = vpop.f32.mrb[0].mxu0
      %v6017 = vadd.f32 0.0, %v6016
      %v6018 = vpop.f32.mrb[0].mxu0
      %6019 = vmatprep.mubr.bf16.mxu0 0
      %6020 = vmatmul.mubr.bf16.gmra.mrb[0].mxu0 %v5756
      %v6021 = vpop.f32.mrb[0].mxu0
      %v6022 = vadd.f32 0.0, %v6021
      %v6023 = vpop.f32.mrb[0].mxu0
      %v6024 = vpop.f32.mrb[0].mxu0
      %v6025 = vadd.f32 0.0, %v6024
      %v6026 = vpop.f32.mrb[0].mxu0
      %6027 = vmatprep.mubr.bf16.mxu0 0
      %6028 = vmatmul.mubr.bf16.gmra.mrb[0].mxu0 %v5759
      %v6029 = vpop.f32.mrb[0].mxu0
      %v6030 = vadd.f32 0.0, %v6029
      %v6031 = vpop.f32.mrb[0].mxu0
      %v6032 = vpop.f32.mrb[0].mxu0
      %v6033 = vadd.f32 0.0, %v6032
      %v6034 = vpop.f32.mrb[0].mxu0
      %6035 = vmatprep.mubr.bf16.mxu0 0
      %6036 = vmatmul.mubr.bf16.gmra.mrb[0].mxu0 %v5762
      %v6037 = vpop.f32.mrb[0].mxu0
      %v6038 = vadd.f32 0.0, %v6037
      %v6039 = vpop.f32.mrb[0].mxu0
      %v6040 = vpop.f32.mrb[0].mxu0
      %v6041 = vadd.f32 0.0, %v6040
      %v6042 = vpop.f32.mrb[0].mxu0
      %6043 = vmatprep.mubr.bf16.mxu0 0
      %6044 = vmatmul.mubr.bf16.gmra.mrb[0].mxu0 %v5765
      %v6045 = vpop.f32.mrb[0].mxu0
      %v6046 = vadd.f32 0.0, %v6045
      %v6047 = vpop.f32.mrb[0].mxu0
      %v6048 = vpop.f32.mrb[0].mxu0
      %v6049 = vadd.f32 0.0, %v6048
      %v6050 = vpop.f32.mrb[0].mxu0
      %6051 = vmatprep.mubr.bf16.mxu0 0
      %6052 = vmatmul.mubr.bf16.gmra.mrb[0].mxu0 %v5768
      %v6053 = vpop.f32.mrb[0].mxu0
      %v6054 = vadd.f32 0.0, %v6053
      %v6055 = vpop.f32.mrb[0].mxu0
      %v6056 = vpop.f32.mrb[0].mxu0
      %v6057 = vadd.f32 0.0, %v6056
      %v6058 = vpop.f32.mrb[0].mxu0
      %6059 = vmatprep.mubr.bf16.mxu0 0
      %6060 = vmatmul.mubr.bf16.gmra.mrb[0].mxu0 %v5771
      %v6061 = vpop.f32.mrb[0].mxu0
      %v6062 = vadd.f32 0.0, %v6061
      %v6063 = vpop.f32.mrb[0].mxu0
      %v6064 = vpop.f32.mrb[0].mxu0
      %v6065 = vadd.f32 0.0, %v6064
      %v6066 = vpop.f32.mrb[0].mxu0
      %6067 = vmatprep.mubr.bf16.mxu0 0
      %6068 = vmatmul.mubr.bf16.gmra.mrb[0].mxu0 %v5774
      %v6069 = vpop.f32.mrb[0].mxu0
      %v6070 = vadd.f32 0.0, %v6069
      %v6071 = vpop.f32.mrb[0].mxu0
      %v6072 = vpop.f32.mrb[0].mxu0
      %v6073 = vadd.f32 0.0, %v6072
      %v6074 = vpop.f32.mrb[0].mxu0
      %6075 = vmatprep.mubr.bf16.mxu0 0
      %6076 = vmatmul.mubr.bf16.gmra.mrb[0].mxu0 %v5777
      %v6077 = vpop.f32.mrb[0].mxu0
      %v6078 = vadd.f32 0.0, %v6077
      %v6079 = vpop.f32.mrb[0].mxu0
      %v6080 = vpop.f32.mrb[0].mxu0
      %v6081 = vadd.f32 0.0, %v6080
      %v6082 = vpop.f32.mrb[0].mxu0
      %6083 = vmatprep.mubr.bf16.mxu0 0
      %6084 = vmatmul.mubr.bf16.gmra.mrb[0].mxu0 %v5780
      %v6085 = vpop.f32.mrb[0].mxu0
      %v6086 = vadd.f32 0.0, %v6085
      %v6087 = vpop.f32.mrb[0].mxu0
      %v6088 = vpop.f32.mrb[0].mxu0
      %v6089 = vadd.f32 0.0, %v6088
      %v6090 = vpop.f32.mrb[0].mxu0
      %6091 = vmatprep.mubr.bf16.mxu0 0
      %6092 = vmatmul.mubr.bf16.gmra.mrb[0].mxu0 %v5783
      %v6093 = vpop.f32.mrb[0].mxu0
      %v6094 = vadd.f32 0.0, %v6093
      %v6095 = vpop.f32.mrb[0].mxu0
      %v6096 = vpop.f32.mrb[0].mxu0
      %v6097 = vadd.f32 0.0, %v6096
      %v6098 = vpop.f32.mrb[0].mxu0
      %6099 = vmatprep.mubr.bf16.mxu0 0
      %6100 = vmatmul.mubr.bf16.gmra.mrb[0].mxu0 %v5786
      %v6101 = vpop.f32.mrb[0].mxu0
      %v6102 = vadd.f32 0.0, %v6101
      %v6103 = vpop.f32.mrb[0].mxu0
      %v6104 = vpop.f32.mrb[0].mxu0
      %v6105 = vadd.f32 0.0, %v6104
      %v6106 = vpop.f32.mrb[0].mxu0
      %6107 = vmatprep.mubr.bf16.mxu0 0
      %6108 = vmatmul.mubr.bf16.gmra.mrb[0].mxu0 %v5789
      %v6109 = vpop.f32.mrb[0].mxu0
      %v6110 = vadd.f32 0.0, %v6109
      %v6111 = vpop.f32.mrb[0].mxu0
      %v6112 = vpop.f32.mrb[0].mxu0
      %v6113 = vadd.f32 0.0, %v6112
      %v6114 = vpop.f32.mrb[0].mxu0
      %6115 = vmatprep.mubr.bf16.mxu0 0
      %6116 = vmatmul.mubr.bf16.gmra.mrb[0].mxu0 %v5792
      %v6117 = vpop.f32.mrb[0].mxu0
      %v6118 = vadd.f32 0.0, %v6117
      %v6119 = vpop.f32.mrb[0].mxu0
      %v6120 = vpop.f32.mrb[0].mxu0
      %v6121 = vadd.f32 0.0, %v6120
      %v6122 = vpop.f32.mrb[0].mxu0
      %6123 = vmatprep.mubr.bf16.mxu0 0
      %6124 = vmatmul.mubr.bf16.gmra.mrb[0].mxu0 %v5795
      %v6125 = vpop.f32.mrb[0].mxu0
      %v6126 = vadd.f32 0.0, %v6125
      %v6127 = vpop.f32.mrb[0].mxu0
      %v6128 = vpop.f32.mrb[0].mxu0
      %v6129 = vadd.f32 0.0, %v6128
      %v6130 = vpop.f32.mrb[0].mxu0
      %6131 = vmatprep.mubr.bf16.mxu0 0
      %6132 = vmatmul.mubr.bf16.gmra.mrb[0].mxu0 %v5798
      %v6133 = vpop.f32.mrb[0].mxu0
      %v6134 = vadd.f32 0.0, %v6133
      %v6135 = vpop.f32.mrb[0].mxu0
      %v6136 = vpop.f32.mrb[0].mxu0
      %v6137 = vadd.f32 0.0, %v6136
      %v6138 = vpop.f32.mrb[0].mxu0
      %6139 = vmatprep.mubr.bf16.mxu0 0
      %6140 = vmatmul.mubr.bf16.gmra.mrb[0].mxu0 %v5801
      %v6141 = vpop.f32.mrb[0].mxu0
      %v6142 = vadd.f32 0.0, %v6141
      %v6143 = vpop.f32.mrb[0].mxu0
      %v6144 = vpop.f32.mrb[0].mxu0
      %v6145 = vadd.f32 0.0, %v6144
      %v6146 = vpop.f32.mrb[0].mxu0
      %6147 = vmatprep.mubr.bf16.mxu0 0
      %6148 = vmatmul.mubr.bf16.gmra.mrb[0].mxu0 %v5804
      %v6149 = vpop.f32.mrb[0].mxu0
      %v6150 = vadd.f32 0.0, %v6149
      %v6151 = vpop.f32.mrb[0].mxu0
      %v6152 = vpop.f32.mrb[0].mxu0
      %v6153 = vadd.f32 0.0, %v6152
      %v6154 = vpop.f32.mrb[0].mxu0
      %6155 = vmatprep.mubr.bf16.mxu0 0
      %6156 = vmatmul.mubr.bf16.gmra.mrb[0].mxu0 %v5807
      %v6157 = vpop.f32.mrb[0].mxu0
      %v6158 = vadd.f32 0.0, %v6157
      %v6159 = vpop.f32.mrb[0].mxu0
      %v6160 = vpop.f32.mrb[0].mxu0
      %v6161 = vadd.f32 0.0, %v6160
      %v6162 = vpop.f32.mrb[0].mxu0
      %6163 = vmatprep.mubr.bf16.mxu0 0
      %6164 = vmatmul.mubr.bf16.gmra.mrb[0].mxu0 %v5810
      %v6165 = vpop.f32.mrb[0].mxu0
      %v6166 = vadd.f32 0.0, %v6165
      %v6167 = vpop.f32.mrb[0].mxu0
      %v6168 = vpop.f32.mrb[0].mxu0
      %v6169 = vadd.f32 0.0, %v6168
      %v6170 = vpop.f32.mrb[0].mxu0
      %6171 = vmatprep.mubr.bf16.mxu0 0
      %6172 = vmatmul.mubr.bf16.gmra.mrb[0].mxu0 %v5813
      %v6173 = vpop.f32.mrb[0].mxu0
      %v6174 = vadd.f32 0.0, %v6173
      %v6175 = vpop.f32.mrb[0].mxu0
      %v6176 = vpop.f32.mrb[0].mxu0
      %v6177 = vadd.f32 0.0, %v6176
      %v6178 = vpop.f32.mrb[0].mxu0
      %6179 = vmatprep.mubr.bf16.mxu0 0
      %6180 = vmatmul.mubr.bf16.gmra.mrb[0].mxu0 %v5816
      %v6181 = vpop.f32.mrb[0].mxu0
      %v6182 = vadd.f32 0.0, %v6181
      %v6183 = vpop.f32.mrb[0].mxu0
      %v6184 = vpop.f32.mrb[0].mxu0
      %v6185 = vadd.f32 0.0, %v6184
      %v6186 = vpop.f32.mrb[0].mxu0
      %6187 = vmatprep.mubr.bf16.mxu0 0
      %6188 = vmatmul.mubr.bf16.gmra.mrb[0].mxu0 %v5819
      %v6189 = vpop.f32.mrb[0].mxu0
      %v6190 = vadd.f32 0.0, %v6189
      %v6191 = vpop.f32.mrb[0].mxu0
      %v6192 = vpop.f32.mrb[0].mxu0
      %v6193 = vadd.f32 0.0, %v6192
      %v6194 = vpop.f32.mrb[0].mxu0
      %6195 = vmatprep.mubr.bf16.mxu0 0
      %6196 = vmatmul.mubr.bf16.gmra.mrb[0].mxu0 %v5822
      %v6197 = vpop.f32.mrb[0].mxu0
      %v6198 = vadd.f32 0.0, %v6197
      %v6199 = vpop.f32.mrb[0].mxu0
      %v6200 = vpop.f32.mrb[0].mxu0
      %v6201 = vadd.f32 0.0, %v6200
      %v6202 = vpop.f32.mrb[0].mxu0
      %6203 = vmatprep.mubr.bf16.mxu0 0
      %6204 = vmatmul.mubr.bf16.gmra.mrb[0].mxu0 %v5825
      %v6205 = vpop.f32.mrb[0].mxu0
      %v6206 = vadd.f32 0.0, %v6205
      %v6207 = vpop.f32.mrb[0].mxu0
      %v6208 = vpop.f32.mrb[0].mxu0
      %v6209 = vadd.f32 0.0, %v6208
      %v6210 = vpop.f32.mrb[0].mxu0
      %6211 = vmatprep.mubr.bf16.mxu0 0
      %6212 = vmatmul.mubr.bf16.gmra.mrb[0].mxu0 %v5828
      %v6213 = vpop.f32.mrb[0].mxu0
      %v6214 = vadd.f32 0.0, %v6213
      %v6215 = vpop.f32.mrb[0].mxu0
      %v6216 = vpop.f32.mrb[0].mxu0
      %v6217 = vadd.f32 0.0, %v6216
      %v6218 = vpop.f32.mrb[0].mxu0
      %6219 = vmatprep.mubr.bf16.mxu0 0
      %6220 = vmatmul.mubr.bf16.gmra.mrb[0].mxu0 %v5831
      %v6221 = vpop.f32.mrb[0].mxu0
      %v6222 = vadd.f32 0.0, %v6221
      %v6223 = vpop.f32.mrb[0].mxu0
      %v6224 = vpop.f32.mrb[0].mxu0
      %v6225 = vadd.f32 0.0, %v6224
      %v6226 = vpop.f32.mrb[0].mxu0
      %6227 = vmatprep.mubr.bf16.mxu0 0
      %6228 = vmatmul.mubr.bf16.gmra.mrb[0].mxu0 %v5834
      %v6229 = vpop.f32.mrb[0].mxu0
      %v6230 = vadd.f32 0.0, %v6229
      %v6231 = vpop.f32.mrb[0].mxu0
      %v6232 = vpop.f32.mrb[0].mxu0
      %v6233 = vadd.f32 0.0, %v6232
      %v6234 = vpop.f32.mrb[0].mxu0
      %6235 = vmatprep.mubr.bf16.mxu0 0
      %6236 = vmatmul.mubr.bf16.gmra.mrb[0].mxu0 %v5837
      %v6237 = vpop.f32.mrb[0].mxu0
      %v6238 = vadd.f32 0.0, %v6237
      %v6239 = vpop.f32.mrb[0].mxu0
      %v6240 = vpop.f32.mrb[0].mxu0
      %v6241 = vadd.f32 0.0, %v6240
      %v6242 = vpop.f32.mrb[0].mxu0
      %6243 = vmatprep.mubr.bf16.mxu0 0
      %6244 = vmatmul.mubr.bf16.gmra.mrb[0].mxu0 %v5840
      %v6245 = vpop.f32.mrb[0].mxu0
      %v6246 = vadd.f32 0.0, %v6245
      %v6247 = vpop.f32.mrb[0].mxu0
      %v6248 = vpop.f32.mrb[0].mxu0
      %v6249 = vadd.f32 0.0, %v6248
      %v6250 = vpop.f32.mrb[0].mxu0
      %6251 = vmatprep.mubr.bf16.mxu0 0
      %6252 = vmatmul.mubr.bf16.gmra.mrb[0].mxu0 %v5843
      %v6253 = vpop.f32.mrb[0].mxu0
      %v6254 = vadd.f32 0.0, %v6253
      %v6255 = vpop.f32.mrb[0].mxu0
      %v6256 = vpop.f32.mrb[0].mxu0
      %v6257 = vadd.f32 0.0, %v6256
      %v6258 = vpop.f32.mrb[0].mxu0
      %6259 = vmatprep.mubr.bf16.mxu0 0
      %6260 = vmatmul.mubr.bf16.gmra.mrb[0].mxu0 %v5846
      %v6261 = vpop.f32.mrb[0].mxu0
      %v6262 = vadd.f32 0.0, %v6261
      %v6263 = vpop.f32.mrb[0].mxu0
      %v6264 = vpop.f32.mrb[0].mxu0
      %v6265 = vadd.f32 0.0, %v6264
      %v6266 = vpop.f32.mrb[0].mxu0
      %6267 = vmatprep.mubr.bf16.mxu0 0
      %6268 = vmatmul.mubr.bf16.gmra.mrb[0].mxu0 %v5849
      %v6269 = vpop.f32.mrb[0].mxu0
      %v6270 = vadd.f32 0.0, %v6269
      %v6271 = vpop.f32.mrb[0].mxu0
      %v6272 = vpop.f32.mrb[0].mxu0
      %v6273 = vadd.f32 0.0, %v6272
      %v6274 = vpop.f32.mrb[0].mxu0
      %6275 = vmatprep.mubr.bf16.mxu0 0
      %6276 = vmatmul.mubr.bf16.gmra.mrb[0].mxu0 %v5852
      %v6277 = vpop.f32.mrb[0].mxu0
      %v6278 = vadd.f32 0.0, %v6277
      %v6279 = vpop.f32.mrb[0].mxu0
      %v6280 = vpop.f32.mrb[0].mxu0
      %v6281 = vadd.f32 0.0, %v6280
      %v6282 = vpop.f32.mrb[0].mxu0
      %6283 = vmatprep.mubr.bf16.mxu0 0
      %6284 = vmatmul.mubr.bf16.gmra.mrb[0].mxu0 %v5855
      %v6285 = vpop.f32.mrb[0].mxu0
      %v6286 = vadd.f32 0.0, %v6285
      %v6287 = vpop.f32.mrb[0].mxu0
      %v6288 = vpop.f32.mrb[0].mxu0
      %v6289 = vadd.f32 0.0, %v6288
      %v6290 = vpop.f32.mrb[0].mxu0
      %6291 = vmatprep.mubr.bf16.mxu0 0
      %6292 = vmatmul.mubr.bf16.gmra.mrb[0].mxu0 %v5858
      %v6293 = vpop.f32.mrb[0].mxu0
      %v6294 = vadd.f32 0.0, %v6293
      %v6295 = vpop.f32.mrb[0].mxu0
      %v6296 = vpop.f32.mrb[0].mxu0
      %v6297 = vadd.f32 0.0, %v6296
      %v6298 = vpop.f32.mrb[0].mxu0
      %6299 = vmatprep.mubr.bf16.mxu0 0
      %6300 = vmatmul.mubr.bf16.gmra.mrb[0].mxu0 %v5861
      %v6301 = vpop.f32.mrb[0].mxu0
      %v6302 = vadd.f32 0.0, %v6301
      %v6303 = vpop.f32.mrb[0].mxu0
      %v6304 = vpop.f32.mrb[0].mxu0
      %v6305 = vadd.f32 0.0, %v6304
      %v6306 = vpop.f32.mrb[0].mxu0
      %6307 = vmatprep.mubr.bf16.mxu0 0
      %6308 = vmatmul.mubr.bf16.gmra.mrb[0].mxu0 %v5864
      %v6309 = vpop.f32.mrb[0].mxu0
      %v6310 = vadd.f32 0.0, %v6309
      %v6311 = vpop.f32.mrb[0].mxu0
      %v6312 = vpop.f32.mrb[0].mxu0
      %v6313 = vadd.f32 0.0, %v6312
      %v6314 = vpop.f32.mrb[0].mxu0
      %6315 = vmatprep.mubr.bf16.mxu0 0
      %6316 = vmatmul.mubr.bf16.gmra.mrb[0].mxu0 %v5867
      %v6317 = vpop.f32.mrb[0].mxu0
      %v6318 = vadd.f32 0.0, %v6317
      %v6319 = vpop.f32.mrb[0].mxu0
      %v6320 = vpop.f32.mrb[0].mxu0
      %v6321 = vadd.f32 0.0, %v6320
      %v6322 = vpop.f32.mrb[0].mxu0
      %6323 = vmatprep.mubr.bf16.mxu0 0
      %6324 = vmatmul.mubr.bf16.gmra.mrb[0].mxu0 %v5870
      %v6325 = vpop.f32.mrb[0].mxu0
      %v6326 = vadd.f32 0.0, %v6325
      %v6327 = vpop.f32.mrb[0].mxu0
      %v6328 = vpop.f32.mrb[0].mxu0
      %v6329 = vadd.f32 0.0, %v6328
      %v6330 = vpop.f32.mrb[0].mxu0
      %6331 = vmatprep.mubr.bf16.mxu0 0
      %6332 = vmatmul.mubr.bf16.gmra.mrb[0].mxu0 %v5873
      %v6333 = vpop.f32.mrb[0].mxu0
      %v6334 = vadd.f32 0.0, %v6333
      %v6335 = vpop.f32.mrb[0].mxu0
      %v6336 = vpop.f32.mrb[0].mxu0
      %v6337 = vadd.f32 0.0, %v6336
      %v6338 = vpop.f32.mrb[0].mxu0
      %6339 = vmatprep.mubr.bf16.mxu0 0
      %6340 = vmatmul.mubr.bf16.gmra.mrb[0].mxu0 %v5876
      %v6341 = vpop.f32.mrb[0].mxu0
      %v6342 = vadd.f32 0.0, %v6341
      %v6343 = vpop.f32.mrb[0].mxu0
      %v6344 = vpop.f32.mrb[0].mxu0
      %v6345 = vadd.f32 0.0, %v6344
      %v6346 = vpop.f32.mrb[0].mxu0
      %6347 = vmatprep.mubr.bf16.mxu0 0
      %6348 = vmatmul.mubr.bf16.gmra.mrb[0].mxu0 %v5879
      %v6349 = vpop.f32.mrb[0].mxu0
      %v6350 = vadd.f32 0.0, %v6349
      %v6351 = vpop.f32.mrb[0].mxu0
      %v6352 = vpop.f32.mrb[0].mxu0
      %v6353 = vadd.f32 0.0, %v6352
      %v6354 = vpop.f32.mrb[0].mxu0
      %6355 = vmatprep.mubr.bf16.mxu0 0
      %6356 = vmatmul.mubr.bf16.gmra.mrb[0].mxu0 %v5882
      %v6357 = vpop.f32.mrb[0].mxu0
      %v6358 = vadd.f32 0.0, %v6357
      %v6359 = vpop.f32.mrb[0].mxu0
      %v6360 = vpop.f32.mrb[0].mxu0
      %v6361 = vadd.f32 0.0, %v6360
      %v6362 = vpop.f32.mrb[0].mxu0
      %6363 = vmatprep.mubr.bf16.mxu0 0
      %6364 = vmatmul.mubr.bf16.gmra.mrb[0].mxu0 %v5885
      %v6365 = vpop.f32.mrb[0].mxu0
      %v6366 = vadd.f32 0.0, %v6365
      %v6367 = vpop.f32.mrb[0].mxu0
      %v6368 = vpop.f32.mrb[0].mxu0
      %v6369 = vadd.f32 0.0, %v6368
      %v6370 = vpop.f32.mrb[0].mxu0
      %6371 = vmatprep.mubr.bf16.mxu0 0
      %6372 = vmatmul.mubr.bf16.gmra.mrb[0].mxu0 %v5888
      %v6373 = vpop.f32.mrb[0].mxu0
      %v6374 = vadd.f32 0.0, %v6373
      %v6375 = vpop.f32.mrb[0].mxu0
      %v6376 = vpop.f32.mrb[0].mxu0
      %v6377 = vadd.f32 0.0, %v6376
      %v6378 = vpop.f32.mrb[0].mxu0
      %6379 = vmatprep.mubr.bf16.mxu0 0
      %6380 = vmatmul.mubr.bf16.gmra.mrb[0].mxu0 %v5891
      %v6381 = vpop.f32.mrb[0].mxu0
      %v6382 = vadd.f32 0.0, %v6381
      %v6383 = vpop.f32.mrb[0].mxu0
      %v6384 = vpop.f32.mrb[0].mxu0
      %v6385 = vadd.f32 0.0, %v6384
      %v6386 = vpop.f32.mrb[0].mxu0
      %6387 = vmatprep.mubr.bf16.mxu0 0
      %6388 = vmatmul.mubr.bf16.gmra.mrb[0].mxu0 %v5894
      %v6389 = vpop.f32.mrb[0].mxu0
      %v6390 = vadd.f32 0.0, %v6389
      %v6391 = vpop.f32.mrb[0].mxu0
      %v6392 = vpop.f32.mrb[0].mxu0
      %v6393 = vadd.f32 0.0, %v6392
      %v6394 = vpop.f32.mrb[0].mxu0
      %6395 = vmatprep.mubr.bf16.mxu0 0
      %6396 = vmatmul.mubr.bf16.gmra.mrb[0].mxu0 %v5897
      %v6397 = vpop.f32.mrb[0].mxu0
      %v6398 = vadd.f32 0.0, %v6397
      %v6399 = vpop.f32.mrb[0].mxu0
      %v6400 = vpop.f32.mrb[0].mxu0
      %v6401 = vadd.f32 0.0, %v6400
      %v6402 = vpop.f32.mrb[0].mxu0
      %6403 = vmatprep.mubr.bf16.mxu0 0
      %6404 = vmatmul.mubr.bf16.gmra.mrb[0].mxu0 %v5900
      %v6405 = vpop.f32.mrb[0].mxu0
      %v6406 = vadd.f32 0.0, %v6405
      %v6407 = vpop.f32.mrb[0].mxu0
      %v6408 = vpop.f32.mrb[0].mxu0
      %v6409 = vadd.f32 0.0, %v6408
      %v6410 = vpop.f32.mrb[0].mxu0
      %6411 = vmatprep.mubr.bf16.mxu0 0
      %6412 = vmatmul.mubr.bf16.gmra.mrb[0].mxu0 %v5903
      %v6413 = vpop.f32.mrb[0].mxu0
      %v6414 = vadd.f32 0.0, %v6413
      %v6415 = vpop.f32.mrb[0].mxu0
      %v6416 = vpop.f32.mrb[0].mxu0
      %v6417 = vadd.f32 0.0, %v6416
      %v6418 = vpop.f32.mrb[0].mxu0
      %6419 = vmatprep.mubr.bf16.mxu0 0
      %6420 = vmatmul.mubr.bf16.gmra.mrb[0].mxu0 %v5906
      %v6421 = vpop.f32.mrb[0].mxu0
      %v6422 = vadd.f32 0.0, %v6421
      %v6423 = vpop.f32.mrb[0].mxu0
      %v6424 = vpop.f32.mrb[0].mxu0
      %v6425 = vadd.f32 0.0, %v6424
      %v6426 = vpop.f32.mrb[0].mxu0
      %6427 = vmatprep.mubr.bf16.mxu0 0
      %6428 = vmatmul.mubr.bf16.gmra.mrb[0].mxu0 %v5909
      %v6429 = vpop.f32.mrb[0].mxu0
      %v6430 = vadd.f32 0.0, %v6429
      %v6431 = vpop.f32.mrb[0].mxu0
      %v6432 = vpop.f32.mrb[0].mxu0
      %v6433 = vadd.f32 0.0, %v6432
      %v6434 = vpop.f32.mrb[0].mxu0
      %6435 = vmatprep.mubr.bf16.mxu0 0
      %6436 = vmatmul.mubr.bf16.gmra.mrb[0].mxu0 %v5912
      %v6437 = vpop.f32.mrb[0].mxu0
      %v6438 = vadd.f32 0.0, %v6437
      %v6439 = vpop.f32.mrb[0].mxu0
      %v6440 = vpop.f32.mrb[0].mxu0
      %v6441 = vadd.f32 0.0, %v6440
      %v6442 = vpop.f32.mrb[0].mxu0
      %6443 = vmatprep.mubr.bf16.mxu0 0
      %6444 = vmatmul.mubr.bf16.gmra.mrb[0].mxu0 %v5915
      %v6445 = vpop.f32.mrb[0].mxu0
      %v6446 = vadd.f32 0.0, %v6445
      %v6447 = vpop.f32.mrb[0].mxu0
      %v6448 = vpop.f32.mrb[0].mxu0
      %v6449 = vadd.f32 0.0, %v6448
      %v6450 = vpop.f32.mrb[0].mxu0
      %6451 = vmatprep.mubr.bf16.mxu0 0
      %6452 = vmatmul.mubr.bf16.gmra.mrb[0].mxu0 %v5918
      %v6453 = vpop.f32.mrb[0].mxu0
      %v6454 = vadd.f32 0.0, %v6453
      %v6455 = vpop.f32.mrb[0].mxu0
      %v6456 = vpop.f32.mrb[0].mxu0
      %v6457 = vadd.f32 0.0, %v6456
      %v6458 = vpop.f32.mrb[0].mxu0
      %6459 = vmatprep.mubr.bf16.mxu0 0
      %6460 = vmatmul.mubr.bf16.gmra.mrb[0].mxu0 %v5921
      %v6461 = vpop.f32.mrb[0].mxu0
      %v6462 = vadd.f32 0.0, %v6461
      %v6463 = vpop.f32.mrb[0].mxu0
      %v6464 = vpop.f32.mrb[0].mxu0
      %v6465 = vadd.f32 0.0, %v6464
      %v6466 = vpop.f32.mrb[0].mxu0
      %6467 = vmatprep.mubr.bf16.mxu0 0
      %6468 = vmatmul.mubr.bf16.gmra.mrb[0].mxu0 %v5924
      %v6469 = vpop.f32.mrb[0].mxu0
      %v6470 = vadd.f32 0.0, %v6469
      %v6471 = vpop.f32.mrb[0].mxu0
      %v6472 = vpop.f32.mrb[0].mxu0
      %v6473 = vadd.f32 0.0, %v6472
      %v6474 = vpop.f32.mrb[0].mxu0
      %6475 = vmatprep.mubr.bf16.mxu0 0
      %6476 = vmatmul.mubr.bf16.gmra.mrb[0].mxu0 %v5927
      %v6477 = vpop.f32.mrb[0].mxu0
      %v6478 = vadd.f32 0.0, %v6477
      %v6479 = vpop.f32.mrb[0].mxu0
      %v6480 = vpop.f32.mrb[0].mxu0
      %v6481 = vadd.f32 0.0, %v6480
      %v6482 = vpop.f32.mrb[0].mxu0
      %6483 = vmatprep.mubr.bf16.mxu0 0
      %6484 = vmatmul.mubr.bf16.gmra.mrb[0].mxu0 %v5930
      %v6485 = vpop.f32.mrb[0].mxu0
      %v6486 = vadd.f32 0.0, %v6485
      %v6487 = vpop.f32.mrb[0].mxu0
      %v6488 = vpop.f32.mrb[0].mxu0
      %v6489 = vadd.f32 0.0, %v6488
      %v6490 = vpop.f32.mrb[0].mxu0
      %6491 = vmatprep.mubr.bf16.mxu0 0
      %6492 = vmatmul.mubr.bf16.gmra.mrb[0].mxu0 %v5933
      %v6493 = vpop.f32.mrb[0].mxu0
      %v6494 = vadd.f32 0.0, %v6493
      %v6495 = vpop.f32.mrb[0].mxu0
      %v6496 = vpop.f32.mrb[0].mxu0
      %v6497 = vadd.f32 0.0, %v6496
      %v6498 = vpop.f32.mrb[0].mxu0
      %6499 = vmatprep.mubr.bf16.mxu0 0
      %6500 = vmatmul.mubr.bf16.gmra.mrb[0].mxu0 %v5936
      %v6501 = vpop.f32.mrb[0].mxu0
      %v6502 = vadd.f32 0.0, %v6501
      %v6503 = vpop.f32.mrb[0].mxu0
      %v6504 = vpop.f32.mrb[0].mxu0
      %v6505 = vadd.f32 0.0, %v6504
      %v6506 = vpop.f32.mrb[0].mxu0
      %6507 = vmatprep.mubr.bf16.mxu0 0
      %6508 = vmatmul.mubr.bf16.gmra.mrb[0].mxu0 %v5939
      %v6509 = vpop.f32.mrb[0].mxu0
      %v6510 = vadd.f32 0.0, %v6509
      %v6511 = vpop.f32.mrb[0].mxu0
      %v6512 = vpop.f32.mrb[0].mxu0
      %v6513 = vadd.f32 0.0, %v6512
      %v6514 = vpop.f32.mrb[0].mxu0
      %6515 = vmatprep.mubr.bf16.mxu0 0
      %6516 = vmatmul.mubr.bf16.gmra.mrb[0].mxu0 %v5942
      %v6517 = vpop.f32.mrb[0].mxu0
      %v6518 = vadd.f32 0.0, %v6517
      %v6519 = vpop.f32.mrb[0].mxu0
      %v6520 = vpop.f32.mrb[0].mxu0
      %v6521 = vadd.f32 0.0, %v6520
      %v6522 = vpop.f32.mrb[0].mxu0
      %6523 = vdwg.mxu0
      %v6524 = vadd.f32 %v5398, %v5982
      %v6525 = vadd.f32 %v5399, %v5985
      %v6526 = vadd.f32 %v5400, %v5990
      %v6527 = vadd.f32 %v5401, %v5993
      %v6528 = vadd.f32 %v5402, %v5998
      %v6529 = vadd.f32 %v5403, %v6001
      %v6530 = vadd.f32 %v5404, %v6006
      %v6531 = vadd.f32 %v5405, %v6009
      %v6532 = vadd.f32 %v5406, %v6014
      %v6533 = vadd.f32 %v5407, %v6017
      %v6534 = vadd.f32 %v5408, %v6022
      %v6535 = vadd.f32 %v5409, %v6025
      %v6536 = vadd.f32 %v5410, %v6030
      %v6537 = vadd.f32 %v5411, %v6033
      %v6538 = vadd.f32 %v5412, %v6038
      %v6539 = vadd.f32 %v5413, %v6041
      %v6540 = vadd.f32 %v5414, %v6046
      %v6541 = vadd.f32 %v5415, %v6049
      %v6542 = vadd.f32 %v5416, %v6054
      %v6543 = vadd.f32 %v5417, %v6057
      %v6544 = vadd.f32 %v5418, %v6062
      %v6545 = vadd.f32 %v5419, %v6065
      %v6546 = vadd.f32 %v5420, %v6070
      %v6547 = vadd.f32 %v5421, %v6073
      %v6548 = vadd.f32 %v5422, %v6078
      %v6549 = vadd.f32 %v5423, %v6081
      %v6550 = vadd.f32 %v5424, %v6086
      %v6551 = vadd.f32 %v5425, %v6089
      %v6552 = vadd.f32 %v5426, %v6094
      %v6553 = vadd.f32 %v5427, %v6097
      %v6554 = vadd.f32 %v5428, %v6102
      %v6555 = vadd.f32 %v5429, %v6105
      %v6556 = vadd.f32 %v5430, %v6110
      %v6557 = vadd.f32 %v5431, %v6113
      %v6558 = vadd.f32 %v5432, %v6118
      %v6559 = vadd.f32 %v5433, %v6121
      %v6560 = vadd.f32 %v5434, %v6126
      %v6561 = vadd.f32 %v5435, %v6129
      %v6562 = vadd.f32 %v5436, %v6134
      %v6563 = vadd.f32 %v5437, %v6137
      %v6564 = vadd.f32 %v5438, %v6142
      %v6565 = vadd.f32 %v5439, %v6145
      %v6566 = vadd.f32 %v5440, %v6150
      %v6567 = vadd.f32 %v5441, %v6153
      %v6568 = vadd.f32 %v5442, %v6158
      %v6569 = vadd.f32 %v5443, %v6161
      %v6570 = vadd.f32 %v5444, %v6166
      %v6571 = vadd.f32 %v5445, %v6169
      %v6572 = vadd.f32 %v5446, %v6174
      %v6573 = vadd.f32 %v5447, %v6177
      %v6574 = vadd.f32 %v5448, %v6182
      %v6575 = vadd.f32 %v5449, %v6185
      %v6576 = vadd.f32 %v5450, %v6190
      %v6577 = vadd.f32 %v5451, %v6193
      %v6578 = vadd.f32 %v5452, %v6198
      %v6579 = vadd.f32 %v5453, %v6201
      %v6580 = vadd.f32 %v5454, %v6206
      %v6581 = vadd.f32 %v5455, %v6209
      %v6582 = vadd.f32 %v5456, %v6214
      %v6583 = vadd.f32 %v5457, %v6217
      %v6584 = vadd.f32 %v5458, %v6222
      %v6585 = vadd.f32 %v5459, %v6225
      %v6586 = vadd.f32 %v5460, %v6230
      %v6587 = vadd.f32 %v5461, %v6233
      %v6588 = vadd.f32 %v5462, %v6238
      %v6589 = vadd.f32 %v5463, %v6241
      %v6590 = vadd.f32 %v5464, %v6246
      %v6591 = vadd.f32 %v5465, %v6249
      %v6592 = vadd.f32 %v5466, %v6254
      %v6593 = vadd.f32 %v5467, %v6257
      %v6594 = vadd.f32 %v5468, %v6262
      %v6595 = vadd.f32 %v5469, %v6265
      %v6596 = vadd.f32 %v5470, %v6270
      %v6597 = vadd.f32 %v5471, %v6273
      %v6598 = vadd.f32 %v5472, %v6278
      %v6599 = vadd.f32 %v5473, %v6281
      %v6600 = vadd.f32 %v5474, %v6286
      %v6601 = vadd.f32 %v5475, %v6289
      %v6602 = vadd.f32 %v5476, %v6294
      %v6603 = vadd.f32 %v5477, %v6297
      %v6604 = vadd.f32 %v5478, %v6302
      %v6605 = vadd.f32 %v5479, %v6305
      %v6606 = vadd.f32 %v5480, %v6310
      %v6607 = vadd.f32 %v5481, %v6313
      %v6608 = vadd.f32 %v5482, %v6318
      %v6609 = vadd.f32 %v5483, %v6321
      %v6610 = vadd.f32 %v5484, %v6326
      %v6611 = vadd.f32 %v5485, %v6329
      %v6612 = vadd.f32 %v5486, %v6334
      %v6613 = vadd.f32 %v5487, %v6337
      %v6614 = vadd.f32 %v5488, %v6342
      %v6615 = vadd.f32 %v5489, %v6345
      %v6616 = vadd.f32 %v5490, %v6350
      %v6617 = vadd.f32 %v5491, %v6353
      %v6618 = vadd.f32 %v5492, %v6358
      %v6619 = vadd.f32 %v5493, %v6361
      %v6620 = vadd.f32 %v5494, %v6366
      %v6621 = vadd.f32 %v5495, %v6369
      %v6622 = vadd.f32 %v5496, %v6374
      %v6623 = vadd.f32 %v5497, %v6377
      %v6624 = vadd.f32 %v5498, %v6382
      %v6625 = vadd.f32 %v5499, %v6385
      %v6626 = vadd.f32 %v5500, %v6390
      %v6627 = vadd.f32 %v5501, %v6393
      %v6628 = vadd.f32 %v5502, %v6398
      %v6629 = vadd.f32 %v5503, %v6401
      %v6630 = vadd.f32 %v5504, %v6406
      %v6631 = vadd.f32 %v5505, %v6409
      %v6632 = vadd.f32 %v5506, %v6414
      %v6633 = vadd.f32 %v5507, %v6417
      %v6634 = vadd.f32 %v5508, %v6422
      %v6635 = vadd.f32 %v5509, %v6425
      %v6636 = vadd.f32 %v5510, %v6430
      %v6637 = vadd.f32 %v5511, %v6433
      %v6638 = vadd.f32 %v5512, %v6438
      %v6639 = vadd.f32 %v5513, %v6441
      %v6640 = vadd.f32 %v5514, %v6446
      %v6641 = vadd.f32 %v5515, %v6449
      %v6642 = vadd.f32 %v5516, %v6454
      %v6643 = vadd.f32 %v5517, %v6457
      %v6644 = vadd.f32 %v5518, %v6462
      %v6645 = vadd.f32 %v5519, %v6465
      %v6646 = vadd.f32 %v5520, %v6470
      %v6647 = vadd.f32 %v5521, %v6473
      %v6648 = vadd.f32 %v5522, %v6478
      %v6649 = vadd.f32 %v5523, %v6481
      %v6650 = vadd.f32 %v5524, %v6486
      %v6651 = vadd.f32 %v5525, %v6489
      %v6652 = vadd.f32 %v5526, %v6494
      %v6653 = vadd.f32 %v5527, %v6497
      %v6654 = vadd.f32 %v5528, %v6502
      %v6655 = vadd.f32 %v5529, %v6505
      %v6656 = vadd.f32 %v5530, %v6510
      %v6657 = vadd.f32 %v5531, %v6513
      %v6658 = vadd.f32 %v5532, %v6518
      %v6659 = vadd.f32 %v5533, %v6521
      %v6660 = vld [vmem:[%s165 + $0x44] sm:$0xff]
      %v6661 = vld [vmem:[%s165 + $0x4c] sm:$0xff]
      %v6662 = vld [vmem:[%s165 + $0x54] sm:$0xff]
      %v6663 = vld [vmem:[%s165 + $0x5c] sm:$0xff]
      %v6664 = vld [vmem:[%s165 + $0x64] sm:$0xff]
      %v6665 = vld [vmem:[%s165 + $0x6c] sm:$0xff]
      %v6666 = vld [vmem:[%s165 + $0x74] sm:$0xff]
      %v6667 = vld [vmem:[%s165 + $0x7c] sm:$0xff]
      %v6668 = vld [vmem:[%s165 + $0x84] sm:$0xff]
      %v6669 = vld [vmem:[%s165 + $0x8c] sm:$0xff]
      %v6670 = vld [vmem:[%s165 + $0x94] sm:$0xff]
      %v6671 = vld [vmem:[%s165 + $0x9c] sm:$0xff]
      %v6672 = vld [vmem:[%s165 + $0xa4] sm:$0xff]
      %v6673 = vld [vmem:[%s165 + $0xac] sm:$0xff]
      %v6674 = vld [vmem:[%s165 + $0xb4] sm:$0xff]
      %v6675 = vld [vmem:[%s165 + $0xbc] sm:$0xff]
      %v6676 = vld [vmem:[%s165 + $0xc4] sm:$0xff]
      %v6677 = vld [vmem:[%s165 + $0xcc] sm:$0xff]
      %v6678 = vld [vmem:[%s165 + $0xd4] sm:$0xff]
      %v6679 = vld [vmem:[%s165 + $0xdc] sm:$0xff]
      %v6680 = vld [vmem:[%s165 + $0xe4] sm:$0xff]
      %v6681 = vld [vmem:[%s165 + $0xec] sm:$0xff]
      %v6682 = vld [vmem:[%s165 + $0xf4] sm:$0xff]
      %v6683 = vld [vmem:[%s165 + $0xfc] sm:$0xff]
      %v6684 = vld [vmem:[%s165 + $0x104] sm:$0xff]
      %v6685 = vld [vmem:[%s165 + $0x10c] sm:$0xff]
      %v6686 = vld [vmem:[%s165 + $0x114] sm:$0xff]
      %v6687 = vld [vmem:[%s165 + $0x11c] sm:$0xff]
      %v6688 = vld [vmem:[%s165 + $0x124] sm:$0xff]
      %v6689 = vld [vmem:[%s165 + $0x12c] sm:$0xff]
      %v6690 = vld [vmem:[%s165 + $0x134] sm:$0xff]
      %v6691 = vld [vmem:[%s165 + $0x13c] sm:$0xff]
      %v6692 = vld [vmem:[%s165 + $0x144] sm:$0xff]
      %v6693 = vld [vmem:[%s165 + $0x14c] sm:$0xff]
      %v6694 = vld [vmem:[%s165 + $0x154] sm:$0xff]
      %v6695 = vld [vmem:[%s165 + $0x15c] sm:$0xff]
      %v6696 = vld [vmem:[%s165 + $0x164] sm:$0xff]
      %v6697 = vld [vmem:[%s165 + $0x16c] sm:$0xff]
      %v6698 = vld [vmem:[%s165 + $0x174] sm:$0xff]
      %v6699 = vld [vmem:[%s165 + $0x17c] sm:$0xff]
      %v6700 = vld [vmem:[%s165 + $0x184] sm:$0xff]
      %v6701 = vld [vmem:[%s165 + $0x18c] sm:$0xff]
      %v6702 = vld [vmem:[%s165 + $0x194] sm:$0xff]
      %v6703 = vld [vmem:[%s165 + $0x19c] sm:$0xff]
      %v6704 = vld [vmem:[%s165 + $0x1a4] sm:$0xff]
      %v6705 = vld [vmem:[%s165 + $0x1ac] sm:$0xff]
      %v6706 = vld [vmem:[%s165 + $0x1b4] sm:$0xff]
      %v6707 = vld [vmem:[%s165 + $0x1bc] sm:$0xff]
      %v6708 = vld [vmem:[%s165 + $0x1c4] sm:$0xff]
      %v6709 = vld [vmem:[%s165 + $0x1cc] sm:$0xff]
      %v6710 = vld [vmem:[%s165 + $0x1d4] sm:$0xff]
      %v6711 = vld [vmem:[%s165 + $0x1dc] sm:$0xff]
      %v6712 = vld [vmem:[%s165 + $0x1e4] sm:$0xff]
      %v6713 = vld [vmem:[%s165 + $0x1ec] sm:$0xff]
      %v6714 = vld [vmem:[%s165 + $0x1f4] sm:$0xff]
      %v6715 = vld [vmem:[%s165 + $0x1fc] sm:$0xff]
      %v6716 = vld [vmem:[%s165 + $0x204] sm:$0xff]
      %v6717 = vld [vmem:[%s165 + $0x20c] sm:$0xff]
      %v6718 = vld [vmem:[%s165 + $0x214] sm:$0xff]
      %v6719 = vld [vmem:[%s165 + $0x21c] sm:$0xff]
      %v6720 = vld [vmem:[%s165 + $0x224] sm:$0xff]
      %v6721 = vld [vmem:[%s165 + $0x22c] sm:$0xff]
      %v6722 = vld [vmem:[%s165 + $0x234] sm:$0xff]
      %v6723 = vld [vmem:[%s165 + $0x23c] sm:$0xff]
      %v6724 = vld [vmem:[%s165 + $0x244] sm:$0xff]
      %v6725 = vld [vmem:[%s165 + $0x24c] sm:$0xff]
      %v6726 = vld [vmem:[%s165 + $0x254] sm:$0xff]
      %v6727 = vld [vmem:[%s165 + $0x25c] sm:$0xff]
      %v6728 = vld [vmem:[%s165 + $0x264] sm:$0xff]
      %v6729 = vld [vmem:[%s165 + $0x26c] sm:$0xff]
      %v6730 = vld [vmem:[%s165 + $0x274] sm:$0xff]
      %v6731 = vld [vmem:[%s165 + $0x27c] sm:$0xff]
      %v6732 = vld [vmem:[%s165 + $0x284] sm:$0xff]
      %v6733 = vld [vmem:[%s165 + $0x28c] sm:$0xff]
      %v6734 = vld [vmem:[%s165 + $0x294] sm:$0xff]
      %v6735 = vld [vmem:[%s165 + $0x29c] sm:$0xff]
      %v6736 = vld [vmem:[%s165 + $0x2a4] sm:$0xff]
      %v6737 = vld [vmem:[%s165 + $0x2ac] sm:$0xff]
      %v6738 = vld [vmem:[%s165 + $0x2b4] sm:$0xff]
      %v6739 = vld [vmem:[%s165 + $0x2bc] sm:$0xff]
      %v6740 = vld [vmem:[%s165 + $0x2c4] sm:$0xff]
      %v6741 = vld [vmem:[%s165 + $0x2cc] sm:$0xff]
      %v6742 = vld [vmem:[%s165 + $0x2d4] sm:$0xff]
      %v6743 = vld [vmem:[%s165 + $0x2dc] sm:$0xff]
      %v6744 = vld [vmem:[%s165 + $0x2e4] sm:$0xff]
      %v6745 = vld [vmem:[%s165 + $0x2ec] sm:$0xff]
      %v6746 = vld [vmem:[%s165 + $0x2f4] sm:$0xff]
      %v6747 = vld [vmem:[%s165 + $0x2fc] sm:$0xff]
      %v6748 = vld [vmem:[%s165 + $0x304] sm:$0xff]
      %v6749 = vld [vmem:[%s165 + $0x30c] sm:$0xff]
      %v6750 = vld [vmem:[%s165 + $0x314] sm:$0xff]
      %v6751 = vld [vmem:[%s165 + $0x31c] sm:$0xff]
      %v6752 = vld [vmem:[%s165 + $0x324] sm:$0xff]
      %v6753 = vld [vmem:[%s165 + $0x32c] sm:$0xff]
      %v6754 = vld [vmem:[%s165 + $0x334] sm:$0xff]
      %v6755 = vld [vmem:[%s165 + $0x33c] sm:$0xff]
      %v6756 = vld [vmem:[%s165 + $0x344] sm:$0xff]
      %v6757 = vld [vmem:[%s165 + $0x34c] sm:$0xff]
      %v6758 = vld [vmem:[%s165 + $0x354] sm:$0xff]
      %v6759 = vld [vmem:[%s165 + $0x35c] sm:$0xff]
      %v6760 = vld [vmem:[%s165 + $0x364] sm:$0xff]
      %v6761 = vld [vmem:[%s165 + $0x36c] sm:$0xff]
      %v6762 = vld [vmem:[%s165 + $0x374] sm:$0xff]
      %v6763 = vld [vmem:[%s165 + $0x37c] sm:$0xff]
      %v6764 = vld [vmem:[%s165 + $0x384] sm:$0xff]
      %v6765 = vld [vmem:[%s165 + $0x38c] sm:$0xff]
      %v6766 = vld [vmem:[%s165 + $0x394] sm:$0xff]
      %v6767 = vld [vmem:[%s165 + $0x39c] sm:$0xff]
      %v6768 = vld [vmem:[%s165 + $0x3a4] sm:$0xff]
      %v6769 = vld [vmem:[%s165 + $0x3ac] sm:$0xff]
      %v6770 = vld [vmem:[%s165 + $0x3b4] sm:$0xff]
      %v6771 = vld [vmem:[%s165 + $0x3bc] sm:$0xff]
      %v6772 = vld [vmem:[%s165 + $0x3c4] sm:$0xff]
      %v6773 = vld [vmem:[%s165 + $0x3cc] sm:$0xff]
      %v6774 = vld [vmem:[%s165 + $0x3d4] sm:$0xff]
      %v6775 = vld [vmem:[%s165 + $0x3dc] sm:$0xff]
      %v6776 = vld [vmem:[%s165 + $0x3e4] sm:$0xff]
      %v6777 = vld [vmem:[%s165 + $0x3ec] sm:$0xff]
      %v6778 = vld [vmem:[%s165 + $0x3f4] sm:$0xff]
      %v6779 = vld [vmem:[%s165 + $0x3fc] sm:$0xff]
      %v6780 = vld [vmem:[%s165 + $0x404] sm:$0xff]
      %v6781 = vld [vmem:[%s165 + $0x40c] sm:$0xff]
      %v6782 = vld [vmem:[%s165 + $0x414] sm:$0xff]
      %v6783 = vld [vmem:[%s165 + $0x41c] sm:$0xff]
      %v6784 = vld [vmem:[%s165 + $0x424] sm:$0xff]
      %v6785 = vld [vmem:[%s165 + $0x42c] sm:$0xff]
      %v6786 = vld [vmem:[%s165 + $0x434] sm:$0xff]
      %v6787 = vld [vmem:[%s165 + $0x43c] sm:$0xff]
      %v6788 = vld [vmem:[%s165 + $0x444] sm:$0xff]
      %v6789 = vld [vmem:[%s165 + $0x44c] sm:$0xff]
      %v6790 = vld [vmem:[%s165 + $0x454] sm:$0xff]
      %v6791 = vld [vmem:[%s165 + $0x45c] sm:$0xff]
      %v6792 = vld [vmem:[%s165 + $0x464] sm:$0xff]
      %v6793 = vld [vmem:[%s165 + $0x46c] sm:$0xff]
      %v6794 = vld [vmem:[%s165 + $0x474] sm:$0xff]
      %v6795 = vld [vmem:[%s165 + $0x47c] sm:$0xff]
      %v6796 = vpack.c.bf16 %v6661, %v6660
      %v6797 = vpack.c.bf16 %v6663, %v6662
      %v6798 = vpack.c.bf16 %v6665, %v6664
      %v6799 = vpack.c.bf16 %v6667, %v6666
      %v6800 = vpack.c.bf16 %v6669, %v6668
      %v6801 = vpack.c.bf16 %v6671, %v6670
      %v6802 = vpack.c.bf16 %v6673, %v6672
      %v6803 = vpack.c.bf16 %v6675, %v6674
      %v6804 = vpack.c.bf16 %v6677, %v6676
      %v6805 = vpack.c.bf16 %v6679, %v6678
      %v6806 = vpack.c.bf16 %v6681, %v6680
      %v6807 = vpack.c.bf16 %v6683, %v6682
      %v6808 = vpack.c.bf16 %v6685, %v6684
      %v6809 = vpack.c.bf16 %v6687, %v6686
      %v6810 = vpack.c.bf16 %v6689, %v6688
      %v6811 = vpack.c.bf16 %v6691, %v6690
      %v6812 = vpack.c.bf16 %v6693, %v6692
      %v6813 = vpack.c.bf16 %v6695, %v6694
      %v6814 = vpack.c.bf16 %v6697, %v6696
      %v6815 = vpack.c.bf16 %v6699, %v6698
      %v6816 = vpack.c.bf16 %v6701, %v6700
      %v6817 = vpack.c.bf16 %v6703, %v6702
      %v6818 = vpack.c.bf16 %v6705, %v6704
      %v6819 = vpack.c.bf16 %v6707, %v6706
      %v6820 = vpack.c.bf16 %v6709, %v6708
      %v6821 = vpack.c.bf16 %v6711, %v6710
      %v6822 = vpack.c.bf16 %v6713, %v6712
      %v6823 = vpack.c.bf16 %v6715, %v6714
      %v6824 = vpack.c.bf16 %v6717, %v6716
      %v6825 = vpack.c.bf16 %v6719, %v6718
      %v6826 = vpack.c.bf16 %v6721, %v6720
      %v6827 = vpack.c.bf16 %v6723, %v6722
      %v6828 = vpack.c.bf16 %v6725, %v6724
      %v6829 = vpack.c.bf16 %v6727, %v6726
      %v6830 = vpack.c.bf16 %v6729, %v6728
      %v6831 = vpack.c.bf16 %v6731, %v6730
      %v6832 = vpack.c.bf16 %v6733, %v6732
      %v6833 = vpack.c.bf16 %v6735, %v6734
      %v6834 = vpack.c.bf16 %v6737, %v6736
      %v6835 = vpack.c.bf16 %v6739, %v6738
      %v6836 = vpack.c.bf16 %v6741, %v6740
      %v6837 = vpack.c.bf16 %v6743, %v6742
      %v6838 = vpack.c.bf16 %v6745, %v6744
      %v6839 = vpack.c.bf16 %v6747, %v6746
      %v6840 = vpack.c.bf16 %v6749, %v6748
      %v6841 = vpack.c.bf16 %v6751, %v6750
      %v6842 = vpack.c.bf16 %v6753, %v6752
      %v6843 = vpack.c.bf16 %v6755, %v6754
      %v6844 = vpack.c.bf16 %v6757, %v6756
      %v6845 = vpack.c.bf16 %v6759, %v6758
      %v6846 = vpack.c.bf16 %v6761, %v6760
      %v6847 = vpack.c.bf16 %v6763, %v6762
      %v6848 = vpack.c.bf16 %v6765, %v6764
      %v6849 = vpack.c.bf16 %v6767, %v6766
      %v6850 = vpack.c.bf16 %v6769, %v6768
      %v6851 = vpack.c.bf16 %v6771, %v6770
      %v6852 = vpack.c.bf16 %v6773, %v6772
      %v6853 = vpack.c.bf16 %v6775, %v6774
      %v6854 = vpack.c.bf16 %v6777, %v6776
      %v6855 = vpack.c.bf16 %v6779, %v6778
      %v6856 = vpack.c.bf16 %v6781, %v6780
      %v6857 = vpack.c.bf16 %v6783, %v6782
      %v6858 = vpack.c.bf16 %v6785, %v6784
      %v6859 = vpack.c.bf16 %v6787, %v6786
      %v6860 = vpack.c.bf16 %v6789, %v6788
      %v6861 = vpack.c.bf16 %v6791, %v6790
      %v6862 = vpack.c.bf16 %v6793, %v6792
      %v6863 = vpack.c.bf16 %v6795, %v6794
      %s6864 = scalar_lea.vmem %s1, 12
      %v6865 = vld [vmem:[%s6864] sm:$0x3]
      %v6867 = vsel %vm583, %v6796, 0
      %v6870 = vsel %vm583, %v6797, 0
      %v6873 = vsel %vm583, %v6798, 0
      %v6876 = vsel %vm583, %v6799, 0
      %v6879 = vsel %vm583, %v6800, 0
      %v6882 = vsel %vm583, %v6801, 0
      %v6885 = vsel %vm583, %v6802, 0
      %v6888 = vsel %vm583, %v6803, 0
      %v6891 = vsel %vm583, %v6804, 0
      %v6894 = vsel %vm583, %v6805, 0
      %v6897 = vsel %vm583, %v6806, 0
      %v6900 = vsel %vm583, %v6807, 0
      %v6903 = vsel %vm583, %v6808, 0
      %v6906 = vsel %vm583, %v6809, 0
      %v6909 = vsel %vm583, %v6810, 0
      %v6912 = vsel %vm583, %v6811, 0
      %v6915 = vsel %vm583, %v6812, 0
      %v6918 = vsel %vm583, %v6813, 0
      %v6921 = vsel %vm583, %v6814, 0
      %v6924 = vsel %vm583, %v6815, 0
      %v6927 = vsel %vm583, %v6816, 0
      %v6930 = vsel %vm583, %v6817, 0
      %v6933 = vsel %vm583, %v6818, 0
      %v6936 = vsel %vm583, %v6819, 0
      %v6939 = vsel %vm583, %v6820, 0
      %v6942 = vsel %vm583, %v6821, 0
      %v6945 = vsel %vm583, %v6822, 0
      %v6948 = vsel %vm583, %v6823, 0
      %v6951 = vsel %vm583, %v6824, 0
      %v6954 = vsel %vm583, %v6825, 0
      %v6957 = vsel %vm583, %v6826, 0
      %v6960 = vsel %vm583, %v6827, 0
      %v6963 = vsel %vm583, %v6828, 0
      %v6966 = vsel %vm583, %v6829, 0
      %v6969 = vsel %vm583, %v6830, 0
      %v6972 = vsel %vm583, %v6831, 0
      %v6975 = vsel %vm583, %v6832, 0
      %v6978 = vsel %vm583, %v6833, 0
      %v6981 = vsel %vm583, %v6834, 0
      %v6984 = vsel %vm583, %v6835, 0
      %v6987 = vsel %vm583, %v6836, 0
      %v6990 = vsel %vm583, %v6837, 0
      %v6993 = vsel %vm583, %v6838, 0
      %v6996 = vsel %vm583, %v6839, 0
      %v6999 = vsel %vm583, %v6840, 0
      %v7002 = vsel %vm583, %v6841, 0
      %v7005 = vsel %vm583, %v6842, 0
      %v7008 = vsel %vm583, %v6843, 0
      %v7011 = vsel %vm583, %v6844, 0
      %v7014 = vsel %vm583, %v6845, 0
      %v7017 = vsel %vm583, %v6846, 0
      %v7020 = vsel %vm583, %v6847, 0
      %v7023 = vsel %vm583, %v6848, 0
      %v7026 = vsel %vm583, %v6849, 0
      %v7029 = vsel %vm583, %v6850, 0
      %v7032 = vsel %vm583, %v6851, 0
      %v7035 = vsel %vm583, %v6852, 0
      %v7038 = vsel %vm583, %v6853, 0
      %v7041 = vsel %vm583, %v6854, 0
      %v7044 = vsel %vm583, %v6855, 0
      %v7047 = vsel %vm583, %v6856, 0
      %v7050 = vsel %vm583, %v6857, 0
      %v7053 = vsel %vm583, %v6858, 0
      %v7056 = vsel %vm583, %v6859, 0
      %v7059 = vsel %vm583, %v6860, 0
      %v7062 = vsel %vm583, %v6861, 0
      %v7065 = vsel %vm583, %v6862, 0
      %v7068 = vsel %vm583, %v6863, 0
      %v7071 = vand.u32 %v6865, %v791
      %7073 = vmatprep.subr.bf16.mxu0 0
      %7074 = vmatpush1.bf16.msra.mxu0 %v7071
      %7075 = vmatprep.subr.bf16.mxu0 0
      %7076 = vmatpush1.bf16.msra.mxu0 0
      %7077 = vmatprep.subr.bf16.mxu0 0
      %7078 = vmatpush1.bf16.msra.mxu0 0
      %7079 = vmatprep.subr.bf16.mxu0 0
      %7080 = vmatpush1.bf16.msra.mxu0 0
      %7081 = vmatprep.subr.bf16.mxu0 0
      %7082 = vmatpush1.bf16.msra.mxu0 0
      %7083 = vmatprep.subr.bf16.mxu0 0
      %7084 = vmatpush1.bf16.msra.mxu0 0
      %7085 = vmatprep.subr.bf16.mxu0 0
      %7086 = vmatpush1.bf16.msra.mxu0 0
      %7087 = vmatprep.subr.bf16.mxu0 0
      %7088 = vmatpush1.bf16.msra.mxu0 0
      %7089 = vmatprep.subr.bf16.mxu0 0
      %7090 = vmatpush1.bf16.msra.mxu0 0
      %7091 = vmatprep.subr.bf16.mxu0 0
      %7092 = vmatpush1.bf16.msra.mxu0 0
      %7093 = vmatprep.subr.bf16.mxu0 0
      %7094 = vmatpush1.bf16.msra.mxu0 0
      %7095 = vmatprep.subr.bf16.mxu0 0
      %7096 = vmatpush1.bf16.msra.mxu0 0
      %7097 = vmatprep.subr.bf16.mxu0 0
      %7098 = vmatpush1.bf16.msra.mxu0 0
      %7099 = vmatprep.subr.bf16.mxu0 0
      %7100 = vmatpush1.bf16.msra.mxu0 0
      %7101 = vmatprep.subr.bf16.mxu0 0
      %7102 = vmatpush1.bf16.msra.mxu0 0
      %7103 = vmatprep.subr.bf16.mxu0 0
      %7104 = vmatpush1.bf16.msra.mxu0 0
      %7105 = vmatprep.mubr.bf16.mxu0 0
      %7106 = vmatmul.mubr.bf16.gmra.mrb[0].mxu0 %v6867
      %v7107 = vpop.f32.mrb[0].mxu0
      %v7108 = vadd.f32 0.0, %v7107
      %v7109 = vpop.f32.mrb[0].mxu0
      %v7110 = vpop.f32.mrb[0].mxu0
      %v7111 = vadd.f32 0.0, %v7110
      %v7112 = vpop.f32.mrb[0].mxu0
      %7113 = vmatprep.mubr.bf16.mxu0 0
      %7114 = vmatmul.mubr.bf16.gmra.mrb[0].mxu0 %v6870
      %v7115 = vpop.f32.mrb[0].mxu0
      %v7116 = vadd.f32 0.0, %v7115
      %v7117 = vpop.f32.mrb[0].mxu0
      %v7118 = vpop.f32.mrb[0].mxu0
      %v7119 = vadd.f32 0.0, %v7118
      %v7120 = vpop.f32.mrb[0].mxu0
      %7121 = vmatprep.mubr.bf16.mxu0 0
      %7122 = vmatmul.mubr.bf16.gmra.mrb[0].mxu0 %v6873
      %v7123 = vpop.f32.mrb[0].mxu0
      %v7124 = vadd.f32 0.0, %v7123
      %v7125 = vpop.f32.mrb[0].mxu0
      %v7126 = vpop.f32.mrb[0].mxu0
      %v7127 = vadd.f32 0.0, %v7126
      %v7128 = vpop.f32.mrb[0].mxu0
      %7129 = vmatprep.mubr.bf16.mxu0 0
      %7130 = vmatmul.mubr.bf16.gmra.mrb[0].mxu0 %v6876
      %v7131 = vpop.f32.mrb[0].mxu0
      %v7132 = vadd.f32 0.0, %v7131
      %v7133 = vpop.f32.mrb[0].mxu0
      %v7134 = vpop.f32.mrb[0].mxu0
      %v7135 = vadd.f32 0.0, %v7134
      %v7136 = vpop.f32.mrb[0].mxu0
      %7137 = vmatprep.mubr.bf16.mxu0 0
      %7138 = vmatmul.mubr.bf16.gmra.mrb[0].mxu0 %v6879
      %v7139 = vpop.f32.mrb[0].mxu0
      %v7140 = vadd.f32 0.0, %v7139
      %v7141 = vpop.f32.mrb[0].mxu0
      %v7142 = vpop.f32.mrb[0].mxu0
      %v7143 = vadd.f32 0.0, %v7142
      %v7144 = vpop.f32.mrb[0].mxu0
      %7145 = vmatprep.mubr.bf16.mxu0 0
      %7146 = vmatmul.mubr.bf16.gmra.mrb[0].mxu0 %v6882
      %v7147 = vpop.f32.mrb[0].mxu0
      %v7148 = vadd.f32 0.0, %v7147
      %v7149 = vpop.f32.mrb[0].mxu0
      %v7150 = vpop.f32.mrb[0].mxu0
      %v7151 = vadd.f32 0.0, %v7150
      %v7152 = vpop.f32.mrb[0].mxu0
      %7153 = vmatprep.mubr.bf16.mxu0 0
      %7154 = vmatmul.mubr.bf16.gmra.mrb[0].mxu0 %v6885
      %v7155 = vpop.f32.mrb[0].mxu0
      %v7156 = vadd.f32 0.0, %v7155
      %v7157 = vpop.f32.mrb[0].mxu0
      %v7158 = vpop.f32.mrb[0].mxu0
      %v7159 = vadd.f32 0.0, %v7158
      %v7160 = vpop.f32.mrb[0].mxu0
      %7161 = vmatprep.mubr.bf16.mxu0 0
      %7162 = vmatmul.mubr.bf16.gmra.mrb[0].mxu0 %v6888
      %v7163 = vpop.f32.mrb[0].mxu0
      %v7164 = vadd.f32 0.0, %v7163
      %v7165 = vpop.f32.mrb[0].mxu0
      %v7166 = vpop.f32.mrb[0].mxu0
      %v7167 = vadd.f32 0.0, %v7166
      %v7168 = vpop.f32.mrb[0].mxu0
      %7169 = vmatprep.mubr.bf16.mxu0 0
      %7170 = vmatmul.mubr.bf16.gmra.mrb[0].mxu0 %v6891
      %v7171 = vpop.f32.mrb[0].mxu0
      %v7172 = vadd.f32 0.0, %v7171
      %v7173 = vpop.f32.mrb[0].mxu0
      %v7174 = vpop.f32.mrb[0].mxu0
      %v7175 = vadd.f32 0.0, %v7174
      %v7176 = vpop.f32.mrb[0].mxu0
      %7177 = vmatprep.mubr.bf16.mxu0 0
      %7178 = vmatmul.mubr.bf16.gmra.mrb[0].mxu0 %v6894
      %v7179 = vpop.f32.mrb[0].mxu0
      %v7180 = vadd.f32 0.0, %v7179
      %v7181 = vpop.f32.mrb[0].mxu0
      %v7182 = vpop.f32.mrb[0].mxu0
      %v7183 = vadd.f32 0.0, %v7182
      %v7184 = vpop.f32.mrb[0].mxu0
      %7185 = vmatprep.mubr.bf16.mxu0 0
      %7186 = vmatmul.mubr.bf16.gmra.mrb[0].mxu0 %v6897
      %v7187 = vpop.f32.mrb[0].mxu0
      %v7188 = vadd.f32 0.0, %v7187
      %v7189 = vpop.f32.mrb[0].mxu0
      %v7190 = vpop.f32.mrb[0].mxu0
      %v7191 = vadd.f32 0.0, %v7190
      %v7192 = vpop.f32.mrb[0].mxu0
      %7193 = vmatprep.mubr.bf16.mxu0 0
      %7194 = vmatmul.mubr.bf16.gmra.mrb[0].mxu0 %v6900
      %v7195 = vpop.f32.mrb[0].mxu0
      %v7196 = vadd.f32 0.0, %v7195
      %v7197 = vpop.f32.mrb[0].mxu0
      %v7198 = vpop.f32.mrb[0].mxu0
      %v7199 = vadd.f32 0.0, %v7198
      %v7200 = vpop.f32.mrb[0].mxu0
      %7201 = vmatprep.mubr.bf16.mxu0 0
      %7202 = vmatmul.mubr.bf16.gmra.mrb[0].mxu0 %v6903
      %v7203 = vpop.f32.mrb[0].mxu0
      %v7204 = vadd.f32 0.0, %v7203
      %v7205 = vpop.f32.mrb[0].mxu0
      %v7206 = vpop.f32.mrb[0].mxu0
      %v7207 = vadd.f32 0.0, %v7206
      %v7208 = vpop.f32.mrb[0].mxu0
      %7209 = vmatprep.mubr.bf16.mxu0 0
      %7210 = vmatmul.mubr.bf16.gmra.mrb[0].mxu0 %v6906
      %v7211 = vpop.f32.mrb[0].mxu0
      %v7212 = vadd.f32 0.0, %v7211
      %v7213 = vpop.f32.mrb[0].mxu0
      %v7214 = vpop.f32.mrb[0].mxu0
      %v7215 = vadd.f32 0.0, %v7214
      %v7216 = vpop.f32.mrb[0].mxu0
      %7217 = vmatprep.mubr.bf16.mxu0 0
      %7218 = vmatmul.mubr.bf16.gmra.mrb[0].mxu0 %v6909
      %v7219 = vpop.f32.mrb[0].mxu0
      %v7220 = vadd.f32 0.0, %v7219
      %v7221 = vpop.f32.mrb[0].mxu0
      %v7222 = vpop.f32.mrb[0].mxu0
      %v7223 = vadd.f32 0.0, %v7222
      %v7224 = vpop.f32.mrb[0].mxu0
      %7225 = vmatprep.mubr.bf16.mxu0 0
      %7226 = vmatmul.mubr.bf16.gmra.mrb[0].mxu0 %v6912
      %v7227 = vpop.f32.mrb[0].mxu0
      %v7228 = vadd.f32 0.0, %v7227
      %v7229 = vpop.f32.mrb[0].mxu0
      %v7230 = vpop.f32.mrb[0].mxu0
      %v7231 = vadd.f32 0.0, %v7230
      %v7232 = vpop.f32.mrb[0].mxu0
      %7233 = vmatprep.mubr.bf16.mxu0 0
      %7234 = vmatmul.mubr.bf16.gmra.mrb[0].mxu0 %v6915
      %v7235 = vpop.f32.mrb[0].mxu0
      %v7236 = vadd.f32 0.0, %v7235
      %v7237 = vpop.f32.mrb[0].mxu0
      %v7238 = vpop.f32.mrb[0].mxu0
      %v7239 = vadd.f32 0.0, %v7238
      %v7240 = vpop.f32.mrb[0].mxu0
      %7241 = vmatprep.mubr.bf16.mxu0 0
      %7242 = vmatmul.mubr.bf16.gmra.mrb[0].mxu0 %v6918
      %v7243 = vpop.f32.mrb[0].mxu0
      %v7244 = vadd.f32 0.0, %v7243
      %v7245 = vpop.f32.mrb[0].mxu0
      %v7246 = vpop.f32.mrb[0].mxu0
      %v7247 = vadd.f32 0.0, %v7246
      %v7248 = vpop.f32.mrb[0].mxu0
      %7249 = vmatprep.mubr.bf16.mxu0 0
      %7250 = vmatmul.mubr.bf16.gmra.mrb[0].mxu0 %v6921
      %v7251 = vpop.f32.mrb[0].mxu0
      %v7252 = vadd.f32 0.0, %v7251
      %v7253 = vpop.f32.mrb[0].mxu0
      %v7254 = vpop.f32.mrb[0].mxu0
      %v7255 = vadd.f32 0.0, %v7254
      %v7256 = vpop.f32.mrb[0].mxu0
      %7257 = vmatprep.mubr.bf16.mxu0 0
      %7258 = vmatmul.mubr.bf16.gmra.mrb[0].mxu0 %v6924
      %v7259 = vpop.f32.mrb[0].mxu0
      %v7260 = vadd.f32 0.0, %v7259
      %v7261 = vpop.f32.mrb[0].mxu0
      %v7262 = vpop.f32.mrb[0].mxu0
      %v7263 = vadd.f32 0.0, %v7262
      %v7264 = vpop.f32.mrb[0].mxu0
      %7265 = vmatprep.mubr.bf16.mxu0 0
      %7266 = vmatmul.mubr.bf16.gmra.mrb[0].mxu0 %v6927
      %v7267 = vpop.f32.mrb[0].mxu0
      %v7268 = vadd.f32 0.0, %v7267
      %v7269 = vpop.f32.mrb[0].mxu0
      %v7270 = vpop.f32.mrb[0].mxu0
      %v7271 = vadd.f32 0.0, %v7270
      %v7272 = vpop.f32.mrb[0].mxu0
      %7273 = vmatprep.mubr.bf16.mxu0 0
      %7274 = vmatmul.mubr.bf16.gmra.mrb[0].mxu0 %v6930
      %v7275 = vpop.f32.mrb[0].mxu0
      %v7276 = vadd.f32 0.0, %v7275
      %v7277 = vpop.f32.mrb[0].mxu0
      %v7278 = vpop.f32.mrb[0].mxu0
      %v7279 = vadd.f32 0.0, %v7278
      %v7280 = vpop.f32.mrb[0].mxu0
      %7281 = vmatprep.mubr.bf16.mxu0 0
      %7282 = vmatmul.mubr.bf16.gmra.mrb[0].mxu0 %v6933
      %v7283 = vpop.f32.mrb[0].mxu0
      %v7284 = vadd.f32 0.0, %v7283
      %v7285 = vpop.f32.mrb[0].mxu0
      %v7286 = vpop.f32.mrb[0].mxu0
      %v7287 = vadd.f32 0.0, %v7286
      %v7288 = vpop.f32.mrb[0].mxu0
      %7289 = vmatprep.mubr.bf16.mxu0 0
      %7290 = vmatmul.mubr.bf16.gmra.mrb[0].mxu0 %v6936
      %v7291 = vpop.f32.mrb[0].mxu0
      %v7292 = vadd.f32 0.0, %v7291
      %v7293 = vpop.f32.mrb[0].mxu0
      %v7294 = vpop.f32.mrb[0].mxu0
      %v7295 = vadd.f32 0.0, %v7294
      %v7296 = vpop.f32.mrb[0].mxu0
      %7297 = vmatprep.mubr.bf16.mxu0 0
      %7298 = vmatmul.mubr.bf16.gmra.mrb[0].mxu0 %v6939
      %v7299 = vpop.f32.mrb[0].mxu0
      %v7300 = vadd.f32 0.0, %v7299
      %v7301 = vpop.f32.mrb[0].mxu0
      %v7302 = vpop.f32.mrb[0].mxu0
      %v7303 = vadd.f32 0.0, %v7302
      %v7304 = vpop.f32.mrb[0].mxu0
      %7305 = vmatprep.mubr.bf16.mxu0 0
      %7306 = vmatmul.mubr.bf16.gmra.mrb[0].mxu0 %v6942
      %v7307 = vpop.f32.mrb[0].mxu0
      %v7308 = vadd.f32 0.0, %v7307
      %v7309 = vpop.f32.mrb[0].mxu0
      %v7310 = vpop.f32.mrb[0].mxu0
      %v7311 = vadd.f32 0.0, %v7310
      %v7312 = vpop.f32.mrb[0].mxu0
      %7313 = vmatprep.mubr.bf16.mxu0 0
      %7314 = vmatmul.mubr.bf16.gmra.mrb[0].mxu0 %v6945
      %v7315 = vpop.f32.mrb[0].mxu0
      %v7316 = vadd.f32 0.0, %v7315
      %v7317 = vpop.f32.mrb[0].mxu0
      %v7318 = vpop.f32.mrb[0].mxu0
      %v7319 = vadd.f32 0.0, %v7318
      %v7320 = vpop.f32.mrb[0].mxu0
      %7321 = vmatprep.mubr.bf16.mxu0 0
      %7322 = vmatmul.mubr.bf16.gmra.mrb[0].mxu0 %v6948
      %v7323 = vpop.f32.mrb[0].mxu0
      %v7324 = vadd.f32 0.0, %v7323
      %v7325 = vpop.f32.mrb[0].mxu0
      %v7326 = vpop.f32.mrb[0].mxu0
      %v7327 = vadd.f32 0.0, %v7326
      %v7328 = vpop.f32.mrb[0].mxu0
      %7329 = vmatprep.mubr.bf16.mxu0 0
      %7330 = vmatmul.mubr.bf16.gmra.mrb[0].mxu0 %v6951
      %v7331 = vpop.f32.mrb[0].mxu0
      %v7332 = vadd.f32 0.0, %v7331
      %v7333 = vpop.f32.mrb[0].mxu0
      %v7334 = vpop.f32.mrb[0].mxu0
      %v7335 = vadd.f32 0.0, %v7334
      %v7336 = vpop.f32.mrb[0].mxu0
      %7337 = vmatprep.mubr.bf16.mxu0 0
      %7338 = vmatmul.mubr.bf16.gmra.mrb[0].mxu0 %v6954
      %v7339 = vpop.f32.mrb[0].mxu0
      %v7340 = vadd.f32 0.0, %v7339
      %v7341 = vpop.f32.mrb[0].mxu0
      %v7342 = vpop.f32.mrb[0].mxu0
      %v7343 = vadd.f32 0.0, %v7342
      %v7344 = vpop.f32.mrb[0].mxu0
      %7345 = vmatprep.mubr.bf16.mxu0 0
      %7346 = vmatmul.mubr.bf16.gmra.mrb[0].mxu0 %v6957
      %v7347 = vpop.f32.mrb[0].mxu0
      %v7348 = vadd.f32 0.0, %v7347
      %v7349 = vpop.f32.mrb[0].mxu0
      %v7350 = vpop.f32.mrb[0].mxu0
      %v7351 = vadd.f32 0.0, %v7350
      %v7352 = vpop.f32.mrb[0].mxu0
      %7353 = vmatprep.mubr.bf16.mxu0 0
      %7354 = vmatmul.mubr.bf16.gmra.mrb[0].mxu0 %v6960
      %v7355 = vpop.f32.mrb[0].mxu0
      %v7356 = vadd.f32 0.0, %v7355
      %v7357 = vpop.f32.mrb[0].mxu0
      %v7358 = vpop.f32.mrb[0].mxu0
      %v7359 = vadd.f32 0.0, %v7358
      %v7360 = vpop.f32.mrb[0].mxu0
      %7361 = vmatprep.mubr.bf16.mxu0 0
      %7362 = vmatmul.mubr.bf16.gmra.mrb[0].mxu0 %v6963
      %v7363 = vpop.f32.mrb[0].mxu0
      %v7364 = vadd.f32 0.0, %v7363
      %v7365 = vpop.f32.mrb[0].mxu0
      %v7366 = vpop.f32.mrb[0].mxu0
      %v7367 = vadd.f32 0.0, %v7366
      %v7368 = vpop.f32.mrb[0].mxu0
      %7369 = vmatprep.mubr.bf16.mxu0 0
      %7370 = vmatmul.mubr.bf16.gmra.mrb[0].mxu0 %v6966
      %v7371 = vpop.f32.mrb[0].mxu0
      %v7372 = vadd.f32 0.0, %v7371
      %v7373 = vpop.f32.mrb[0].mxu0
      %v7374 = vpop.f32.mrb[0].mxu0
      %v7375 = vadd.f32 0.0, %v7374
      %v7376 = vpop.f32.mrb[0].mxu0
      %7377 = vmatprep.mubr.bf16.mxu0 0
      %7378 = vmatmul.mubr.bf16.gmra.mrb[0].mxu0 %v6969
      %v7379 = vpop.f32.mrb[0].mxu0
      %v7380 = vadd.f32 0.0, %v7379
      %v7381 = vpop.f32.mrb[0].mxu0
      %v7382 = vpop.f32.mrb[0].mxu0
      %v7383 = vadd.f32 0.0, %v7382
      %v7384 = vpop.f32.mrb[0].mxu0
      %7385 = vmatprep.mubr.bf16.mxu0 0
      %7386 = vmatmul.mubr.bf16.gmra.mrb[0].mxu0 %v6972
      %v7387 = vpop.f32.mrb[0].mxu0
      %v7388 = vadd.f32 0.0, %v7387
      %v7389 = vpop.f32.mrb[0].mxu0
      %v7390 = vpop.f32.mrb[0].mxu0
      %v7391 = vadd.f32 0.0, %v7390
      %v7392 = vpop.f32.mrb[0].mxu0
      %7393 = vmatprep.mubr.bf16.mxu0 0
      %7394 = vmatmul.mubr.bf16.gmra.mrb[0].mxu0 %v6975
      %v7395 = vpop.f32.mrb[0].mxu0
      %v7396 = vadd.f32 0.0, %v7395
      %v7397 = vpop.f32.mrb[0].mxu0
      %v7398 = vpop.f32.mrb[0].mxu0
      %v7399 = vadd.f32 0.0, %v7398
      %v7400 = vpop.f32.mrb[0].mxu0
      %7401 = vmatprep.mubr.bf16.mxu0 0
      %7402 = vmatmul.mubr.bf16.gmra.mrb[0].mxu0 %v6978
      %v7403 = vpop.f32.mrb[0].mxu0
      %v7404 = vadd.f32 0.0, %v7403
      %v7405 = vpop.f32.mrb[0].mxu0
      %v7406 = vpop.f32.mrb[0].mxu0
      %v7407 = vadd.f32 0.0, %v7406
      %v7408 = vpop.f32.mrb[0].mxu0
      %7409 = vmatprep.mubr.bf16.mxu0 0
      %7410 = vmatmul.mubr.bf16.gmra.mrb[0].mxu0 %v6981
      %v7411 = vpop.f32.mrb[0].mxu0
      %v7412 = vadd.f32 0.0, %v7411
      %v7413 = vpop.f32.mrb[0].mxu0
      %v7414 = vpop.f32.mrb[0].mxu0
      %v7415 = vadd.f32 0.0, %v7414
      %v7416 = vpop.f32.mrb[0].mxu0
      %7417 = vmatprep.mubr.bf16.mxu0 0
      %7418 = vmatmul.mubr.bf16.gmra.mrb[0].mxu0 %v6984
      %v7419 = vpop.f32.mrb[0].mxu0
      %v7420 = vadd.f32 0.0, %v7419
      %v7421 = vpop.f32.mrb[0].mxu0
      %v7422 = vpop.f32.mrb[0].mxu0
      %v7423 = vadd.f32 0.0, %v7422
      %v7424 = vpop.f32.mrb[0].mxu0
      %7425 = vmatprep.mubr.bf16.mxu0 0
      %7426 = vmatmul.mubr.bf16.gmra.mrb[0].mxu0 %v6987
      %v7427 = vpop.f32.mrb[0].mxu0
      %v7428 = vadd.f32 0.0, %v7427
      %v7429 = vpop.f32.mrb[0].mxu0
      %v7430 = vpop.f32.mrb[0].mxu0
      %v7431 = vadd.f32 0.0, %v7430
      %v7432 = vpop.f32.mrb[0].mxu0
      %7433 = vmatprep.mubr.bf16.mxu0 0
      %7434 = vmatmul.mubr.bf16.gmra.mrb[0].mxu0 %v6990
      %v7435 = vpop.f32.mrb[0].mxu0
      %v7436 = vadd.f32 0.0, %v7435
      %v7437 = vpop.f32.mrb[0].mxu0
      %v7438 = vpop.f32.mrb[0].mxu0
      %v7439 = vadd.f32 0.0, %v7438
      %v7440 = vpop.f32.mrb[0].mxu0
      %7441 = vmatprep.mubr.bf16.mxu0 0
      %7442 = vmatmul.mubr.bf16.gmra.mrb[0].mxu0 %v6993
      %v7443 = vpop.f32.mrb[0].mxu0
      %v7444 = vadd.f32 0.0, %v7443
      %v7445 = vpop.f32.mrb[0].mxu0
      %v7446 = vpop.f32.mrb[0].mxu0
      %v7447 = vadd.f32 0.0, %v7446
      %v7448 = vpop.f32.mrb[0].mxu0
      %7449 = vmatprep.mubr.bf16.mxu0 0
      %7450 = vmatmul.mubr.bf16.gmra.mrb[0].mxu0 %v6996
      %v7451 = vpop.f32.mrb[0].mxu0
      %v7452 = vadd.f32 0.0, %v7451
      %v7453 = vpop.f32.mrb[0].mxu0
      %v7454 = vpop.f32.mrb[0].mxu0
      %v7455 = vadd.f32 0.0, %v7454
      %v7456 = vpop.f32.mrb[0].mxu0
      %7457 = vmatprep.mubr.bf16.mxu0 0
      %7458 = vmatmul.mubr.bf16.gmra.mrb[0].mxu0 %v6999
      %v7459 = vpop.f32.mrb[0].mxu0
      %v7460 = vadd.f32 0.0, %v7459
      %v7461 = vpop.f32.mrb[0].mxu0
      %v7462 = vpop.f32.mrb[0].mxu0
      %v7463 = vadd.f32 0.0, %v7462
      %v7464 = vpop.f32.mrb[0].mxu0
      %7465 = vmatprep.mubr.bf16.mxu0 0
      %7466 = vmatmul.mubr.bf16.gmra.mrb[0].mxu0 %v7002
      %v7467 = vpop.f32.mrb[0].mxu0
      %v7468 = vadd.f32 0.0, %v7467
      %v7469 = vpop.f32.mrb[0].mxu0
      %v7470 = vpop.f32.mrb[0].mxu0
      %v7471 = vadd.f32 0.0, %v7470
      %v7472 = vpop.f32.mrb[0].mxu0
      %7473 = vmatprep.mubr.bf16.mxu0 0
      %7474 = vmatmul.mubr.bf16.gmra.mrb[0].mxu0 %v7005
      %v7475 = vpop.f32.mrb[0].mxu0
      %v7476 = vadd.f32 0.0, %v7475
      %v7477 = vpop.f32.mrb[0].mxu0
      %v7478 = vpop.f32.mrb[0].mxu0
      %v7479 = vadd.f32 0.0, %v7478
      %v7480 = vpop.f32.mrb[0].mxu0
      %7481 = vmatprep.mubr.bf16.mxu0 0
      %7482 = vmatmul.mubr.bf16.gmra.mrb[0].mxu0 %v7008
      %v7483 = vpop.f32.mrb[0].mxu0
      %v7484 = vadd.f32 0.0, %v7483
      %v7485 = vpop.f32.mrb[0].mxu0
      %v7486 = vpop.f32.mrb[0].mxu0
      %v7487 = vadd.f32 0.0, %v7486
      %v7488 = vpop.f32.mrb[0].mxu0
      %7489 = vmatprep.mubr.bf16.mxu0 0
      %7490 = vmatmul.mubr.bf16.gmra.mrb[0].mxu0 %v7011
      %v7491 = vpop.f32.mrb[0].mxu0
      %v7492 = vadd.f32 0.0, %v7491
      %v7493 = vpop.f32.mrb[0].mxu0
      %v7494 = vpop.f32.mrb[0].mxu0
      %v7495 = vadd.f32 0.0, %v7494
      %v7496 = vpop.f32.mrb[0].mxu0
      %7497 = vmatprep.mubr.bf16.mxu0 0
      %7498 = vmatmul.mubr.bf16.gmra.mrb[0].mxu0 %v7014
      %v7499 = vpop.f32.mrb[0].mxu0
      %v7500 = vadd.f32 0.0, %v7499
      %v7501 = vpop.f32.mrb[0].mxu0
      %v7502 = vpop.f32.mrb[0].mxu0
      %v7503 = vadd.f32 0.0, %v7502
      %v7504 = vpop.f32.mrb[0].mxu0
      %7505 = vmatprep.mubr.bf16.mxu0 0
      %7506 = vmatmul.mubr.bf16.gmra.mrb[0].mxu0 %v7017
      %v7507 = vpop.f32.mrb[0].mxu0
      %v7508 = vadd.f32 0.0, %v7507
      %v7509 = vpop.f32.mrb[0].mxu0
      %v7510 = vpop.f32.mrb[0].mxu0
      %v7511 = vadd.f32 0.0, %v7510
      %v7512 = vpop.f32.mrb[0].mxu0
      %7513 = vmatprep.mubr.bf16.mxu0 0
      %7514 = vmatmul.mubr.bf16.gmra.mrb[0].mxu0 %v7020
      %v7515 = vpop.f32.mrb[0].mxu0
      %v7516 = vadd.f32 0.0, %v7515
      %v7517 = vpop.f32.mrb[0].mxu0
      %v7518 = vpop.f32.mrb[0].mxu0
      %v7519 = vadd.f32 0.0, %v7518
      %v7520 = vpop.f32.mrb[0].mxu0
      %7521 = vmatprep.mubr.bf16.mxu0 0
      %7522 = vmatmul.mubr.bf16.gmra.mrb[0].mxu0 %v7023
      %v7523 = vpop.f32.mrb[0].mxu0
      %v7524 = vadd.f32 0.0, %v7523
      %v7525 = vpop.f32.mrb[0].mxu0
      %v7526 = vpop.f32.mrb[0].mxu0
      %v7527 = vadd.f32 0.0, %v7526
      %v7528 = vpop.f32.mrb[0].mxu0
      %7529 = vmatprep.mubr.bf16.mxu0 0
      %7530 = vmatmul.mubr.bf16.gmra.mrb[0].mxu0 %v7026
      %v7531 = vpop.f32.mrb[0].mxu0
      %v7532 = vadd.f32 0.0, %v7531
      %v7533 = vpop.f32.mrb[0].mxu0
      %v7534 = vpop.f32.mrb[0].mxu0
      %v7535 = vadd.f32 0.0, %v7534
      %v7536 = vpop.f32.mrb[0].mxu0
      %7537 = vmatprep.mubr.bf16.mxu0 0
      %7538 = vmatmul.mubr.bf16.gmra.mrb[0].mxu0 %v7029
      %v7539 = vpop.f32.mrb[0].mxu0
      %v7540 = vadd.f32 0.0, %v7539
      %v7541 = vpop.f32.mrb[0].mxu0
      %v7542 = vpop.f32.mrb[0].mxu0
      %v7543 = vadd.f32 0.0, %v7542
      %v7544 = vpop.f32.mrb[0].mxu0
      %7545 = vmatprep.mubr.bf16.mxu0 0
      %7546 = vmatmul.mubr.bf16.gmra.mrb[0].mxu0 %v7032
      %v7547 = vpop.f32.mrb[0].mxu0
      %v7548 = vadd.f32 0.0, %v7547
      %v7549 = vpop.f32.mrb[0].mxu0
      %v7550 = vpop.f32.mrb[0].mxu0
      %v7551 = vadd.f32 0.0, %v7550
      %v7552 = vpop.f32.mrb[0].mxu0
      %7553 = vmatprep.mubr.bf16.mxu0 0
      %7554 = vmatmul.mubr.bf16.gmra.mrb[0].mxu0 %v7035
      %v7555 = vpop.f32.mrb[0].mxu0
      %v7556 = vadd.f32 0.0, %v7555
      %v7557 = vpop.f32.mrb[0].mxu0
      %v7558 = vpop.f32.mrb[0].mxu0
      %v7559 = vadd.f32 0.0, %v7558
      %v7560 = vpop.f32.mrb[0].mxu0
      %7561 = vmatprep.mubr.bf16.mxu0 0
      %7562 = vmatmul.mubr.bf16.gmra.mrb[0].mxu0 %v7038
      %v7563 = vpop.f32.mrb[0].mxu0
      %v7564 = vadd.f32 0.0, %v7563
      %v7565 = vpop.f32.mrb[0].mxu0
      %v7566 = vpop.f32.mrb[0].mxu0
      %v7567 = vadd.f32 0.0, %v7566
      %v7568 = vpop.f32.mrb[0].mxu0
      %7569 = vmatprep.mubr.bf16.mxu0 0
      %7570 = vmatmul.mubr.bf16.gmra.mrb[0].mxu0 %v7041
      %v7571 = vpop.f32.mrb[0].mxu0
      %v7572 = vadd.f32 0.0, %v7571
      %v7573 = vpop.f32.mrb[0].mxu0
      %v7574 = vpop.f32.mrb[0].mxu0
      %v7575 = vadd.f32 0.0, %v7574
      %v7576 = vpop.f32.mrb[0].mxu0
      %7577 = vmatprep.mubr.bf16.mxu0 0
      %7578 = vmatmul.mubr.bf16.gmra.mrb[0].mxu0 %v7044
      %v7579 = vpop.f32.mrb[0].mxu0
      %v7580 = vadd.f32 0.0, %v7579
      %v7581 = vpop.f32.mrb[0].mxu0
      %v7582 = vpop.f32.mrb[0].mxu0
      %v7583 = vadd.f32 0.0, %v7582
      %v7584 = vpop.f32.mrb[0].mxu0
      %7585 = vmatprep.mubr.bf16.mxu0 0
      %7586 = vmatmul.mubr.bf16.gmra.mrb[0].mxu0 %v7047
      %v7587 = vpop.f32.mrb[0].mxu0
      %v7588 = vadd.f32 0.0, %v7587
      %v7589 = vpop.f32.mrb[0].mxu0
      %v7590 = vpop.f32.mrb[0].mxu0
      %v7591 = vadd.f32 0.0, %v7590
      %v7592 = vpop.f32.mrb[0].mxu0
      %7593 = vmatprep.mubr.bf16.mxu0 0
      %7594 = vmatmul.mubr.bf16.gmra.mrb[0].mxu0 %v7050
      %v7595 = vpop.f32.mrb[0].mxu0
      %v7596 = vadd.f32 0.0, %v7595
      %v7597 = vpop.f32.mrb[0].mxu0
      %v7598 = vpop.f32.mrb[0].mxu0
      %v7599 = vadd.f32 0.0, %v7598
      %v7600 = vpop.f32.mrb[0].mxu0
      %7601 = vmatprep.mubr.bf16.mxu0 0
      %7602 = vmatmul.mubr.bf16.gmra.mrb[0].mxu0 %v7053
      %v7603 = vpop.f32.mrb[0].mxu0
      %v7604 = vadd.f32 0.0, %v7603
      %v7605 = vpop.f32.mrb[0].mxu0
      %v7606 = vpop.f32.mrb[0].mxu0
      %v7607 = vadd.f32 0.0, %v7606
      %v7608 = vpop.f32.mrb[0].mxu0
      %7609 = vmatprep.mubr.bf16.mxu0 0
      %7610 = vmatmul.mubr.bf16.gmra.mrb[0].mxu0 %v7056
      %v7611 = vpop.f32.mrb[0].mxu0
      %v7612 = vadd.f32 0.0, %v7611
      %v7613 = vpop.f32.mrb[0].mxu0
      %v7614 = vpop.f32.mrb[0].mxu0
      %v7615 = vadd.f32 0.0, %v7614
      %v7616 = vpop.f32.mrb[0].mxu0
      %7617 = vmatprep.mubr.bf16.mxu0 0
      %7618 = vmatmul.mubr.bf16.gmra.mrb[0].mxu0 %v7059
      %v7619 = vpop.f32.mrb[0].mxu0
      %v7620 = vadd.f32 0.0, %v7619
      %v7621 = vpop.f32.mrb[0].mxu0
      %v7622 = vpop.f32.mrb[0].mxu0
      %v7623 = vadd.f32 0.0, %v7622
      %v7624 = vpop.f32.mrb[0].mxu0
      %7625 = vmatprep.mubr.bf16.mxu0 0
      %7626 = vmatmul.mubr.bf16.gmra.mrb[0].mxu0 %v7062
      %v7627 = vpop.f32.mrb[0].mxu0
      %v7628 = vadd.f32 0.0, %v7627
      %v7629 = vpop.f32.mrb[0].mxu0
      %v7630 = vpop.f32.mrb[0].mxu0
      %v7631 = vadd.f32 0.0, %v7630
      %v7632 = vpop.f32.mrb[0].mxu0
      %7633 = vmatprep.mubr.bf16.mxu0 0
      %7634 = vmatmul.mubr.bf16.gmra.mrb[0].mxu0 %v7065
      %v7635 = vpop.f32.mrb[0].mxu0
      %v7636 = vadd.f32 0.0, %v7635
      %v7637 = vpop.f32.mrb[0].mxu0
      %v7638 = vpop.f32.mrb[0].mxu0
      %v7639 = vadd.f32 0.0, %v7638
      %v7640 = vpop.f32.mrb[0].mxu0
      %7641 = vmatprep.mubr.bf16.mxu0 0
      %7642 = vmatmul.mubr.bf16.gmra.mrb[0].mxu0 %v7068
      %v7643 = vpop.f32.mrb[0].mxu0
      %v7644 = vadd.f32 0.0, %v7643
      %v7645 = vpop.f32.mrb[0].mxu0
      %v7646 = vpop.f32.mrb[0].mxu0
      %v7647 = vadd.f32 0.0, %v7646
      %v7648 = vpop.f32.mrb[0].mxu0
      %7649 = vdwg.mxu0
      %v7650 = vadd.f32 %v6524, %v7108
      %v7651 = vadd.f32 %v6525, %v7111
      %v7652 = vadd.f32 %v6526, %v7116
      %v7653 = vadd.f32 %v6527, %v7119
      %v7654 = vadd.f32 %v6528, %v7124
      %v7655 = vadd.f32 %v6529, %v7127
      %v7656 = vadd.f32 %v6530, %v7132
      %v7657 = vadd.f32 %v6531, %v7135
      %v7658 = vadd.f32 %v6532, %v7140
      %v7659 = vadd.f32 %v6533, %v7143
      %v7660 = vadd.f32 %v6534, %v7148
      %v7661 = vadd.f32 %v6535, %v7151
      %v7662 = vadd.f32 %v6536, %v7156
      %v7663 = vadd.f32 %v6537, %v7159
      %v7664 = vadd.f32 %v6538, %v7164
      %v7665 = vadd.f32 %v6539, %v7167
      %v7666 = vadd.f32 %v6540, %v7172
      %v7667 = vadd.f32 %v6541, %v7175
      %v7668 = vadd.f32 %v6542, %v7180
      %v7669 = vadd.f32 %v6543, %v7183
      %v7670 = vadd.f32 %v6544, %v7188
      %v7671 = vadd.f32 %v6545, %v7191
      %v7672 = vadd.f32 %v6546, %v7196
      %v7673 = vadd.f32 %v6547, %v7199
      %v7674 = vadd.f32 %v6548, %v7204
      %v7675 = vadd.f32 %v6549, %v7207
      %v7676 = vadd.f32 %v6550, %v7212
      %v7677 = vadd.f32 %v6551, %v7215
      %v7678 = vadd.f32 %v6552, %v7220
      %v7679 = vadd.f32 %v6553, %v7223
      %v7680 = vadd.f32 %v6554, %v7228
      %v7681 = vadd.f32 %v6555, %v7231
      %v7682 = vadd.f32 %v6556, %v7236
      %v7683 = vadd.f32 %v6557, %v7239
      %v7684 = vadd.f32 %v6558, %v7244
      %v7685 = vadd.f32 %v6559, %v7247
      %v7686 = vadd.f32 %v6560, %v7252
      %v7687 = vadd.f32 %v6561, %v7255
      %v7688 = vadd.f32 %v6562, %v7260
      %v7689 = vadd.f32 %v6563, %v7263
      %v7690 = vadd.f32 %v6564, %v7268
      %v7691 = vadd.f32 %v6565, %v7271
      %v7692 = vadd.f32 %v6566, %v7276
      %v7693 = vadd.f32 %v6567, %v7279
      %v7694 = vadd.f32 %v6568, %v7284
      %v7695 = vadd.f32 %v6569, %v7287
      %v7696 = vadd.f32 %v6570, %v7292
      %v7697 = vadd.f32 %v6571, %v7295
      %v7698 = vadd.f32 %v6572, %v7300
      %v7699 = vadd.f32 %v6573, %v7303
      %v7700 = vadd.f32 %v6574, %v7308
      %v7701 = vadd.f32 %v6575, %v7311
      %v7702 = vadd.f32 %v6576, %v7316
      %v7703 = vadd.f32 %v6577, %v7319
      %v7704 = vadd.f32 %v6578, %v7324
      %v7705 = vadd.f32 %v6579, %v7327
      %v7706 = vadd.f32 %v6580, %v7332
      %v7707 = vadd.f32 %v6581, %v7335
      %v7708 = vadd.f32 %v6582, %v7340
      %v7709 = vadd.f32 %v6583, %v7343
      %v7710 = vadd.f32 %v6584, %v7348
      %v7711 = vadd.f32 %v6585, %v7351
      %v7712 = vadd.f32 %v6586, %v7356
      %v7713 = vadd.f32 %v6587, %v7359
      %v7714 = vadd.f32 %v6588, %v7364
      %v7715 = vadd.f32 %v6589, %v7367
      %v7716 = vadd.f32 %v6590, %v7372
      %v7717 = vadd.f32 %v6591, %v7375
      %v7718 = vadd.f32 %v6592, %v7380
      %v7719 = vadd.f32 %v6593, %v7383
      %v7720 = vadd.f32 %v6594, %v7388
      %v7721 = vadd.f32 %v6595, %v7391
      %v7722 = vadd.f32 %v6596, %v7396
      %v7723 = vadd.f32 %v6597, %v7399
      %v7724 = vadd.f32 %v6598, %v7404
      %v7725 = vadd.f32 %v6599, %v7407
      %v7726 = vadd.f32 %v6600, %v7412
      %v7727 = vadd.f32 %v6601, %v7415
      %v7728 = vadd.f32 %v6602, %v7420
      %v7729 = vadd.f32 %v6603, %v7423
      %v7730 = vadd.f32 %v6604, %v7428
      %v7731 = vadd.f32 %v6605, %v7431
      %v7732 = vadd.f32 %v6606, %v7436
      %v7733 = vadd.f32 %v6607, %v7439
      %v7734 = vadd.f32 %v6608, %v7444
      %v7735 = vadd.f32 %v6609, %v7447
      %v7736 = vadd.f32 %v6610, %v7452
      %v7737 = vadd.f32 %v6611, %v7455
      %v7738 = vadd.f32 %v6612, %v7460
      %v7739 = vadd.f32 %v6613, %v7463
      %v7740 = vadd.f32 %v6614, %v7468
      %v7741 = vadd.f32 %v6615, %v7471
      %v7742 = vadd.f32 %v6616, %v7476
      %v7743 = vadd.f32 %v6617, %v7479
      %v7744 = vadd.f32 %v6618, %v7484
      %v7745 = vadd.f32 %v6619, %v7487
      %v7746 = vadd.f32 %v6620, %v7492
      %v7747 = vadd.f32 %v6621, %v7495
      %v7748 = vadd.f32 %v6622, %v7500
      %v7749 = vadd.f32 %v6623, %v7503
      %v7750 = vadd.f32 %v6624, %v7508
      %v7751 = vadd.f32 %v6625, %v7511
      %v7752 = vadd.f32 %v6626, %v7516
      %v7753 = vadd.f32 %v6627, %v7519
      %v7754 = vadd.f32 %v6628, %v7524
      %v7755 = vadd.f32 %v6629, %v7527
      %v7756 = vadd.f32 %v6630, %v7532
      %v7757 = vadd.f32 %v6631, %v7535
      %v7758 = vadd.f32 %v6632, %v7540
      %v7759 = vadd.f32 %v6633, %v7543
      %v7760 = vadd.f32 %v6634, %v7548
      %v7761 = vadd.f32 %v6635, %v7551
      %v7762 = vadd.f32 %v6636, %v7556
      %v7763 = vadd.f32 %v6637, %v7559
      %v7764 = vadd.f32 %v6638, %v7564
      %v7765 = vadd.f32 %v6639, %v7567
      %v7766 = vadd.f32 %v6640, %v7572
      %v7767 = vadd.f32 %v6641, %v7575
      %v7768 = vadd.f32 %v6642, %v7580
      %v7769 = vadd.f32 %v6643, %v7583
      %v7770 = vadd.f32 %v6644, %v7588
      %v7771 = vadd.f32 %v6645, %v7591
      %v7772 = vadd.f32 %v6646, %v7596
      %v7773 = vadd.f32 %v6647, %v7599
      %v7774 = vadd.f32 %v6648, %v7604
      %v7775 = vadd.f32 %v6649, %v7607
      %v7776 = vadd.f32 %v6650, %v7612
      %v7777 = vadd.f32 %v6651, %v7615
      %v7778 = vadd.f32 %v6652, %v7620
      %v7779 = vadd.f32 %v6653, %v7623
      %v7780 = vadd.f32 %v6654, %v7628
      %v7781 = vadd.f32 %v6655, %v7631
      %v7782 = vadd.f32 %v6656, %v7636
      %v7783 = vadd.f32 %v6657, %v7639
      %v7784 = vadd.f32 %v6658, %v7644
      %v7785 = vadd.f32 %v6659, %v7647
      %v7786 = vld [vmem:[%s165 + $0x45] sm:$0xff]
      %v7787 = vld [vmem:[%s165 + $0x4d] sm:$0xff]
      %v7788 = vld [vmem:[%s165 + $0x55] sm:$0xff]
      %v7789 = vld [vmem:[%s165 + $0x5d] sm:$0xff]
      %v7790 = vld [vmem:[%s165 + $0x65] sm:$0xff]
      %v7791 = vld [vmem:[%s165 + $0x6d] sm:$0xff]
      %v7792 = vld [vmem:[%s165 + $0x75] sm:$0xff]
      %v7793 = vld [vmem:[%s165 + $0x7d] sm:$0xff]
      %v7794 = vld [vmem:[%s165 + $0x85] sm:$0xff]
      %v7795 = vld [vmem:[%s165 + $0x8d] sm:$0xff]
      %v7796 = vld [vmem:[%s165 + $0x95] sm:$0xff]
      %v7797 = vld [vmem:[%s165 + $0x9d] sm:$0xff]
      %v7798 = vld [vmem:[%s165 + $0xa5] sm:$0xff]
      %v7799 = vld [vmem:[%s165 + $0xad] sm:$0xff]
      %v7800 = vld [vmem:[%s165 + $0xb5] sm:$0xff]
      %v7801 = vld [vmem:[%s165 + $0xbd] sm:$0xff]
      %v7802 = vld [vmem:[%s165 + $0xc5] sm:$0xff]
      %v7803 = vld [vmem:[%s165 + $0xcd] sm:$0xff]
      %v7804 = vld [vmem:[%s165 + $0xd5] sm:$0xff]
      %v7805 = vld [vmem:[%s165 + $0xdd] sm:$0xff]
      %v7806 = vld [vmem:[%s165 + $0xe5] sm:$0xff]
      %v7807 = vld [vmem:[%s165 + $0xed] sm:$0xff]
      %v7808 = vld [vmem:[%s165 + $0xf5] sm:$0xff]
      %v7809 = vld [vmem:[%s165 + $0xfd] sm:$0xff]
      %v7810 = vld [vmem:[%s165 + $0x105] sm:$0xff]
      %v7811 = vld [vmem:[%s165 + $0x10d] sm:$0xff]
      %v7812 = vld [vmem:[%s165 + $0x115] sm:$0xff]
      %v7813 = vld [vmem:[%s165 + $0x11d] sm:$0xff]
      %v7814 = vld [vmem:[%s165 + $0x125] sm:$0xff]
      %v7815 = vld [vmem:[%s165 + $0x12d] sm:$0xff]
      %v7816 = vld [vmem:[%s165 + $0x135] sm:$0xff]
      %v7817 = vld [vmem:[%s165 + $0x13d] sm:$0xff]
      %v7818 = vld [vmem:[%s165 + $0x145] sm:$0xff]
      %v7819 = vld [vmem:[%s165 + $0x14d] sm:$0xff]
      %v7820 = vld [vmem:[%s165 + $0x155] sm:$0xff]
      %v7821 = vld [vmem:[%s165 + $0x15d] sm:$0xff]
      %v7822 = vld [vmem:[%s165 + $0x165] sm:$0xff]
      %v7823 = vld [vmem:[%s165 + $0x16d] sm:$0xff]
      %v7824 = vld [vmem:[%s165 + $0x175] sm:$0xff]
      %v7825 = vld [vmem:[%s165 + $0x17d] sm:$0xff]
      %v7826 = vld [vmem:[%s165 + $0x185] sm:$0xff]
      %v7827 = vld [vmem:[%s165 + $0x18d] sm:$0xff]
      %v7828 = vld [vmem:[%s165 + $0x195] sm:$0xff]
      %v7829 = vld [vmem:[%s165 + $0x19d] sm:$0xff]
      %v7830 = vld [vmem:[%s165 + $0x1a5] sm:$0xff]
      %v7831 = vld [vmem:[%s165 + $0x1ad] sm:$0xff]
      %v7832 = vld [vmem:[%s165 + $0x1b5] sm:$0xff]
      %v7833 = vld [vmem:[%s165 + $0x1bd] sm:$0xff]
      %v7834 = vld [vmem:[%s165 + $0x1c5] sm:$0xff]
      %v7835 = vld [vmem:[%s165 + $0x1cd] sm:$0xff]
      %v7836 = vld [vmem:[%s165 + $0x1d5] sm:$0xff]
      %v7837 = vld [vmem:[%s165 + $0x1dd] sm:$0xff]
      %v7838 = vld [vmem:[%s165 + $0x1e5] sm:$0xff]
      %v7839 = vld [vmem:[%s165 + $0x1ed] sm:$0xff]
      %v7840 = vld [vmem:[%s165 + $0x1f5] sm:$0xff]
      %v7841 = vld [vmem:[%s165 + $0x1fd] sm:$0xff]
      %v7842 = vld [vmem:[%s165 + $0x205] sm:$0xff]
      %v7843 = vld [vmem:[%s165 + $0x20d] sm:$0xff]
      %v7844 = vld [vmem:[%s165 + $0x215] sm:$0xff]
      %v7845 = vld [vmem:[%s165 + $0x21d] sm:$0xff]
      %v7846 = vld [vmem:[%s165 + $0x225] sm:$0xff]
      %v7847 = vld [vmem:[%s165 + $0x22d] sm:$0xff]
      %v7848 = vld [vmem:[%s165 + $0x235] sm:$0xff]
      %v7849 = vld [vmem:[%s165 + $0x23d] sm:$0xff]
      %v7850 = vld [vmem:[%s165 + $0x245] sm:$0xff]
      %v7851 = vld [vmem:[%s165 + $0x24d] sm:$0xff]
      %v7852 = vld [vmem:[%s165 + $0x255] sm:$0xff]
      %v7853 = vld [vmem:[%s165 + $0x25d] sm:$0xff]
      %v7854 = vld [vmem:[%s165 + $0x265] sm:$0xff]
      %v7855 = vld [vmem:[%s165 + $0x26d] sm:$0xff]
      %v7856 = vld [vmem:[%s165 + $0x275] sm:$0xff]
      %v7857 = vld [vmem:[%s165 + $0x27d] sm:$0xff]
      %v7858 = vld [vmem:[%s165 + $0x285] sm:$0xff]
      %v7859 = vld [vmem:[%s165 + $0x28d] sm:$0xff]
      %v7860 = vld [vmem:[%s165 + $0x295] sm:$0xff]
      %v7861 = vld [vmem:[%s165 + $0x29d] sm:$0xff]
      %v7862 = vld [vmem:[%s165 + $0x2a5] sm:$0xff]
      %v7863 = vld [vmem:[%s165 + $0x2ad] sm:$0xff]
      %v7864 = vld [vmem:[%s165 + $0x2b5] sm:$0xff]
      %v7865 = vld [vmem:[%s165 + $0x2bd] sm:$0xff]
      %v7866 = vld [vmem:[%s165 + $0x2c5] sm:$0xff]
      %v7867 = vld [vmem:[%s165 + $0x2cd] sm:$0xff]
      %v7868 = vld [vmem:[%s165 + $0x2d5] sm:$0xff]
      %v7869 = vld [vmem:[%s165 + $0x2dd] sm:$0xff]
      %v7870 = vld [vmem:[%s165 + $0x2e5] sm:$0xff]
      %v7871 = vld [vmem:[%s165 + $0x2ed] sm:$0xff]
      %v7872 = vld [vmem:[%s165 + $0x2f5] sm:$0xff]
      %v7873 = vld [vmem:[%s165 + $0x2fd] sm:$0xff]
      %v7874 = vld [vmem:[%s165 + $0x305] sm:$0xff]
      %v7875 = vld [vmem:[%s165 + $0x30d] sm:$0xff]
      %v7876 = vld [vmem:[%s165 + $0x315] sm:$0xff]
      %v7877 = vld [vmem:[%s165 + $0x31d] sm:$0xff]
      %v7878 = vld [vmem:[%s165 + $0x325] sm:$0xff]
      %v7879 = vld [vmem:[%s165 + $0x32d] sm:$0xff]
      %v7880 = vld [vmem:[%s165 + $0x335] sm:$0xff]
      %v7881 = vld [vmem:[%s165 + $0x33d] sm:$0xff]
      %v7882 = vld [vmem:[%s165 + $0x345] sm:$0xff]
      %v7883 = vld [vmem:[%s165 + $0x34d] sm:$0xff]
      %v7884 = vld [vmem:[%s165 + $0x355] sm:$0xff]
      %v7885 = vld [vmem:[%s165 + $0x35d] sm:$0xff]
      %v7886 = vld [vmem:[%s165 + $0x365] sm:$0xff]
      %v7887 = vld [vmem:[%s165 + $0x36d] sm:$0xff]
      %v7888 = vld [vmem:[%s165 + $0x375] sm:$0xff]
      %v7889 = vld [vmem:[%s165 + $0x37d] sm:$0xff]
      %v7890 = vld [vmem:[%s165 + $0x385] sm:$0xff]
      %v7891 = vld [vmem:[%s165 + $0x38d] sm:$0xff]
      %v7892 = vld [vmem:[%s165 + $0x395] sm:$0xff]
      %v7893 = vld [vmem:[%s165 + $0x39d] sm:$0xff]
      %v7894 = vld [vmem:[%s165 + $0x3a5] sm:$0xff]
      %v7895 = vld [vmem:[%s165 + $0x3ad] sm:$0xff]
      %v7896 = vld [vmem:[%s165 + $0x3b5] sm:$0xff]
      %v7897 = vld [vmem:[%s165 + $0x3bd] sm:$0xff]
      %v7898 = vld [vmem:[%s165 + $0x3c5] sm:$0xff]
      %v7899 = vld [vmem:[%s165 + $0x3cd] sm:$0xff]
      %v7900 = vld [vmem:[%s165 + $0x3d5] sm:$0xff]
      %v7901 = vld [vmem:[%s165 + $0x3dd] sm:$0xff]
      %v7902 = vld [vmem:[%s165 + $0x3e5] sm:$0xff]
      %v7903 = vld [vmem:[%s165 + $0x3ed] sm:$0xff]
      %v7904 = vld [vmem:[%s165 + $0x3f5] sm:$0xff]
      %v7905 = vld [vmem:[%s165 + $0x3fd] sm:$0xff]
      %v7906 = vld [vmem:[%s165 + $0x405] sm:$0xff]
      %v7907 = vld [vmem:[%s165 + $0x40d] sm:$0xff]
      %v7908 = vld [vmem:[%s165 + $0x415] sm:$0xff]
      %v7909 = vld [vmem:[%s165 + $0x41d] sm:$0xff]
      %v7910 = vld [vmem:[%s165 + $0x425] sm:$0xff]
      %v7911 = vld [vmem:[%s165 + $0x42d] sm:$0xff]
      %v7912 = vld [vmem:[%s165 + $0x435] sm:$0xff]
      %v7913 = vld [vmem:[%s165 + $0x43d] sm:$0xff]
      %v7914 = vld [vmem:[%s165 + $0x445] sm:$0xff]
      %v7915 = vld [vmem:[%s165 + $0x44d] sm:$0xff]
      %v7916 = vld [vmem:[%s165 + $0x455] sm:$0xff]
      %v7917 = vld [vmem:[%s165 + $0x45d] sm:$0xff]
      %v7918 = vld [vmem:[%s165 + $0x465] sm:$0xff]
      %v7919 = vld [vmem:[%s165 + $0x46d] sm:$0xff]
      %v7920 = vld [vmem:[%s165 + $0x475] sm:$0xff]
      %v7921 = vld [vmem:[%s165 + $0x47d] sm:$0xff]
      %v7922 = vpack.c.bf16 %v7787, %v7786
      %v7923 = vpack.c.bf16 %v7789, %v7788
      %v7924 = vpack.c.bf16 %v7791, %v7790
      %v7925 = vpack.c.bf16 %v7793, %v7792
      %v7926 = vpack.c.bf16 %v7795, %v7794
      %v7927 = vpack.c.bf16 %v7797, %v7796
      %v7928 = vpack.c.bf16 %v7799, %v7798
      %v7929 = vpack.c.bf16 %v7801, %v7800
      %v7930 = vpack.c.bf16 %v7803, %v7802
      %v7931 = vpack.c.bf16 %v7805, %v7804
      %v7932 = vpack.c.bf16 %v7807, %v7806
      %v7933 = vpack.c.bf16 %v7809, %v7808
      %v7934 = vpack.c.bf16 %v7811, %v7810
      %v7935 = vpack.c.bf16 %v7813, %v7812
      %v7936 = vpack.c.bf16 %v7815, %v7814
      %v7937 = vpack.c.bf16 %v7817, %v7816
      %v7938 = vpack.c.bf16 %v7819, %v7818
      %v7939 = vpack.c.bf16 %v7821, %v7820
      %v7940 = vpack.c.bf16 %v7823, %v7822
      %v7941 = vpack.c.bf16 %v7825, %v7824
      %v7942 = vpack.c.bf16 %v7827, %v7826
      %v7943 = vpack.c.bf16 %v7829, %v7828
      %v7944 = vpack.c.bf16 %v7831, %v7830
      %v7945 = vpack.c.bf16 %v7833, %v7832
      %v7946 = vpack.c.bf16 %v7835, %v7834
      %v7947 = vpack.c.bf16 %v7837, %v7836
      %v7948 = vpack.c.bf16 %v7839, %v7838
      %v7949 = vpack.c.bf16 %v7841, %v7840
      %v7950 = vpack.c.bf16 %v7843, %v7842
      %v7951 = vpack.c.bf16 %v7845, %v7844
      %v7952 = vpack.c.bf16 %v7847, %v7846
      %v7953 = vpack.c.bf16 %v7849, %v7848
      %v7954 = vpack.c.bf16 %v7851, %v7850
      %v7955 = vpack.c.bf16 %v7853, %v7852
      %v7956 = vpack.c.bf16 %v7855, %v7854
      %v7957 = vpack.c.bf16 %v7857, %v7856
      %v7958 = vpack.c.bf16 %v7859, %v7858
      %v7959 = vpack.c.bf16 %v7861, %v7860
      %v7960 = vpack.c.bf16 %v7863, %v7862
      %v7961 = vpack.c.bf16 %v7865, %v7864
      %v7962 = vpack.c.bf16 %v7867, %v7866
      %v7963 = vpack.c.bf16 %v7869, %v7868
      %v7964 = vpack.c.bf16 %v7871, %v7870
      %v7965 = vpack.c.bf16 %v7873, %v7872
      %v7966 = vpack.c.bf16 %v7875, %v7874
      %v7967 = vpack.c.bf16 %v7877, %v7876
      %v7968 = vpack.c.bf16 %v7879, %v7878
      %v7969 = vpack.c.bf16 %v7881, %v7880
      %v7970 = vpack.c.bf16 %v7883, %v7882
      %v7971 = vpack.c.bf16 %v7885, %v7884
      %v7972 = vpack.c.bf16 %v7887, %v7886
      %v7973 = vpack.c.bf16 %v7889, %v7888
      %v7974 = vpack.c.bf16 %v7891, %v7890
      %v7975 = vpack.c.bf16 %v7893, %v7892
      %v7976 = vpack.c.bf16 %v7895, %v7894
      %v7977 = vpack.c.bf16 %v7897, %v7896
      %v7978 = vpack.c.bf16 %v7899, %v7898
      %v7979 = vpack.c.bf16 %v7901, %v7900
      %v7980 = vpack.c.bf16 %v7903, %v7902
      %v7981 = vpack.c.bf16 %v7905, %v7904
      %v7982 = vpack.c.bf16 %v7907, %v7906
      %v7983 = vpack.c.bf16 %v7909, %v7908
      %v7984 = vpack.c.bf16 %v7911, %v7910
      %v7985 = vpack.c.bf16 %v7913, %v7912
      %v7986 = vpack.c.bf16 %v7915, %v7914
      %v7987 = vpack.c.bf16 %v7917, %v7916
      %v7988 = vpack.c.bf16 %v7919, %v7918
      %v7989 = vpack.c.bf16 %v7921, %v7920
      %s7990 = scalar_lea.vmem %s1, 14
      %v7991 = vld [vmem:[%s7990] sm:$0x3]
      %v7993 = vsel %vm583, %v7922, 0
      %v7996 = vsel %vm583, %v7923, 0
      %v7999 = vsel %vm583, %v7924, 0
      %v8002 = vsel %vm583, %v7925, 0
      %v8005 = vsel %vm583, %v7926, 0
      %v8008 = vsel %vm583, %v7927, 0
      %v8011 = vsel %vm583, %v7928, 0
      %v8014 = vsel %vm583, %v7929, 0
      %v8017 = vsel %vm583, %v7930, 0
      %v8020 = vsel %vm583, %v7931, 0
      %v8023 = vsel %vm583, %v7932, 0
      %v8026 = vsel %vm583, %v7933, 0
      %v8029 = vsel %vm583, %v7934, 0
      %v8032 = vsel %vm583, %v7935, 0
      %v8035 = vsel %vm583, %v7936, 0
      %v8038 = vsel %vm583, %v7937, 0
      %v8041 = vsel %vm583, %v7938, 0
      %v8044 = vsel %vm583, %v7939, 0
      %v8047 = vsel %vm583, %v7940, 0
      %v8050 = vsel %vm583, %v7941, 0
      %v8053 = vsel %vm583, %v7942, 0
      %v8056 = vsel %vm583, %v7943, 0
      %v8059 = vsel %vm583, %v7944, 0
      %v8062 = vsel %vm583, %v7945, 0
      %v8065 = vsel %vm583, %v7946, 0
      %v8068 = vsel %vm583, %v7947, 0
      %v8071 = vsel %vm583, %v7948, 0
      %v8074 = vsel %vm583, %v7949, 0
      %v8077 = vsel %vm583, %v7950, 0
      %v8080 = vsel %vm583, %v7951, 0
      %v8083 = vsel %vm583, %v7952, 0
      %v8086 = vsel %vm583, %v7953, 0
      %v8089 = vsel %vm583, %v7954, 0
      %v8092 = vsel %vm583, %v7955, 0
      %v8095 = vsel %vm583, %v7956, 0
      %v8098 = vsel %vm583, %v7957, 0
      %v8101 = vsel %vm583, %v7958, 0
      %v8104 = vsel %vm583, %v7959, 0
      %v8107 = vsel %vm583, %v7960, 0
      %v8110 = vsel %vm583, %v7961, 0
      %v8113 = vsel %vm583, %v7962, 0
      %v8116 = vsel %vm583, %v7963, 0
      %v8119 = vsel %vm583, %v7964, 0
      %v8122 = vsel %vm583, %v7965, 0
      %v8125 = vsel %vm583, %v7966, 0
      %v8128 = vsel %vm583, %v7967, 0
      %v8131 = vsel %vm583, %v7968, 0
      %v8134 = vsel %vm583, %v7969, 0
      %v8137 = vsel %vm583, %v7970, 0
      %v8140 = vsel %vm583, %v7971, 0
      %v8143 = vsel %vm583, %v7972, 0
      %v8146 = vsel %vm583, %v7973, 0
      %v8149 = vsel %vm583, %v7974, 0
      %v8152 = vsel %vm583, %v7975, 0
      %v8155 = vsel %vm583, %v7976, 0
      %v8158 = vsel %vm583, %v7977, 0
      %v8161 = vsel %vm583, %v7978, 0
      %v8164 = vsel %vm583, %v7979, 0
      %v8167 = vsel %vm583, %v7980, 0
      %v8170 = vsel %vm583, %v7981, 0
      %v8173 = vsel %vm583, %v7982, 0
      %v8176 = vsel %vm583, %v7983, 0
      %v8179 = vsel %vm583, %v7984, 0
      %v8182 = vsel %vm583, %v7985, 0
      %v8185 = vsel %vm583, %v7986, 0
      %v8188 = vsel %vm583, %v7987, 0
      %v8191 = vsel %vm583, %v7988, 0
      %v8194 = vsel %vm583, %v7989, 0
      %v8197 = vand.u32 %v7991, %v791
      %8199 = vmatprep.subr.bf16.mxu0 0
      %8200 = vmatpush1.bf16.msra.mxu0 %v8197
      %8201 = vmatprep.subr.bf16.mxu0 0
      %8202 = vmatpush1.bf16.msra.mxu0 0
      %8203 = vmatprep.subr.bf16.mxu0 0
      %8204 = vmatpush1.bf16.msra.mxu0 0
      %8205 = vmatprep.subr.bf16.mxu0 0
      %8206 = vmatpush1.bf16.msra.mxu0 0
      %8207 = vmatprep.subr.bf16.mxu0 0
      %8208 = vmatpush1.bf16.msra.mxu0 0
      %8209 = vmatprep.subr.bf16.mxu0 0
      %8210 = vmatpush1.bf16.msra.mxu0 0
      %8211 = vmatprep.subr.bf16.mxu0 0
      %8212 = vmatpush1.bf16.msra.mxu0 0
      %8213 = vmatprep.subr.bf16.mxu0 0
      %8214 = vmatpush1.bf16.msra.mxu0 0
      %8215 = vmatprep.subr.bf16.mxu0 0
      %8216 = vmatpush1.bf16.msra.mxu0 0
      %8217 = vmatprep.subr.bf16.mxu0 0
      %8218 = vmatpush1.bf16.msra.mxu0 0
      %8219 = vmatprep.subr.bf16.mxu0 0
      %8220 = vmatpush1.bf16.msra.mxu0 0
      %8221 = vmatprep.subr.bf16.mxu0 0
      %8222 = vmatpush1.bf16.msra.mxu0 0
      %8223 = vmatprep.subr.bf16.mxu0 0
      %8224 = vmatpush1.bf16.msra.mxu0 0
      %8225 = vmatprep.subr.bf16.mxu0 0
      %8226 = vmatpush1.bf16.msra.mxu0 0
      %8227 = vmatprep.subr.bf16.mxu0 0
      %8228 = vmatpush1.bf16.msra.mxu0 0
      %8229 = vmatprep.subr.bf16.mxu0 0
      %8230 = vmatpush1.bf16.msra.mxu0 0
      %8231 = vmatprep.mubr.bf16.mxu0 0
      %8232 = vmatmul.mubr.bf16.gmra.mrb[0].mxu0 %v7993
      %v8233 = vpop.f32.mrb[0].mxu0
      %v8234 = vadd.f32 0.0, %v8233
      %v8235 = vpop.f32.mrb[0].mxu0
      %v8236 = vpop.f32.mrb[0].mxu0
      %v8237 = vadd.f32 0.0, %v8236
      %v8238 = vpop.f32.mrb[0].mxu0
      %8239 = vmatprep.mubr.bf16.mxu0 0
      %8240 = vmatmul.mubr.bf16.gmra.mrb[0].mxu0 %v7996
      %v8241 = vpop.f32.mrb[0].mxu0
      %v8242 = vadd.f32 0.0, %v8241
      %v8243 = vpop.f32.mrb[0].mxu0
      %v8244 = vpop.f32.mrb[0].mxu0
      %v8245 = vadd.f32 0.0, %v8244
      %v8246 = vpop.f32.mrb[0].mxu0
      %8247 = vmatprep.mubr.bf16.mxu0 0
      %8248 = vmatmul.mubr.bf16.gmra.mrb[0].mxu0 %v7999
      %v8249 = vpop.f32.mrb[0].mxu0
      %v8250 = vadd.f32 0.0, %v8249
      %v8251 = vpop.f32.mrb[0].mxu0
      %v8252 = vpop.f32.mrb[0].mxu0
      %v8253 = vadd.f32 0.0, %v8252
      %v8254 = vpop.f32.mrb[0].mxu0
      %8255 = vmatprep.mubr.bf16.mxu0 0
      %8256 = vmatmul.mubr.bf16.gmra.mrb[0].mxu0 %v8002
      %v8257 = vpop.f32.mrb[0].mxu0
      %v8258 = vadd.f32 0.0, %v8257
      %v8259 = vpop.f32.mrb[0].mxu0
      %v8260 = vpop.f32.mrb[0].mxu0
      %v8261 = vadd.f32 0.0, %v8260
      %v8262 = vpop.f32.mrb[0].mxu0
      %8263 = vmatprep.mubr.bf16.mxu0 0
      %8264 = vmatmul.mubr.bf16.gmra.mrb[0].mxu0 %v8005
      %v8265 = vpop.f32.mrb[0].mxu0
      %v8266 = vadd.f32 0.0, %v8265
      %v8267 = vpop.f32.mrb[0].mxu0
      %v8268 = vpop.f32.mrb[0].mxu0
      %v8269 = vadd.f32 0.0, %v8268
      %v8270 = vpop.f32.mrb[0].mxu0
      %8271 = vmatprep.mubr.bf16.mxu0 0
      %8272 = vmatmul.mubr.bf16.gmra.mrb[0].mxu0 %v8008
      %v8273 = vpop.f32.mrb[0].mxu0
      %v8274 = vadd.f32 0.0, %v8273
      %v8275 = vpop.f32.mrb[0].mxu0
      %v8276 = vpop.f32.mrb[0].mxu0
      %v8277 = vadd.f32 0.0, %v8276
      %v8278 = vpop.f32.mrb[0].mxu0
      %8279 = vmatprep.mubr.bf16.mxu0 0
      %8280 = vmatmul.mubr.bf16.gmra.mrb[0].mxu0 %v8011
      %v8281 = vpop.f32.mrb[0].mxu0
      %v8282 = vadd.f32 0.0, %v8281
      %v8283 = vpop.f32.mrb[0].mxu0
      %v8284 = vpop.f32.mrb[0].mxu0
      %v8285 = vadd.f32 0.0, %v8284
      %v8286 = vpop.f32.mrb[0].mxu0
      %8287 = vmatprep.mubr.bf16.mxu0 0
      %8288 = vmatmul.mubr.bf16.gmra.mrb[0].mxu0 %v8014
      %v8289 = vpop.f32.mrb[0].mxu0
      %v8290 = vadd.f32 0.0, %v8289
      %v8291 = vpop.f32.mrb[0].mxu0
      %v8292 = vpop.f32.mrb[0].mxu0
      %v8293 = vadd.f32 0.0, %v8292
      %v8294 = vpop.f32.mrb[0].mxu0
      %8295 = vmatprep.mubr.bf16.mxu0 0
      %8296 = vmatmul.mubr.bf16.gmra.mrb[0].mxu0 %v8017
      %v8297 = vpop.f32.mrb[0].mxu0
      %v8298 = vadd.f32 0.0, %v8297
      %v8299 = vpop.f32.mrb[0].mxu0
      %v8300 = vpop.f32.mrb[0].mxu0
      %v8301 = vadd.f32 0.0, %v8300
      %v8302 = vpop.f32.mrb[0].mxu0
      %8303 = vmatprep.mubr.bf16.mxu0 0
      %8304 = vmatmul.mubr.bf16.gmra.mrb[0].mxu0 %v8020
      %v8305 = vpop.f32.mrb[0].mxu0
      %v8306 = vadd.f32 0.0, %v8305
      %v8307 = vpop.f32.mrb[0].mxu0
      %v8308 = vpop.f32.mrb[0].mxu0
      %v8309 = vadd.f32 0.0, %v8308
      %v8310 = vpop.f32.mrb[0].mxu0
      %8311 = vmatprep.mubr.bf16.mxu0 0
      %8312 = vmatmul.mubr.bf16.gmra.mrb[0].mxu0 %v8023
      %v8313 = vpop.f32.mrb[0].mxu0
      %v8314 = vadd.f32 0.0, %v8313
      %v8315 = vpop.f32.mrb[0].mxu0
      %v8316 = vpop.f32.mrb[0].mxu0
      %v8317 = vadd.f32 0.0, %v8316
      %v8318 = vpop.f32.mrb[0].mxu0
      %8319 = vmatprep.mubr.bf16.mxu0 0
      %8320 = vmatmul.mubr.bf16.gmra.mrb[0].mxu0 %v8026
      %v8321 = vpop.f32.mrb[0].mxu0
      %v8322 = vadd.f32 0.0, %v8321
      %v8323 = vpop.f32.mrb[0].mxu0
      %v8324 = vpop.f32.mrb[0].mxu0
      %v8325 = vadd.f32 0.0, %v8324
      %v8326 = vpop.f32.mrb[0].mxu0
      %8327 = vmatprep.mubr.bf16.mxu0 0
      %8328 = vmatmul.mubr.bf16.gmra.mrb[0].mxu0 %v8029
      %v8329 = vpop.f32.mrb[0].mxu0
      %v8330 = vadd.f32 0.0, %v8329
      %v8331 = vpop.f32.mrb[0].mxu0
      %v8332 = vpop.f32.mrb[0].mxu0
      %v8333 = vadd.f32 0.0, %v8332
      %v8334 = vpop.f32.mrb[0].mxu0
      %8335 = vmatprep.mubr.bf16.mxu0 0
      %8336 = vmatmul.mubr.bf16.gmra.mrb[0].mxu0 %v8032
      %v8337 = vpop.f32.mrb[0].mxu0
      %v8338 = vadd.f32 0.0, %v8337
      %v8339 = vpop.f32.mrb[0].mxu0
      %v8340 = vpop.f32.mrb[0].mxu0
      %v8341 = vadd.f32 0.0, %v8340
      %v8342 = vpop.f32.mrb[0].mxu0
      %8343 = vmatprep.mubr.bf16.mxu0 0
      %8344 = vmatmul.mubr.bf16.gmra.mrb[0].mxu0 %v8035
      %v8345 = vpop.f32.mrb[0].mxu0
      %v8346 = vadd.f32 0.0, %v8345
      %v8347 = vpop.f32.mrb[0].mxu0
      %v8348 = vpop.f32.mrb[0].mxu0
      %v8349 = vadd.f32 0.0, %v8348
      %v8350 = vpop.f32.mrb[0].mxu0
      %8351 = vmatprep.mubr.bf16.mxu0 0
      %8352 = vmatmul.mubr.bf16.gmra.mrb[0].mxu0 %v8038
      %v8353 = vpop.f32.mrb[0].mxu0
      %v8354 = vadd.f32 0.0, %v8353
      %v8355 = vpop.f32.mrb[0].mxu0
      %v8356 = vpop.f32.mrb[0].mxu0
      %v8357 = vadd.f32 0.0, %v8356
      %v8358 = vpop.f32.mrb[0].mxu0
      %8359 = vmatprep.mubr.bf16.mxu0 0
      %8360 = vmatmul.mubr.bf16.gmra.mrb[0].mxu0 %v8041
      %v8361 = vpop.f32.mrb[0].mxu0
      %v8362 = vadd.f32 0.0, %v8361
      %v8363 = vpop.f32.mrb[0].mxu0
      %v8364 = vpop.f32.mrb[0].mxu0
      %v8365 = vadd.f32 0.0, %v8364
      %v8366 = vpop.f32.mrb[0].mxu0
      %8367 = vmatprep.mubr.bf16.mxu0 0
      %8368 = vmatmul.mubr.bf16.gmra.mrb[0].mxu0 %v8044
      %v8369 = vpop.f32.mrb[0].mxu0
      %v8370 = vadd.f32 0.0, %v8369
      %v8371 = vpop.f32.mrb[0].mxu0
      %v8372 = vpop.f32.mrb[0].mxu0
      %v8373 = vadd.f32 0.0, %v8372
      %v8374 = vpop.f32.mrb[0].mxu0
      %8375 = vmatprep.mubr.bf16.mxu0 0
      %8376 = vmatmul.mubr.bf16.gmra.mrb[0].mxu0 %v8047
      %v8377 = vpop.f32.mrb[0].mxu0
      %v8378 = vadd.f32 0.0, %v8377
      %v8379 = vpop.f32.mrb[0].mxu0
      %v8380 = vpop.f32.mrb[0].mxu0
      %v8381 = vadd.f32 0.0, %v8380
      %v8382 = vpop.f32.mrb[0].mxu0
      %8383 = vmatprep.mubr.bf16.mxu0 0
      %8384 = vmatmul.mubr.bf16.gmra.mrb[0].mxu0 %v8050
      %v8385 = vpop.f32.mrb[0].mxu0
      %v8386 = vadd.f32 0.0, %v8385
      %v8387 = vpop.f32.mrb[0].mxu0
      %v8388 = vpop.f32.mrb[0].mxu0
      %v8389 = vadd.f32 0.0, %v8388
      %v8390 = vpop.f32.mrb[0].mxu0
      %8391 = vmatprep.mubr.bf16.mxu0 0
      %8392 = vmatmul.mubr.bf16.gmra.mrb[0].mxu0 %v8053
      %v8393 = vpop.f32.mrb[0].mxu0
      %v8394 = vadd.f32 0.0, %v8393
      %v8395 = vpop.f32.mrb[0].mxu0
      %v8396 = vpop.f32.mrb[0].mxu0
      %v8397 = vadd.f32 0.0, %v8396
      %v8398 = vpop.f32.mrb[0].mxu0
      %8399 = vmatprep.mubr.bf16.mxu0 0
      %8400 = vmatmul.mubr.bf16.gmra.mrb[0].mxu0 %v8056
      %v8401 = vpop.f32.mrb[0].mxu0
      %v8402 = vadd.f32 0.0, %v8401
      %v8403 = vpop.f32.mrb[0].mxu0
      %v8404 = vpop.f32.mrb[0].mxu0
      %v8405 = vadd.f32 0.0, %v8404
      %v8406 = vpop.f32.mrb[0].mxu0
      %8407 = vmatprep.mubr.bf16.mxu0 0
      %8408 = vmatmul.mubr.bf16.gmra.mrb[0].mxu0 %v8059
      %v8409 = vpop.f32.mrb[0].mxu0
      %v8410 = vadd.f32 0.0, %v8409
      %v8411 = vpop.f32.mrb[0].mxu0
      %v8412 = vpop.f32.mrb[0].mxu0
      %v8413 = vadd.f32 0.0, %v8412
      %v8414 = vpop.f32.mrb[0].mxu0
      %8415 = vmatprep.mubr.bf16.mxu0 0
      %8416 = vmatmul.mubr.bf16.gmra.mrb[0].mxu0 %v8062
      %v8417 = vpop.f32.mrb[0].mxu0
      %v8418 = vadd.f32 0.0, %v8417
      %v8419 = vpop.f32.mrb[0].mxu0
      %v8420 = vpop.f32.mrb[0].mxu0
      %v8421 = vadd.f32 0.0, %v8420
      %v8422 = vpop.f32.mrb[0].mxu0
      %8423 = vmatprep.mubr.bf16.mxu0 0
      %8424 = vmatmul.mubr.bf16.gmra.mrb[0].mxu0 %v8065
      %v8425 = vpop.f32.mrb[0].mxu0
      %v8426 = vadd.f32 0.0, %v8425
      %v8427 = vpop.f32.mrb[0].mxu0
      %v8428 = vpop.f32.mrb[0].mxu0
      %v8429 = vadd.f32 0.0, %v8428
      %v8430 = vpop.f32.mrb[0].mxu0
      %8431 = vmatprep.mubr.bf16.mxu0 0
      %8432 = vmatmul.mubr.bf16.gmra.mrb[0].mxu0 %v8068
      %v8433 = vpop.f32.mrb[0].mxu0
      %v8434 = vadd.f32 0.0, %v8433
      %v8435 = vpop.f32.mrb[0].mxu0
      %v8436 = vpop.f32.mrb[0].mxu0
      %v8437 = vadd.f32 0.0, %v8436
      %v8438 = vpop.f32.mrb[0].mxu0
      %8439 = vmatprep.mubr.bf16.mxu0 0
      %8440 = vmatmul.mubr.bf16.gmra.mrb[0].mxu0 %v8071
      %v8441 = vpop.f32.mrb[0].mxu0
      %v8442 = vadd.f32 0.0, %v8441
      %v8443 = vpop.f32.mrb[0].mxu0
      %v8444 = vpop.f32.mrb[0].mxu0
      %v8445 = vadd.f32 0.0, %v8444
      %v8446 = vpop.f32.mrb[0].mxu0
      %8447 = vmatprep.mubr.bf16.mxu0 0
      %8448 = vmatmul.mubr.bf16.gmra.mrb[0].mxu0 %v8074
      %v8449 = vpop.f32.mrb[0].mxu0
      %v8450 = vadd.f32 0.0, %v8449
      %v8451 = vpop.f32.mrb[0].mxu0
      %v8452 = vpop.f32.mrb[0].mxu0
      %v8453 = vadd.f32 0.0, %v8452
      %v8454 = vpop.f32.mrb[0].mxu0
      %8455 = vmatprep.mubr.bf16.mxu0 0
      %8456 = vmatmul.mubr.bf16.gmra.mrb[0].mxu0 %v8077
      %v8457 = vpop.f32.mrb[0].mxu0
      %v8458 = vadd.f32 0.0, %v8457
      %v8459 = vpop.f32.mrb[0].mxu0
      %v8460 = vpop.f32.mrb[0].mxu0
      %v8461 = vadd.f32 0.0, %v8460
      %v8462 = vpop.f32.mrb[0].mxu0
      %8463 = vmatprep.mubr.bf16.mxu0 0
      %8464 = vmatmul.mubr.bf16.gmra.mrb[0].mxu0 %v8080
      %v8465 = vpop.f32.mrb[0].mxu0
      %v8466 = vadd.f32 0.0, %v8465
      %v8467 = vpop.f32.mrb[0].mxu0
      %v8468 = vpop.f32.mrb[0].mxu0
      %v8469 = vadd.f32 0.0, %v8468
      %v8470 = vpop.f32.mrb[0].mxu0
      %8471 = vmatprep.mubr.bf16.mxu0 0
      %8472 = vmatmul.mubr.bf16.gmra.mrb[0].mxu0 %v8083
      %v8473 = vpop.f32.mrb[0].mxu0
      %v8474 = vadd.f32 0.0, %v8473
      %v8475 = vpop.f32.mrb[0].mxu0
      %v8476 = vpop.f32.mrb[0].mxu0
      %v8477 = vadd.f32 0.0, %v8476
      %v8478 = vpop.f32.mrb[0].mxu0
      %8479 = vmatprep.mubr.bf16.mxu0 0
      %8480 = vmatmul.mubr.bf16.gmra.mrb[0].mxu0 %v8086
      %v8481 = vpop.f32.mrb[0].mxu0
      %v8482 = vadd.f32 0.0, %v8481
      %v8483 = vpop.f32.mrb[0].mxu0
      %v8484 = vpop.f32.mrb[0].mxu0
      %v8485 = vadd.f32 0.0, %v8484
      %v8486 = vpop.f32.mrb[0].mxu0
      %8487 = vmatprep.mubr.bf16.mxu0 0
      %8488 = vmatmul.mubr.bf16.gmra.mrb[0].mxu0 %v8089
      %v8489 = vpop.f32.mrb[0].mxu0
      %v8490 = vadd.f32 0.0, %v8489
      %v8491 = vpop.f32.mrb[0].mxu0
      %v8492 = vpop.f32.mrb[0].mxu0
      %v8493 = vadd.f32 0.0, %v8492
      %v8494 = vpop.f32.mrb[0].mxu0
      %8495 = vmatprep.mubr.bf16.mxu0 0
      %8496 = vmatmul.mubr.bf16.gmra.mrb[0].mxu0 %v8092
      %v8497 = vpop.f32.mrb[0].mxu0
      %v8498 = vadd.f32 0.0, %v8497
      %v8499 = vpop.f32.mrb[0].mxu0
      %v8500 = vpop.f32.mrb[0].mxu0
      %v8501 = vadd.f32 0.0, %v8500
      %v8502 = vpop.f32.mrb[0].mxu0
      %8503 = vmatprep.mubr.bf16.mxu0 0
      %8504 = vmatmul.mubr.bf16.gmra.mrb[0].mxu0 %v8095
      %v8505 = vpop.f32.mrb[0].mxu0
      %v8506 = vadd.f32 0.0, %v8505
      %v8507 = vpop.f32.mrb[0].mxu0
      %v8508 = vpop.f32.mrb[0].mxu0
      %v8509 = vadd.f32 0.0, %v8508
      %v8510 = vpop.f32.mrb[0].mxu0
      %8511 = vmatprep.mubr.bf16.mxu0 0
      %8512 = vmatmul.mubr.bf16.gmra.mrb[0].mxu0 %v8098
      %v8513 = vpop.f32.mrb[0].mxu0
      %v8514 = vadd.f32 0.0, %v8513
      %v8515 = vpop.f32.mrb[0].mxu0
      %v8516 = vpop.f32.mrb[0].mxu0
      %v8517 = vadd.f32 0.0, %v8516
      %v8518 = vpop.f32.mrb[0].mxu0
      %8519 = vmatprep.mubr.bf16.mxu0 0
      %8520 = vmatmul.mubr.bf16.gmra.mrb[0].mxu0 %v8101
      %v8521 = vpop.f32.mrb[0].mxu0
      %v8522 = vadd.f32 0.0, %v8521
      %v8523 = vpop.f32.mrb[0].mxu0
      %v8524 = vpop.f32.mrb[0].mxu0
      %v8525 = vadd.f32 0.0, %v8524
      %v8526 = vpop.f32.mrb[0].mxu0
      %8527 = vmatprep.mubr.bf16.mxu0 0
      %8528 = vmatmul.mubr.bf16.gmra.mrb[0].mxu0 %v8104
      %v8529 = vpop.f32.mrb[0].mxu0
      %v8530 = vadd.f32 0.0, %v8529
      %v8531 = vpop.f32.mrb[0].mxu0
      %v8532 = vpop.f32.mrb[0].mxu0
      %v8533 = vadd.f32 0.0, %v8532
      %v8534 = vpop.f32.mrb[0].mxu0
      %8535 = vmatprep.mubr.bf16.mxu0 0
      %8536 = vmatmul.mubr.bf16.gmra.mrb[0].mxu0 %v8107
      %v8537 = vpop.f32.mrb[0].mxu0
      %v8538 = vadd.f32 0.0, %v8537
      %v8539 = vpop.f32.mrb[0].mxu0
      %v8540 = vpop.f32.mrb[0].mxu0
      %v8541 = vadd.f32 0.0, %v8540
      %v8542 = vpop.f32.mrb[0].mxu0
      %8543 = vmatprep.mubr.bf16.mxu0 0
      %8544 = vmatmul.mubr.bf16.gmra.mrb[0].mxu0 %v8110
      %v8545 = vpop.f32.mrb[0].mxu0
      %v8546 = vadd.f32 0.0, %v8545
      %v8547 = vpop.f32.mrb[0].mxu0
      %v8548 = vpop.f32.mrb[0].mxu0
      %v8549 = vadd.f32 0.0, %v8548
      %v8550 = vpop.f32.mrb[0].mxu0
      %8551 = vmatprep.mubr.bf16.mxu0 0
      %8552 = vmatmul.mubr.bf16.gmra.mrb[0].mxu0 %v8113
      %v8553 = vpop.f32.mrb[0].mxu0
      %v8554 = vadd.f32 0.0, %v8553
      %v8555 = vpop.f32.mrb[0].mxu0
      %v8556 = vpop.f32.mrb[0].mxu0
      %v8557 = vadd.f32 0.0, %v8556
      %v8558 = vpop.f32.mrb[0].mxu0
      %8559 = vmatprep.mubr.bf16.mxu0 0
      %8560 = vmatmul.mubr.bf16.gmra.mrb[0].mxu0 %v8116
      %v8561 = vpop.f32.mrb[0].mxu0
      %v8562 = vadd.f32 0.0, %v8561
      %v8563 = vpop.f32.mrb[0].mxu0
      %v8564 = vpop.f32.mrb[0].mxu0
      %v8565 = vadd.f32 0.0, %v8564
      %v8566 = vpop.f32.mrb[0].mxu0
      %8567 = vmatprep.mubr.bf16.mxu0 0
      %8568 = vmatmul.mubr.bf16.gmra.mrb[0].mxu0 %v8119
      %v8569 = vpop.f32.mrb[0].mxu0
      %v8570 = vadd.f32 0.0, %v8569
      %v8571 = vpop.f32.mrb[0].mxu0
      %v8572 = vpop.f32.mrb[0].mxu0
      %v8573 = vadd.f32 0.0, %v8572
      %v8574 = vpop.f32.mrb[0].mxu0
      %8575 = vmatprep.mubr.bf16.mxu0 0
      %8576 = vmatmul.mubr.bf16.gmra.mrb[0].mxu0 %v8122
      %v8577 = vpop.f32.mrb[0].mxu0
      %v8578 = vadd.f32 0.0, %v8577
      %v8579 = vpop.f32.mrb[0].mxu0
      %v8580 = vpop.f32.mrb[0].mxu0
      %v8581 = vadd.f32 0.0, %v8580
      %v8582 = vpop.f32.mrb[0].mxu0
      %8583 = vmatprep.mubr.bf16.mxu0 0
      %8584 = vmatmul.mubr.bf16.gmra.mrb[0].mxu0 %v8125
      %v8585 = vpop.f32.mrb[0].mxu0
      %v8586 = vadd.f32 0.0, %v8585
      %v8587 = vpop.f32.mrb[0].mxu0
      %v8588 = vpop.f32.mrb[0].mxu0
      %v8589 = vadd.f32 0.0, %v8588
      %v8590 = vpop.f32.mrb[0].mxu0
      %8591 = vmatprep.mubr.bf16.mxu0 0
      %8592 = vmatmul.mubr.bf16.gmra.mrb[0].mxu0 %v8128
      %v8593 = vpop.f32.mrb[0].mxu0
      %v8594 = vadd.f32 0.0, %v8593
      %v8595 = vpop.f32.mrb[0].mxu0
      %v8596 = vpop.f32.mrb[0].mxu0
      %v8597 = vadd.f32 0.0, %v8596
      %v8598 = vpop.f32.mrb[0].mxu0
      %8599 = vmatprep.mubr.bf16.mxu0 0
      %8600 = vmatmul.mubr.bf16.gmra.mrb[0].mxu0 %v8131
      %v8601 = vpop.f32.mrb[0].mxu0
      %v8602 = vadd.f32 0.0, %v8601
      %v8603 = vpop.f32.mrb[0].mxu0
      %v8604 = vpop.f32.mrb[0].mxu0
      %v8605 = vadd.f32 0.0, %v8604
      %v8606 = vpop.f32.mrb[0].mxu0
      %8607 = vmatprep.mubr.bf16.mxu0 0
      %8608 = vmatmul.mubr.bf16.gmra.mrb[0].mxu0 %v8134
      %v8609 = vpop.f32.mrb[0].mxu0
      %v8610 = vadd.f32 0.0, %v8609
      %v8611 = vpop.f32.mrb[0].mxu0
      %v8612 = vpop.f32.mrb[0].mxu0
      %v8613 = vadd.f32 0.0, %v8612
      %v8614 = vpop.f32.mrb[0].mxu0
      %8615 = vmatprep.mubr.bf16.mxu0 0
      %8616 = vmatmul.mubr.bf16.gmra.mrb[0].mxu0 %v8137
      %v8617 = vpop.f32.mrb[0].mxu0
      %v8618 = vadd.f32 0.0, %v8617
      %v8619 = vpop.f32.mrb[0].mxu0
      %v8620 = vpop.f32.mrb[0].mxu0
      %v8621 = vadd.f32 0.0, %v8620
      %v8622 = vpop.f32.mrb[0].mxu0
      %8623 = vmatprep.mubr.bf16.mxu0 0
      %8624 = vmatmul.mubr.bf16.gmra.mrb[0].mxu0 %v8140
      %v8625 = vpop.f32.mrb[0].mxu0
      %v8626 = vadd.f32 0.0, %v8625
      %v8627 = vpop.f32.mrb[0].mxu0
      %v8628 = vpop.f32.mrb[0].mxu0
      %v8629 = vadd.f32 0.0, %v8628
      %v8630 = vpop.f32.mrb[0].mxu0
      %8631 = vmatprep.mubr.bf16.mxu0 0
      %8632 = vmatmul.mubr.bf16.gmra.mrb[0].mxu0 %v8143
      %v8633 = vpop.f32.mrb[0].mxu0
      %v8634 = vadd.f32 0.0, %v8633
      %v8635 = vpop.f32.mrb[0].mxu0
      %v8636 = vpop.f32.mrb[0].mxu0
      %v8637 = vadd.f32 0.0, %v8636
      %v8638 = vpop.f32.mrb[0].mxu0
      %8639 = vmatprep.mubr.bf16.mxu0 0
      %8640 = vmatmul.mubr.bf16.gmra.mrb[0].mxu0 %v8146
      %v8641 = vpop.f32.mrb[0].mxu0
      %v8642 = vadd.f32 0.0, %v8641
      %v8643 = vpop.f32.mrb[0].mxu0
      %v8644 = vpop.f32.mrb[0].mxu0
      %v8645 = vadd.f32 0.0, %v8644
      %v8646 = vpop.f32.mrb[0].mxu0
      %8647 = vmatprep.mubr.bf16.mxu0 0
      %8648 = vmatmul.mubr.bf16.gmra.mrb[0].mxu0 %v8149
      %v8649 = vpop.f32.mrb[0].mxu0
      %v8650 = vadd.f32 0.0, %v8649
      %v8651 = vpop.f32.mrb[0].mxu0
      %v8652 = vpop.f32.mrb[0].mxu0
      %v8653 = vadd.f32 0.0, %v8652
      %v8654 = vpop.f32.mrb[0].mxu0
      %8655 = vmatprep.mubr.bf16.mxu0 0
      %8656 = vmatmul.mubr.bf16.gmra.mrb[0].mxu0 %v8152
      %v8657 = vpop.f32.mrb[0].mxu0
      %v8658 = vadd.f32 0.0, %v8657
      %v8659 = vpop.f32.mrb[0].mxu0
      %v8660 = vpop.f32.mrb[0].mxu0
      %v8661 = vadd.f32 0.0, %v8660
      %v8662 = vpop.f32.mrb[0].mxu0
      %8663 = vmatprep.mubr.bf16.mxu0 0
      %8664 = vmatmul.mubr.bf16.gmra.mrb[0].mxu0 %v8155
      %v8665 = vpop.f32.mrb[0].mxu0
      %v8666 = vadd.f32 0.0, %v8665
      %v8667 = vpop.f32.mrb[0].mxu0
      %v8668 = vpop.f32.mrb[0].mxu0
      %v8669 = vadd.f32 0.0, %v8668
      %v8670 = vpop.f32.mrb[0].mxu0
      %8671 = vmatprep.mubr.bf16.mxu0 0
      %8672 = vmatmul.mubr.bf16.gmra.mrb[0].mxu0 %v8158
      %v8673 = vpop.f32.mrb[0].mxu0
      %v8674 = vadd.f32 0.0, %v8673
      %v8675 = vpop.f32.mrb[0].mxu0
      %v8676 = vpop.f32.mrb[0].mxu0
      %v8677 = vadd.f32 0.0, %v8676
      %v8678 = vpop.f32.mrb[0].mxu0
      %8679 = vmatprep.mubr.bf16.mxu0 0
      %8680 = vmatmul.mubr.bf16.gmra.mrb[0].mxu0 %v8161
      %v8681 = vpop.f32.mrb[0].mxu0
      %v8682 = vadd.f32 0.0, %v8681
      %v8683 = vpop.f32.mrb[0].mxu0
      %v8684 = vpop.f32.mrb[0].mxu0
      %v8685 = vadd.f32 0.0, %v8684
      %v8686 = vpop.f32.mrb[0].mxu0
      %8687 = vmatprep.mubr.bf16.mxu0 0
      %8688 = vmatmul.mubr.bf16.gmra.mrb[0].mxu0 %v8164
      %v8689 = vpop.f32.mrb[0].mxu0
      %v8690 = vadd.f32 0.0, %v8689
      %v8691 = vpop.f32.mrb[0].mxu0
      %v8692 = vpop.f32.mrb[0].mxu0
      %v8693 = vadd.f32 0.0, %v8692
      %v8694 = vpop.f32.mrb[0].mxu0
      %8695 = vmatprep.mubr.bf16.mxu0 0
      %8696 = vmatmul.mubr.bf16.gmra.mrb[0].mxu0 %v8167
      %v8697 = vpop.f32.mrb[0].mxu0
      %v8698 = vadd.f32 0.0, %v8697
      %v8699 = vpop.f32.mrb[0].mxu0
      %v8700 = vpop.f32.mrb[0].mxu0
      %v8701 = vadd.f32 0.0, %v8700
      %v8702 = vpop.f32.mrb[0].mxu0
      %8703 = vmatprep.mubr.bf16.mxu0 0
      %8704 = vmatmul.mubr.bf16.gmra.mrb[0].mxu0 %v8170
      %v8705 = vpop.f32.mrb[0].mxu0
      %v8706 = vadd.f32 0.0, %v8705
      %v8707 = vpop.f32.mrb[0].mxu0
      %v8708 = vpop.f32.mrb[0].mxu0
      %v8709 = vadd.f32 0.0, %v8708
      %v8710 = vpop.f32.mrb[0].mxu0
      %8711 = vmatprep.mubr.bf16.mxu0 0
      %8712 = vmatmul.mubr.bf16.gmra.mrb[0].mxu0 %v8173
      %v8713 = vpop.f32.mrb[0].mxu0
      %v8714 = vadd.f32 0.0, %v8713
      %v8715 = vpop.f32.mrb[0].mxu0
      %v8716 = vpop.f32.mrb[0].mxu0
      %v8717 = vadd.f32 0.0, %v8716
      %v8718 = vpop.f32.mrb[0].mxu0
      %8719 = vmatprep.mubr.bf16.mxu0 0
      %8720 = vmatmul.mubr.bf16.gmra.mrb[0].mxu0 %v8176
      %v8721 = vpop.f32.mrb[0].mxu0
      %v8722 = vadd.f32 0.0, %v8721
      %v8723 = vpop.f32.mrb[0].mxu0
      %v8724 = vpop.f32.mrb[0].mxu0
      %v8725 = vadd.f32 0.0, %v8724
      %v8726 = vpop.f32.mrb[0].mxu0
      %8727 = vmatprep.mubr.bf16.mxu0 0
      %8728 = vmatmul.mubr.bf16.gmra.mrb[0].mxu0 %v8179
      %v8729 = vpop.f32.mrb[0].mxu0
      %v8730 = vadd.f32 0.0, %v8729
      %v8731 = vpop.f32.mrb[0].mxu0
      %v8732 = vpop.f32.mrb[0].mxu0
      %v8733 = vadd.f32 0.0, %v8732
      %v8734 = vpop.f32.mrb[0].mxu0
      %8735 = vmatprep.mubr.bf16.mxu0 0
      %8736 = vmatmul.mubr.bf16.gmra.mrb[0].mxu0 %v8182
      %v8737 = vpop.f32.mrb[0].mxu0
      %v8738 = vadd.f32 0.0, %v8737
      %v8739 = vpop.f32.mrb[0].mxu0
      %v8740 = vpop.f32.mrb[0].mxu0
      %v8741 = vadd.f32 0.0, %v8740
      %v8742 = vpop.f32.mrb[0].mxu0
      %8743 = vmatprep.mubr.bf16.mxu0 0
      %8744 = vmatmul.mubr.bf16.gmra.mrb[0].mxu0 %v8185
      %v8745 = vpop.f32.mrb[0].mxu0
      %v8746 = vadd.f32 0.0, %v8745
      %v8747 = vpop.f32.mrb[0].mxu0
      %v8748 = vpop.f32.mrb[0].mxu0
      %v8749 = vadd.f32 0.0, %v8748
      %v8750 = vpop.f32.mrb[0].mxu0
      %8751 = vmatprep.mubr.bf16.mxu0 0
      %8752 = vmatmul.mubr.bf16.gmra.mrb[0].mxu0 %v8188
      %v8753 = vpop.f32.mrb[0].mxu0
      %v8754 = vadd.f32 0.0, %v8753
      %v8755 = vpop.f32.mrb[0].mxu0
      %v8756 = vpop.f32.mrb[0].mxu0
      %v8757 = vadd.f32 0.0, %v8756
      %v8758 = vpop.f32.mrb[0].mxu0
      %8759 = vmatprep.mubr.bf16.mxu0 0
      %8760 = vmatmul.mubr.bf16.gmra.mrb[0].mxu0 %v8191
      %v8761 = vpop.f32.mrb[0].mxu0
      %v8762 = vadd.f32 0.0, %v8761
      %v8763 = vpop.f32.mrb[0].mxu0
      %v8764 = vpop.f32.mrb[0].mxu0
      %v8765 = vadd.f32 0.0, %v8764
      %v8766 = vpop.f32.mrb[0].mxu0
      %8767 = vmatprep.mubr.bf16.mxu0 0
      %8768 = vmatmul.mubr.bf16.gmra.mrb[0].mxu0 %v8194
      %v8769 = vpop.f32.mrb[0].mxu0
      %v8770 = vadd.f32 0.0, %v8769
      %v8771 = vpop.f32.mrb[0].mxu0
      %v8772 = vpop.f32.mrb[0].mxu0
      %v8773 = vadd.f32 0.0, %v8772
      %v8774 = vpop.f32.mrb[0].mxu0
      %8775 = vdwg.mxu0
      %v8776 = vadd.f32 %v7650, %v8234
      %v8777 = vadd.f32 %v7651, %v8237
      %v8778 = vadd.f32 %v7652, %v8242
      %v8779 = vadd.f32 %v7653, %v8245
      %v8780 = vadd.f32 %v7654, %v8250
      %v8781 = vadd.f32 %v7655, %v8253
      %v8782 = vadd.f32 %v7656, %v8258
      %v8783 = vadd.f32 %v7657, %v8261
      %v8784 = vadd.f32 %v7658, %v8266
      %v8785 = vadd.f32 %v7659, %v8269
      %v8786 = vadd.f32 %v7660, %v8274
      %v8787 = vadd.f32 %v7661, %v8277
      %v8788 = vadd.f32 %v7662, %v8282
      %v8789 = vadd.f32 %v7663, %v8285
      %v8790 = vadd.f32 %v7664, %v8290
      %v8791 = vadd.f32 %v7665, %v8293
      %v8792 = vadd.f32 %v7666, %v8298
      %v8793 = vadd.f32 %v7667, %v8301
      %v8794 = vadd.f32 %v7668, %v8306
      %v8795 = vadd.f32 %v7669, %v8309
      %v8796 = vadd.f32 %v7670, %v8314
      %v8797 = vadd.f32 %v7671, %v8317
      %v8798 = vadd.f32 %v7672, %v8322
      %v8799 = vadd.f32 %v7673, %v8325
      %v8800 = vadd.f32 %v7674, %v8330
      %v8801 = vadd.f32 %v7675, %v8333
      %v8802 = vadd.f32 %v7676, %v8338
      %v8803 = vadd.f32 %v7677, %v8341
      %v8804 = vadd.f32 %v7678, %v8346
      %v8805 = vadd.f32 %v7679, %v8349
      %v8806 = vadd.f32 %v7680, %v8354
      %v8807 = vadd.f32 %v7681, %v8357
      %v8808 = vadd.f32 %v7682, %v8362
      %v8809 = vadd.f32 %v7683, %v8365
      %v8810 = vadd.f32 %v7684, %v8370
      %v8811 = vadd.f32 %v7685, %v8373
      %v8812 = vadd.f32 %v7686, %v8378
      %v8813 = vadd.f32 %v7687, %v8381
      %v8814 = vadd.f32 %v7688, %v8386
      %v8815 = vadd.f32 %v7689, %v8389
      %v8816 = vadd.f32 %v7690, %v8394
      %v8817 = vadd.f32 %v7691, %v8397
      %v8818 = vadd.f32 %v7692, %v8402
      %v8819 = vadd.f32 %v7693, %v8405
      %v8820 = vadd.f32 %v7694, %v8410
      %v8821 = vadd.f32 %v7695, %v8413
      %v8822 = vadd.f32 %v7696, %v8418
      %v8823 = vadd.f32 %v7697, %v8421
      %v8824 = vadd.f32 %v7698, %v8426
      %v8825 = vadd.f32 %v7699, %v8429
      %v8826 = vadd.f32 %v7700, %v8434
      %v8827 = vadd.f32 %v7701, %v8437
      %v8828 = vadd.f32 %v7702, %v8442
      %v8829 = vadd.f32 %v7703, %v8445
      %v8830 = vadd.f32 %v7704, %v8450
      %v8831 = vadd.f32 %v7705, %v8453
      %v8832 = vadd.f32 %v7706, %v8458
      %v8833 = vadd.f32 %v7707, %v8461
      %v8834 = vadd.f32 %v7708, %v8466
      %v8835 = vadd.f32 %v7709, %v8469
      %v8836 = vadd.f32 %v7710, %v8474
      %v8837 = vadd.f32 %v7711, %v8477
      %v8838 = vadd.f32 %v7712, %v8482
      %v8839 = vadd.f32 %v7713, %v8485
      %v8840 = vadd.f32 %v7714, %v8490
      %v8841 = vadd.f32 %v7715, %v8493
      %v8842 = vadd.f32 %v7716, %v8498
      %v8843 = vadd.f32 %v7717, %v8501
      %v8844 = vadd.f32 %v7718, %v8506
      %v8845 = vadd.f32 %v7719, %v8509
      %v8846 = vadd.f32 %v7720, %v8514
      %v8847 = vadd.f32 %v7721, %v8517
      %v8848 = vadd.f32 %v7722, %v8522
      %v8849 = vadd.f32 %v7723, %v8525
      %v8850 = vadd.f32 %v7724, %v8530
      %v8851 = vadd.f32 %v7725, %v8533
      %v8852 = vadd.f32 %v7726, %v8538
      %v8853 = vadd.f32 %v7727, %v8541
      %v8854 = vadd.f32 %v7728, %v8546
      %v8855 = vadd.f32 %v7729, %v8549
      %v8856 = vadd.f32 %v7730, %v8554
      %v8857 = vadd.f32 %v7731, %v8557
      %v8858 = vadd.f32 %v7732, %v8562
      %v8859 = vadd.f32 %v7733, %v8565
      %v8860 = vadd.f32 %v7734, %v8570
      %v8861 = vadd.f32 %v7735, %v8573
      %v8862 = vadd.f32 %v7736, %v8578
      %v8863 = vadd.f32 %v7737, %v8581
      %v8864 = vadd.f32 %v7738, %v8586
      %v8865 = vadd.f32 %v7739, %v8589
      %v8866 = vadd.f32 %v7740, %v8594
      %v8867 = vadd.f32 %v7741, %v8597
      %v8868 = vadd.f32 %v7742, %v8602
      %v8869 = vadd.f32 %v7743, %v8605
      %v8870 = vadd.f32 %v7744, %v8610
      %v8871 = vadd.f32 %v7745, %v8613
      %v8872 = vadd.f32 %v7746, %v8618
      %v8873 = vadd.f32 %v7747, %v8621
      %v8874 = vadd.f32 %v7748, %v8626
      %v8875 = vadd.f32 %v7749, %v8629
      %v8876 = vadd.f32 %v7750, %v8634
      %v8877 = vadd.f32 %v7751, %v8637
      %v8878 = vadd.f32 %v7752, %v8642
      %v8879 = vadd.f32 %v7753, %v8645
      %v8880 = vadd.f32 %v7754, %v8650
      %v8881 = vadd.f32 %v7755, %v8653
      %v8882 = vadd.f32 %v7756, %v8658
      %v8883 = vadd.f32 %v7757, %v8661
      %v8884 = vadd.f32 %v7758, %v8666
      %v8885 = vadd.f32 %v7759, %v8669
      %v8886 = vadd.f32 %v7760, %v8674
      %v8887 = vadd.f32 %v7761, %v8677
      %v8888 = vadd.f32 %v7762, %v8682
      %v8889 = vadd.f32 %v7763, %v8685
      %v8890 = vadd.f32 %v7764, %v8690
      %v8891 = vadd.f32 %v7765, %v8693
      %v8892 = vadd.f32 %v7766, %v8698
      %v8893 = vadd.f32 %v7767, %v8701
      %v8894 = vadd.f32 %v7768, %v8706
      %v8895 = vadd.f32 %v7769, %v8709
      %v8896 = vadd.f32 %v7770, %v8714
      %v8897 = vadd.f32 %v7771, %v8717
      %v8898 = vadd.f32 %v7772, %v8722
      %v8899 = vadd.f32 %v7773, %v8725
      %v8900 = vadd.f32 %v7774, %v8730
      %v8901 = vadd.f32 %v7775, %v8733
      %v8902 = vadd.f32 %v7776, %v8738
      %v8903 = vadd.f32 %v7777, %v8741
      %v8904 = vadd.f32 %v7778, %v8746
      %v8905 = vadd.f32 %v7779, %v8749
      %v8906 = vadd.f32 %v7780, %v8754
      %v8907 = vadd.f32 %v7781, %v8757
      %v8908 = vadd.f32 %v7782, %v8762
      %v8909 = vadd.f32 %v7783, %v8765
      %v8910 = vadd.f32 %v7784, %v8770
      %v8911 = vadd.f32 %v7785, %v8773
      %v8912 = vld [vmem:[%s165 + $0x46] sm:$0xff]
      %v8913 = vld [vmem:[%s165 + $0x4e] sm:$0xff]
      %v8914 = vld [vmem:[%s165 + $0x56] sm:$0xff]
      %v8915 = vld [vmem:[%s165 + $0x5e] sm:$0xff]
      %v8916 = vld [vmem:[%s165 + $0x66] sm:$0xff]
      %v8917 = vld [vmem:[%s165 + $0x6e] sm:$0xff]
      %v8918 = vld [vmem:[%s165 + $0x76] sm:$0xff]
      %v8919 = vld [vmem:[%s165 + $0x7e] sm:$0xff]
      %v8920 = vld [vmem:[%s165 + $0x86] sm:$0xff]
      %v8921 = vld [vmem:[%s165 + $0x8e] sm:$0xff]
      %v8922 = vld [vmem:[%s165 + $0x96] sm:$0xff]
      %v8923 = vld [vmem:[%s165 + $0x9e] sm:$0xff]
      %v8924 = vld [vmem:[%s165 + $0xa6] sm:$0xff]
      %v8925 = vld [vmem:[%s165 + $0xae] sm:$0xff]
      %v8926 = vld [vmem:[%s165 + $0xb6] sm:$0xff]
      %v8927 = vld [vmem:[%s165 + $0xbe] sm:$0xff]
      %v8928 = vld [vmem:[%s165 + $0xc6] sm:$0xff]
      %v8929 = vld [vmem:[%s165 + $0xce] sm:$0xff]
      %v8930 = vld [vmem:[%s165 + $0xd6] sm:$0xff]
      %v8931 = vld [vmem:[%s165 + $0xde] sm:$0xff]
      %v8932 = vld [vmem:[%s165 + $0xe6] sm:$0xff]
      %v8933 = vld [vmem:[%s165 + $0xee] sm:$0xff]
      %v8934 = vld [vmem:[%s165 + $0xf6] sm:$0xff]
      %v8935 = vld [vmem:[%s165 + $0xfe] sm:$0xff]
      %v8936 = vld [vmem:[%s165 + $0x106] sm:$0xff]
      %v8937 = vld [vmem:[%s165 + $0x10e] sm:$0xff]
      %v8938 = vld [vmem:[%s165 + $0x116] sm:$0xff]
      %v8939 = vld [vmem:[%s165 + $0x11e] sm:$0xff]
      %v8940 = vld [vmem:[%s165 + $0x126] sm:$0xff]
      %v8941 = vld [vmem:[%s165 + $0x12e] sm:$0xff]
      %v8942 = vld [vmem:[%s165 + $0x136] sm:$0xff]
      %v8943 = vld [vmem:[%s165 + $0x13e] sm:$0xff]
      %v8944 = vld [vmem:[%s165 + $0x146] sm:$0xff]
      %v8945 = vld [vmem:[%s165 + $0x14e] sm:$0xff]
      %v8946 = vld [vmem:[%s165 + $0x156] sm:$0xff]
      %v8947 = vld [vmem:[%s165 + $0x15e] sm:$0xff]
      %v8948 = vld [vmem:[%s165 + $0x166] sm:$0xff]
      %v8949 = vld [vmem:[%s165 + $0x16e] sm:$0xff]
      %v8950 = vld [vmem:[%s165 + $0x176] sm:$0xff]
      %v8951 = vld [vmem:[%s165 + $0x17e] sm:$0xff]
      %v8952 = vld [vmem:[%s165 + $0x186] sm:$0xff]
      %v8953 = vld [vmem:[%s165 + $0x18e] sm:$0xff]
      %v8954 = vld [vmem:[%s165 + $0x196] sm:$0xff]
      %v8955 = vld [vmem:[%s165 + $0x19e] sm:$0xff]
      %v8956 = vld [vmem:[%s165 + $0x1a6] sm:$0xff]
      %v8957 = vld [vmem:[%s165 + $0x1ae] sm:$0xff]
      %v8958 = vld [vmem:[%s165 + $0x1b6] sm:$0xff]
      %v8959 = vld [vmem:[%s165 + $0x1be] sm:$0xff]
      %v8960 = vld [vmem:[%s165 + $0x1c6] sm:$0xff]
      %v8961 = vld [vmem:[%s165 + $0x1ce] sm:$0xff]
      %v8962 = vld [vmem:[%s165 + $0x1d6] sm:$0xff]
      %v8963 = vld [vmem:[%s165 + $0x1de] sm:$0xff]
      %v8964 = vld [vmem:[%s165 + $0x1e6] sm:$0xff]
      %v8965 = vld [vmem:[%s165 + $0x1ee] sm:$0xff]
      %v8966 = vld [vmem:[%s165 + $0x1f6] sm:$0xff]
      %v8967 = vld [vmem:[%s165 + $0x1fe] sm:$0xff]
      %v8968 = vld [vmem:[%s165 + $0x206] sm:$0xff]
      %v8969 = vld [vmem:[%s165 + $0x20e] sm:$0xff]
      %v8970 = vld [vmem:[%s165 + $0x216] sm:$0xff]
      %v8971 = vld [vmem:[%s165 + $0x21e] sm:$0xff]
      %v8972 = vld [vmem:[%s165 + $0x226] sm:$0xff]
      %v8973 = vld [vmem:[%s165 + $0x22e] sm:$0xff]
      %v8974 = vld [vmem:[%s165 + $0x236] sm:$0xff]
      %v8975 = vld [vmem:[%s165 + $0x23e] sm:$0xff]
      %v8976 = vld [vmem:[%s165 + $0x246] sm:$0xff]
      %v8977 = vld [vmem:[%s165 + $0x24e] sm:$0xff]
      %v8978 = vld [vmem:[%s165 + $0x256] sm:$0xff]
      %v8979 = vld [vmem:[%s165 + $0x25e] sm:$0xff]
      %v8980 = vld [vmem:[%s165 + $0x266] sm:$0xff]
      %v8981 = vld [vmem:[%s165 + $0x26e] sm:$0xff]
      %v8982 = vld [vmem:[%s165 + $0x276] sm:$0xff]
      %v8983 = vld [vmem:[%s165 + $0x27e] sm:$0xff]
      %v8984 = vld [vmem:[%s165 + $0x286] sm:$0xff]
      %v8985 = vld [vmem:[%s165 + $0x28e] sm:$0xff]
      %v8986 = vld [vmem:[%s165 + $0x296] sm:$0xff]
      %v8987 = vld [vmem:[%s165 + $0x29e] sm:$0xff]
      %v8988 = vld [vmem:[%s165 + $0x2a6] sm:$0xff]
      %v8989 = vld [vmem:[%s165 + $0x2ae] sm:$0xff]
      %v8990 = vld [vmem:[%s165 + $0x2b6] sm:$0xff]
      %v8991 = vld [vmem:[%s165 + $0x2be] sm:$0xff]
      %v8992 = vld [vmem:[%s165 + $0x2c6] sm:$0xff]
      %v8993 = vld [vmem:[%s165 + $0x2ce] sm:$0xff]
      %v8994 = vld [vmem:[%s165 + $0x2d6] sm:$0xff]
      %v8995 = vld [vmem:[%s165 + $0x2de] sm:$0xff]
      %v8996 = vld [vmem:[%s165 + $0x2e6] sm:$0xff]
      %v8997 = vld [vmem:[%s165 + $0x2ee] sm:$0xff]
      %v8998 = vld [vmem:[%s165 + $0x2f6] sm:$0xff]
      %v8999 = vld [vmem:[%s165 + $0x2fe] sm:$0xff]
      %v9000 = vld [vmem:[%s165 + $0x306] sm:$0xff]
      %v9001 = vld [vmem:[%s165 + $0x30e] sm:$0xff]
      %v9002 = vld [vmem:[%s165 + $0x316] sm:$0xff]
      %v9003 = vld [vmem:[%s165 + $0x31e] sm:$0xff]
      %v9004 = vld [vmem:[%s165 + $0x326] sm:$0xff]
      %v9005 = vld [vmem:[%s165 + $0x32e] sm:$0xff]
      %v9006 = vld [vmem:[%s165 + $0x336] sm:$0xff]
      %v9007 = vld [vmem:[%s165 + $0x33e] sm:$0xff]
      %v9008 = vld [vmem:[%s165 + $0x346] sm:$0xff]
      %v9009 = vld [vmem:[%s165 + $0x34e] sm:$0xff]
      %v9010 = vld [vmem:[%s165 + $0x356] sm:$0xff]
      %v9011 = vld [vmem:[%s165 + $0x35e] sm:$0xff]
      %v9012 = vld [vmem:[%s165 + $0x366] sm:$0xff]
      %v9013 = vld [vmem:[%s165 + $0x36e] sm:$0xff]
      %v9014 = vld [vmem:[%s165 + $0x376] sm:$0xff]
      %v9015 = vld [vmem:[%s165 + $0x37e] sm:$0xff]
      %v9016 = vld [vmem:[%s165 + $0x386] sm:$0xff]
      %v9017 = vld [vmem:[%s165 + $0x38e] sm:$0xff]
      %v9018 = vld [vmem:[%s165 + $0x396] sm:$0xff]
      %v9019 = vld [vmem:[%s165 + $0x39e] sm:$0xff]
      %v9020 = vld [vmem:[%s165 + $0x3a6] sm:$0xff]
      %v9021 = vld [vmem:[%s165 + $0x3ae] sm:$0xff]
      %v9022 = vld [vmem:[%s165 + $0x3b6] sm:$0xff]
      %v9023 = vld [vmem:[%s165 + $0x3be] sm:$0xff]
      %v9024 = vld [vmem:[%s165 + $0x3c6] sm:$0xff]
      %v9025 = vld [vmem:[%s165 + $0x3ce] sm:$0xff]
      %v9026 = vld [vmem:[%s165 + $0x3d6] sm:$0xff]
      %v9027 = vld [vmem:[%s165 + $0x3de] sm:$0xff]
      %v9028 = vld [vmem:[%s165 + $0x3e6] sm:$0xff]
      %v9029 = vld [vmem:[%s165 + $0x3ee] sm:$0xff]
      %v9030 = vld [vmem:[%s165 + $0x3f6] sm:$0xff]
      %v9031 = vld [vmem:[%s165 + $0x3fe] sm:$0xff]
      %v9032 = vld [vmem:[%s165 + $0x406] sm:$0xff]
      %v9033 = vld [vmem:[%s165 + $0x40e] sm:$0xff]
      %v9034 = vld [vmem:[%s165 + $0x416] sm:$0xff]
      %v9035 = vld [vmem:[%s165 + $0x41e] sm:$0xff]
      %v9036 = vld [vmem:[%s165 + $0x426] sm:$0xff]
      %v9037 = vld [vmem:[%s165 + $0x42e] sm:$0xff]
      %v9038 = vld [vmem:[%s165 + $0x436] sm:$0xff]
      %v9039 = vld [vmem:[%s165 + $0x43e] sm:$0xff]
      %v9040 = vld [vmem:[%s165 + $0x446] sm:$0xff]
      %v9041 = vld [vmem:[%s165 + $0x44e] sm:$0xff]
      %v9042 = vld [vmem:[%s165 + $0x456] sm:$0xff]
      %v9043 = vld [vmem:[%s165 + $0x45e] sm:$0xff]
      %v9044 = vld [vmem:[%s165 + $0x466] sm:$0xff]
      %v9045 = vld [vmem:[%s165 + $0x46e] sm:$0xff]
      %v9046 = vld [vmem:[%s165 + $0x476] sm:$0xff]
      %v9047 = vld [vmem:[%s165 + $0x47e] sm:$0xff]
      %v9048 = vpack.c.bf16 %v8913, %v8912
      %v9049 = vpack.c.bf16 %v8915, %v8914
      %v9050 = vpack.c.bf16 %v8917, %v8916
      %v9051 = vpack.c.bf16 %v8919, %v8918
      %v9052 = vpack.c.bf16 %v8921, %v8920
      %v9053 = vpack.c.bf16 %v8923, %v8922
      %v9054 = vpack.c.bf16 %v8925, %v8924
      %v9055 = vpack.c.bf16 %v8927, %v8926
      %v9056 = vpack.c.bf16 %v8929, %v8928
      %v9057 = vpack.c.bf16 %v8931, %v8930
      %v9058 = vpack.c.bf16 %v8933, %v8932
      %v9059 = vpack.c.bf16 %v8935, %v8934
      %v9060 = vpack.c.bf16 %v8937, %v8936
      %v9061 = vpack.c.bf16 %v8939, %v8938
      %v9062 = vpack.c.bf16 %v8941, %v8940
      %v9063 = vpack.c.bf16 %v8943, %v8942
      %v9064 = vpack.c.bf16 %v8945, %v8944
      %v9065 = vpack.c.bf16 %v8947, %v8946
      %v9066 = vpack.c.bf16 %v8949, %v8948
      %v9067 = vpack.c.bf16 %v8951, %v8950
      %v9068 = vpack.c.bf16 %v8953, %v8952
      %v9069 = vpack.c.bf16 %v8955, %v8954
      %v9070 = vpack.c.bf16 %v8957, %v8956
      %v9071 = vpack.c.bf16 %v8959, %v8958
      %v9072 = vpack.c.bf16 %v8961, %v8960
      %v9073 = vpack.c.bf16 %v8963, %v8962
      %v9074 = vpack.c.bf16 %v8965, %v8964
      %v9075 = vpack.c.bf16 %v8967, %v8966
      %v9076 = vpack.c.bf16 %v8969, %v8968
      %v9077 = vpack.c.bf16 %v8971, %v8970
      %v9078 = vpack.c.bf16 %v8973, %v8972
      %v9079 = vpack.c.bf16 %v8975, %v8974
      %v9080 = vpack.c.bf16 %v8977, %v8976
      %v9081 = vpack.c.bf16 %v8979, %v8978
      %v9082 = vpack.c.bf16 %v8981, %v8980
      %v9083 = vpack.c.bf16 %v8983, %v8982
      %v9084 = vpack.c.bf16 %v8985, %v8984
      %v9085 = vpack.c.bf16 %v8987, %v8986
      %v9086 = vpack.c.bf16 %v8989, %v8988
      %v9087 = vpack.c.bf16 %v8991, %v8990
      %v9088 = vpack.c.bf16 %v8993, %v8992
      %v9089 = vpack.c.bf16 %v8995, %v8994
      %v9090 = vpack.c.bf16 %v8997, %v8996
      %v9091 = vpack.c.bf16 %v8999, %v8998
      %v9092 = vpack.c.bf16 %v9001, %v9000
      %v9093 = vpack.c.bf16 %v9003, %v9002
      %v9094 = vpack.c.bf16 %v9005, %v9004
      %v9095 = vpack.c.bf16 %v9007, %v9006
      %v9096 = vpack.c.bf16 %v9009, %v9008
      %v9097 = vpack.c.bf16 %v9011, %v9010
      %v9098 = vpack.c.bf16 %v9013, %v9012
      %v9099 = vpack.c.bf16 %v9015, %v9014
      %v9100 = vpack.c.bf16 %v9017, %v9016
      %v9101 = vpack.c.bf16 %v9019, %v9018
      %v9102 = vpack.c.bf16 %v9021, %v9020
      %v9103 = vpack.c.bf16 %v9023, %v9022
      %v9104 = vpack.c.bf16 %v9025, %v9024
      %v9105 = vpack.c.bf16 %v9027, %v9026
      %v9106 = vpack.c.bf16 %v9029, %v9028
      %v9107 = vpack.c.bf16 %v9031, %v9030
      %v9108 = vpack.c.bf16 %v9033, %v9032
      %v9109 = vpack.c.bf16 %v9035, %v9034
      %v9110 = vpack.c.bf16 %v9037, %v9036
      %v9111 = vpack.c.bf16 %v9039, %v9038
      %v9112 = vpack.c.bf16 %v9041, %v9040
      %v9113 = vpack.c.bf16 %v9043, %v9042
      %v9114 = vpack.c.bf16 %v9045, %v9044
      %v9115 = vpack.c.bf16 %v9047, %v9046
      %s9116 = scalar_lea.vmem %s1, 16
      %v9117 = vld [vmem:[%s9116] sm:$0x3]
      %v9119 = vsel %vm583, %v9048, 0
      %v9122 = vsel %vm583, %v9049, 0
      %v9125 = vsel %vm583, %v9050, 0
      %v9128 = vsel %vm583, %v9051, 0
      %v9131 = vsel %vm583, %v9052, 0
      %v9134 = vsel %vm583, %v9053, 0
      %v9137 = vsel %vm583, %v9054, 0
      %v9140 = vsel %vm583, %v9055, 0
      %v9143 = vsel %vm583, %v9056, 0
      %v9146 = vsel %vm583, %v9057, 0
      %v9149 = vsel %vm583, %v9058, 0
      %v9152 = vsel %vm583, %v9059, 0
      %v9155 = vsel %vm583, %v9060, 0
      %v9158 = vsel %vm583, %v9061, 0
      %v9161 = vsel %vm583, %v9062, 0
      %v9164 = vsel %vm583, %v9063, 0
      %v9167 = vsel %vm583, %v9064, 0
      %v9170 = vsel %vm583, %v9065, 0
      %v9173 = vsel %vm583, %v9066, 0
      %v9176 = vsel %vm583, %v9067, 0
      %v9179 = vsel %vm583, %v9068, 0
      %v9182 = vsel %vm583, %v9069, 0
      %v9185 = vsel %vm583, %v9070, 0
      %v9188 = vsel %vm583, %v9071, 0
      %v9191 = vsel %vm583, %v9072, 0
      %v9194 = vsel %vm583, %v9073, 0
      %v9197 = vsel %vm583, %v9074, 0
      %v9200 = vsel %vm583, %v9075, 0
      %v9203 = vsel %vm583, %v9076, 0
      %v9206 = vsel %vm583, %v9077, 0
      %v9209 = vsel %vm583, %v9078, 0
      %v9212 = vsel %vm583, %v9079, 0
      %v9215 = vsel %vm583, %v9080, 0
      %v9218 = vsel %vm583, %v9081, 0
      %v9221 = vsel %vm583, %v9082, 0
      %v9224 = vsel %vm583, %v9083, 0
      %v9227 = vsel %vm583, %v9084, 0
      %v9230 = vsel %vm583, %v9085, 0
      %v9233 = vsel %vm583, %v9086, 0
      %v9236 = vsel %vm583, %v9087, 0
      %v9239 = vsel %vm583, %v9088, 0
      %v9242 = vsel %vm583, %v9089, 0
      %v9245 = vsel %vm583, %v9090, 0
      %v9248 = vsel %vm583, %v9091, 0
      %v9251 = vsel %vm583, %v9092, 0
      %v9254 = vsel %vm583, %v9093, 0
      %v9257 = vsel %vm583, %v9094, 0
      %v9260 = vsel %vm583, %v9095, 0
      %v9263 = vsel %vm583, %v9096, 0
      %v9266 = vsel %vm583, %v9097, 0
      %v9269 = vsel %vm583, %v9098, 0
      %v9272 = vsel %vm583, %v9099, 0
      %v9275 = vsel %vm583, %v9100, 0
      %v9278 = vsel %vm583, %v9101, 0
      %v9281 = vsel %vm583, %v9102, 0
      %v9284 = vsel %vm583, %v9103, 0
      %v9287 = vsel %vm583, %v9104, 0
      %v9290 = vsel %vm583, %v9105, 0
      %v9293 = vsel %vm583, %v9106, 0
      %v9296 = vsel %vm583, %v9107, 0
      %v9299 = vsel %vm583, %v9108, 0
      %v9302 = vsel %vm583, %v9109, 0
      %v9305 = vsel %vm583, %v9110, 0
      %v9308 = vsel %vm583, %v9111, 0
      %v9311 = vsel %vm583, %v9112, 0
      %v9314 = vsel %vm583, %v9113, 0
      %v9317 = vsel %vm583, %v9114, 0
      %v9320 = vsel %vm583, %v9115, 0
      %v9323 = vand.u32 %v9117, %v791
      %9325 = vmatprep.subr.bf16.mxu0 0
      %9326 = vmatpush1.bf16.msra.mxu0 %v9323
      %9327 = vmatprep.subr.bf16.mxu0 0
      %9328 = vmatpush1.bf16.msra.mxu0 0
      %9329 = vmatprep.subr.bf16.mxu0 0
      %9330 = vmatpush1.bf16.msra.mxu0 0
      %9331 = vmatprep.subr.bf16.mxu0 0
      %9332 = vmatpush1.bf16.msra.mxu0 0
      %9333 = vmatprep.subr.bf16.mxu0 0
      %9334 = vmatpush1.bf16.msra.mxu0 0
      %9335 = vmatprep.subr.bf16.mxu0 0
      %9336 = vmatpush1.bf16.msra.mxu0 0
      %9337 = vmatprep.subr.bf16.mxu0 0
      %9338 = vmatpush1.bf16.msra.mxu0 0
      %9339 = vmatprep.subr.bf16.mxu0 0
      %9340 = vmatpush1.bf16.msra.mxu0 0
      %9341 = vmatprep.subr.bf16.mxu0 0
      %9342 = vmatpush1.bf16.msra.mxu0 0
      %9343 = vmatprep.subr.bf16.mxu0 0
      %9344 = vmatpush1.bf16.msra.mxu0 0
      %9345 = vmatprep.subr.bf16.mxu0 0
      %9346 = vmatpush1.bf16.msra.mxu0 0
      %9347 = vmatprep.subr.bf16.mxu0 0
      %9348 = vmatpush1.bf16.msra.mxu0 0
      %9349 = vmatprep.subr.bf16.mxu0 0
      %9350 = vmatpush1.bf16.msra.mxu0 0
      %9351 = vmatprep.subr.bf16.mxu0 0
      %9352 = vmatpush1.bf16.msra.mxu0 0
      %9353 = vmatprep.subr.bf16.mxu0 0
      %9354 = vmatpush1.bf16.msra.mxu0 0
      %9355 = vmatprep.subr.bf16.mxu0 0
      %9356 = vmatpush1.bf16.msra.mxu0 0
      %9357 = vmatprep.mubr.bf16.mxu0 0
      %9358 = vmatmul.mubr.bf16.gmra.mrb[0].mxu0 %v9119
      %v9359 = vpop.f32.mrb[0].mxu0
      %v9360 = vadd.f32 0.0, %v9359
      %v9361 = vpop.f32.mrb[0].mxu0
      %v9362 = vpop.f32.mrb[0].mxu0
      %v9363 = vadd.f32 0.0, %v9362
      %v9364 = vpop.f32.mrb[0].mxu0
      %9365 = vmatprep.mubr.bf16.mxu0 0
      %9366 = vmatmul.mubr.bf16.gmra.mrb[0].mxu0 %v9122
      %v9367 = vpop.f32.mrb[0].mxu0
      %v9368 = vadd.f32 0.0, %v9367
      %v9369 = vpop.f32.mrb[0].mxu0
      %v9370 = vpop.f32.mrb[0].mxu0
      %v9371 = vadd.f32 0.0, %v9370
      %v9372 = vpop.f32.mrb[0].mxu0
      %9373 = vmatprep.mubr.bf16.mxu0 0
      %9374 = vmatmul.mubr.bf16.gmra.mrb[0].mxu0 %v9125
      %v9375 = vpop.f32.mrb[0].mxu0
      %v9376 = vadd.f32 0.0, %v9375
      %v9377 = vpop.f32.mrb[0].mxu0
      %v9378 = vpop.f32.mrb[0].mxu0
      %v9379 = vadd.f32 0.0, %v9378
      %v9380 = vpop.f32.mrb[0].mxu0
      %9381 = vmatprep.mubr.bf16.mxu0 0
      %9382 = vmatmul.mubr.bf16.gmra.mrb[0].mxu0 %v9128
      %v9383 = vpop.f32.mrb[0].mxu0
      %v9384 = vadd.f32 0.0, %v9383
      %v9385 = vpop.f32.mrb[0].mxu0
      %v9386 = vpop.f32.mrb[0].mxu0
      %v9387 = vadd.f32 0.0, %v9386
      %v9388 = vpop.f32.mrb[0].mxu0
      %9389 = vmatprep.mubr.bf16.mxu0 0
      %9390 = vmatmul.mubr.bf16.gmra.mrb[0].mxu0 %v9131
      %v9391 = vpop.f32.mrb[0].mxu0
      %v9392 = vadd.f32 0.0, %v9391
      %v9393 = vpop.f32.mrb[0].mxu0
      %v9394 = vpop.f32.mrb[0].mxu0
      %v9395 = vadd.f32 0.0, %v9394
      %v9396 = vpop.f32.mrb[0].mxu0
      %9397 = vmatprep.mubr.bf16.mxu0 0
      %9398 = vmatmul.mubr.bf16.gmra.mrb[0].mxu0 %v9134
      %v9399 = vpop.f32.mrb[0].mxu0
      %v9400 = vadd.f32 0.0, %v9399
      %v9401 = vpop.f32.mrb[0].mxu0
      %v9402 = vpop.f32.mrb[0].mxu0
      %v9403 = vadd.f32 0.0, %v9402
      %v9404 = vpop.f32.mrb[0].mxu0
      %9405 = vmatprep.mubr.bf16.mxu0 0
      %9406 = vmatmul.mubr.bf16.gmra.mrb[0].mxu0 %v9137
      %v9407 = vpop.f32.mrb[0].mxu0
      %v9408 = vadd.f32 0.0, %v9407
      %v9409 = vpop.f32.mrb[0].mxu0
      %v9410 = vpop.f32.mrb[0].mxu0
      %v9411 = vadd.f32 0.0, %v9410
      %v9412 = vpop.f32.mrb[0].mxu0
      %9413 = vmatprep.mubr.bf16.mxu0 0
      %9414 = vmatmul.mubr.bf16.gmra.mrb[0].mxu0 %v9140
      %v9415 = vpop.f32.mrb[0].mxu0
      %v9416 = vadd.f32 0.0, %v9415
      %v9417 = vpop.f32.mrb[0].mxu0
      %v9418 = vpop.f32.mrb[0].mxu0
      %v9419 = vadd.f32 0.0, %v9418
      %v9420 = vpop.f32.mrb[0].mxu0
      %9421 = vmatprep.mubr.bf16.mxu0 0
      %9422 = vmatmul.mubr.bf16.gmra.mrb[0].mxu0 %v9143
      %v9423 = vpop.f32.mrb[0].mxu0
      %v9424 = vadd.f32 0.0, %v9423
      %v9425 = vpop.f32.mrb[0].mxu0
      %v9426 = vpop.f32.mrb[0].mxu0
      %v9427 = vadd.f32 0.0, %v9426
      %v9428 = vpop.f32.mrb[0].mxu0
      %9429 = vmatprep.mubr.bf16.mxu0 0
      %9430 = vmatmul.mubr.bf16.gmra.mrb[0].mxu0 %v9146
      %v9431 = vpop.f32.mrb[0].mxu0
      %v9432 = vadd.f32 0.0, %v9431
      %v9433 = vpop.f32.mrb[0].mxu0
      %v9434 = vpop.f32.mrb[0].mxu0
      %v9435 = vadd.f32 0.0, %v9434
      %v9436 = vpop.f32.mrb[0].mxu0
      %9437 = vmatprep.mubr.bf16.mxu0 0
      %9438 = vmatmul.mubr.bf16.gmra.mrb[0].mxu0 %v9149
      %v9439 = vpop.f32.mrb[0].mxu0
      %v9440 = vadd.f32 0.0, %v9439
      %v9441 = vpop.f32.mrb[0].mxu0
      %v9442 = vpop.f32.mrb[0].mxu0
      %v9443 = vadd.f32 0.0, %v9442
      %v9444 = vpop.f32.mrb[0].mxu0
      %9445 = vmatprep.mubr.bf16.mxu0 0
      %9446 = vmatmul.mubr.bf16.gmra.mrb[0].mxu0 %v9152
      %v9447 = vpop.f32.mrb[0].mxu0
      %v9448 = vadd.f32 0.0, %v9447
      %v9449 = vpop.f32.mrb[0].mxu0
      %v9450 = vpop.f32.mrb[0].mxu0
      %v9451 = vadd.f32 0.0, %v9450
      %v9452 = vpop.f32.mrb[0].mxu0
      %9453 = vmatprep.mubr.bf16.mxu0 0
      %9454 = vmatmul.mubr.bf16.gmra.mrb[0].mxu0 %v9155
      %v9455 = vpop.f32.mrb[0].mxu0
      %v9456 = vadd.f32 0.0, %v9455
      %v9457 = vpop.f32.mrb[0].mxu0
      %v9458 = vpop.f32.mrb[0].mxu0
      %v9459 = vadd.f32 0.0, %v9458
      %v9460 = vpop.f32.mrb[0].mxu0
      %9461 = vmatprep.mubr.bf16.mxu0 0
      %9462 = vmatmul.mubr.bf16.gmra.mrb[0].mxu0 %v9158
      %v9463 = vpop.f32.mrb[0].mxu0
      %v9464 = vadd.f32 0.0, %v9463
      %v9465 = vpop.f32.mrb[0].mxu0
      %v9466 = vpop.f32.mrb[0].mxu0
      %v9467 = vadd.f32 0.0, %v9466
      %v9468 = vpop.f32.mrb[0].mxu0
      %9469 = vmatprep.mubr.bf16.mxu0 0
      %9470 = vmatmul.mubr.bf16.gmra.mrb[0].mxu0 %v9161
      %v9471 = vpop.f32.mrb[0].mxu0
      %v9472 = vadd.f32 0.0, %v9471
      %v9473 = vpop.f32.mrb[0].mxu0
      %v9474 = vpop.f32.mrb[0].mxu0
      %v9475 = vadd.f32 0.0, %v9474
      %v9476 = vpop.f32.mrb[0].mxu0
      %9477 = vmatprep.mubr.bf16.mxu0 0
      %9478 = vmatmul.mubr.bf16.gmra.mrb[0].mxu0 %v9164
      %v9479 = vpop.f32.mrb[0].mxu0
      %v9480 = vadd.f32 0.0, %v9479
      %v9481 = vpop.f32.mrb[0].mxu0
      %v9482 = vpop.f32.mrb[0].mxu0
      %v9483 = vadd.f32 0.0, %v9482
      %v9484 = vpop.f32.mrb[0].mxu0
      %9485 = vmatprep.mubr.bf16.mxu0 0
      %9486 = vmatmul.mubr.bf16.gmra.mrb[0].mxu0 %v9167
      %v9487 = vpop.f32.mrb[0].mxu0
      %v9488 = vadd.f32 0.0, %v9487
      %v9489 = vpop.f32.mrb[0].mxu0
      %v9490 = vpop.f32.mrb[0].mxu0
      %v9491 = vadd.f32 0.0, %v9490
      %v9492 = vpop.f32.mrb[0].mxu0
      %9493 = vmatprep.mubr.bf16.mxu0 0
      %9494 = vmatmul.mubr.bf16.gmra.mrb[0].mxu0 %v9170
      %v9495 = vpop.f32.mrb[0].mxu0
      %v9496 = vadd.f32 0.0, %v9495
      %v9497 = vpop.f32.mrb[0].mxu0
      %v9498 = vpop.f32.mrb[0].mxu0
      %v9499 = vadd.f32 0.0, %v9498
      %v9500 = vpop.f32.mrb[0].mxu0
      %9501 = vmatprep.mubr.bf16.mxu0 0
      %9502 = vmatmul.mubr.bf16.gmra.mrb[0].mxu0 %v9173
      %v9503 = vpop.f32.mrb[0].mxu0
      %v9504 = vadd.f32 0.0, %v9503
      %v9505 = vpop.f32.mrb[0].mxu0
      %v9506 = vpop.f32.mrb[0].mxu0
      %v9507 = vadd.f32 0.0, %v9506
      %v9508 = vpop.f32.mrb[0].mxu0
      %9509 = vmatprep.mubr.bf16.mxu0 0
      %9510 = vmatmul.mubr.bf16.gmra.mrb[0].mxu0 %v9176
      %v9511 = vpop.f32.mrb[0].mxu0
      %v9512 = vadd.f32 0.0, %v9511
      %v9513 = vpop.f32.mrb[0].mxu0
      %v9514 = vpop.f32.mrb[0].mxu0
      %v9515 = vadd.f32 0.0, %v9514
      %v9516 = vpop.f32.mrb[0].mxu0
      %9517 = vmatprep.mubr.bf16.mxu0 0
      %9518 = vmatmul.mubr.bf16.gmra.mrb[0].mxu0 %v9179
      %v9519 = vpop.f32.mrb[0].mxu0
      %v9520 = vadd.f32 0.0, %v9519
      %v9521 = vpop.f32.mrb[0].mxu0
      %v9522 = vpop.f32.mrb[0].mxu0
      %v9523 = vadd.f32 0.0, %v9522
      %v9524 = vpop.f32.mrb[0].mxu0
      %9525 = vmatprep.mubr.bf16.mxu0 0
      %9526 = vmatmul.mubr.bf16.gmra.mrb[0].mxu0 %v9182
      %v9527 = vpop.f32.mrb[0].mxu0
      %v9528 = vadd.f32 0.0, %v9527
      %v9529 = vpop.f32.mrb[0].mxu0
      %v9530 = vpop.f32.mrb[0].mxu0
      %v9531 = vadd.f32 0.0, %v9530
      %v9532 = vpop.f32.mrb[0].mxu0
      %9533 = vmatprep.mubr.bf16.mxu0 0
      %9534 = vmatmul.mubr.bf16.gmra.mrb[0].mxu0 %v9185
      %v9535 = vpop.f32.mrb[0].mxu0
      %v9536 = vadd.f32 0.0, %v9535
      %v9537 = vpop.f32.mrb[0].mxu0
      %v9538 = vpop.f32.mrb[0].mxu0
      %v9539 = vadd.f32 0.0, %v9538
      %v9540 = vpop.f32.mrb[0].mxu0
      %9541 = vmatprep.mubr.bf16.mxu0 0
      %9542 = vmatmul.mubr.bf16.gmra.mrb[0].mxu0 %v9188
      %v9543 = vpop.f32.mrb[0].mxu0
      %v9544 = vadd.f32 0.0, %v9543
      %v9545 = vpop.f32.mrb[0].mxu0
      %v9546 = vpop.f32.mrb[0].mxu0
      %v9547 = vadd.f32 0.0, %v9546
      %v9548 = vpop.f32.mrb[0].mxu0
      %9549 = vmatprep.mubr.bf16.mxu0 0
      %9550 = vmatmul.mubr.bf16.gmra.mrb[0].mxu0 %v9191
      %v9551 = vpop.f32.mrb[0].mxu0
      %v9552 = vadd.f32 0.0, %v9551
      %v9553 = vpop.f32.mrb[0].mxu0
      %v9554 = vpop.f32.mrb[0].mxu0
      %v9555 = vadd.f32 0.0, %v9554
      %v9556 = vpop.f32.mrb[0].mxu0
      %9557 = vmatprep.mubr.bf16.mxu0 0
      %9558 = vmatmul.mubr.bf16.gmra.mrb[0].mxu0 %v9194
      %v9559 = vpop.f32.mrb[0].mxu0
      %v9560 = vadd.f32 0.0, %v9559
      %v9561 = vpop.f32.mrb[0].mxu0
      %v9562 = vpop.f32.mrb[0].mxu0
      %v9563 = vadd.f32 0.0, %v9562
      %v9564 = vpop.f32.mrb[0].mxu0
      %9565 = vmatprep.mubr.bf16.mxu0 0
      %9566 = vmatmul.mubr.bf16.gmra.mrb[0].mxu0 %v9197
      %v9567 = vpop.f32.mrb[0].mxu0
      %v9568 = vadd.f32 0.0, %v9567
      %v9569 = vpop.f32.mrb[0].mxu0
      %v9570 = vpop.f32.mrb[0].mxu0
      %v9571 = vadd.f32 0.0, %v9570
      %v9572 = vpop.f32.mrb[0].mxu0
      %9573 = vmatprep.mubr.bf16.mxu0 0
      %9574 = vmatmul.mubr.bf16.gmra.mrb[0].mxu0 %v9200
      %v9575 = vpop.f32.mrb[0].mxu0
      %v9576 = vadd.f32 0.0, %v9575
      %v9577 = vpop.f32.mrb[0].mxu0
      %v9578 = vpop.f32.mrb[0].mxu0
      %v9579 = vadd.f32 0.0, %v9578
      %v9580 = vpop.f32.mrb[0].mxu0
      %9581 = vmatprep.mubr.bf16.mxu0 0
      %9582 = vmatmul.mubr.bf16.gmra.mrb[0].mxu0 %v9203
      %v9583 = vpop.f32.mrb[0].mxu0
      %v9584 = vadd.f32 0.0, %v9583
      %v9585 = vpop.f32.mrb[0].mxu0
      %v9586 = vpop.f32.mrb[0].mxu0
      %v9587 = vadd.f32 0.0, %v9586
      %v9588 = vpop.f32.mrb[0].mxu0
      %9589 = vmatprep.mubr.bf16.mxu0 0
      %9590 = vmatmul.mubr.bf16.gmra.mrb[0].mxu0 %v9206
      %v9591 = vpop.f32.mrb[0].mxu0
      %v9592 = vadd.f32 0.0, %v9591
      %v9593 = vpop.f32.mrb[0].mxu0
      %v9594 = vpop.f32.mrb[0].mxu0
      %v9595 = vadd.f32 0.0, %v9594
      %v9596 = vpop.f32.mrb[0].mxu0
      %9597 = vmatprep.mubr.bf16.mxu0 0
      %9598 = vmatmul.mubr.bf16.gmra.mrb[0].mxu0 %v9209
      %v9599 = vpop.f32.mrb[0].mxu0
      %v9600 = vadd.f32 0.0, %v9599
      %v9601 = vpop.f32.mrb[0].mxu0
      %v9602 = vpop.f32.mrb[0].mxu0
      %v9603 = vadd.f32 0.0, %v9602
      %v9604 = vpop.f32.mrb[0].mxu0
      %9605 = vmatprep.mubr.bf16.mxu0 0
      %9606 = vmatmul.mubr.bf16.gmra.mrb[0].mxu0 %v9212
      %v9607 = vpop.f32.mrb[0].mxu0
      %v9608 = vadd.f32 0.0, %v9607
      %v9609 = vpop.f32.mrb[0].mxu0
      %v9610 = vpop.f32.mrb[0].mxu0
      %v9611 = vadd.f32 0.0, %v9610
      %v9612 = vpop.f32.mrb[0].mxu0
      %9613 = vmatprep.mubr.bf16.mxu0 0
      %9614 = vmatmul.mubr.bf16.gmra.mrb[0].mxu0 %v9215
      %v9615 = vpop.f32.mrb[0].mxu0
      %v9616 = vadd.f32 0.0, %v9615
      %v9617 = vpop.f32.mrb[0].mxu0
      %v9618 = vpop.f32.mrb[0].mxu0
      %v9619 = vadd.f32 0.0, %v9618
      %v9620 = vpop.f32.mrb[0].mxu0
      %9621 = vmatprep.mubr.bf16.mxu0 0
      %9622 = vmatmul.mubr.bf16.gmra.mrb[0].mxu0 %v9218
      %v9623 = vpop.f32.mrb[0].mxu0
      %v9624 = vadd.f32 0.0, %v9623
      %v9625 = vpop.f32.mrb[0].mxu0
      %v9626 = vpop.f32.mrb[0].mxu0
      %v9627 = vadd.f32 0.0, %v9626
      %v9628 = vpop.f32.mrb[0].mxu0
      %9629 = vmatprep.mubr.bf16.mxu0 0
      %9630 = vmatmul.mubr.bf16.gmra.mrb[0].mxu0 %v9221
      %v9631 = vpop.f32.mrb[0].mxu0
      %v9632 = vadd.f32 0.0, %v9631
      %v9633 = vpop.f32.mrb[0].mxu0
      %v9634 = vpop.f32.mrb[0].mxu0
      %v9635 = vadd.f32 0.0, %v9634
      %v9636 = vpop.f32.mrb[0].mxu0
      %9637 = vmatprep.mubr.bf16.mxu0 0
      %9638 = vmatmul.mubr.bf16.gmra.mrb[0].mxu0 %v9224
      %v9639 = vpop.f32.mrb[0].mxu0
      %v9640 = vadd.f32 0.0, %v9639
      %v9641 = vpop.f32.mrb[0].mxu0
      %v9642 = vpop.f32.mrb[0].mxu0
      %v9643 = vadd.f32 0.0, %v9642
      %v9644 = vpop.f32.mrb[0].mxu0
      %9645 = vmatprep.mubr.bf16.mxu0 0
      %9646 = vmatmul.mubr.bf16.gmra.mrb[0].mxu0 %v9227
      %v9647 = vpop.f32.mrb[0].mxu0
      %v9648 = vadd.f32 0.0, %v9647
      %v9649 = vpop.f32.mrb[0].mxu0
      %v9650 = vpop.f32.mrb[0].mxu0
      %v9651 = vadd.f32 0.0, %v9650
      %v9652 = vpop.f32.mrb[0].mxu0
      %9653 = vmatprep.mubr.bf16.mxu0 0
      %9654 = vmatmul.mubr.bf16.gmra.mrb[0].mxu0 %v9230
      %v9655 = vpop.f32.mrb[0].mxu0
      %v9656 = vadd.f32 0.0, %v9655
      %v9657 = vpop.f32.mrb[0].mxu0
      %v9658 = vpop.f32.mrb[0].mxu0
      %v9659 = vadd.f32 0.0, %v9658
      %v9660 = vpop.f32.mrb[0].mxu0
      %9661 = vmatprep.mubr.bf16.mxu0 0
      %9662 = vmatmul.mubr.bf16.gmra.mrb[0].mxu0 %v9233
      %v9663 = vpop.f32.mrb[0].mxu0
      %v9664 = vadd.f32 0.0, %v9663
      %v9665 = vpop.f32.mrb[0].mxu0
      %v9666 = vpop.f32.mrb[0].mxu0
      %v9667 = vadd.f32 0.0, %v9666
      %v9668 = vpop.f32.mrb[0].mxu0
      %9669 = vmatprep.mubr.bf16.mxu0 0
      %9670 = vmatmul.mubr.bf16.gmra.mrb[0].mxu0 %v9236
      %v9671 = vpop.f32.mrb[0].mxu0
      %v9672 = vadd.f32 0.0, %v9671
      %v9673 = vpop.f32.mrb[0].mxu0
      %v9674 = vpop.f32.mrb[0].mxu0
      %v9675 = vadd.f32 0.0, %v9674
      %v9676 = vpop.f32.mrb[0].mxu0
      %9677 = vmatprep.mubr.bf16.mxu0 0
      %9678 = vmatmul.mubr.bf16.gmra.mrb[0].mxu0 %v9239
      %v9679 = vpop.f32.mrb[0].mxu0
      %v9680 = vadd.f32 0.0, %v9679
      %v9681 = vpop.f32.mrb[0].mxu0
      %v9682 = vpop.f32.mrb[0].mxu0
      %v9683 = vadd.f32 0.0, %v9682
      %v9684 = vpop.f32.mrb[0].mxu0
      %9685 = vmatprep.mubr.bf16.mxu0 0
      %9686 = vmatmul.mubr.bf16.gmra.mrb[0].mxu0 %v9242
      %v9687 = vpop.f32.mrb[0].mxu0
      %v9688 = vadd.f32 0.0, %v9687
      %v9689 = vpop.f32.mrb[0].mxu0
      %v9690 = vpop.f32.mrb[0].mxu0
      %v9691 = vadd.f32 0.0, %v9690
      %v9692 = vpop.f32.mrb[0].mxu0
      %9693 = vmatprep.mubr.bf16.mxu0 0
      %9694 = vmatmul.mubr.bf16.gmra.mrb[0].mxu0 %v9245
      %v9695 = vpop.f32.mrb[0].mxu0
      %v9696 = vadd.f32 0.0, %v9695
      %v9697 = vpop.f32.mrb[0].mxu0
      %v9698 = vpop.f32.mrb[0].mxu0
      %v9699 = vadd.f32 0.0, %v9698
      %v9700 = vpop.f32.mrb[0].mxu0
      %9701 = vmatprep.mubr.bf16.mxu0 0
      %9702 = vmatmul.mubr.bf16.gmra.mrb[0].mxu0 %v9248
      %v9703 = vpop.f32.mrb[0].mxu0
      %v9704 = vadd.f32 0.0, %v9703
      %v9705 = vpop.f32.mrb[0].mxu0
      %v9706 = vpop.f32.mrb[0].mxu0
      %v9707 = vadd.f32 0.0, %v9706
      %v9708 = vpop.f32.mrb[0].mxu0
      %9709 = vmatprep.mubr.bf16.mxu0 0
      %9710 = vmatmul.mubr.bf16.gmra.mrb[0].mxu0 %v9251
      %v9711 = vpop.f32.mrb[0].mxu0
      %v9712 = vadd.f32 0.0, %v9711
      %v9713 = vpop.f32.mrb[0].mxu0
      %v9714 = vpop.f32.mrb[0].mxu0
      %v9715 = vadd.f32 0.0, %v9714
      %v9716 = vpop.f32.mrb[0].mxu0
      %9717 = vmatprep.mubr.bf16.mxu0 0
      %9718 = vmatmul.mubr.bf16.gmra.mrb[0].mxu0 %v9254
      %v9719 = vpop.f32.mrb[0].mxu0
      %v9720 = vadd.f32 0.0, %v9719
      %v9721 = vpop.f32.mrb[0].mxu0
      %v9722 = vpop.f32.mrb[0].mxu0
      %v9723 = vadd.f32 0.0, %v9722
      %v9724 = vpop.f32.mrb[0].mxu0
      %9725 = vmatprep.mubr.bf16.mxu0 0
      %9726 = vmatmul.mubr.bf16.gmra.mrb[0].mxu0 %v9257
      %v9727 = vpop.f32.mrb[0].mxu0
      %v9728 = vadd.f32 0.0, %v9727
      %v9729 = vpop.f32.mrb[0].mxu0
      %v9730 = vpop.f32.mrb[0].mxu0
      %v9731 = vadd.f32 0.0, %v9730
      %v9732 = vpop.f32.mrb[0].mxu0
      %9733 = vmatprep.mubr.bf16.mxu0 0
      %9734 = vmatmul.mubr.bf16.gmra.mrb[0].mxu0 %v9260
      %v9735 = vpop.f32.mrb[0].mxu0
      %v9736 = vadd.f32 0.0, %v9735
      %v9737 = vpop.f32.mrb[0].mxu0
      %v9738 = vpop.f32.mrb[0].mxu0
      %v9739 = vadd.f32 0.0, %v9738
      %v9740 = vpop.f32.mrb[0].mxu0
      %9741 = vmatprep.mubr.bf16.mxu0 0
      %9742 = vmatmul.mubr.bf16.gmra.mrb[0].mxu0 %v9263
      %v9743 = vpop.f32.mrb[0].mxu0
      %v9744 = vadd.f32 0.0, %v9743
      %v9745 = vpop.f32.mrb[0].mxu0
      %v9746 = vpop.f32.mrb[0].mxu0
      %v9747 = vadd.f32 0.0, %v9746
      %v9748 = vpop.f32.mrb[0].mxu0
      %9749 = vmatprep.mubr.bf16.mxu0 0
      %9750 = vmatmul.mubr.bf16.gmra.mrb[0].mxu0 %v9266
      %v9751 = vpop.f32.mrb[0].mxu0
      %v9752 = vadd.f32 0.0, %v9751
      %v9753 = vpop.f32.mrb[0].mxu0
      %v9754 = vpop.f32.mrb[0].mxu0
      %v9755 = vadd.f32 0.0, %v9754
      %v9756 = vpop.f32.mrb[0].mxu0
      %9757 = vmatprep.mubr.bf16.mxu0 0
      %9758 = vmatmul.mubr.bf16.gmra.mrb[0].mxu0 %v9269
      %v9759 = vpop.f32.mrb[0].mxu0
      %v9760 = vadd.f32 0.0, %v9759
      %v9761 = vpop.f32.mrb[0].mxu0
      %v9762 = vpop.f32.mrb[0].mxu0
      %v9763 = vadd.f32 0.0, %v9762
      %v9764 = vpop.f32.mrb[0].mxu0
      %9765 = vmatprep.mubr.bf16.mxu0 0
      %9766 = vmatmul.mubr.bf16.gmra.mrb[0].mxu0 %v9272
      %v9767 = vpop.f32.mrb[0].mxu0
      %v9768 = vadd.f32 0.0, %v9767
      %v9769 = vpop.f32.mrb[0].mxu0
      %v9770 = vpop.f32.mrb[0].mxu0
      %v9771 = vadd.f32 0.0, %v9770
      %v9772 = vpop.f32.mrb[0].mxu0
      %9773 = vmatprep.mubr.bf16.mxu0 0
      %9774 = vmatmul.mubr.bf16.gmra.mrb[0].mxu0 %v9275
      %v9775 = vpop.f32.mrb[0].mxu0
      %v9776 = vadd.f32 0.0, %v9775
      %v9777 = vpop.f32.mrb[0].mxu0
      %v9778 = vpop.f32.mrb[0].mxu0
      %v9779 = vadd.f32 0.0, %v9778
      %v9780 = vpop.f32.mrb[0].mxu0
      %9781 = vmatprep.mubr.bf16.mxu0 0
      %9782 = vmatmul.mubr.bf16.gmra.mrb[0].mxu0 %v9278
      %v9783 = vpop.f32.mrb[0].mxu0
      %v9784 = vadd.f32 0.0, %v9783
      %v9785 = vpop.f32.mrb[0].mxu0
      %v9786 = vpop.f32.mrb[0].mxu0
      %v9787 = vadd.f32 0.0, %v9786
      %v9788 = vpop.f32.mrb[0].mxu0
      %9789 = vmatprep.mubr.bf16.mxu0 0
      %9790 = vmatmul.mubr.bf16.gmra.mrb[0].mxu0 %v9281
      %v9791 = vpop.f32.mrb[0].mxu0
      %v9792 = vadd.f32 0.0, %v9791
      %v9793 = vpop.f32.mrb[0].mxu0
      %v9794 = vpop.f32.mrb[0].mxu0
      %v9795 = vadd.f32 0.0, %v9794
      %v9796 = vpop.f32.mrb[0].mxu0
      %9797 = vmatprep.mubr.bf16.mxu0 0
      %9798 = vmatmul.mubr.bf16.gmra.mrb[0].mxu0 %v9284
      %v9799 = vpop.f32.mrb[0].mxu0
      %v9800 = vadd.f32 0.0, %v9799
      %v9801 = vpop.f32.mrb[0].mxu0
      %v9802 = vpop.f32.mrb[0].mxu0
      %v9803 = vadd.f32 0.0, %v9802
      %v9804 = vpop.f32.mrb[0].mxu0
      %9805 = vmatprep.mubr.bf16.mxu0 0
      %9806 = vmatmul.mubr.bf16.gmra.mrb[0].mxu0 %v9287
      %v9807 = vpop.f32.mrb[0].mxu0
      %v9808 = vadd.f32 0.0, %v9807
      %v9809 = vpop.f32.mrb[0].mxu0
      %v9810 = vpop.f32.mrb[0].mxu0
      %v9811 = vadd.f32 0.0, %v9810
      %v9812 = vpop.f32.mrb[0].mxu0
      %9813 = vmatprep.mubr.bf16.mxu0 0
      %9814 = vmatmul.mubr.bf16.gmra.mrb[0].mxu0 %v9290
      %v9815 = vpop.f32.mrb[0].mxu0
      %v9816 = vadd.f32 0.0, %v9815
      %v9817 = vpop.f32.mrb[0].mxu0
      %v9818 = vpop.f32.mrb[0].mxu0
      %v9819 = vadd.f32 0.0, %v9818
      %v9820 = vpop.f32.mrb[0].mxu0
      %9821 = vmatprep.mubr.bf16.mxu0 0
      %9822 = vmatmul.mubr.bf16.gmra.mrb[0].mxu0 %v9293
      %v9823 = vpop.f32.mrb[0].mxu0
      %v9824 = vadd.f32 0.0, %v9823
      %v9825 = vpop.f32.mrb[0].mxu0
      %v9826 = vpop.f32.mrb[0].mxu0
      %v9827 = vadd.f32 0.0, %v9826
      %v9828 = vpop.f32.mrb[0].mxu0
      %9829 = vmatprep.mubr.bf16.mxu0 0
      %9830 = vmatmul.mubr.bf16.gmra.mrb[0].mxu0 %v9296
      %v9831 = vpop.f32.mrb[0].mxu0
      %v9832 = vadd.f32 0.0, %v9831
      %v9833 = vpop.f32.mrb[0].mxu0
      %v9834 = vpop.f32.mrb[0].mxu0
      %v9835 = vadd.f32 0.0, %v9834
      %v9836 = vpop.f32.mrb[0].mxu0
      %9837 = vmatprep.mubr.bf16.mxu0 0
      %9838 = vmatmul.mubr.bf16.gmra.mrb[0].mxu0 %v9299
      %v9839 = vpop.f32.mrb[0].mxu0
      %v9840 = vadd.f32 0.0, %v9839
      %v9841 = vpop.f32.mrb[0].mxu0
      %v9842 = vpop.f32.mrb[0].mxu0
      %v9843 = vadd.f32 0.0, %v9842
      %v9844 = vpop.f32.mrb[0].mxu0
      %9845 = vmatprep.mubr.bf16.mxu0 0
      %9846 = vmatmul.mubr.bf16.gmra.mrb[0].mxu0 %v9302
      %v9847 = vpop.f32.mrb[0].mxu0
      %v9848 = vadd.f32 0.0, %v9847
      %v9849 = vpop.f32.mrb[0].mxu0
      %v9850 = vpop.f32.mrb[0].mxu0
      %v9851 = vadd.f32 0.0, %v9850
      %v9852 = vpop.f32.mrb[0].mxu0
      %9853 = vmatprep.mubr.bf16.mxu0 0
      %9854 = vmatmul.mubr.bf16.gmra.mrb[0].mxu0 %v9305
      %v9855 = vpop.f32.mrb[0].mxu0
      %v9856 = vadd.f32 0.0, %v9855
      %v9857 = vpop.f32.mrb[0].mxu0
      %v9858 = vpop.f32.mrb[0].mxu0
      %v9859 = vadd.f32 0.0, %v9858
      %v9860 = vpop.f32.mrb[0].mxu0
      %9861 = vmatprep.mubr.bf16.mxu0 0
      %9862 = vmatmul.mubr.bf16.gmra.mrb[0].mxu0 %v9308
      %v9863 = vpop.f32.mrb[0].mxu0
      %v9864 = vadd.f32 0.0, %v9863
      %v9865 = vpop.f32.mrb[0].mxu0
      %v9866 = vpop.f32.mrb[0].mxu0
      %v9867 = vadd.f32 0.0, %v9866
      %v9868 = vpop.f32.mrb[0].mxu0
      %9869 = vmatprep.mubr.bf16.mxu0 0
      %9870 = vmatmul.mubr.bf16.gmra.mrb[0].mxu0 %v9311
      %v9871 = vpop.f32.mrb[0].mxu0
      %v9872 = vadd.f32 0.0, %v9871
      %v9873 = vpop.f32.mrb[0].mxu0
      %v9874 = vpop.f32.mrb[0].mxu0
      %v9875 = vadd.f32 0.0, %v9874
      %v9876 = vpop.f32.mrb[0].mxu0
      %9877 = vmatprep.mubr.bf16.mxu0 0
      %9878 = vmatmul.mubr.bf16.gmra.mrb[0].mxu0 %v9314
      %v9879 = vpop.f32.mrb[0].mxu0
      %v9880 = vadd.f32 0.0, %v9879
      %v9881 = vpop.f32.mrb[0].mxu0
      %v9882 = vpop.f32.mrb[0].mxu0
      %v9883 = vadd.f32 0.0, %v9882
      %v9884 = vpop.f32.mrb[0].mxu0
      %9885 = vmatprep.mubr.bf16.mxu0 0
      %9886 = vmatmul.mubr.bf16.gmra.mrb[0].mxu0 %v9317
      %v9887 = vpop.f32.mrb[0].mxu0
      %v9888 = vadd.f32 0.0, %v9887
      %v9889 = vpop.f32.mrb[0].mxu0
      %v9890 = vpop.f32.mrb[0].mxu0
      %v9891 = vadd.f32 0.0, %v9890
      %v9892 = vpop.f32.mrb[0].mxu0
      %9893 = vmatprep.mubr.bf16.mxu0 0
      %9894 = vmatmul.mubr.bf16.gmra.mrb[0].mxu0 %v9320
      %v9895 = vpop.f32.mrb[0].mxu0
      %v9896 = vadd.f32 0.0, %v9895
      %v9897 = vpop.f32.mrb[0].mxu0
      %v9898 = vpop.f32.mrb[0].mxu0
      %v9899 = vadd.f32 0.0, %v9898
      %v9900 = vpop.f32.mrb[0].mxu0
      %9901 = vdwg.mxu0
      %v9902 = vadd.f32 %v8776, %v9360
      %v9903 = vadd.f32 %v8777, %v9363
      %v9904 = vadd.f32 %v8778, %v9368
      %v9905 = vadd.f32 %v8779, %v9371
      %v9906 = vadd.f32 %v8780, %v9376
      %v9907 = vadd.f32 %v8781, %v9379
      %v9908 = vadd.f32 %v8782, %v9384
      %v9909 = vadd.f32 %v8783, %v9387
      %v9910 = vadd.f32 %v8784, %v9392
      %v9911 = vadd.f32 %v8785, %v9395
      %v9912 = vadd.f32 %v8786, %v9400
      %v9913 = vadd.f32 %v8787, %v9403
      %v9914 = vadd.f32 %v8788, %v9408
      %v9915 = vadd.f32 %v8789, %v9411
      %v9916 = vadd.f32 %v8790, %v9416
      %v9917 = vadd.f32 %v8791, %v9419
      %v9918 = vadd.f32 %v8792, %v9424
      %v9919 = vadd.f32 %v8793, %v9427
      %v9920 = vadd.f32 %v8794, %v9432
      %v9921 = vadd.f32 %v8795, %v9435
      %v9922 = vadd.f32 %v8796, %v9440
      %v9923 = vadd.f32 %v8797, %v9443
      %v9924 = vadd.f32 %v8798, %v9448
      %v9925 = vadd.f32 %v8799, %v9451
      %v9926 = vadd.f32 %v8800, %v9456
      %v9927 = vadd.f32 %v8801, %v9459
      %v9928 = vadd.f32 %v8802, %v9464
      %v9929 = vadd.f32 %v8803, %v9467
      %v9930 = vadd.f32 %v8804, %v9472
      %v9931 = vadd.f32 %v8805, %v9475
      %v9932 = vadd.f32 %v8806, %v9480
      %v9933 = vadd.f32 %v8807, %v9483
      %v9934 = vadd.f32 %v8808, %v9488
      %v9935 = vadd.f32 %v8809, %v9491
      %v9936 = vadd.f32 %v8810, %v9496
      %v9937 = vadd.f32 %v8811, %v9499
      %v9938 = vadd.f32 %v8812, %v9504
      %v9939 = vadd.f32 %v8813, %v9507
      %v9940 = vadd.f32 %v8814, %v9512
      %v9941 = vadd.f32 %v8815, %v9515
      %v9942 = vadd.f32 %v8816, %v9520
      %v9943 = vadd.f32 %v8817, %v9523
      %v9944 = vadd.f32 %v8818, %v9528
      %v9945 = vadd.f32 %v8819, %v9531
      %v9946 = vadd.f32 %v8820, %v9536
      %v9947 = vadd.f32 %v8821, %v9539
      %v9948 = vadd.f32 %v8822, %v9544
      %v9949 = vadd.f32 %v8823, %v9547
      %v9950 = vadd.f32 %v8824, %v9552
      %v9951 = vadd.f32 %v8825, %v9555
      %v9952 = vadd.f32 %v8826, %v9560
      %v9953 = vadd.f32 %v8827, %v9563
      %v9954 = vadd.f32 %v8828, %v9568
      %v9955 = vadd.f32 %v8829, %v9571
      %v9956 = vadd.f32 %v8830, %v9576
      %v9957 = vadd.f32 %v8831, %v9579
      %v9958 = vadd.f32 %v8832, %v9584
      %v9959 = vadd.f32 %v8833, %v9587
      %v9960 = vadd.f32 %v8834, %v9592
      %v9961 = vadd.f32 %v8835, %v9595
      %v9962 = vadd.f32 %v8836, %v9600
      %v9963 = vadd.f32 %v8837, %v9603
      %v9964 = vadd.f32 %v8838, %v9608
      %v9965 = vadd.f32 %v8839, %v9611
      %v9966 = vadd.f32 %v8840, %v9616
      %v9967 = vadd.f32 %v8841, %v9619
      %v9968 = vadd.f32 %v8842, %v9624
      %v9969 = vadd.f32 %v8843, %v9627
      %v9970 = vadd.f32 %v8844, %v9632
      %v9971 = vadd.f32 %v8845, %v9635
      %v9972 = vadd.f32 %v8846, %v9640
      %v9973 = vadd.f32 %v8847, %v9643
      %v9974 = vadd.f32 %v8848, %v9648
      %v9975 = vadd.f32 %v8849, %v9651
      %v9976 = vadd.f32 %v8850, %v9656
      %v9977 = vadd.f32 %v8851, %v9659
      %v9978 = vadd.f32 %v8852, %v9664
      %v9979 = vadd.f32 %v8853, %v9667
      %v9980 = vadd.f32 %v8854, %v9672
      %v9981 = vadd.f32 %v8855, %v9675
      %v9982 = vadd.f32 %v8856, %v9680
      %v9983 = vadd.f32 %v8857, %v9683
      %v9984 = vadd.f32 %v8858, %v9688
      %v9985 = vadd.f32 %v8859, %v9691
      %v9986 = vadd.f32 %v8860, %v9696
      %v9987 = vadd.f32 %v8861, %v9699
      %v9988 = vadd.f32 %v8862, %v9704
      %v9989 = vadd.f32 %v8863, %v9707
      %v9990 = vadd.f32 %v8864, %v9712
      %v9991 = vadd.f32 %v8865, %v9715
      %v9992 = vadd.f32 %v8866, %v9720
      %v9993 = vadd.f32 %v8867, %v9723
      %v9994 = vadd.f32 %v8868, %v9728
      %v9995 = vadd.f32 %v8869, %v9731
      %v9996 = vadd.f32 %v8870, %v9736
      %v9997 = vadd.f32 %v8871, %v9739
      %v9998 = vadd.f32 %v8872, %v9744
      %v9999 = vadd.f32 %v8873, %v9747
      %v10000 = vadd.f32 %v8874, %v9752
      %v10001 = vadd.f32 %v8875, %v9755
      %v10002 = vadd.f32 %v8876, %v9760
      %v10003 = vadd.f32 %v8877, %v9763
      %v10004 = vadd.f32 %v8878, %v9768
      %v10005 = vadd.f32 %v8879, %v9771
      %v10006 = vadd.f32 %v8880, %v9776
      %v10007 = vadd.f32 %v8881, %v9779
      %v10008 = vadd.f32 %v8882, %v9784
      %v10009 = vadd.f32 %v8883, %v9787
      %v10010 = vadd.f32 %v8884, %v9792
      %v10011 = vadd.f32 %v8885, %v9795
      %v10012 = vadd.f32 %v8886, %v9800
      %v10013 = vadd.f32 %v8887, %v9803
      %v10014 = vadd.f32 %v8888, %v9808
      %v10015 = vadd.f32 %v8889, %v9811
      %v10016 = vadd.f32 %v8890, %v9816
      %v10017 = vadd.f32 %v8891, %v9819
      %v10018 = vadd.f32 %v8892, %v9824
      %v10019 = vadd.f32 %v8893, %v9827
      %v10020 = vadd.f32 %v8894, %v9832
      %v10021 = vadd.f32 %v8895, %v9835
      %v10022 = vadd.f32 %v8896, %v9840
      %v10023 = vadd.f32 %v8897, %v9843
      %v10024 = vadd.f32 %v8898, %v9848
      %v10025 = vadd.f32 %v8899, %v9851
      %v10026 = vadd.f32 %v8900, %v9856
      %v10027 = vadd.f32 %v8901, %v9859
      %v10028 = vadd.f32 %v8902, %v9864
      %v10029 = vadd.f32 %v8903, %v9867
      %v10030 = vadd.f32 %v8904, %v9872
      %v10031 = vadd.f32 %v8905, %v9875
      %v10032 = vadd.f32 %v8906, %v9880
      %v10033 = vadd.f32 %v8907, %v9883
      %v10034 = vadd.f32 %v8908, %v9888
      %v10035 = vadd.f32 %v8909, %v9891
      %v10036 = vadd.f32 %v8910, %v9896
      %v10037 = vadd.f32 %v8911, %v9899
      %v10038 = vld [vmem:[%s2] sm:$0x1]
      %v10040 = vlaneseq
      %v10041 = vshrl.u32 %v10040, 7
      %v10042 = vsub.s32 0, %v10041
      %v10043 = vrot.slane %v10038, %v10042
      %v10045 = vadd.f32 %v9902, %v10043
      %v10046 = vadd.f32 %v9903, %v10043
      %v10047 = vadd.f32 %v9904, %v10043
      %v10048 = vadd.f32 %v9905, %v10043
      %v10049 = vadd.f32 %v9906, %v10043
      %v10050 = vadd.f32 %v9907, %v10043
      %v10051 = vadd.f32 %v9908, %v10043
      %v10052 = vadd.f32 %v9909, %v10043
      %v10053 = vadd.f32 %v9910, %v10043
      %v10054 = vadd.f32 %v9911, %v10043
      %v10055 = vadd.f32 %v9912, %v10043
      %v10056 = vadd.f32 %v9913, %v10043
      %v10057 = vadd.f32 %v9914, %v10043
      %v10058 = vadd.f32 %v9915, %v10043
      %v10059 = vadd.f32 %v9916, %v10043
      %v10060 = vadd.f32 %v9917, %v10043
      %v10061 = vadd.f32 %v9918, %v10043
      %v10062 = vadd.f32 %v9919, %v10043
      %v10063 = vadd.f32 %v9920, %v10043
      %v10064 = vadd.f32 %v9921, %v10043
      %v10065 = vadd.f32 %v9922, %v10043
      %v10066 = vadd.f32 %v9923, %v10043
      %v10067 = vadd.f32 %v9924, %v10043
      %v10068 = vadd.f32 %v9925, %v10043
      %v10069 = vadd.f32 %v9926, %v10043
      %v10070 = vadd.f32 %v9927, %v10043
      %v10071 = vadd.f32 %v9928, %v10043
      %v10072 = vadd.f32 %v9929, %v10043
      %v10073 = vadd.f32 %v9930, %v10043
      %v10074 = vadd.f32 %v9931, %v10043
      %v10075 = vadd.f32 %v9932, %v10043
      %v10076 = vadd.f32 %v9933, %v10043
      %v10077 = vadd.f32 %v9934, %v10043
      %v10078 = vadd.f32 %v9935, %v10043
      %v10079 = vadd.f32 %v9936, %v10043
      %v10080 = vadd.f32 %v9937, %v10043
      %v10081 = vadd.f32 %v9938, %v10043
      %v10082 = vadd.f32 %v9939, %v10043
      %v10083 = vadd.f32 %v9940, %v10043
      %v10084 = vadd.f32 %v9941, %v10043
      %v10085 = vadd.f32 %v9942, %v10043
      %v10086 = vadd.f32 %v9943, %v10043
      %v10087 = vadd.f32 %v9944, %v10043
      %v10088 = vadd.f32 %v9945, %v10043
      %v10089 = vadd.f32 %v9946, %v10043
      %v10090 = vadd.f32 %v9947, %v10043
      %v10091 = vadd.f32 %v9948, %v10043
      %v10092 = vadd.f32 %v9949, %v10043
      %v10093 = vadd.f32 %v9950, %v10043
      %v10094 = vadd.f32 %v9951, %v10043
      %v10095 = vadd.f32 %v9952, %v10043
      %v10096 = vadd.f32 %v9953, %v10043
      %v10097 = vadd.f32 %v9954, %v10043
      %v10098 = vadd.f32 %v9955, %v10043
      %v10099 = vadd.f32 %v9956, %v10043
      %v10100 = vadd.f32 %v9957, %v10043
      %v10101 = vadd.f32 %v9958, %v10043
      %v10102 = vadd.f32 %v9959, %v10043
      %v10103 = vadd.f32 %v9960, %v10043
      %v10104 = vadd.f32 %v9961, %v10043
      %v10105 = vadd.f32 %v9962, %v10043
      %v10106 = vadd.f32 %v9963, %v10043
      %v10107 = vadd.f32 %v9964, %v10043
      %v10108 = vadd.f32 %v9965, %v10043
      %v10109 = vadd.f32 %v9966, %v10043
      %v10110 = vadd.f32 %v9967, %v10043
      %v10111 = vadd.f32 %v9968, %v10043
      %v10112 = vadd.f32 %v9969, %v10043
      %v10113 = vadd.f32 %v9970, %v10043
      %v10114 = vadd.f32 %v9971, %v10043
      %v10115 = vadd.f32 %v9972, %v10043
      %v10116 = vadd.f32 %v9973, %v10043
      %v10117 = vadd.f32 %v9974, %v10043
      %v10118 = vadd.f32 %v9975, %v10043
      %v10119 = vadd.f32 %v9976, %v10043
      %v10120 = vadd.f32 %v9977, %v10043
      %v10121 = vadd.f32 %v9978, %v10043
      %v10122 = vadd.f32 %v9979, %v10043
      %v10123 = vadd.f32 %v9980, %v10043
      %v10124 = vadd.f32 %v9981, %v10043
      %v10125 = vadd.f32 %v9982, %v10043
      %v10126 = vadd.f32 %v9983, %v10043
      %v10127 = vadd.f32 %v9984, %v10043
      %v10128 = vadd.f32 %v9985, %v10043
      %v10129 = vadd.f32 %v9986, %v10043
      %v10130 = vadd.f32 %v9987, %v10043
      %v10131 = vadd.f32 %v9988, %v10043
      %v10132 = vadd.f32 %v9989, %v10043
      %v10133 = vadd.f32 %v9990, %v10043
      %v10134 = vadd.f32 %v9991, %v10043
      %v10135 = vadd.f32 %v9992, %v10043
      %v10136 = vadd.f32 %v9993, %v10043
      %v10137 = vadd.f32 %v9994, %v10043
      %v10138 = vadd.f32 %v9995, %v10043
      %v10139 = vadd.f32 %v9996, %v10043
      %v10140 = vadd.f32 %v9997, %v10043
      %v10141 = vadd.f32 %v9998, %v10043
      %v10142 = vadd.f32 %v9999, %v10043
      %v10143 = vadd.f32 %v10000, %v10043
      %v10144 = vadd.f32 %v10001, %v10043
      %v10145 = vadd.f32 %v10002, %v10043
      %v10146 = vadd.f32 %v10003, %v10043
      %v10147 = vadd.f32 %v10004, %v10043
      %v10148 = vadd.f32 %v10005, %v10043
      %v10149 = vadd.f32 %v10006, %v10043
      %v10150 = vadd.f32 %v10007, %v10043
      %v10151 = vadd.f32 %v10008, %v10043
      %v10152 = vadd.f32 %v10009, %v10043
      %v10153 = vadd.f32 %v10010, %v10043
      %v10154 = vadd.f32 %v10011, %v10043
      %v10155 = vadd.f32 %v10012, %v10043
      %v10156 = vadd.f32 %v10013, %v10043
      %v10157 = vadd.f32 %v10014, %v10043
      %v10158 = vadd.f32 %v10015, %v10043
      %v10159 = vadd.f32 %v10016, %v10043
      %v10160 = vadd.f32 %v10017, %v10043
      %v10161 = vadd.f32 %v10018, %v10043
      %v10162 = vadd.f32 %v10019, %v10043
      %v10163 = vadd.f32 %v10020, %v10043
      %v10164 = vadd.f32 %v10021, %v10043
      %v10165 = vadd.f32 %v10022, %v10043
      %v10166 = vadd.f32 %v10023, %v10043
      %v10167 = vadd.f32 %v10024, %v10043
      %v10168 = vadd.f32 %v10025, %v10043
      %v10169 = vadd.f32 %v10026, %v10043
      %v10170 = vadd.f32 %v10027, %v10043
      %v10171 = vadd.f32 %v10028, %v10043
      %v10172 = vadd.f32 %v10029, %v10043
      %v10173 = vadd.f32 %v10030, %v10043
      %v10174 = vadd.f32 %v10031, %v10043
      %v10175 = vadd.f32 %v10032, %v10043
      %v10176 = vadd.f32 %v10033, %v10043
      %v10177 = vadd.f32 %v10034, %v10043
      %v10178 = vadd.f32 %v10035, %v10043
      %v10179 = vadd.f32 %v10036, %v10043
      %v10180 = vadd.f32 %v10037, %v10043
      %v10181 = vmax.f32 %v10045, 0.0
      %v10182 = vmax.f32 %v10046, 0.0
      %v10183 = vmax.f32 %v10047, 0.0
      %v10184 = vmax.f32 %v10048, 0.0
      %v10185 = vmax.f32 %v10049, 0.0
      %v10186 = vmax.f32 %v10050, 0.0
      %v10187 = vmax.f32 %v10051, 0.0
      %v10188 = vmax.f32 %v10052, 0.0
      %v10189 = vmax.f32 %v10053, 0.0
      %v10190 = vmax.f32 %v10054, 0.0
      %v10191 = vmax.f32 %v10055, 0.0
      %v10192 = vmax.f32 %v10056, 0.0
      %v10193 = vmax.f32 %v10057, 0.0
      %v10194 = vmax.f32 %v10058, 0.0
      %v10195 = vmax.f32 %v10059, 0.0
      %v10196 = vmax.f32 %v10060, 0.0
      %v10197 = vmax.f32 %v10061, 0.0
      %v10198 = vmax.f32 %v10062, 0.0
      %v10199 = vmax.f32 %v10063, 0.0
      %v10200 = vmax.f32 %v10064, 0.0
      %v10201 = vmax.f32 %v10065, 0.0
      %v10202 = vmax.f32 %v10066, 0.0
      %v10203 = vmax.f32 %v10067, 0.0
      %v10204 = vmax.f32 %v10068, 0.0
      %v10205 = vmax.f32 %v10069, 0.0
      %v10206 = vmax.f32 %v10070, 0.0
      %v10207 = vmax.f32 %v10071, 0.0
      %v10208 = vmax.f32 %v10072, 0.0
      %v10209 = vmax.f32 %v10073, 0.0
      %v10210 = vmax.f32 %v10074, 0.0
      %v10211 = vmax.f32 %v10075, 0.0
      %v10212 = vmax.f32 %v10076, 0.0
      %v10213 = vmax.f32 %v10077, 0.0
      %v10214 = vmax.f32 %v10078, 0.0
      %v10215 = vmax.f32 %v10079, 0.0
      %v10216 = vmax.f32 %v10080, 0.0
      %v10217 = vmax.f32 %v10081, 0.0
      %v10218 = vmax.f32 %v10082, 0.0
      %v10219 = vmax.f32 %v10083, 0.0
      %v10220 = vmax.f32 %v10084, 0.0
      %v10221 = vmax.f32 %v10085, 0.0
      %v10222 = vmax.f32 %v10086, 0.0
      %v10223 = vmax.f32 %v10087, 0.0
      %v10224 = vmax.f32 %v10088, 0.0
      %v10225 = vmax.f32 %v10089, 0.0
      %v10226 = vmax.f32 %v10090, 0.0
      %v10227 = vmax.f32 %v10091, 0.0
      %v10228 = vmax.f32 %v10092, 0.0
      %v10229 = vmax.f32 %v10093, 0.0
      %v10230 = vmax.f32 %v10094, 0.0
      %v10231 = vmax.f32 %v10095, 0.0
      %v10232 = vmax.f32 %v10096, 0.0
      %v10233 = vmax.f32 %v10097, 0.0
      %v10234 = vmax.f32 %v10098, 0.0
      %v10235 = vmax.f32 %v10099, 0.0
      %v10236 = vmax.f32 %v10100, 0.0
      %v10237 = vmax.f32 %v10101, 0.0
      %v10238 = vmax.f32 %v10102, 0.0
      %v10239 = vmax.f32 %v10103, 0.0
      %v10240 = vmax.f32 %v10104, 0.0
      %v10241 = vmax.f32 %v10105, 0.0
      %v10242 = vmax.f32 %v10106, 0.0
      %v10243 = vmax.f32 %v10107, 0.0
      %v10244 = vmax.f32 %v10108, 0.0
      %v10245 = vmax.f32 %v10109, 0.0
      %v10246 = vmax.f32 %v10110, 0.0
      %v10247 = vmax.f32 %v10111, 0.0
      %v10248 = vmax.f32 %v10112, 0.0
      %v10249 = vmax.f32 %v10113, 0.0
      %v10250 = vmax.f32 %v10114, 0.0
      %v10251 = vmax.f32 %v10115, 0.0
      %v10252 = vmax.f32 %v10116, 0.0
      %v10253 = vmax.f32 %v10117, 0.0
      %v10254 = vmax.f32 %v10118, 0.0
      %v10255 = vmax.f32 %v10119, 0.0
      %v10256 = vmax.f32 %v10120, 0.0
      %v10257 = vmax.f32 %v10121, 0.0
      %v10258 = vmax.f32 %v10122, 0.0
      %v10259 = vmax.f32 %v10123, 0.0
      %v10260 = vmax.f32 %v10124, 0.0
      %v10261 = vmax.f32 %v10125, 0.0
      %v10262 = vmax.f32 %v10126, 0.0
      %v10263 = vmax.f32 %v10127, 0.0
      %v10264 = vmax.f32 %v10128, 0.0
      %v10265 = vmax.f32 %v10129, 0.0
      %v10266 = vmax.f32 %v10130, 0.0
      %v10267 = vmax.f32 %v10131, 0.0
      %v10268 = vmax.f32 %v10132, 0.0
      %v10269 = vmax.f32 %v10133, 0.0
      %v10270 = vmax.f32 %v10134, 0.0
      %v10271 = vmax.f32 %v10135, 0.0
      %v10272 = vmax.f32 %v10136, 0.0
      %v10273 = vmax.f32 %v10137, 0.0
      %v10274 = vmax.f32 %v10138, 0.0
      %v10275 = vmax.f32 %v10139, 0.0
      %v10276 = vmax.f32 %v10140, 0.0
      %v10277 = vmax.f32 %v10141, 0.0
      %v10278 = vmax.f32 %v10142, 0.0
      %v10279 = vmax.f32 %v10143, 0.0
      %v10280 = vmax.f32 %v10144, 0.0
      %v10281 = vmax.f32 %v10145, 0.0
      %v10282 = vmax.f32 %v10146, 0.0
      %v10283 = vmax.f32 %v10147, 0.0
      %v10284 = vmax.f32 %v10148, 0.0
      %v10285 = vmax.f32 %v10149, 0.0
      %v10286 = vmax.f32 %v10150, 0.0
      %v10287 = vmax.f32 %v10151, 0.0
      %v10288 = vmax.f32 %v10152, 0.0
      %v10289 = vmax.f32 %v10153, 0.0
      %v10290 = vmax.f32 %v10154, 0.0
      %v10291 = vmax.f32 %v10155, 0.0
      %v10292 = vmax.f32 %v10156, 0.0
      %v10293 = vmax.f32 %v10157, 0.0
      %v10294 = vmax.f32 %v10158, 0.0
      %v10295 = vmax.f32 %v10159, 0.0
      %v10296 = vmax.f32 %v10160, 0.0
      %v10297 = vmax.f32 %v10161, 0.0
      %v10298 = vmax.f32 %v10162, 0.0
      %v10299 = vmax.f32 %v10163, 0.0
      %v10300 = vmax.f32 %v10164, 0.0
      %v10301 = vmax.f32 %v10165, 0.0
      %v10302 = vmax.f32 %v10166, 0.0
      %v10303 = vmax.f32 %v10167, 0.0
      %v10304 = vmax.f32 %v10168, 0.0
      %v10305 = vmax.f32 %v10169, 0.0
      %v10306 = vmax.f32 %v10170, 0.0
      %v10307 = vmax.f32 %v10171, 0.0
      %v10308 = vmax.f32 %v10172, 0.0
      %v10309 = vmax.f32 %v10173, 0.0
      %v10310 = vmax.f32 %v10174, 0.0
      %v10311 = vmax.f32 %v10175, 0.0
      %v10312 = vmax.f32 %v10176, 0.0
      %v10313 = vmax.f32 %v10177, 0.0
      %v10314 = vmax.f32 %v10178, 0.0
      %v10315 = vmax.f32 %v10179, 0.0
      %v10316 = vmax.f32 %v10180, 0.0
      %vm10317 = vcmask 261120
      %10318 = vst.msk [vmem:[%s170] sm:$0xff] %vm10317, %v10181
      %10319 = vst.msk [vmem:[%s170 + $0x8] sm:$0xff] %vm10317, %v10182
      %10320 = vst.msk [vmem:[%s170 + $0x10] sm:$0xff] %vm10317, %v10183
      %10321 = vst.msk [vmem:[%s170 + $0x18] sm:$0xff] %vm10317, %v10184
      %10322 = vst.msk [vmem:[%s170 + $0x20] sm:$0xff] %vm10317, %v10185
      %10323 = vst.msk [vmem:[%s170 + $0x28] sm:$0xff] %vm10317, %v10186
      %10324 = vst.msk [vmem:[%s170 + $0x30] sm:$0xff] %vm10317, %v10187
      %10325 = vst.msk [vmem:[%s170 + $0x38] sm:$0xff] %vm10317, %v10188
      %10326 = vst.msk [vmem:[%s170 + $0x40] sm:$0xff] %vm10317, %v10189
      %10327 = vst.msk [vmem:[%s170 + $0x48] sm:$0xff] %vm10317, %v10190
      %10328 = vst.msk [vmem:[%s170 + $0x50] sm:$0xff] %vm10317, %v10191
      %10329 = vst.msk [vmem:[%s170 + $0x58] sm:$0xff] %vm10317, %v10192
      %10330 = vst.msk [vmem:[%s170 + $0x60] sm:$0xff] %vm10317, %v10193
      %10331 = vst.msk [vmem:[%s170 + $0x68] sm:$0xff] %vm10317, %v10194
      %10332 = vst.msk [vmem:[%s170 + $0x70] sm:$0xff] %vm10317, %v10195
      %10333 = vst.msk [vmem:[%s170 + $0x78] sm:$0xff] %vm10317, %v10196
      %10334 = vst.msk [vmem:[%s170 + $0x80] sm:$0xff] %vm10317, %v10197
      %10335 = vst.msk [vmem:[%s170 + $0x88] sm:$0xff] %vm10317, %v10198
      %10336 = vst.msk [vmem:[%s170 + $0x90] sm:$0xff] %vm10317, %v10199
      %10337 = vst.msk [vmem:[%s170 + $0x98] sm:$0xff] %vm10317, %v10200
      %10338 = vst.msk [vmem:[%s170 + $0xa0] sm:$0xff] %vm10317, %v10201
      %10339 = vst.msk [vmem:[%s170 + $0xa8] sm:$0xff] %vm10317, %v10202
      %10340 = vst.msk [vmem:[%s170 + $0xb0] sm:$0xff] %vm10317, %v10203
      %10341 = vst.msk [vmem:[%s170 + $0xb8] sm:$0xff] %vm10317, %v10204
      %10342 = vst.msk [vmem:[%s170 + $0xc0] sm:$0xff] %vm10317, %v10205
      %10343 = vst.msk [vmem:[%s170 + $0xc8] sm:$0xff] %vm10317, %v10206
      %10344 = vst.msk [vmem:[%s170 + $0xd0] sm:$0xff] %vm10317, %v10207
      %10345 = vst.msk [vmem:[%s170 + $0xd8] sm:$0xff] %vm10317, %v10208
      %10346 = vst.msk [vmem:[%s170 + $0xe0] sm:$0xff] %vm10317, %v10209
      %10347 = vst.msk [vmem:[%s170 + $0xe8] sm:$0xff] %vm10317, %v10210
      %10348 = vst.msk [vmem:[%s170 + $0xf0] sm:$0xff] %vm10317, %v10211
      %10349 = vst.msk [vmem:[%s170 + $0xf8] sm:$0xff] %vm10317, %v10212
      %10350 = vst.msk [vmem:[%s170 + $0x100] sm:$0xff] %vm10317, %v10213
      %10351 = vst.msk [vmem:[%s170 + $0x108] sm:$0xff] %vm10317, %v10214
      %10352 = vst.msk [vmem:[%s170 + $0x110] sm:$0xff] %vm10317, %v10215
      %10353 = vst.msk [vmem:[%s170 + $0x118] sm:$0xff] %vm10317, %v10216
      %10354 = vst.msk [vmem:[%s170 + $0x120] sm:$0xff] %vm10317, %v10217
      %10355 = vst.msk [vmem:[%s170 + $0x128] sm:$0xff] %vm10317, %v10218
      %10356 = vst.msk [vmem:[%s170 + $0x130] sm:$0xff] %vm10317, %v10219
      %10357 = vst.msk [vmem:[%s170 + $0x138] sm:$0xff] %vm10317, %v10220
      %10358 = vst.msk [vmem:[%s170 + $0x140] sm:$0xff] %vm10317, %v10221
      %10359 = vst.msk [vmem:[%s170 + $0x148] sm:$0xff] %vm10317, %v10222
      %10360 = vst.msk [vmem:[%s170 + $0x150] sm:$0xff] %vm10317, %v10223
      %10361 = vst.msk [vmem:[%s170 + $0x158] sm:$0xff] %vm10317, %v10224
      %10362 = vst.msk [vmem:[%s170 + $0x160] sm:$0xff] %vm10317, %v10225
      %10363 = vst.msk [vmem:[%s170 + $0x168] sm:$0xff] %vm10317, %v10226
      %10364 = vst.msk [vmem:[%s170 + $0x170] sm:$0xff] %vm10317, %v10227
      %10365 = vst.msk [vmem:[%s170 + $0x178] sm:$0xff] %vm10317, %v10228
      %10366 = vst.msk [vmem:[%s170 + $0x180] sm:$0xff] %vm10317, %v10229
      %10367 = vst.msk [vmem:[%s170 + $0x188] sm:$0xff] %vm10317, %v10230
      %10368 = vst.msk [vmem:[%s170 + $0x190] sm:$0xff] %vm10317, %v10231
      %10369 = vst.msk [vmem:[%s170 + $0x198] sm:$0xff] %vm10317, %v10232
      %10370 = vst.msk [vmem:[%s170 + $0x1a0] sm:$0xff] %vm10317, %v10233
      %10371 = vst.msk [vmem:[%s170 + $0x1a8] sm:$0xff] %vm10317, %v10234
      %10372 = vst.msk [vmem:[%s170 + $0x1b0] sm:$0xff] %vm10317, %v10235
      %10373 = vst.msk [vmem:[%s170 + $0x1b8] sm:$0xff] %vm10317, %v10236
      %10374 = vst.msk [vmem:[%s170 + $0x1c0] sm:$0xff] %vm10317, %v10237
      %10375 = vst.msk [vmem:[%s170 + $0x1c8] sm:$0xff] %vm10317, %v10238
      %10376 = vst.msk [vmem:[%s170 + $0x1d0] sm:$0xff] %vm10317, %v10239
      %10377 = vst.msk [vmem:[%s170 + $0x1d8] sm:$0xff] %vm10317, %v10240
      %10378 = vst.msk [vmem:[%s170 + $0x1e0] sm:$0xff] %vm10317, %v10241
      %10379 = vst.msk [vmem:[%s170 + $0x1e8] sm:$0xff] %vm10317, %v10242
      %10380 = vst.msk [vmem:[%s170 + $0x1f0] sm:$0xff] %vm10317, %v10243
      %10381 = vst.msk [vmem:[%s170 + $0x1f8] sm:$0xff] %vm10317, %v10244
      %10382 = vst.msk [vmem:[%s170 + $0x200] sm:$0xff] %vm10317, %v10245
      %10383 = vst.msk [vmem:[%s170 + $0x208] sm:$0xff] %vm10317, %v10246
      %10384 = vst.msk [vmem:[%s170 + $0x210] sm:$0xff] %vm10317, %v10247
      %10385 = vst.msk [vmem:[%s170 + $0x218] sm:$0xff] %vm10317, %v10248
      %10386 = vst.msk [vmem:[%s170 + $0x220] sm:$0xff] %vm10317, %v10249
      %10387 = vst.msk [vmem:[%s170 + $0x228] sm:$0xff] %vm10317, %v10250
      %10388 = vst.msk [vmem:[%s170 + $0x230] sm:$0xff] %vm10317, %v10251
      %10389 = vst.msk [vmem:[%s170 + $0x238] sm:$0xff] %vm10317, %v10252
      %10390 = vst.msk [vmem:[%s170 + $0x240] sm:$0xff] %vm10317, %v10253
      %10391 = vst.msk [vmem:[%s170 + $0x248] sm:$0xff] %vm10317, %v10254
      %10392 = vst.msk [vmem:[%s170 + $0x250] sm:$0xff] %vm10317, %v10255
      %10393 = vst.msk [vmem:[%s170 + $0x258] sm:$0xff] %vm10317, %v10256
      %10394 = vst.msk [vmem:[%s170 + $0x260] sm:$0xff] %vm10317, %v10257
      %10395 = vst.msk [vmem:[%s170 + $0x268] sm:$0xff] %vm10317, %v10258
      %10396 = vst.msk [vmem:[%s170 + $0x270] sm:$0xff] %vm10317, %v10259
      %10397 = vst.msk [vmem:[%s170 + $0x278] sm:$0xff] %vm10317, %v10260
      %10398 = vst.msk [vmem:[%s170 + $0x280] sm:$0xff] %vm10317, %v10261
      %10399 = vst.msk [vmem:[%s170 + $0x288] sm:$0xff] %vm10317, %v10262
      %10400 = vst.msk [vmem:[%s170 + $0x290] sm:$0xff] %vm10317, %v10263
      %10401 = vst.msk [vmem:[%s170 + $0x298] sm:$0xff] %vm10317, %v10264
      %10402 = vst.msk [vmem:[%s170 + $0x2a0] sm:$0xff] %vm10317, %v10265
      %10403 = vst.msk [vmem:[%s170 + $0x2a8] sm:$0xff] %vm10317, %v10266
      %10404 = vst.msk [vmem:[%s170 + $0x2b0] sm:$0xff] %vm10317, %v10267
      %10405 = vst.msk [vmem:[%s170 + $0x2b8] sm:$0xff] %vm10317, %v10268
      %10406 = vst.msk [vmem:[%s170 + $0x2c0] sm:$0xff] %vm10317, %v10269
      %10407 = vst.msk [vmem:[%s170 + $0x2c8] sm:$0xff] %vm10317, %v10270
      %10408 = vst.msk [vmem:[%s170 + $0x2d0] sm:$0xff] %vm10317, %v10271
      %10409 = vst.msk [vmem:[%s170 + $0x2d8] sm:$0xff] %vm10317, %v10272
      %10410 = vst.msk [vmem:[%s170 + $0x2e0] sm:$0xff] %vm10317, %v10273
      %10411 = vst.msk [vmem:[%s170 + $0x2e8] sm:$0xff] %vm10317, %v10274
      %10412 = vst.msk [vmem:[%s170 + $0x2f0] sm:$0xff] %vm10317, %v10275
      %10413 = vst.msk [vmem:[%s170 + $0x2f8] sm:$0xff] %vm10317, %v10276
      %10414 = vst.msk [vmem:[%s170 + $0x300] sm:$0xff] %vm10317, %v10277
      %10415 = vst.msk [vmem:[%s170 + $0x308] sm:$0xff] %vm10317, %v10278
      %10416 = vst.msk [vmem:[%s170 + $0x310] sm:$0xff] %vm10317, %v10279
      %10417 = vst.msk [vmem:[%s170 + $0x318] sm:$0xff] %vm10317, %v10280
      %10418 = vst.msk [vmem:[%s170 + $0x320] sm:$0xff] %vm10317, %v10281
      %10419 = vst.msk [vmem:[%s170 + $0x328] sm:$0xff] %vm10317, %v10282
      %10420 = vst.msk [vmem:[%s170 + $0x330] sm:$0xff] %vm10317, %v10283
      %10421 = vst.msk [vmem:[%s170 + $0x338] sm:$0xff] %vm10317, %v10284
      %10422 = vst.msk [vmem:[%s170 + $0x340] sm:$0xff] %vm10317, %v10285
      %10423 = vst.msk [vmem:[%s170 + $0x348] sm:$0xff] %vm10317, %v10286
      %10424 = vst.msk [vmem:[%s170 + $0x350] sm:$0xff] %vm10317, %v10287
      %10425 = vst.msk [vmem:[%s170 + $0x358] sm:$0xff] %vm10317, %v10288
      %10426 = vst.msk [vmem:[%s170 + $0x360] sm:$0xff] %vm10317, %v10289
      %10427 = vst.msk [vmem:[%s170 + $0x368] sm:$0xff] %vm10317, %v10290
      %10428 = vst.msk [vmem:[%s170 + $0x370] sm:$0xff] %vm10317, %v10291
      %10429 = vst.msk [vmem:[%s170 + $0x378] sm:$0xff] %vm10317, %v10292
      %10430 = vst.msk [vmem:[%s170 + $0x380] sm:$0xff] %vm10317, %v10293
      %10431 = vst.msk [vmem:[%s170 + $0x388] sm:$0xff] %vm10317, %v10294
      %10432 = vst.msk [vmem:[%s170 + $0x390] sm:$0xff] %vm10317, %v10295
      %10433 = vst.msk [vmem:[%s170 + $0x398] sm:$0xff] %vm10317, %v10296
      %10434 = vst.msk [vmem:[%s170 + $0x3a0] sm:$0xff] %vm10317, %v10297
      %10435 = vst.msk [vmem:[%s170 + $0x3a8] sm:$0xff] %vm10317, %v10298
      %10436 = vst.msk [vmem:[%s170 + $0x3b0] sm:$0xff] %vm10317, %v10299
      %10437 = vst.msk [vmem:[%s170 + $0x3b8] sm:$0xff] %vm10317, %v10300
      %10438 = vst.msk [vmem:[%s170 + $0x3c0] sm:$0xff] %vm10317, %v10301
      %10439 = vst.msk [vmem:[%s170 + $0x3c8] sm:$0xff] %vm10317, %v10302
      %10440 = vst.msk [vmem:[%s170 + $0x3d0] sm:$0xff] %vm10317, %v10303
      %10441 = vst.msk [vmem:[%s170 + $0x3d8] sm:$0xff] %vm10317, %v10304
      %10442 = vst.msk [vmem:[%s170 + $0x3e0] sm:$0xff] %vm10317, %v10305
      %10443 = vst.msk [vmem:[%s170 + $0x3e8] sm:$0xff] %vm10317, %v10306
      %10444 = vst.msk [vmem:[%s170 + $0x3f0] sm:$0xff] %vm10317, %v10307
      %10445 = vst.msk [vmem:[%s170 + $0x3f8] sm:$0xff] %vm10317, %v10308
      %10446 = vst.msk [vmem:[%s170 + $0x400] sm:$0xff] %vm10317, %v10309
      %10447 = vst.msk [vmem:[%s170 + $0x408] sm:$0xff] %vm10317, %v10310
      %10448 = vst.msk [vmem:[%s170 + $0x410] sm:$0xff] %vm10317, %v10311
      %10449 = vst.msk [vmem:[%s170 + $0x418] sm:$0xff] %vm10317, %v10312
      %10450 = vst.msk [vmem:[%s170 + $0x420] sm:$0xff] %vm10317, %v10313
      %10451 = vst.msk [vmem:[%s170 + $0x428] sm:$0xff] %vm10317, %v10314
      %10452 = vst.msk [vmem:[%s170 + $0x430] sm:$0xff] %vm10317, %v10315
      %10453 = vst.msk [vmem:[%s170 + $0x438] sm:$0xff] %vm10317, %v10316
      %p10454 = scmp.lt.s32.totalorder %s14, 1
      %s10455 = scalar_select %p10454, %s14, 1
      %s10456 = smul.addr %s10455, 136
      %s10457 = smul.addr %s10456, 8
      %s10458 = scalar_lea.vmem %s3, %s10457
      // Predicated region
      $region33: #{tpu_custom_call.1} parent=31 // pred_check
        %p10459 = pneg %p100
      $region34: #{tpu_custom_call.1} parent=31 // pred_check_branch
        %10461 = sbr.rel (%p10459) target = $region36
      $region35: #{tpu_custom_call.1} parent=31 // pred_region
        _
      $region36: #{tpu_custom_call.1} parent=31 // pred_fallthru
        _
    $region32: #{tpu_custom_call.1} parent=5 // pred_fallthru
      _
    %p10462 = scmp.le.s32.totalorder 2, %s9
    // Predicated region
    $region37: #{tpu_custom_call.1} parent=5 // pred_check
      %p10463 = pneg %p10462
    $region38: #{tpu_custom_call.1} parent=5 // pred_check_branch
      %10465 = sbr.rel (%p10463) target = $region40
    $region39: #{tpu_custom_call.1} parent=5 // pred_region
      %s10466 = ssub.s32 %s9, 2
      // Predicated region
      $region41: #{tpu_custom_call.1} parent=39 // pred_check
        %p10467 = pneg %p106
      $region42: #{tpu_custom_call.1} parent=39 // pred_check_branch
        %10469 = sbr.rel (%p10467) target = $region44
      $region43: #{tpu_custom_call.1} parent=39 // pred_region
        %p10470 = scmp.lt.s32.totalorder %s15, 1
        %s10471 = scalar_select %p10470, %s15, 1
        %s10472 = smul.addr %s10471, 136
        %s10473 = smul.addr %s10472, 8
        %s10474 = scalar_lea.vmem %s3, %s10473
      $region44: #{tpu_custom_call.1} parent=39 // pred_fallthru
        _
    $region40: #{tpu_custom_call.1} parent=5 // pred_fallthru
      _
  $region6: #{tpu_custom_call.1} parent=0 // loop_footer
    %s13 = sadd.s32 1, %s9
  $region7: #{tpu_custom_call.1} parent=0 // loop_footer_branch
    %8 = sbr.rel target = $region3
  $region8: #{tpu_custom_call.1} parent=0 // loop_exit
    _

</llo_original>
